<compile_context>
chip_gen: v6e
topology: v6e:2x2x1
jax: 0.10.0
libtpu: 0.0.40
codegen_flags: <defaults>
</compile_context>

<pallas_src>
import jax
import jax.numpy as jnp
import numpy as np
from jax import lax
from jax.experimental import pallas as pl
from jax.experimental.pallas import tpu as pltpu

H = W = 32
CIN, COUT = 3, 240
TAPS = CIN * 9          # 27 conv taps
KP = 32                 # taps (+1 bias column) padded to 32 lanes
PH = PW = 3             # MaxPool2d(8, 8) on 30x30 -> 3x3 (floor mode)
NWIN = PH * PW          # 9 pooled windows
WINSZ = 64              # 8x8 conv positions per pooled window
NPOS = NWIN * WINSZ     # 576 conv positions actually used by the pool
FC1_OUT, FC2_OUT = 40, 3
PAD = 128               # lane padding for fc layers
TB = 16                 # images per grid step (clamped down for tiny batches)


def _cnn_kernel(p_ref, wc_ref, w1_ref, b1_ref, w2_ref, b2_ref, out_ref):
    tb = p_ref.shape[0]
    wc = wc_ref[...]                                    # (32, 240) bf16, hoisted
    acc = jnp.zeros((tb, PAD), jnp.float32)
    for w in range(NWIN):
        # 64 conv positions of pooled window w: contiguous, sublane-aligned slice.
        pw = p_ref[:, w * WINSZ:(w + 1) * WINSZ, :].reshape(tb * WINSZ, KP)
        # conv1 (bias folded into tap column 27): (TB*64, 32) @ (32, 240) -> f32
        co = jnp.dot(pw, wc, preferred_element_type=jnp.float32)
        # MaxPool2d(8,8): aligned 64-row sublane max per image.
        pooled = jnp.max(co.reshape(tb, WINSZ, COUT), axis=1)          # (TB, 240) f32
        # fc1 contribution of this window: (TB, 240) @ (240, 128), f32 accumulate.
        acc = acc + jnp.dot(pooled.astype(jnp.bfloat16), w1_ref[w],
                            preferred_element_type=jnp.float32)
    h1 = jnp.maximum(acc + b1_ref[...], 0.0)            # fc1 bias + ReLU
    # TODO(synk): nn.Dropout(0.5) is identity in eval mode; training-mode RNG masking not implemented.
    out_ref[...] = jnp.dot(h1.astype(jnp.bfloat16), w2_ref[...],
                           preferred_element_type=jnp.float32) + b2_ref[...]


def color_constancy_cnn(x, params, tb=TB):
    """x: (N, 3, 32, 32) float32 NCHW. Returns (N, 3) float32."""
    conv_w, conv_b, fc1_w, fc1_b, fc2_w, fc2_b = params
    n = x.shape[0]
    tb = max(8, min(tb, ((n + 7) // 8) * 8))            # don't over-pad tiny batches
    tb = (tb // 8) * 8
    n_pad = ((n + tb - 1) // tb) * tb
    if n_pad != n:
        x = jnp.pad(x, ((0, n_pad - n), (0, 0), (0, 0), (0, 0)))

    # --- glue: im2col in pool-window order (pure gather/reshape, no arithmetic) ---
    cols = []
    for c in range(CIN):
        for kh in range(3):
            for kw in range(3):
                win = x[:, c, kh:kh + 24, kw:kw + 24]             # (Np, 24, 24)
                win = win.reshape(n_pad, PH, 8, PW, 8)
                win = win.transpose(0, 1, 3, 2, 4).reshape(n_pad, NPOS)
                cols.append(win)
    patches = jnp.stack(cols, axis=-1)                            # (Np, 576, 27)
    ones = jnp.ones((n_pad, NPOS, 1), patches.dtype)              # bias column
    patches = jnp.concatenate([patches, ones], axis=-1)           # (Np, 576, 28)
    patches = jnp.pad(patches, ((0, 0), (0, 0), (0, KP - TAPS - 1)))
    patches = patches.astype(jnp.bfloat16)                        # (Np, 576, 32)

    # --- glue: parameter repacking to kernel layout ---
    wc = conv_w.reshape(COUT, TAPS).T                             # (27, 240)
    wc = jnp.concatenate([wc, conv_b.reshape(1, COUT)], axis=0)   # bias row at 27
    wc = jnp.pad(wc, ((0, KP - TAPS - 1), (0, 0))).astype(jnp.bfloat16)   # (32, 240)
    # torch flatten of (240, 3, 3) is c*9 + window; reorder fc1 to (window, c, out)
    w1 = jnp.transpose(fc1_w.reshape(FC1_OUT, COUT, NWIN), (2, 1, 0))     # (9, 240, 40)
    w1 = jnp.pad(w1, ((0, 0), (0, 0), (0, PAD - FC1_OUT))).astype(jnp.bfloat16)
    b1 = jnp.pad(fc1_b.reshape(1, FC1_OUT), ((0, 0), (0, PAD - FC1_OUT)))
    w2 = jnp.pad(fc2_w.T, ((0, PAD - FC1_OUT), (0, PAD - FC2_OUT))).astype(jnp.bfloat16)
    b2 = jnp.pad(fc2_b.reshape(1, FC2_OUT), ((0, 0), (0, PAD - FC2_OUT)))

    out = pl.pallas_call(
        _cnn_kernel,
        out_shape=jax.ShapeDtypeStruct((n_pad, PAD), jnp.float32),
        grid=(n_pad // tb,),
        in_specs=[
            pl.BlockSpec((tb, NPOS, KP), lambda b: (b, 0, 0)),      # patches
            pl.BlockSpec((KP, COUT), lambda b: (0, 0)),             # conv w (+bias row)
            pl.BlockSpec((NWIN, COUT, PAD), lambda b: (0, 0, 0)),   # fc1 weight
            pl.BlockSpec((1, PAD), lambda b: (0, 0)),               # fc1 bias
            pl.BlockSpec((PAD, PAD), lambda b: (0, 0)),             # fc2 weight
            pl.BlockSpec((1, PAD), lambda b: (0, 0)),               # fc2 bias
        ],
        out_specs=pl.BlockSpec((tb, PAD), lambda b: (b, 0)),
        compiler_params=pltpu.CompilerParams(
            dimension_semantics=("parallel",),
            vmem_limit_bytes=32 * 1024 * 1024),
    )(patches, wc, w1, b1, w2, b2)
    return out[:n, :FC2_OUT]


def reference(x, params):
    """Plain-JAX replica of the PyTorch forward pass (eval mode), full f32."""
    conv_w, conv_b, fc1_w, fc1_b, fc2_w, fc2_b = params
    co = lax.conv_general_dilated(
        x, conv_w, (1, 1), 'VALID',
        dimension_numbers=('NCHW', 'OIHW', 'NCHW')) + conv_b[None, :, None, None]
    pooled = lax.reduce_window(co, -jnp.inf, lax.max,
                               (1, 1, 8, 8), (1, 1, 8, 8), 'VALID')   # (N, 240, 3, 3)
    flat = pooled.reshape(x.shape[0], COUT * PH * PW)
    h1 = jnp.maximum(flat @ fc1_w.T + fc1_b, 0.0)
    return h1 @ fc2_w.T + fc2_b


if __name__ == "__main__":
    key = jax.random.PRNGKey(0)
    ks = jax.random.split(key, 7)
    x = jax.random.normal(ks[0], (2, CIN, H, W), jnp.float32)
    conv_w = 0.05 * jax.random.normal(ks[1], (COUT, CIN, 3, 3), jnp.float32)
    conv_b = 0.05 * jax.random.normal(ks[2], (COUT,), jnp.float32)
    fc1_w = 0.02 * jax.random.normal(ks[3], (FC1_OUT, COUT * PH * PW), jnp.float32)
    fc1_b = 0.02 * jax.random.normal(ks[4], (FC1_OUT,), jnp.float32)
    fc2_w = 0.10 * jax.random.normal(ks[5], (FC2_OUT, FC1_OUT), jnp.float32)
    fc2_b = 0.10 * jax.random.normal(ks[6], (FC2_OUT,), jnp.float32)
    params = (conv_w, conv_b, fc1_w, fc1_b, fc2_w, fc2_b)

    out = jax.block_until_ready(color_constancy_cnn(x, params))
    ref = jax.block_until_ready(reference(x, params))
    np.testing.assert_allclose(np.asarray(out), np.asarray(ref), rtol=8e-2, atol=2e-2)
    print("KERNEL_OK")
</pallas_src>

<mosaic_0001>
module attributes {stable_mosaic.version = 11 : i64} {
  func.func @_cnn_kernel(%arg0: i32, %arg1: memref<8x576x32xbf16, #tpu.memory_space<vmem>>, %arg2: memref<32x240xbf16, #tpu.memory_space<vmem>>, %arg3: memref<9x240x128xbf16, #tpu.memory_space<vmem>>, %arg4: memref<1x128xf32, #tpu.memory_space<vmem>>, %arg5: memref<128x128xbf16, #tpu.memory_space<vmem>>, %arg6: memref<1x128xf32, #tpu.memory_space<vmem>>, %arg7: memref<8x128xf32, #tpu.memory_space<vmem>>) attributes {dimension_semantics = [#tpu.dimension_semantics<parallel>], iteration_bounds = array<i64: 1>, scalar_prefetch = 0 : i64, scratch_operands = 0 : i64, tpu.core_type = #tpu.core_type<tc>, window_params = [{transform_indices = @transform_0, window_bounds = array<i64: 8, 576, 32>}, {pipeline_mode = #tpu.pipeline_mode<synchronous>, transform_indices = @transform_1, window_bounds = array<i64: 32, 240>}, {pipeline_mode = #tpu.pipeline_mode<synchronous>, transform_indices = @transform_2, window_bounds = array<i64: 9, 240, 128>}, {pipeline_mode = #tpu.pipeline_mode<synchronous>, transform_indices = @transform_3, window_bounds = array<i64: 1, 128>}, {pipeline_mode = #tpu.pipeline_mode<synchronous>, transform_indices = @transform_4, window_bounds = array<i64: 128, 128>}, {pipeline_mode = #tpu.pipeline_mode<synchronous>, transform_indices = @transform_5, window_bounds = array<i64: 1, 128>}, {transform_indices = @transform_6, window_bounds = array<i64: 8, 128>}]} {
    %c0 = arith.constant 0 : index
    %c0_0 = arith.constant 0 : index
    %0 = vector.load %arg2[%c0, %c0_0] : memref<32x240xbf16, #tpu.memory_space<vmem>>, vector<32x240xbf16>
    %cst = arith.constant 0.000000e+00 : f32
    %1 = vector.broadcast %cst : f32 to vector<8x128xf32>
    %c0_1 = arith.constant 0 : index
    %c0_2 = arith.constant 0 : index
    %c0_3 = arith.constant 0 : index
    %2 = vector.load %arg1[%c0_1, %c0_2, %c0_3] : memref<8x576x32xbf16, #tpu.memory_space<vmem>>, vector<8x64x32xbf16>
    %3 = vector.shape_cast %2 : vector<8x64x32xbf16> to vector<512x32xbf16>
    %cst_4 = arith.constant dense<0.000000e+00> : vector<512x240xf32>
    %4 = tpu.matmul %3, %0, %cst_4 {dimension_numbers = #tpu.dot_dimension_numbers<[1], [0], [0], [1], [0, 0, 1, 1], [], []>} : vector<512x32xbf16>, vector<32x240xbf16>, vector<512x240xf32> -> vector<512x240xf32>
    %5 = vector.shape_cast %4 : vector<512x240xf32> to vector<8x64x240xf32>
    %cst_5 = arith.constant dense<0xFF800000> : vector<8x240xf32>
    %6 = vector.multi_reduction <maximumf>, %5, %cst_5 [1] : vector<8x64x240xf32> to vector<8x240xf32>
    %7 = arith.truncf %6 : vector<8x240xf32> to vector<8x240xbf16>
    %c0_6 = arith.constant 0 : index
    %c0_7 = arith.constant 0 : index
    %c0_8 = arith.constant 0 : index
    %8 = vector.load %arg3[%c0_6, %c0_7, %c0_8] : memref<9x240x128xbf16, #tpu.memory_space<vmem>>, vector<1x240x128xbf16>
    %9 = vector.shape_cast %8 : vector<1x240x128xbf16> to vector<240x128xbf16>
    %cst_9 = arith.constant dense<0.000000e+00> : vector<8x128xf32>
    %10 = tpu.matmul %7, %9, %cst_9 {dimension_numbers = #tpu.dot_dimension_numbers<[1], [0], [0], [1], [0, 0, 1, 1], [], []>} : vector<8x240xbf16>, vector<240x128xbf16>, vector<8x128xf32> -> vector<8x128xf32>
    %11 = arith.addf %1, %10 : vector<8x128xf32>
    %c0_10 = arith.constant 0 : index
    %c64 = arith.constant 64 : index
    %c0_11 = arith.constant 0 : index
    %12 = vector.load %arg1[%c0_10, %c64, %c0_11] : memref<8x576x32xbf16, #tpu.memory_space<vmem>>, vector<8x64x32xbf16>
    %13 = vector.shape_cast %12 : vector<8x64x32xbf16> to vector<512x32xbf16>
    %cst_12 = arith.constant dense<0.000000e+00> : vector<512x240xf32>
    %14 = tpu.matmul %13, %0, %cst_12 {dimension_numbers = #tpu.dot_dimension_numbers<[1], [0], [0], [1], [0, 0, 1, 1], [], []>} : vector<512x32xbf16>, vector<32x240xbf16>, vector<512x240xf32> -> vector<512x240xf32>
    %15 = vector.shape_cast %14 : vector<512x240xf32> to vector<8x64x240xf32>
    %cst_13 = arith.constant dense<0xFF800000> : vector<8x240xf32>
    %16 = vector.multi_reduction <maximumf>, %15, %cst_13 [1] : vector<8x64x240xf32> to vector<8x240xf32>
    %17 = arith.truncf %16 : vector<8x240xf32> to vector<8x240xbf16>
    %c1 = arith.constant 1 : index
    %c0_14 = arith.constant 0 : index
    %c0_15 = arith.constant 0 : index
    %18 = vector.load %arg3[%c1, %c0_14, %c0_15] : memref<9x240x128xbf16, #tpu.memory_space<vmem>>, vector<1x240x128xbf16>
    %19 = vector.shape_cast %18 : vector<1x240x128xbf16> to vector<240x128xbf16>
    %cst_16 = arith.constant dense<0.000000e+00> : vector<8x128xf32>
    %20 = tpu.matmul %17, %19, %cst_16 {dimension_numbers = #tpu.dot_dimension_numbers<[1], [0], [0], [1], [0, 0, 1, 1], [], []>} : vector<8x240xbf16>, vector<240x128xbf16>, vector<8x128xf32> -> vector<8x128xf32>
    %21 = arith.addf %11, %20 : vector<8x128xf32>
    %c0_17 = arith.constant 0 : index
    %c128 = arith.constant 128 : index
    %c0_18 = arith.constant 0 : index
    %22 = vector.load %arg1[%c0_17, %c128, %c0_18] : memref<8x576x32xbf16, #tpu.memory_space<vmem>>, vector<8x64x32xbf16>
    %23 = vector.shape_cast %22 : vector<8x64x32xbf16> to vector<512x32xbf16>
    %cst_19 = arith.constant dense<0.000000e+00> : vector<512x240xf32>
    %24 = tpu.matmul %23, %0, %cst_19 {dimension_numbers = #tpu.dot_dimension_numbers<[1], [0], [0], [1], [0, 0, 1, 1], [], []>} : vector<512x32xbf16>, vector<32x240xbf16>, vector<512x240xf32> -> vector<512x240xf32>
    %25 = vector.shape_cast %24 : vector<512x240xf32> to vector<8x64x240xf32>
    %cst_20 = arith.constant dense<0xFF800000> : vector<8x240xf32>
    %26 = vector.multi_reduction <maximumf>, %25, %cst_20 [1] : vector<8x64x240xf32> to vector<8x240xf32>
    %27 = arith.truncf %26 : vector<8x240xf32> to vector<8x240xbf16>
    %c2 = arith.constant 2 : index
    %c0_21 = arith.constant 0 : index
    %c0_22 = arith.constant 0 : index
    %28 = vector.load %arg3[%c2, %c0_21, %c0_22] : memref<9x240x128xbf16, #tpu.memory_space<vmem>>, vector<1x240x128xbf16>
    %29 = vector.shape_cast %28 : vector<1x240x128xbf16> to vector<240x128xbf16>
    %cst_23 = arith.constant dense<0.000000e+00> : vector<8x128xf32>
    %30 = tpu.matmul %27, %29, %cst_23 {dimension_numbers = #tpu.dot_dimension_numbers<[1], [0], [0], [1], [0, 0, 1, 1], [], []>} : vector<8x240xbf16>, vector<240x128xbf16>, vector<8x128xf32> -> vector<8x128xf32>
    %31 = arith.addf %21, %30 : vector<8x128xf32>
    %c0_24 = arith.constant 0 : index
    %c192 = arith.constant 192 : index
    %c0_25 = arith.constant 0 : index
    %32 = vector.load %arg1[%c0_24, %c192, %c0_25] : memref<8x576x32xbf16, #tpu.memory_space<vmem>>, vector<8x64x32xbf16>
    %33 = vector.shape_cast %32 : vector<8x64x32xbf16> to vector<512x32xbf16>
    %cst_26 = arith.constant dense<0.000000e+00> : vector<512x240xf32>
    %34 = tpu.matmul %33, %0, %cst_26 {dimension_numbers = #tpu.dot_dimension_numbers<[1], [0], [0], [1], [0, 0, 1, 1], [], []>} : vector<512x32xbf16>, vector<32x240xbf16>, vector<512x240xf32> -> vector<512x240xf32>
    %35 = vector.shape_cast %34 : vector<512x240xf32> to vector<8x64x240xf32>
    %cst_27 = arith.constant dense<0xFF800000> : vector<8x240xf32>
    %36 = vector.multi_reduction <maximumf>, %35, %cst_27 [1] : vector<8x64x240xf32> to vector<8x240xf32>
    %37 = arith.truncf %36 : vector<8x240xf32> to vector<8x240xbf16>
    %c3 = arith.constant 3 : index
    %c0_28 = arith.constant 0 : index
    %c0_29 = arith.constant 0 : index
    %38 = vector.load %arg3[%c3, %c0_28, %c0_29] : memref<9x240x128xbf16, #tpu.memory_space<vmem>>, vector<1x240x128xbf16>
    %39 = vector.shape_cast %38 : vector<1x240x128xbf16> to vector<240x128xbf16>
    %cst_30 = arith.constant dense<0.000000e+00> : vector<8x128xf32>
    %40 = tpu.matmul %37, %39, %cst_30 {dimension_numbers = #tpu.dot_dimension_numbers<[1], [0], [0], [1], [0, 0, 1, 1], [], []>} : vector<8x240xbf16>, vector<240x128xbf16>, vector<8x128xf32> -> vector<8x128xf32>
    %41 = arith.addf %31, %40 : vector<8x128xf32>
    %c0_31 = arith.constant 0 : index
    %c256 = arith.constant 256 : index
    %c0_32 = arith.constant 0 : index
    %42 = vector.load %arg1[%c0_31, %c256, %c0_32] : memref<8x576x32xbf16, #tpu.memory_space<vmem>>, vector<8x64x32xbf16>
    %43 = vector.shape_cast %42 : vector<8x64x32xbf16> to vector<512x32xbf16>
    %cst_33 = arith.constant dense<0.000000e+00> : vector<512x240xf32>
    %44 = tpu.matmul %43, %0, %cst_33 {dimension_numbers = #tpu.dot_dimension_numbers<[1], [0], [0], [1], [0, 0, 1, 1], [], []>} : vector<512x32xbf16>, vector<32x240xbf16>, vector<512x240xf32> -> vector<512x240xf32>
    %45 = vector.shape_cast %44 : vector<512x240xf32> to vector<8x64x240xf32>
    %cst_34 = arith.constant dense<0xFF800000> : vector<8x240xf32>
    %46 = vector.multi_reduction <maximumf>, %45, %cst_34 [1] : vector<8x64x240xf32> to vector<8x240xf32>
    %47 = arith.truncf %46 : vector<8x240xf32> to vector<8x240xbf16>
    %c4 = arith.constant 4 : index
    %c0_35 = arith.constant 0 : index
    %c0_36 = arith.constant 0 : index
    %48 = vector.load %arg3[%c4, %c0_35, %c0_36] : memref<9x240x128xbf16, #tpu.memory_space<vmem>>, vector<1x240x128xbf16>
    %49 = vector.shape_cast %48 : vector<1x240x128xbf16> to vector<240x128xbf16>
    %cst_37 = arith.constant dense<0.000000e+00> : vector<8x128xf32>
    %50 = tpu.matmul %47, %49, %cst_37 {dimension_numbers = #tpu.dot_dimension_numbers<[1], [0], [0], [1], [0, 0, 1, 1], [], []>} : vector<8x240xbf16>, vector<240x128xbf16>, vector<8x128xf32> -> vector<8x128xf32>
    %51 = arith.addf %41, %50 : vector<8x128xf32>
    %c0_38 = arith.constant 0 : index
    %c320 = arith.constant 320 : index
    %c0_39 = arith.constant 0 : index
    %52 = vector.load %arg1[%c0_38, %c320, %c0_39] : memref<8x576x32xbf16, #tpu.memory_space<vmem>>, vector<8x64x32xbf16>
    %53 = vector.shape_cast %52 : vector<8x64x32xbf16> to vector<512x32xbf16>
    %cst_40 = arith.constant dense<0.000000e+00> : vector<512x240xf32>
    %54 = tpu.matmul %53, %0, %cst_40 {dimension_numbers = #tpu.dot_dimension_numbers<[1], [0], [0], [1], [0, 0, 1, 1], [], []>} : vector<512x32xbf16>, vector<32x240xbf16>, vector<512x240xf32> -> vector<512x240xf32>
    %55 = vector.shape_cast %54 : vector<512x240xf32> to vector<8x64x240xf32>
    %cst_41 = arith.constant dense<0xFF800000> : vector<8x240xf32>
    %56 = vector.multi_reduction <maximumf>, %55, %cst_41 [1] : vector<8x64x240xf32> to vector<8x240xf32>
    %57 = arith.truncf %56 : vector<8x240xf32> to vector<8x240xbf16>
    %c5 = arith.constant 5 : index
    %c0_42 = arith.constant 0 : index
    %c0_43 = arith.constant 0 : index
    %58 = vector.load %arg3[%c5, %c0_42, %c0_43] : memref<9x240x128xbf16, #tpu.memory_space<vmem>>, vector<1x240x128xbf16>
    %59 = vector.shape_cast %58 : vector<1x240x128xbf16> to vector<240x128xbf16>
    %cst_44 = arith.constant dense<0.000000e+00> : vector<8x128xf32>
    %60 = tpu.matmul %57, %59, %cst_44 {dimension_numbers = #tpu.dot_dimension_numbers<[1], [0], [0], [1], [0, 0, 1, 1], [], []>} : vector<8x240xbf16>, vector<240x128xbf16>, vector<8x128xf32> -> vector<8x128xf32>
    %61 = arith.addf %51, %60 : vector<8x128xf32>
    %c0_45 = arith.constant 0 : index
    %c384 = arith.constant 384 : index
    %c0_46 = arith.constant 0 : index
    %62 = vector.load %arg1[%c0_45, %c384, %c0_46] : memref<8x576x32xbf16, #tpu.memory_space<vmem>>, vector<8x64x32xbf16>
    %63 = vector.shape_cast %62 : vector<8x64x32xbf16> to vector<512x32xbf16>
    %cst_47 = arith.constant dense<0.000000e+00> : vector<512x240xf32>
    %64 = tpu.matmul %63, %0, %cst_47 {dimension_numbers = #tpu.dot_dimension_numbers<[1], [0], [0], [1], [0, 0, 1, 1], [], []>} : vector<512x32xbf16>, vector<32x240xbf16>, vector<512x240xf32> -> vector<512x240xf32>
    %65 = vector.shape_cast %64 : vector<512x240xf32> to vector<8x64x240xf32>
    %cst_48 = arith.constant dense<0xFF800000> : vector<8x240xf32>
    %66 = vector.multi_reduction <maximumf>, %65, %cst_48 [1] : vector<8x64x240xf32> to vector<8x240xf32>
    %67 = arith.truncf %66 : vector<8x240xf32> to vector<8x240xbf16>
    %c6 = arith.constant 6 : index
    %c0_49 = arith.constant 0 : index
    %c0_50 = arith.constant 0 : index
    %68 = vector.load %arg3[%c6, %c0_49, %c0_50] : memref<9x240x128xbf16, #tpu.memory_space<vmem>>, vector<1x240x128xbf16>
    %69 = vector.shape_cast %68 : vector<1x240x128xbf16> to vector<240x128xbf16>
    %cst_51 = arith.constant dense<0.000000e+00> : vector<8x128xf32>
    %70 = tpu.matmul %67, %69, %cst_51 {dimension_numbers = #tpu.dot_dimension_numbers<[1], [0], [0], [1], [0, 0, 1, 1], [], []>} : vector<8x240xbf16>, vector<240x128xbf16>, vector<8x128xf32> -> vector<8x128xf32>
    %71 = arith.addf %61, %70 : vector<8x128xf32>
    %c0_52 = arith.constant 0 : index
    %c448 = arith.constant 448 : index
    %c0_53 = arith.constant 0 : index
    %72 = vector.load %arg1[%c0_52, %c448, %c0_53] : memref<8x576x32xbf16, #tpu.memory_space<vmem>>, vector<8x64x32xbf16>
    %73 = vector.shape_cast %72 : vector<8x64x32xbf16> to vector<512x32xbf16>
    %cst_54 = arith.constant dense<0.000000e+00> : vector<512x240xf32>
    %74 = tpu.matmul %73, %0, %cst_54 {dimension_numbers = #tpu.dot_dimension_numbers<[1], [0], [0], [1], [0, 0, 1, 1], [], []>} : vector<512x32xbf16>, vector<32x240xbf16>, vector<512x240xf32> -> vector<512x240xf32>
    %75 = vector.shape_cast %74 : vector<512x240xf32> to vector<8x64x240xf32>
    %cst_55 = arith.constant dense<0xFF800000> : vector<8x240xf32>
    %76 = vector.multi_reduction <maximumf>, %75, %cst_55 [1] : vector<8x64x240xf32> to vector<8x240xf32>
    %77 = arith.truncf %76 : vector<8x240xf32> to vector<8x240xbf16>
    %c7 = arith.constant 7 : index
    %c0_56 = arith.constant 0 : index
    %c0_57 = arith.constant 0 : index
    %78 = vector.load %arg3[%c7, %c0_56, %c0_57] : memref<9x240x128xbf16, #tpu.memory_space<vmem>>, vector<1x240x128xbf16>
    %79 = vector.shape_cast %78 : vector<1x240x128xbf16> to vector<240x128xbf16>
    %cst_58 = arith.constant dense<0.000000e+00> : vector<8x128xf32>
    %80 = tpu.matmul %77, %79, %cst_58 {dimension_numbers = #tpu.dot_dimension_numbers<[1], [0], [0], [1], [0, 0, 1, 1], [], []>} : vector<8x240xbf16>, vector<240x128xbf16>, vector<8x128xf32> -> vector<8x128xf32>
    %81 = arith.addf %71, %80 : vector<8x128xf32>
    %c0_59 = arith.constant 0 : index
    %c512 = arith.constant 512 : index
    %c0_60 = arith.constant 0 : index
    %82 = vector.load %arg1[%c0_59, %c512, %c0_60] : memref<8x576x32xbf16, #tpu.memory_space<vmem>>, vector<8x64x32xbf16>
    %83 = vector.shape_cast %82 : vector<8x64x32xbf16> to vector<512x32xbf16>
    %cst_61 = arith.constant dense<0.000000e+00> : vector<512x240xf32>
    %84 = tpu.matmul %83, %0, %cst_61 {dimension_numbers = #tpu.dot_dimension_numbers<[1], [0], [0], [1], [0, 0, 1, 1], [], []>} : vector<512x32xbf16>, vector<32x240xbf16>, vector<512x240xf32> -> vector<512x240xf32>
    %85 = vector.shape_cast %84 : vector<512x240xf32> to vector<8x64x240xf32>
    %cst_62 = arith.constant dense<0xFF800000> : vector<8x240xf32>
    %86 = vector.multi_reduction <maximumf>, %85, %cst_62 [1] : vector<8x64x240xf32> to vector<8x240xf32>
    %87 = arith.truncf %86 : vector<8x240xf32> to vector<8x240xbf16>
    %c8 = arith.constant 8 : index
    %c0_63 = arith.constant 0 : index
    %c0_64 = arith.constant 0 : index
    %88 = vector.load %arg3[%c8, %c0_63, %c0_64] : memref<9x240x128xbf16, #tpu.memory_space<vmem>>, vector<1x240x128xbf16>
    %89 = vector.shape_cast %88 : vector<1x240x128xbf16> to vector<240x128xbf16>
    %cst_65 = arith.constant dense<0.000000e+00> : vector<8x128xf32>
    %90 = tpu.matmul %87, %89, %cst_65 {dimension_numbers = #tpu.dot_dimension_numbers<[1], [0], [0], [1], [0, 0, 1, 1], [], []>} : vector<8x240xbf16>, vector<240x128xbf16>, vector<8x128xf32> -> vector<8x128xf32>
    %91 = arith.addf %81, %90 : vector<8x128xf32>
    %c0_66 = arith.constant 0 : index
    %c0_67 = arith.constant 0 : index
    %92 = vector.load %arg4[%c0_66, %c0_67] : memref<1x128xf32, #tpu.memory_space<vmem>>, vector<1x128xf32>
    %93 = vector.broadcast %92 : vector<1x128xf32> to vector<8x128xf32>
    %94 = arith.addf %91, %93 : vector<8x128xf32>
    %cst_68 = arith.constant 0.000000e+00 : f32
    %95 = vector.broadcast %cst_68 : f32 to vector<8x128xf32>
    %96 = arith.maximumf %94, %95 : vector<8x128xf32>
    %97 = arith.truncf %96 : vector<8x128xf32> to vector<8x128xbf16>
    %c0_69 = arith.constant 0 : index
    %c0_70 = arith.constant 0 : index
    %98 = vector.load %arg5[%c0_69, %c0_70] : memref<128x128xbf16, #tpu.memory_space<vmem>>, vector<128x128xbf16>
    %cst_71 = arith.constant dense<0.000000e+00> : vector<8x128xf32>
    %99 = tpu.matmul %97, %98, %cst_71 {dimension_numbers = #tpu.dot_dimension_numbers<[1], [0], [0], [1], [0, 0, 1, 1], [], []>} : vector<8x128xbf16>, vector<128x128xbf16>, vector<8x128xf32> -> vector<8x128xf32>
    %c0_72 = arith.constant 0 : index
    %c0_73 = arith.constant 0 : index
    %100 = vector.load %arg6[%c0_72, %c0_73] : memref<1x128xf32, #tpu.memory_space<vmem>>, vector<1x128xf32>
    %101 = vector.broadcast %100 : vector<1x128xf32> to vector<8x128xf32>
    %102 = arith.addf %99, %101 : vector<8x128xf32>
    %c0_74 = arith.constant 0 : index
    %c0_75 = arith.constant 0 : index
    %103 = vector.load %arg7[%c0_74, %c0_75] : memref<8x128xf32, #tpu.memory_space<vmem>>, vector<8x128xf32>
    tpu.vector_store %arg7[%c0_74, %c0_75], %102 {strides = array<i32>} : memref<8x128xf32, #tpu.memory_space<vmem>>, vector<8x128xf32>,
    return
  }
  func.func @transform_0(%arg0: i32) -> (i32, i32, i32) {
    %c0_i32 = arith.constant 0 : i32
    %c0_i32_0 = arith.constant 0 : i32
    %c0_i32_1 = arith.constant 0 : i32
    return %arg0, %c0_i32, %c0_i32_0 : i32, i32, i32
  }
  func.func @transform_1(%arg0: i32) -> (i32, i32) {
    %c0_i32 = arith.constant 0 : i32
    %c0_i32_0 = arith.constant 0 : i32
    %c0_i32_1 = arith.constant 0 : i32
    return %c0_i32, %c0_i32_0 : i32, i32
  }
  func.func @transform_2(%arg0: i32) -> (i32, i32, i32) {
    %c0_i32 = arith.constant 0 : i32
    %c0_i32_0 = arith.constant 0 : i32
    %c0_i32_1 = arith.constant 0 : i32
    %c0_i32_2 = arith.constant 0 : i32
    return %c0_i32, %c0_i32_0, %c0_i32_1 : i32, i32, i32
  }
  func.func @transform_3(%arg0: i32) -> (i32, i32) {
    %c0_i32 = arith.constant 0 : i32
    %c0_i32_0 = arith.constant 0 : i32
    %c0_i32_1 = arith.constant 0 : i32
    return %c0_i32, %c0_i32_0 : i32, i32
  }
  func.func @transform_4(%arg0: i32) -> (i32, i32) {
    %c0_i32 = arith.constant 0 : i32
    %c0_i32_0 = arith.constant 0 : i32
    %c0_i32_1 = arith.constant 0 : i32
    return %c0_i32, %c0_i32_0 : i32, i32
  }
  func.func @transform_5(%arg0: i32) -> (i32, i32) {
    %c0_i32 = arith.constant 0 : i32
    %c0_i32_0 = arith.constant 0 : i32
    %c0_i32_1 = arith.constant 0 : i32
    return %c0_i32, %c0_i32_0 : i32, i32
  }
  func.func @transform_6(%arg0: i32) -> (i32, i32) {
    %c0_i32 = arith.constant 0 : i32
    %c0_i32_0 = arith.constant 0 : i32
    return %arg0, %c0_i32 : i32, i32
  }
}

</mosaic_0001>

<llo_original>
// kernel: tpu_custom_call.1
$region0: #{tpu_custom_call.1}
  #allocation0 [shape = 'u32[]', space=smem, size = 0x4, offset = 0x4, fixed_abs, tag = 'smem constant byte address 0x4 - core index']
  #allocation1 [shape = 'u32[144,128]{1,0:T(1,128)}', space=vmem, size = 0x12000, scoped, tag = 'internal scratch']
  %s0 = inlined_call_operand.vmem [shape: bf16[8,576,32], index: 0, kind: input, shape index: {}]
  %s1 = inlined_call_operand.vmem [shape: bf16[32,240], index: 1, kind: input, shape index: {}]
  %s2 = inlined_call_operand.vmem [shape: bf16[9,240,128], index: 2, kind: input, shape index: {}]
  %s3 = inlined_call_operand.vmem [shape: f32[1,128], index: 3, kind: input, shape index: {}]
  %s4 = inlined_call_operand.vmem [shape: bf16[128,128], index: 4, kind: input, shape index: {}]
  %s5 = inlined_call_operand.vmem [shape: f32[1,128], index: 5, kind: input, shape index: {}]
  %s6 = inlined_call_operand.hbm [shape: f32[8,128], index: 6, kind: output, shape index: {}]
  %s7 = sld [smem:[#allocation0]]
  $region34: #{tpu_custom_call.1} parent=0
    _
  %s9 = ssub.s32 1, %s7
  %s10 = scalar_select 0, %s9, %s7
  $region1: #{tpu_custom_call.1} parent=0
    #allocation2 [shape = 'u8[4096]{0}', space=vmem, size = 0x1000, scoped, tag = 'output window, operand 0, single buffered']
    #allocation3 [shape = 's32[1]{0}', space=sflag, size = 0x4, scoped, tag = 'scoped memory for tpu_custom_call.1']
    %11 = vsyncpa [#allocation3], 0
    // Predicated region
    $region2: #{tpu_custom_call.1} parent=1 // pred_check
      _
    $region3: #{tpu_custom_call.1} parent=1 // pred_check_branch
      %13 = sbr.rel (0) target = $region5
    $region4: #{tpu_custom_call.1} parent=1 // pred_region
      _
    $region5: #{tpu_custom_call.1} parent=1 // pred_fallthru
      _
    // Predicated region
    $region6: #{tpu_custom_call.1} parent=1 // pred_check
      _
    $region7: #{tpu_custom_call.1} parent=1 // pred_check_branch
      %15 = sbr.rel (0) target = $region9
    $region8: #{tpu_custom_call.1} parent=1 // pred_region
      _
    $region9: #{tpu_custom_call.1} parent=1 // pred_fallthru
      _
    // Predicated region
    $region10: #{tpu_custom_call.1} parent=1 // pred_check
      _
    $region11: #{tpu_custom_call.1} parent=1 // pred_check_branch
      %17 = sbr.rel (0) target = $region13
    $region12: #{tpu_custom_call.1} parent=1 // pred_region
      _
    $region13: #{tpu_custom_call.1} parent=1 // pred_fallthru
      _
    // Predicated region
    $region14: #{tpu_custom_call.1} parent=1 // pred_check
      _
    $region15: #{tpu_custom_call.1} parent=1 // pred_check_branch
      %19 = sbr.rel (0) target = $region17
    $region16: #{tpu_custom_call.1} parent=1 // pred_region
      _
    $region17: #{tpu_custom_call.1} parent=1 // pred_fallthru
      _
    // Predicated region
    $region18: #{tpu_custom_call.1} parent=1 // pred_check
      _
    $region19: #{tpu_custom_call.1} parent=1 // pred_check_branch
      %21 = sbr.rel (0) target = $region21
    $region20: #{tpu_custom_call.1} parent=1 // pred_region
      _
    $region21: #{tpu_custom_call.1} parent=1 // pred_fallthru
      _
    // Predicated region
    $region22: #{tpu_custom_call.1} parent=1 // pred_check
      _
    $region23: #{tpu_custom_call.1} parent=1 // pred_check_branch
      %23 = sbr.rel (0) target = $region25
    $region24: #{tpu_custom_call.1} parent=1 // pred_region
      _
    $region25: #{tpu_custom_call.1} parent=1 // pred_fallthru
      _
    %v25 = vld [vmem:[%s1] sm:$0xff]
    %v26 = vld [vmem:[%s1 + $0x8] sm:$0xff]
    %v27 = vld [vmem:[%s1 + $0x10] sm:$0xff]
    %v28 = vld [vmem:[%s1 + $0x18] sm:$0xff]
    %v29 = vld [vmem:[%s0] sm:$0xf]
    %v30 = vld [vmem:[%s0 + $0x4] sm:$0xf]
    %v31 = vld [vmem:[%s0 + $0x8] sm:$0xf]
    %v32 = vld [vmem:[%s0 + $0xc] sm:$0xf]
    %v33 = vld [vmem:[%s0 + $0x10] sm:$0xf]
    %v34 = vld [vmem:[%s0 + $0x14] sm:$0xf]
    %v35 = vld [vmem:[%s0 + $0x18] sm:$0xf]
    %v36 = vld [vmem:[%s0 + $0x1c] sm:$0xf]
    %v37 = vld [vmem:[%s0 + $0x120] sm:$0xf]
    %v38 = vld [vmem:[%s0 + $0x124] sm:$0xf]
    %v39 = vld [vmem:[%s0 + $0x128] sm:$0xf]
    %v40 = vld [vmem:[%s0 + $0x12c] sm:$0xf]
    %v41 = vld [vmem:[%s0 + $0x130] sm:$0xf]
    %v42 = vld [vmem:[%s0 + $0x134] sm:$0xf]
    %v43 = vld [vmem:[%s0 + $0x138] sm:$0xf]
    %v44 = vld [vmem:[%s0 + $0x13c] sm:$0xf]
    %v45 = vld [vmem:[%s0 + $0x240] sm:$0xf]
    %v46 = vld [vmem:[%s0 + $0x244] sm:$0xf]
    %v47 = vld [vmem:[%s0 + $0x248] sm:$0xf]
    %v48 = vld [vmem:[%s0 + $0x24c] sm:$0xf]
    %v49 = vld [vmem:[%s0 + $0x250] sm:$0xf]
    %v50 = vld [vmem:[%s0 + $0x254] sm:$0xf]
    %v51 = vld [vmem:[%s0 + $0x258] sm:$0xf]
    %v52 = vld [vmem:[%s0 + $0x25c] sm:$0xf]
    %v53 = vld [vmem:[%s0 + $0x360] sm:$0xf]
    %v54 = vld [vmem:[%s0 + $0x364] sm:$0xf]
    %v55 = vld [vmem:[%s0 + $0x368] sm:$0xf]
    %v56 = vld [vmem:[%s0 + $0x36c] sm:$0xf]
    %v57 = vld [vmem:[%s0 + $0x370] sm:$0xf]
    %v58 = vld [vmem:[%s0 + $0x374] sm:$0xf]
    %v59 = vld [vmem:[%s0 + $0x378] sm:$0xf]
    %v60 = vld [vmem:[%s0 + $0x37c] sm:$0xf]
    %v61 = vld [vmem:[%s0 + $0x480] sm:$0xf]
    %v62 = vld [vmem:[%s0 + $0x484] sm:$0xf]
    %v63 = vld [vmem:[%s0 + $0x488] sm:$0xf]
    %v64 = vld [vmem:[%s0 + $0x48c] sm:$0xf]
    %v65 = vld [vmem:[%s0 + $0x490] sm:$0xf]
    %v66 = vld [vmem:[%s0 + $0x494] sm:$0xf]
    %v67 = vld [vmem:[%s0 + $0x498] sm:$0xf]
    %v68 = vld [vmem:[%s0 + $0x49c] sm:$0xf]
    %v69 = vld [vmem:[%s0 + $0x5a0] sm:$0xf]
    %v70 = vld [vmem:[%s0 + $0x5a4] sm:$0xf]
    %v71 = vld [vmem:[%s0 + $0x5a8] sm:$0xf]
    %v72 = vld [vmem:[%s0 + $0x5ac] sm:$0xf]
    %v73 = vld [vmem:[%s0 + $0x5b0] sm:$0xf]
    %v74 = vld [vmem:[%s0 + $0x5b4] sm:$0xf]
    %v75 = vld [vmem:[%s0 + $0x5b8] sm:$0xf]
    %v76 = vld [vmem:[%s0 + $0x5bc] sm:$0xf]
    %v77 = vld [vmem:[%s0 + $0x6c0] sm:$0xf]
    %v78 = vld [vmem:[%s0 + $0x6c4] sm:$0xf]
    %v79 = vld [vmem:[%s0 + $0x6c8] sm:$0xf]
    %v80 = vld [vmem:[%s0 + $0x6cc] sm:$0xf]
    %v81 = vld [vmem:[%s0 + $0x6d0] sm:$0xf]
    %v82 = vld [vmem:[%s0 + $0x6d4] sm:$0xf]
    %v83 = vld [vmem:[%s0 + $0x6d8] sm:$0xf]
    %v84 = vld [vmem:[%s0 + $0x6dc] sm:$0xf]
    %v85 = vld [vmem:[%s0 + $0x7e0] sm:$0xf]
    %v86 = vld [vmem:[%s0 + $0x7e4] sm:$0xf]
    %v87 = vld [vmem:[%s0 + $0x7e8] sm:$0xf]
    %v88 = vld [vmem:[%s0 + $0x7ec] sm:$0xf]
    %v89 = vld [vmem:[%s0 + $0x7f0] sm:$0xf]
    %v90 = vld [vmem:[%s0 + $0x7f4] sm:$0xf]
    %v91 = vld [vmem:[%s0 + $0x7f8] sm:$0xf]
    %v92 = vld [vmem:[%s0 + $0x7fc] sm:$0xf]
    %v157 = vunpack.c.l.b16 %v29
    %v158 = vunpack.c.l.b16 %v30
    %v159 = vunpack.c.l.b16 %v31
    %v160 = vunpack.c.l.b16 %v32
    %v161 = vunpack.c.l.b16 %v33
    %v162 = vunpack.c.l.b16 %v34
    %v163 = vunpack.c.l.b16 %v35
    %v164 = vunpack.c.l.b16 %v36
    %v165 = vunpack.c.l.b16 %v37
    %v166 = vunpack.c.l.b16 %v38
    %v167 = vunpack.c.l.b16 %v39
    %v168 = vunpack.c.l.b16 %v40
    %v169 = vunpack.c.l.b16 %v41
    %v170 = vunpack.c.l.b16 %v42
    %v171 = vunpack.c.l.b16 %v43
    %v172 = vunpack.c.l.b16 %v44
    %v173 = vunpack.c.l.b16 %v45
    %v174 = vunpack.c.l.b16 %v46
    %v175 = vunpack.c.l.b16 %v47
    %v176 = vunpack.c.l.b16 %v48
    %v177 = vunpack.c.l.b16 %v49
    %v178 = vunpack.c.l.b16 %v50
    %v179 = vunpack.c.l.b16 %v51
    %v180 = vunpack.c.l.b16 %v52
    %v181 = vunpack.c.l.b16 %v53
    %v182 = vunpack.c.l.b16 %v54
    %v183 = vunpack.c.l.b16 %v55
    %v184 = vunpack.c.l.b16 %v56
    %v185 = vunpack.c.l.b16 %v57
    %v186 = vunpack.c.l.b16 %v58
    %v187 = vunpack.c.l.b16 %v59
    %v188 = vunpack.c.l.b16 %v60
    %v189 = vunpack.c.l.b16 %v61
    %v190 = vunpack.c.l.b16 %v62
    %v191 = vunpack.c.l.b16 %v63
    %v192 = vunpack.c.l.b16 %v64
    %v193 = vunpack.c.l.b16 %v65
    %v194 = vunpack.c.l.b16 %v66
    %v195 = vunpack.c.l.b16 %v67
    %v196 = vunpack.c.l.b16 %v68
    %v197 = vunpack.c.l.b16 %v69
    %v198 = vunpack.c.l.b16 %v70
    %v199 = vunpack.c.l.b16 %v71
    %v200 = vunpack.c.l.b16 %v72
    %v201 = vunpack.c.l.b16 %v73
    %v202 = vunpack.c.l.b16 %v74
    %v203 = vunpack.c.l.b16 %v75
    %v204 = vunpack.c.l.b16 %v76
    %v205 = vunpack.c.l.b16 %v77
    %v206 = vunpack.c.l.b16 %v78
    %v207 = vunpack.c.l.b16 %v79
    %v208 = vunpack.c.l.b16 %v80
    %v209 = vunpack.c.l.b16 %v81
    %v210 = vunpack.c.l.b16 %v82
    %v211 = vunpack.c.l.b16 %v83
    %v212 = vunpack.c.l.b16 %v84
    %v213 = vunpack.c.l.b16 %v85
    %v214 = vunpack.c.l.b16 %v86
    %v215 = vunpack.c.l.b16 %v87
    %v216 = vunpack.c.l.b16 %v88
    %v217 = vunpack.c.l.b16 %v89
    %v218 = vunpack.c.l.b16 %v90
    %v219 = vunpack.c.l.b16 %v91
    %v220 = vunpack.c.l.b16 %v92
    %v221 = vpack.c.b16 %v158, %v157
    %v222 = vpack.c.b16 %v160, %v159
    %v223 = vpack.c.b16 %v162, %v161
    %v224 = vpack.c.b16 %v164, %v163
    %v225 = vpack.c.b16 %v166, %v165
    %v226 = vpack.c.b16 %v168, %v167
    %v227 = vpack.c.b16 %v170, %v169
    %v228 = vpack.c.b16 %v172, %v171
    %v229 = vpack.c.b16 %v174, %v173
    %v230 = vpack.c.b16 %v176, %v175
    %v231 = vpack.c.b16 %v178, %v177
    %v232 = vpack.c.b16 %v180, %v179
    %v233 = vpack.c.b16 %v182, %v181
    %v234 = vpack.c.b16 %v184, %v183
    %v235 = vpack.c.b16 %v186, %v185
    %v236 = vpack.c.b16 %v188, %v187
    %v237 = vpack.c.b16 %v190, %v189
    %v238 = vpack.c.b16 %v192, %v191
    %v239 = vpack.c.b16 %v194, %v193
    %v240 = vpack.c.b16 %v196, %v195
    %v241 = vpack.c.b16 %v198, %v197
    %v242 = vpack.c.b16 %v200, %v199
    %v243 = vpack.c.b16 %v202, %v201
    %v244 = vpack.c.b16 %v204, %v203
    %v245 = vpack.c.b16 %v206, %v205
    %v246 = vpack.c.b16 %v208, %v207
    %v247 = vpack.c.b16 %v210, %v209
    %v248 = vpack.c.b16 %v212, %v211
    %v249 = vpack.c.b16 %v214, %v213
    %v250 = vpack.c.b16 %v216, %v215
    %v251 = vpack.c.b16 %v218, %v217
    %v252 = vpack.c.b16 %v220, %v219
    %v257 = vunpack.c.l.b16 %v25
    %v258 = vunpack.c.h.b16 %v25
    %v259 = vunpack.c.l.b16 %v26
    %v260 = vunpack.c.h.b16 %v26
    %v261 = vunpack.c.l.b16 %v27
    %v262 = vunpack.c.h.b16 %v27
    %v263 = vunpack.c.l.b16 %v28
    %v264 = vunpack.c.h.b16 %v28
    %v265 = vpack.c.b16 %v259, %v257
    %v266 = vpack.c.b16 %v260, %v258
    %v267 = vpack.c.b16 %v263, %v261
    %v268 = vpack.c.b16 %v264, %v262
    %vm273 = vcmask 261120
    %v275 = vsel %vm273, %v221, 0
    %v278 = vsel %vm273, %v222, 0
    %v281 = vsel %vm273, %v223, 0
    %v284 = vsel %vm273, %v224, 0
    %v287 = vsel %vm273, %v225, 0
    %v290 = vsel %vm273, %v226, 0
    %v293 = vsel %vm273, %v227, 0
    %v296 = vsel %vm273, %v228, 0
    %v299 = vsel %vm273, %v229, 0
    %v302 = vsel %vm273, %v230, 0
    %v305 = vsel %vm273, %v231, 0
    %v308 = vsel %vm273, %v232, 0
    %v311 = vsel %vm273, %v233, 0
    %v314 = vsel %vm273, %v234, 0
    %v317 = vsel %vm273, %v235, 0
    %v320 = vsel %vm273, %v236, 0
    %v323 = vsel %vm273, %v237, 0
    %v326 = vsel %vm273, %v238, 0
    %v329 = vsel %vm273, %v239, 0
    %v332 = vsel %vm273, %v240, 0
    %v335 = vsel %vm273, %v241, 0
    %v338 = vsel %vm273, %v242, 0
    %v341 = vsel %vm273, %v243, 0
    %v344 = vsel %vm273, %v244, 0
    %v347 = vsel %vm273, %v245, 0
    %v350 = vsel %vm273, %v246, 0
    %v353 = vsel %vm273, %v247, 0
    %v356 = vsel %vm273, %v248, 0
    %v359 = vsel %vm273, %v249, 0
    %v362 = vsel %vm273, %v250, 0
    %v365 = vsel %vm273, %v251, 0
    %v368 = vsel %vm273, %v252, 0
    %370 = vmatprep.subr.bf16.mxu0 0
    %371 = vmatpush1.bf16.msra.mxu0 0
    %372 = vmatprep.subr.bf16.mxu0 0
    %373 = vmatpush1.bf16.msra.mxu0 0
    %374 = vmatprep.subr.bf16.mxu0 0
    %375 = vmatpush1.bf16.msra.mxu0 0
    %376 = vmatprep.subr.bf16.mxu0 0
    %377 = vmatpush1.bf16.msra.mxu0 0
    %378 = vmatprep.subr.bf16.mxu0 0
    %379 = vmatpush1.bf16.msra.mxu0 0
    %380 = vmatprep.subr.bf16.mxu0 0
    %381 = vmatpush1.bf16.msra.mxu0 0
    %382 = vmatprep.subr.bf16.mxu0 %v268
    %383 = vmatpush1.bf16.msra.mxu0 %v267
    %384 = vmatprep.subr.bf16.mxu0 %v266
    %385 = vmatpush1.bf16.msra.mxu0 %v265
    %386 = vmatprep.subr.bf16.mxu0 0
    %387 = vmatpush2.bf16.msra.mxu0 0
    %388 = vmatprep.subr.bf16.mxu0 0
    %389 = vmatpush2.bf16.msra.mxu0 0
    %390 = vmatprep.subr.bf16.mxu0 0
    %391 = vmatpush2.bf16.msra.mxu0 0
    %392 = vmatprep.subr.bf16.mxu0 0
    %393 = vmatpush2.bf16.msra.mxu0 0
    %394 = vmatprep.subr.bf16.mxu0 0
    %395 = vmatpush2.bf16.msra.mxu0 0
    %396 = vmatprep.subr.bf16.mxu0 0
    %397 = vmatpush2.bf16.msra.mxu0 0
    %398 = vmatprep.subr.bf16.mxu0 0
    %399 = vmatpush2.bf16.msra.mxu0 0
    %400 = vmatprep.subr.bf16.mxu0 0
    %401 = vmatpush2.bf16.msra.mxu0 0
    %402 = vmatprep.mubr.bf16.mxu0 0
    %403 = vmatmul.mubr.bf16.gmra.mxu0 %v275
    %v404 = vpop.f32.mrf.mxu0
    %v405 = vadd.f32 0.0, %v404
    %v406 = vpop.f32.mrf.mxu0
    %v407 = vadd.f32 0.0, %v406
    %v408 = vpop.f32.mrf.mxu0
    %v409 = vadd.f32 0.0, %v408
    %v410 = vpop.f32.mrf.mxu0
    %v411 = vadd.f32 0.0, %v410
    %412 = vmatprep.mubr.bf16.mxu0 0
    %413 = vmatmul.mubr.bf16.gmra.mxu0 %v278
    %v414 = vpop.f32.mrf.mxu0
    %v415 = vadd.f32 0.0, %v414
    %v416 = vpop.f32.mrf.mxu0
    %v417 = vadd.f32 0.0, %v416
    %v418 = vpop.f32.mrf.mxu0
    %v419 = vadd.f32 0.0, %v418
    %v420 = vpop.f32.mrf.mxu0
    %v421 = vadd.f32 0.0, %v420
    %422 = vmatprep.mubr.bf16.mxu0 0
    %423 = vmatmul.mubr.bf16.gmra.mxu0 %v281
    %v424 = vpop.f32.mrf.mxu0
    %v425 = vadd.f32 0.0, %v424
    %v426 = vpop.f32.mrf.mxu0
    %v427 = vadd.f32 0.0, %v426
    %v428 = vpop.f32.mrf.mxu0
    %v429 = vadd.f32 0.0, %v428
    %v430 = vpop.f32.mrf.mxu0
    %v431 = vadd.f32 0.0, %v430
    %432 = vmatprep.mubr.bf16.mxu0 0
    %433 = vmatmul.mubr.bf16.gmra.mxu0 %v284
    %v434 = vpop.f32.mrf.mxu0
    %v435 = vadd.f32 0.0, %v434
    %v436 = vpop.f32.mrf.mxu0
    %v437 = vadd.f32 0.0, %v436
    %v438 = vpop.f32.mrf.mxu0
    %v439 = vadd.f32 0.0, %v438
    %v440 = vpop.f32.mrf.mxu0
    %v441 = vadd.f32 0.0, %v440
    %442 = vmatprep.mubr.bf16.mxu0 0
    %443 = vmatmul.mubr.bf16.gmra.mxu0 %v287
    %v444 = vpop.f32.mrf.mxu0
    %v445 = vadd.f32 0.0, %v444
    %v446 = vpop.f32.mrf.mxu0
    %v447 = vadd.f32 0.0, %v446
    %v448 = vpop.f32.mrf.mxu0
    %v449 = vadd.f32 0.0, %v448
    %v450 = vpop.f32.mrf.mxu0
    %v451 = vadd.f32 0.0, %v450
    %452 = vmatprep.mubr.bf16.mxu0 0
    %453 = vmatmul.mubr.bf16.gmra.mxu0 %v290
    %v454 = vpop.f32.mrf.mxu0
    %v455 = vadd.f32 0.0, %v454
    %v456 = vpop.f32.mrf.mxu0
    %v457 = vadd.f32 0.0, %v456
    %v458 = vpop.f32.mrf.mxu0
    %v459 = vadd.f32 0.0, %v458
    %v460 = vpop.f32.mrf.mxu0
    %v461 = vadd.f32 0.0, %v460
    %462 = vmatprep.mubr.bf16.mxu0 0
    %463 = vmatmul.mubr.bf16.gmra.mxu0 %v293
    %v464 = vpop.f32.mrf.mxu0
    %v465 = vadd.f32 0.0, %v464
    %v466 = vpop.f32.mrf.mxu0
    %v467 = vadd.f32 0.0, %v466
    %v468 = vpop.f32.mrf.mxu0
    %v469 = vadd.f32 0.0, %v468
    %v470 = vpop.f32.mrf.mxu0
    %v471 = vadd.f32 0.0, %v470
    %472 = vmatprep.mubr.bf16.mxu0 0
    %473 = vmatmul.mubr.bf16.gmra.mxu0 %v296
    %v474 = vpop.f32.mrf.mxu0
    %v475 = vadd.f32 0.0, %v474
    %v476 = vpop.f32.mrf.mxu0
    %v477 = vadd.f32 0.0, %v476
    %v478 = vpop.f32.mrf.mxu0
    %v479 = vadd.f32 0.0, %v478
    %v480 = vpop.f32.mrf.mxu0
    %v481 = vadd.f32 0.0, %v480
    %482 = vmatprep.mubr.bf16.mxu0 0
    %483 = vmatmul.mubr.bf16.gmra.mxu0 %v299
    %v484 = vpop.f32.mrf.mxu0
    %v485 = vadd.f32 0.0, %v484
    %v486 = vpop.f32.mrf.mxu0
    %v487 = vadd.f32 0.0, %v486
    %v488 = vpop.f32.mrf.mxu0
    %v489 = vadd.f32 0.0, %v488
    %v490 = vpop.f32.mrf.mxu0
    %v491 = vadd.f32 0.0, %v490
    %492 = vmatprep.mubr.bf16.mxu0 0
    %493 = vmatmul.mubr.bf16.gmra.mxu0 %v302
    %v494 = vpop.f32.mrf.mxu0
    %v495 = vadd.f32 0.0, %v494
    %v496 = vpop.f32.mrf.mxu0
    %v497 = vadd.f32 0.0, %v496
    %v498 = vpop.f32.mrf.mxu0
    %v499 = vadd.f32 0.0, %v498
    %v500 = vpop.f32.mrf.mxu0
    %v501 = vadd.f32 0.0, %v500
    %502 = vmatprep.mubr.bf16.mxu0 0
    %503 = vmatmul.mubr.bf16.gmra.mxu0 %v305
    %v504 = vpop.f32.mrf.mxu0
    %v505 = vadd.f32 0.0, %v504
    %v506 = vpop.f32.mrf.mxu0
    %v507 = vadd.f32 0.0, %v506
    %v508 = vpop.f32.mrf.mxu0
    %v509 = vadd.f32 0.0, %v508
    %v510 = vpop.f32.mrf.mxu0
    %v511 = vadd.f32 0.0, %v510
    %512 = vmatprep.mubr.bf16.mxu0 0
    %513 = vmatmul.mubr.bf16.gmra.mxu0 %v308
    %v514 = vpop.f32.mrf.mxu0
    %v515 = vadd.f32 0.0, %v514
    %v516 = vpop.f32.mrf.mxu0
    %v517 = vadd.f32 0.0, %v516
    %v518 = vpop.f32.mrf.mxu0
    %v519 = vadd.f32 0.0, %v518
    %v520 = vpop.f32.mrf.mxu0
    %v521 = vadd.f32 0.0, %v520
    %522 = vmatprep.mubr.bf16.mxu0 0
    %523 = vmatmul.mubr.bf16.gmra.mxu0 %v311
    %v524 = vpop.f32.mrf.mxu0
    %v525 = vadd.f32 0.0, %v524
    %v526 = vpop.f32.mrf.mxu0
    %v527 = vadd.f32 0.0, %v526
    %v528 = vpop.f32.mrf.mxu0
    %v529 = vadd.f32 0.0, %v528
    %v530 = vpop.f32.mrf.mxu0
    %v531 = vadd.f32 0.0, %v530
    %532 = vmatprep.mubr.bf16.mxu0 0
    %533 = vmatmul.mubr.bf16.gmra.mxu0 %v314
    %v534 = vpop.f32.mrf.mxu0
    %v535 = vadd.f32 0.0, %v534
    %v536 = vpop.f32.mrf.mxu0
    %v537 = vadd.f32 0.0, %v536
    %v538 = vpop.f32.mrf.mxu0
    %v539 = vadd.f32 0.0, %v538
    %v540 = vpop.f32.mrf.mxu0
    %v541 = vadd.f32 0.0, %v540
    %542 = vmatprep.mubr.bf16.mxu0 0
    %543 = vmatmul.mubr.bf16.gmra.mxu0 %v317
    %v544 = vpop.f32.mrf.mxu0
    %v545 = vadd.f32 0.0, %v544
    %v546 = vpop.f32.mrf.mxu0
    %v547 = vadd.f32 0.0, %v546
    %v548 = vpop.f32.mrf.mxu0
    %v549 = vadd.f32 0.0, %v548
    %v550 = vpop.f32.mrf.mxu0
    %v551 = vadd.f32 0.0, %v550
    %552 = vmatprep.mubr.bf16.mxu0 0
    %553 = vmatmul.mubr.bf16.gmra.mxu0 %v320
    %v554 = vpop.f32.mrf.mxu0
    %v555 = vadd.f32 0.0, %v554
    %v556 = vpop.f32.mrf.mxu0
    %v557 = vadd.f32 0.0, %v556
    %v558 = vpop.f32.mrf.mxu0
    %v559 = vadd.f32 0.0, %v558
    %v560 = vpop.f32.mrf.mxu0
    %v561 = vadd.f32 0.0, %v560
    %562 = vmatprep.mubr.bf16.mxu0 0
    %563 = vmatmul.mubr.bf16.gmra.mxu0 %v323
    %v564 = vpop.f32.mrf.mxu0
    %v565 = vadd.f32 0.0, %v564
    %v566 = vpop.f32.mrf.mxu0
    %v567 = vadd.f32 0.0, %v566
    %v568 = vpop.f32.mrf.mxu0
    %v569 = vadd.f32 0.0, %v568
    %v570 = vpop.f32.mrf.mxu0
    %v571 = vadd.f32 0.0, %v570
    %572 = vmatprep.mubr.bf16.mxu0 0
    %573 = vmatmul.mubr.bf16.gmra.mxu0 %v326
    %v574 = vpop.f32.mrf.mxu0
    %v575 = vadd.f32 0.0, %v574
    %v576 = vpop.f32.mrf.mxu0
    %v577 = vadd.f32 0.0, %v576
    %v578 = vpop.f32.mrf.mxu0
    %v579 = vadd.f32 0.0, %v578
    %v580 = vpop.f32.mrf.mxu0
    %v581 = vadd.f32 0.0, %v580
    %582 = vmatprep.mubr.bf16.mxu0 0
    %583 = vmatmul.mubr.bf16.gmra.mxu0 %v329
    %v584 = vpop.f32.mrf.mxu0
    %v585 = vadd.f32 0.0, %v584
    %v586 = vpop.f32.mrf.mxu0
    %v587 = vadd.f32 0.0, %v586
    %v588 = vpop.f32.mrf.mxu0
    %v589 = vadd.f32 0.0, %v588
    %v590 = vpop.f32.mrf.mxu0
    %v591 = vadd.f32 0.0, %v590
    %592 = vmatprep.mubr.bf16.mxu0 0
    %593 = vmatmul.mubr.bf16.gmra.mxu0 %v332
    %v594 = vpop.f32.mrf.mxu0
    %v595 = vadd.f32 0.0, %v594
    %v596 = vpop.f32.mrf.mxu0
    %v597 = vadd.f32 0.0, %v596
    %v598 = vpop.f32.mrf.mxu0
    %v599 = vadd.f32 0.0, %v598
    %v600 = vpop.f32.mrf.mxu0
    %v601 = vadd.f32 0.0, %v600
    %602 = vmatprep.mubr.bf16.mxu0 0
    %603 = vmatmul.mubr.bf16.gmra.mxu0 %v335
    %v604 = vpop.f32.mrf.mxu0
    %v605 = vadd.f32 0.0, %v604
    %v606 = vpop.f32.mrf.mxu0
    %v607 = vadd.f32 0.0, %v606
    %v608 = vpop.f32.mrf.mxu0
    %v609 = vadd.f32 0.0, %v608
    %v610 = vpop.f32.mrf.mxu0
    %v611 = vadd.f32 0.0, %v610
    %612 = vmatprep.mubr.bf16.mxu0 0
    %613 = vmatmul.mubr.bf16.gmra.mxu0 %v338
    %v614 = vpop.f32.mrf.mxu0
    %v615 = vadd.f32 0.0, %v614
    %v616 = vpop.f32.mrf.mxu0
    %v617 = vadd.f32 0.0, %v616
    %v618 = vpop.f32.mrf.mxu0
    %v619 = vadd.f32 0.0, %v618
    %v620 = vpop.f32.mrf.mxu0
    %v621 = vadd.f32 0.0, %v620
    %622 = vmatprep.mubr.bf16.mxu0 0
    %623 = vmatmul.mubr.bf16.gmra.mxu0 %v341
    %v624 = vpop.f32.mrf.mxu0
    %v625 = vadd.f32 0.0, %v624
    %v626 = vpop.f32.mrf.mxu0
    %v627 = vadd.f32 0.0, %v626
    %v628 = vpop.f32.mrf.mxu0
    %v629 = vadd.f32 0.0, %v628
    %v630 = vpop.f32.mrf.mxu0
    %v631 = vadd.f32 0.0, %v630
    %632 = vmatprep.mubr.bf16.mxu0 0
    %633 = vmatmul.mubr.bf16.gmra.mxu0 %v344
    %v634 = vpop.f32.mrf.mxu0
    %v635 = vadd.f32 0.0, %v634
    %v636 = vpop.f32.mrf.mxu0
    %v637 = vadd.f32 0.0, %v636
    %v638 = vpop.f32.mrf.mxu0
    %v639 = vadd.f32 0.0, %v638
    %v640 = vpop.f32.mrf.mxu0
    %v641 = vadd.f32 0.0, %v640
    %642 = vmatprep.mubr.bf16.mxu0 0
    %643 = vmatmul.mubr.bf16.gmra.mxu0 %v347
    %v644 = vpop.f32.mrf.mxu0
    %v645 = vadd.f32 0.0, %v644
    %v646 = vpop.f32.mrf.mxu0
    %v647 = vadd.f32 0.0, %v646
    %v648 = vpop.f32.mrf.mxu0
    %v649 = vadd.f32 0.0, %v648
    %v650 = vpop.f32.mrf.mxu0
    %v651 = vadd.f32 0.0, %v650
    %652 = vmatprep.mubr.bf16.mxu0 0
    %653 = vmatmul.mubr.bf16.gmra.mxu0 %v350
    %v654 = vpop.f32.mrf.mxu0
    %v655 = vadd.f32 0.0, %v654
    %v656 = vpop.f32.mrf.mxu0
    %v657 = vadd.f32 0.0, %v656
    %v658 = vpop.f32.mrf.mxu0
    %v659 = vadd.f32 0.0, %v658
    %v660 = vpop.f32.mrf.mxu0
    %v661 = vadd.f32 0.0, %v660
    %662 = vmatprep.mubr.bf16.mxu0 0
    %663 = vmatmul.mubr.bf16.gmra.mxu0 %v353
    %v664 = vpop.f32.mrf.mxu0
    %v665 = vadd.f32 0.0, %v664
    %v666 = vpop.f32.mrf.mxu0
    %v667 = vadd.f32 0.0, %v666
    %v668 = vpop.f32.mrf.mxu0
    %v669 = vadd.f32 0.0, %v668
    %v670 = vpop.f32.mrf.mxu0
    %v671 = vadd.f32 0.0, %v670
    %672 = vmatprep.mubr.bf16.mxu0 0
    %673 = vmatmul.mubr.bf16.gmra.mxu0 %v356
    %v674 = vpop.f32.mrf.mxu0
    %v675 = vadd.f32 0.0, %v674
    %v676 = vpop.f32.mrf.mxu0
    %v677 = vadd.f32 0.0, %v676
    %v678 = vpop.f32.mrf.mxu0
    %v679 = vadd.f32 0.0, %v678
    %v680 = vpop.f32.mrf.mxu0
    %v681 = vadd.f32 0.0, %v680
    %682 = vmatprep.mubr.bf16.mxu0 0
    %683 = vmatmul.mubr.bf16.gmra.mxu0 %v359
    %v684 = vpop.f32.mrf.mxu0
    %v685 = vadd.f32 0.0, %v684
    %v686 = vpop.f32.mrf.mxu0
    %v687 = vadd.f32 0.0, %v686
    %v688 = vpop.f32.mrf.mxu0
    %v689 = vadd.f32 0.0, %v688
    %v690 = vpop.f32.mrf.mxu0
    %v691 = vadd.f32 0.0, %v690
    %692 = vmatprep.mubr.bf16.mxu0 0
    %693 = vmatmul.mubr.bf16.gmra.mxu0 %v362
    %v694 = vpop.f32.mrf.mxu0
    %v695 = vadd.f32 0.0, %v694
    %v696 = vpop.f32.mrf.mxu0
    %v697 = vadd.f32 0.0, %v696
    %v698 = vpop.f32.mrf.mxu0
    %v699 = vadd.f32 0.0, %v698
    %v700 = vpop.f32.mrf.mxu0
    %v701 = vadd.f32 0.0, %v700
    %702 = vmatprep.mubr.bf16.mxu0 0
    %703 = vmatmul.mubr.bf16.gmra.mxu0 %v365
    %v704 = vpop.f32.mrf.mxu0
    %v705 = vadd.f32 0.0, %v704
    %v706 = vpop.f32.mrf.mxu0
    %v707 = vadd.f32 0.0, %v706
    %v708 = vpop.f32.mrf.mxu0
    %v709 = vadd.f32 0.0, %v708
    %v710 = vpop.f32.mrf.mxu0
    %v711 = vadd.f32 0.0, %v710
    %712 = vmatprep.mubr.bf16.mxu0 0
    %713 = vmatmul.mubr.bf16.gmra.mxu0 %v368
    %v714 = vpop.f32.mrf.mxu0
    %v715 = vadd.f32 0.0, %v714
    %v716 = vpop.f32.mrf.mxu0
    %v717 = vadd.f32 0.0, %v716
    %v718 = vpop.f32.mrf.mxu0
    %v719 = vadd.f32 0.0, %v718
    %v720 = vpop.f32.mrf.mxu0
    %v721 = vadd.f32 0.0, %v720
    %722 = vdwg.mxu0
    %v723 = vmax.f32 %v405, %v409
    %v724 = vmax.f32 %v723, %v415
    %v725 = vmax.f32 %v724, %v419
    %v726 = vmax.f32 %v725, %v425
    %v727 = vmax.f32 %v726, %v429
    %v728 = vmax.f32 %v727, %v435
    %v729 = vmax.f32 %v728, %v439
    %v730 = vrot.slane %v729, 4
    %v731 = vmax.f32 %v729, %v730
    %v732 = vrot.slane %v731, 2
    %v733 = vmax.f32 %v731, %v732
    %v734 = vrot.slane %v733, 1
    %v735 = vmax.f32 %v733, %v734
    %vm736 = vcmask 916480
    %v737 = vsel %vm736, %v407, -inf
    %v738 = vsel %vm736, %v411, -inf
    %v739 = vmax.f32 %v737, %v738
    %v740 = vsel %vm736, %v417, -inf
    %v741 = vmax.f32 %v739, %v740
    %v742 = vsel %vm736, %v421, -inf
    %v743 = vmax.f32 %v741, %v742
    %v744 = vsel %vm736, %v427, -inf
    %v745 = vmax.f32 %v743, %v744
    %v746 = vsel %vm736, %v431, -inf
    %v747 = vmax.f32 %v745, %v746
    %v748 = vsel %vm736, %v437, -inf
    %v749 = vmax.f32 %v747, %v748
    %v750 = vsel %vm736, %v441, -inf
    %v751 = vmax.f32 %v749, %v750
    %v752 = vrot.slane %v751, 4
    %v753 = vmax.f32 %v751, %v752
    %v754 = vrot.slane %v753, 2
    %v755 = vmax.f32 %v753, %v754
    %v756 = vrot.slane %v755, 1
    %v757 = vmax.f32 %v755, %v756
    %v758 = vmax.f32 %v445, %v449
    %v759 = vmax.f32 %v758, %v455
    %v760 = vmax.f32 %v759, %v459
    %v761 = vmax.f32 %v760, %v465
    %v762 = vmax.f32 %v761, %v469
    %v763 = vmax.f32 %v762, %v475
    %v764 = vmax.f32 %v763, %v479
    %v765 = vrot.slane %v764, 4
    %v766 = vmax.f32 %v764, %v765
    %v767 = vrot.slane %v766, 2
    %v768 = vmax.f32 %v766, %v767
    %v769 = vrot.slane %v768, 1
    %v770 = vmax.f32 %v768, %v769
    %v771 = vsel %vm736, %v447, -inf
    %v772 = vsel %vm736, %v451, -inf
    %v773 = vmax.f32 %v771, %v772
    %v774 = vsel %vm736, %v457, -inf
    %v775 = vmax.f32 %v773, %v774
    %v776 = vsel %vm736, %v461, -inf
    %v777 = vmax.f32 %v775, %v776
    %v778 = vsel %vm736, %v467, -inf
    %v779 = vmax.f32 %v777, %v778
    %v780 = vsel %vm736, %v471, -inf
    %v781 = vmax.f32 %v779, %v780
    %v782 = vsel %vm736, %v477, -inf
    %v783 = vmax.f32 %v781, %v782
    %v784 = vsel %vm736, %v481, -inf
    %v785 = vmax.f32 %v783, %v784
    %v786 = vrot.slane %v785, 4
    %v787 = vmax.f32 %v785, %v786
    %v788 = vrot.slane %v787, 2
    %v789 = vmax.f32 %v787, %v788
    %v790 = vrot.slane %v789, 1
    %v791 = vmax.f32 %v789, %v790
    %v792 = vmax.f32 %v485, %v489
    %v793 = vmax.f32 %v792, %v495
    %v794 = vmax.f32 %v793, %v499
    %v795 = vmax.f32 %v794, %v505
    %v796 = vmax.f32 %v795, %v509
    %v797 = vmax.f32 %v796, %v515
    %v798 = vmax.f32 %v797, %v519
    %v799 = vrot.slane %v798, 4
    %v800 = vmax.f32 %v798, %v799
    %v801 = vrot.slane %v800, 2
    %v802 = vmax.f32 %v800, %v801
    %v803 = vrot.slane %v802, 1
    %v804 = vmax.f32 %v802, %v803
    %v805 = vsel %vm736, %v487, -inf
    %v806 = vsel %vm736, %v491, -inf
    %v807 = vmax.f32 %v805, %v806
    %v808 = vsel %vm736, %v497, -inf
    %v809 = vmax.f32 %v807, %v808
    %v810 = vsel %vm736, %v501, -inf
    %v811 = vmax.f32 %v809, %v810
    %v812 = vsel %vm736, %v507, -inf
    %v813 = vmax.f32 %v811, %v812
    %v814 = vsel %vm736, %v511, -inf
    %v815 = vmax.f32 %v813, %v814
    %v816 = vsel %vm736, %v517, -inf
    %v817 = vmax.f32 %v815, %v816
    %v818 = vsel %vm736, %v521, -inf
    %v819 = vmax.f32 %v817, %v818
    %v820 = vrot.slane %v819, 4
    %v821 = vmax.f32 %v819, %v820
    %v822 = vrot.slane %v821, 2
    %v823 = vmax.f32 %v821, %v822
    %v824 = vrot.slane %v823, 1
    %v825 = vmax.f32 %v823, %v824
    %v826 = vmax.f32 %v525, %v529
    %v827 = vmax.f32 %v826, %v535
    %v828 = vmax.f32 %v827, %v539
    %v829 = vmax.f32 %v828, %v545
    %v830 = vmax.f32 %v829, %v549
    %v831 = vmax.f32 %v830, %v555
    %v832 = vmax.f32 %v831, %v559
    %v833 = vrot.slane %v832, 4
    %v834 = vmax.f32 %v832, %v833
    %v835 = vrot.slane %v834, 2
    %v836 = vmax.f32 %v834, %v835
    %v837 = vrot.slane %v836, 1
    %v838 = vmax.f32 %v836, %v837
    %v839 = vsel %vm736, %v527, -inf
    %v840 = vsel %vm736, %v531, -inf
    %v841 = vmax.f32 %v839, %v840
    %v842 = vsel %vm736, %v537, -inf
    %v843 = vmax.f32 %v841, %v842
    %v844 = vsel %vm736, %v541, -inf
    %v845 = vmax.f32 %v843, %v844
    %v846 = vsel %vm736, %v547, -inf
    %v847 = vmax.f32 %v845, %v846
    %v848 = vsel %vm736, %v551, -inf
    %v849 = vmax.f32 %v847, %v848
    %v850 = vsel %vm736, %v557, -inf
    %v851 = vmax.f32 %v849, %v850
    %v852 = vsel %vm736, %v561, -inf
    %v853 = vmax.f32 %v851, %v852
    %v854 = vrot.slane %v853, 4
    %v855 = vmax.f32 %v853, %v854
    %v856 = vrot.slane %v855, 2
    %v857 = vmax.f32 %v855, %v856
    %v858 = vrot.slane %v857, 1
    %v859 = vmax.f32 %v857, %v858
    %v860 = vmax.f32 %v565, %v569
    %v861 = vmax.f32 %v860, %v575
    %v862 = vmax.f32 %v861, %v579
    %v863 = vmax.f32 %v862, %v585
    %v864 = vmax.f32 %v863, %v589
    %v865 = vmax.f32 %v864, %v595
    %v866 = vmax.f32 %v865, %v599
    %v867 = vrot.slane %v866, 4
    %v868 = vmax.f32 %v866, %v867
    %v869 = vrot.slane %v868, 2
    %v870 = vmax.f32 %v868, %v869
    %v871 = vrot.slane %v870, 1
    %v872 = vmax.f32 %v870, %v871
    %v873 = vsel %vm736, %v567, -inf
    %v874 = vsel %vm736, %v571, -inf
    %v875 = vmax.f32 %v873, %v874
    %v876 = vsel %vm736, %v577, -inf
    %v877 = vmax.f32 %v875, %v876
    %v878 = vsel %vm736, %v581, -inf
    %v879 = vmax.f32 %v877, %v878
    %v880 = vsel %vm736, %v587, -inf
    %v881 = vmax.f32 %v879, %v880
    %v882 = vsel %vm736, %v591, -inf
    %v883 = vmax.f32 %v881, %v882
    %v884 = vsel %vm736, %v597, -inf
    %v885 = vmax.f32 %v883, %v884
    %v886 = vsel %vm736, %v601, -inf
    %v887 = vmax.f32 %v885, %v886
    %v888 = vrot.slane %v887, 4
    %v889 = vmax.f32 %v887, %v888
    %v890 = vrot.slane %v889, 2
    %v891 = vmax.f32 %v889, %v890
    %v892 = vrot.slane %v891, 1
    %v893 = vmax.f32 %v891, %v892
    %v894 = vmax.f32 %v605, %v609
    %v895 = vmax.f32 %v894, %v615
    %v896 = vmax.f32 %v895, %v619
    %v897 = vmax.f32 %v896, %v625
    %v898 = vmax.f32 %v897, %v629
    %v899 = vmax.f32 %v898, %v635
    %v900 = vmax.f32 %v899, %v639
    %v901 = vrot.slane %v900, 4
    %v902 = vmax.f32 %v900, %v901
    %v903 = vrot.slane %v902, 2
    %v904 = vmax.f32 %v902, %v903
    %v905 = vrot.slane %v904, 1
    %v906 = vmax.f32 %v904, %v905
    %v907 = vsel %vm736, %v607, -inf
    %v908 = vsel %vm736, %v611, -inf
    %v909 = vmax.f32 %v907, %v908
    %v910 = vsel %vm736, %v617, -inf
    %v911 = vmax.f32 %v909, %v910
    %v912 = vsel %vm736, %v621, -inf
    %v913 = vmax.f32 %v911, %v912
    %v914 = vsel %vm736, %v627, -inf
    %v915 = vmax.f32 %v913, %v914
    %v916 = vsel %vm736, %v631, -inf
    %v917 = vmax.f32 %v915, %v916
    %v918 = vsel %vm736, %v637, -inf
    %v919 = vmax.f32 %v917, %v918
    %v920 = vsel %vm736, %v641, -inf
    %v921 = vmax.f32 %v919, %v920
    %v922 = vrot.slane %v921, 4
    %v923 = vmax.f32 %v921, %v922
    %v924 = vrot.slane %v923, 2
    %v925 = vmax.f32 %v923, %v924
    %v926 = vrot.slane %v925, 1
    %v927 = vmax.f32 %v925, %v926
    %v928 = vmax.f32 %v645, %v649
    %v929 = vmax.f32 %v928, %v655
    %v930 = vmax.f32 %v929, %v659
    %v931 = vmax.f32 %v930, %v665
    %v932 = vmax.f32 %v931, %v669
    %v933 = vmax.f32 %v932, %v675
    %v934 = vmax.f32 %v933, %v679
    %v935 = vrot.slane %v934, 4
    %v936 = vmax.f32 %v934, %v935
    %v937 = vrot.slane %v936, 2
    %v938 = vmax.f32 %v936, %v937
    %v939 = vrot.slane %v938, 1
    %v940 = vmax.f32 %v938, %v939
    %v941 = vsel %vm736, %v647, -inf
    %v942 = vsel %vm736, %v651, -inf
    %v943 = vmax.f32 %v941, %v942
    %v944 = vsel %vm736, %v657, -inf
    %v945 = vmax.f32 %v943, %v944
    %v946 = vsel %vm736, %v661, -inf
    %v947 = vmax.f32 %v945, %v946
    %v948 = vsel %vm736, %v667, -inf
    %v949 = vmax.f32 %v947, %v948
    %v950 = vsel %vm736, %v671, -inf
    %v951 = vmax.f32 %v949, %v950
    %v952 = vsel %vm736, %v677, -inf
    %v953 = vmax.f32 %v951, %v952
    %v954 = vsel %vm736, %v681, -inf
    %v955 = vmax.f32 %v953, %v954
    %v956 = vrot.slane %v955, 4
    %v957 = vmax.f32 %v955, %v956
    %v958 = vrot.slane %v957, 2
    %v959 = vmax.f32 %v957, %v958
    %v960 = vrot.slane %v959, 1
    %v961 = vmax.f32 %v959, %v960
    %v962 = vmax.f32 %v685, %v689
    %v963 = vmax.f32 %v962, %v695
    %v964 = vmax.f32 %v963, %v699
    %v965 = vmax.f32 %v964, %v705
    %v966 = vmax.f32 %v965, %v709
    %v967 = vmax.f32 %v966, %v715
    %v968 = vmax.f32 %v967, %v719
    %v969 = vrot.slane %v968, 4
    %v970 = vmax.f32 %v968, %v969
    %v971 = vrot.slane %v970, 2
    %v972 = vmax.f32 %v970, %v971
    %v973 = vrot.slane %v972, 1
    %v974 = vmax.f32 %v972, %v973
    %v975 = vsel %vm736, %v687, -inf
    %v976 = vsel %vm736, %v691, -inf
    %v977 = vmax.f32 %v975, %v976
    %v978 = vsel %vm736, %v697, -inf
    %v979 = vmax.f32 %v977, %v978
    %v980 = vsel %vm736, %v701, -inf
    %v981 = vmax.f32 %v979, %v980
    %v982 = vsel %vm736, %v707, -inf
    %v983 = vmax.f32 %v981, %v982
    %v984 = vsel %vm736, %v711, -inf
    %v985 = vmax.f32 %v983, %v984
    %v986 = vsel %vm736, %v717, -inf
    %v987 = vmax.f32 %v985, %v986
    %v988 = vsel %vm736, %v721, -inf
    %v989 = vmax.f32 %v987, %v988
    %v990 = vrot.slane %v989, 4
    %v991 = vmax.f32 %v989, %v990
    %v992 = vrot.slane %v991, 2
    %v993 = vmax.f32 %v991, %v992
    %v994 = vrot.slane %v993, 1
    %v995 = vmax.f32 %v993, %v994
    %v996 = vpack.c.bf16 %v735, %v735
    %v997 = vpack.c.bf16 %v757, %v757
    %v998 = vpack.c.bf16 %v770, %v770
    %v999 = vpack.c.bf16 %v791, %v791
    %v1000 = vpack.c.bf16 %v804, %v804
    %v1001 = vpack.c.bf16 %v825, %v825
    %v1002 = vpack.c.bf16 %v838, %v838
    %v1003 = vpack.c.bf16 %v859, %v859
    %v1004 = vpack.c.bf16 %v872, %v872
    %v1005 = vpack.c.bf16 %v893, %v893
    %v1006 = vpack.c.bf16 %v906, %v906
    %v1007 = vpack.c.bf16 %v927, %v927
    %v1008 = vpack.c.bf16 %v940, %v940
    %v1009 = vpack.c.bf16 %v961, %v961
    %v1010 = vpack.c.bf16 %v974, %v974
    %v1011 = vpack.c.bf16 %v995, %v995
    %v1012 = vld [vmem:[%s2] sm:$0xf]
    %v1013 = vld [vmem:[%s2 + $0x4] sm:$0xf]
    %v1014 = vld [vmem:[%s2 + $0x8] sm:$0xf]
    %v1015 = vld [vmem:[%s2 + $0xc] sm:$0xf]
    %v1016 = vld [vmem:[%s2 + $0x10] sm:$0xf]
    %v1017 = vld [vmem:[%s2 + $0x14] sm:$0xf]
    %v1018 = vld [vmem:[%s2 + $0x18] sm:$0xf]
    %v1019 = vld [vmem:[%s2 + $0x1c] sm:$0xf]
    %v1020 = vld [vmem:[%s2 + $0x20] sm:$0xf]
    %v1021 = vld [vmem:[%s2 + $0x24] sm:$0xf]
    %v1022 = vld [vmem:[%s2 + $0x28] sm:$0xf]
    %v1023 = vld [vmem:[%s2 + $0x2c] sm:$0xf]
    %v1024 = vld [vmem:[%s2 + $0x30] sm:$0xf]
    %v1025 = vld [vmem:[%s2 + $0x34] sm:$0xf]
    %v1026 = vld [vmem:[%s2 + $0x38] sm:$0xf]
    %v1027 = vld [vmem:[%s2 + $0x3c] sm:$0xf]
    %v1028 = vld [vmem:[%s2 + $0x40] sm:$0xf]
    %v1029 = vld [vmem:[%s2 + $0x44] sm:$0xf]
    %v1030 = vld [vmem:[%s2 + $0x48] sm:$0xf]
    %v1031 = vld [vmem:[%s2 + $0x4c] sm:$0xf]
    %v1032 = vld [vmem:[%s2 + $0x50] sm:$0xf]
    %v1033 = vld [vmem:[%s2 + $0x54] sm:$0xf]
    %v1034 = vld [vmem:[%s2 + $0x58] sm:$0xf]
    %v1035 = vld [vmem:[%s2 + $0x5c] sm:$0xf]
    %v1036 = vld [vmem:[%s2 + $0x60] sm:$0xf]
    %v1037 = vld [vmem:[%s2 + $0x64] sm:$0xf]
    %v1038 = vld [vmem:[%s2 + $0x68] sm:$0xf]
    %v1039 = vld [vmem:[%s2 + $0x6c] sm:$0xf]
    %v1040 = vld [vmem:[%s2 + $0x70] sm:$0xf]
    %v1041 = vld [vmem:[%s2 + $0x74] sm:$0xf]
    %v1042 = vld [vmem:[%s0 + $0x20] sm:$0xf]
    %v1043 = vld [vmem:[%s0 + $0x24] sm:$0xf]
    %v1044 = vld [vmem:[%s0 + $0x28] sm:$0xf]
    %v1045 = vld [vmem:[%s0 + $0x2c] sm:$0xf]
    %v1046 = vld [vmem:[%s0 + $0x30] sm:$0xf]
    %v1047 = vld [vmem:[%s0 + $0x34] sm:$0xf]
    %v1048 = vld [vmem:[%s0 + $0x38] sm:$0xf]
    %v1049 = vld [vmem:[%s0 + $0x3c] sm:$0xf]
    %v1050 = vld [vmem:[%s0 + $0x140] sm:$0xf]
    %v1051 = vld [vmem:[%s0 + $0x144] sm:$0xf]
    %v1052 = vld [vmem:[%s0 + $0x148] sm:$0xf]
    %v1053 = vld [vmem:[%s0 + $0x14c] sm:$0xf]
    %v1054 = vld [vmem:[%s0 + $0x150] sm:$0xf]
    %v1055 = vld [vmem:[%s0 + $0x154] sm:$0xf]
    %v1056 = vld [vmem:[%s0 + $0x158] sm:$0xf]
    %v1057 = vld [vmem:[%s0 + $0x15c] sm:$0xf]
    %v1058 = vld [vmem:[%s0 + $0x260] sm:$0xf]
    %v1059 = vld [vmem:[%s0 + $0x264] sm:$0xf]
    %v1060 = vld [vmem:[%s0 + $0x268] sm:$0xf]
    %v1061 = vld [vmem:[%s0 + $0x26c] sm:$0xf]
    %v1062 = vld [vmem:[%s0 + $0x270] sm:$0xf]
    %v1063 = vld [vmem:[%s0 + $0x274] sm:$0xf]
    %v1064 = vld [vmem:[%s0 + $0x278] sm:$0xf]
    %v1065 = vld [vmem:[%s0 + $0x27c] sm:$0xf]
    %v1066 = vld [vmem:[%s0 + $0x380] sm:$0xf]
    %v1067 = vld [vmem:[%s0 + $0x384] sm:$0xf]
    %v1068 = vld [vmem:[%s0 + $0x388] sm:$0xf]
    %v1069 = vld [vmem:[%s0 + $0x38c] sm:$0xf]
    %v1070 = vld [vmem:[%s0 + $0x390] sm:$0xf]
    %v1071 = vld [vmem:[%s0 + $0x394] sm:$0xf]
    %v1072 = vld [vmem:[%s0 + $0x398] sm:$0xf]
    %v1073 = vld [vmem:[%s0 + $0x39c] sm:$0xf]
    %v1074 = vld [vmem:[%s0 + $0x4a0] sm:$0xf]
    %v1075 = vld [vmem:[%s0 + $0x4a4] sm:$0xf]
    %v1076 = vld [vmem:[%s0 + $0x4a8] sm:$0xf]
    %v1077 = vld [vmem:[%s0 + $0x4ac] sm:$0xf]
    %v1078 = vld [vmem:[%s0 + $0x4b0] sm:$0xf]
    %v1079 = vld [vmem:[%s0 + $0x4b4] sm:$0xf]
    %v1080 = vld [vmem:[%s0 + $0x4b8] sm:$0xf]
    %v1081 = vld [vmem:[%s0 + $0x4bc] sm:$0xf]
    %v1082 = vld [vmem:[%s0 + $0x5c0] sm:$0xf]
    %v1083 = vld [vmem:[%s0 + $0x5c4] sm:$0xf]
    %v1084 = vld [vmem:[%s0 + $0x5c8] sm:$0xf]
    %v1085 = vld [vmem:[%s0 + $0x5cc] sm:$0xf]
    %v1086 = vld [vmem:[%s0 + $0x5d0] sm:$0xf]
    %v1087 = vld [vmem:[%s0 + $0x5d4] sm:$0xf]
    %v1088 = vld [vmem:[%s0 + $0x5d8] sm:$0xf]
    %v1089 = vld [vmem:[%s0 + $0x5dc] sm:$0xf]
    %v1090 = vld [vmem:[%s0 + $0x6e0] sm:$0xf]
    %v1091 = vld [vmem:[%s0 + $0x6e4] sm:$0xf]
    %v1092 = vld [vmem:[%s0 + $0x6e8] sm:$0xf]
    %v1093 = vld [vmem:[%s0 + $0x6ec] sm:$0xf]
    %v1094 = vld [vmem:[%s0 + $0x6f0] sm:$0xf]
    %v1095 = vld [vmem:[%s0 + $0x6f4] sm:$0xf]
    %v1096 = vld [vmem:[%s0 + $0x6f8] sm:$0xf]
    %v1097 = vld [vmem:[%s0 + $0x6fc] sm:$0xf]
    %v1098 = vld [vmem:[%s0 + $0x800] sm:$0xf]
    %v1099 = vld [vmem:[%s0 + $0x804] sm:$0xf]
    %v1100 = vld [vmem:[%s0 + $0x808] sm:$0xf]
    %v1101 = vld [vmem:[%s0 + $0x80c] sm:$0xf]
    %v1102 = vld [vmem:[%s0 + $0x810] sm:$0xf]
    %v1103 = vld [vmem:[%s0 + $0x814] sm:$0xf]
    %v1104 = vld [vmem:[%s0 + $0x818] sm:$0xf]
    %v1105 = vld [vmem:[%s0 + $0x81c] sm:$0xf]
    %v1170 = vunpack.c.l.b16 %v1042
    %v1171 = vunpack.c.l.b16 %v1043
    %v1172 = vunpack.c.l.b16 %v1044
    %v1173 = vunpack.c.l.b16 %v1045
    %v1174 = vunpack.c.l.b16 %v1046
    %v1175 = vunpack.c.l.b16 %v1047
    %v1176 = vunpack.c.l.b16 %v1048
    %v1177 = vunpack.c.l.b16 %v1049
    %v1178 = vunpack.c.l.b16 %v1050
    %v1179 = vunpack.c.l.b16 %v1051
    %v1180 = vunpack.c.l.b16 %v1052
    %v1181 = vunpack.c.l.b16 %v1053
    %v1182 = vunpack.c.l.b16 %v1054
    %v1183 = vunpack.c.l.b16 %v1055
    %v1184 = vunpack.c.l.b16 %v1056
    %v1185 = vunpack.c.l.b16 %v1057
    %v1186 = vunpack.c.l.b16 %v1058
    %v1187 = vunpack.c.l.b16 %v1059
    %v1188 = vunpack.c.l.b16 %v1060
    %v1189 = vunpack.c.l.b16 %v1061
    %v1190 = vunpack.c.l.b16 %v1062
    %v1191 = vunpack.c.l.b16 %v1063
    %v1192 = vunpack.c.l.b16 %v1064
    %v1193 = vunpack.c.l.b16 %v1065
    %v1194 = vunpack.c.l.b16 %v1066
    %v1195 = vunpack.c.l.b16 %v1067
    %v1196 = vunpack.c.l.b16 %v1068
    %v1197 = vunpack.c.l.b16 %v1069
    %v1198 = vunpack.c.l.b16 %v1070
    %v1199 = vunpack.c.l.b16 %v1071
    %v1200 = vunpack.c.l.b16 %v1072
    %v1201 = vunpack.c.l.b16 %v1073
    %v1202 = vunpack.c.l.b16 %v1074
    %v1203 = vunpack.c.l.b16 %v1075
    %v1204 = vunpack.c.l.b16 %v1076
    %v1205 = vunpack.c.l.b16 %v1077
    %v1206 = vunpack.c.l.b16 %v1078
    %v1207 = vunpack.c.l.b16 %v1079
    %v1208 = vunpack.c.l.b16 %v1080
    %v1209 = vunpack.c.l.b16 %v1081
    %v1210 = vunpack.c.l.b16 %v1082
    %v1211 = vunpack.c.l.b16 %v1083
    %v1212 = vunpack.c.l.b16 %v1084
    %v1213 = vunpack.c.l.b16 %v1085
    %v1214 = vunpack.c.l.b16 %v1086
    %v1215 = vunpack.c.l.b16 %v1087
    %v1216 = vunpack.c.l.b16 %v1088
    %v1217 = vunpack.c.l.b16 %v1089
    %v1218 = vunpack.c.l.b16 %v1090
    %v1219 = vunpack.c.l.b16 %v1091
    %v1220 = vunpack.c.l.b16 %v1092
    %v1221 = vunpack.c.l.b16 %v1093
    %v1222 = vunpack.c.l.b16 %v1094
    %v1223 = vunpack.c.l.b16 %v1095
    %v1224 = vunpack.c.l.b16 %v1096
    %v1225 = vunpack.c.l.b16 %v1097
    %v1226 = vunpack.c.l.b16 %v1098
    %v1227 = vunpack.c.l.b16 %v1099
    %v1228 = vunpack.c.l.b16 %v1100
    %v1229 = vunpack.c.l.b16 %v1101
    %v1230 = vunpack.c.l.b16 %v1102
    %v1231 = vunpack.c.l.b16 %v1103
    %v1232 = vunpack.c.l.b16 %v1104
    %v1233 = vunpack.c.l.b16 %v1105
    %v1234 = vpack.c.b16 %v1171, %v1170
    %v1235 = vpack.c.b16 %v1173, %v1172
    %v1236 = vpack.c.b16 %v1175, %v1174
    %v1237 = vpack.c.b16 %v1177, %v1176
    %v1238 = vpack.c.b16 %v1179, %v1178
    %v1239 = vpack.c.b16 %v1181, %v1180
    %v1240 = vpack.c.b16 %v1183, %v1182
    %v1241 = vpack.c.b16 %v1185, %v1184
    %v1242 = vpack.c.b16 %v1187, %v1186
    %v1243 = vpack.c.b16 %v1189, %v1188
    %v1244 = vpack.c.b16 %v1191, %v1190
    %v1245 = vpack.c.b16 %v1193, %v1192
    %v1246 = vpack.c.b16 %v1195, %v1194
    %v1247 = vpack.c.b16 %v1197, %v1196
    %v1248 = vpack.c.b16 %v1199, %v1198
    %v1249 = vpack.c.b16 %v1201, %v1200
    %v1250 = vpack.c.b16 %v1203, %v1202
    %v1251 = vpack.c.b16 %v1205, %v1204
    %v1252 = vpack.c.b16 %v1207, %v1206
    %v1253 = vpack.c.b16 %v1209, %v1208
    %v1254 = vpack.c.b16 %v1211, %v1210
    %v1255 = vpack.c.b16 %v1213, %v1212
    %v1256 = vpack.c.b16 %v1215, %v1214
    %v1257 = vpack.c.b16 %v1217, %v1216
    %v1258 = vpack.c.b16 %v1219, %v1218
    %v1259 = vpack.c.b16 %v1221, %v1220
    %v1260 = vpack.c.b16 %v1223, %v1222
    %v1261 = vpack.c.b16 %v1225, %v1224
    %v1262 = vpack.c.b16 %v1227, %v1226
    %v1263 = vpack.c.b16 %v1229, %v1228
    %v1264 = vpack.c.b16 %v1231, %v1230
    %v1265 = vpack.c.b16 %v1233, %v1232
    %v1267 = vsel %vm273, %v1234, 0
    %v1270 = vsel %vm273, %v1235, 0
    %v1273 = vsel %vm273, %v1236, 0
    %v1276 = vsel %vm273, %v1237, 0
    %v1279 = vsel %vm273, %v1238, 0
    %v1282 = vsel %vm273, %v1239, 0
    %v1285 = vsel %vm273, %v1240, 0
    %v1288 = vsel %vm273, %v1241, 0
    %v1291 = vsel %vm273, %v1242, 0
    %v1294 = vsel %vm273, %v1243, 0
    %v1297 = vsel %vm273, %v1244, 0
    %v1300 = vsel %vm273, %v1245, 0
    %v1303 = vsel %vm273, %v1246, 0
    %v1306 = vsel %vm273, %v1247, 0
    %v1309 = vsel %vm273, %v1248, 0
    %v1312 = vsel %vm273, %v1249, 0
    %v1315 = vsel %vm273, %v1250, 0
    %v1318 = vsel %vm273, %v1251, 0
    %v1321 = vsel %vm273, %v1252, 0
    %v1324 = vsel %vm273, %v1253, 0
    %v1327 = vsel %vm273, %v1254, 0
    %v1330 = vsel %vm273, %v1255, 0
    %v1333 = vsel %vm273, %v1256, 0
    %v1336 = vsel %vm273, %v1257, 0
    %v1339 = vsel %vm273, %v1258, 0
    %v1342 = vsel %vm273, %v1259, 0
    %v1345 = vsel %vm273, %v1260, 0
    %v1348 = vsel %vm273, %v1261, 0
    %v1351 = vsel %vm273, %v1262, 0
    %v1354 = vsel %vm273, %v1263, 0
    %v1357 = vsel %vm273, %v1264, 0
    %v1360 = vsel %vm273, %v1265, 0
    %1362 = vmatprep.subr.bf16.mxu0 0
    %1363 = vmatpush1.bf16.msra.mxu0 0
    %1364 = vmatprep.subr.bf16.mxu0 0
    %1365 = vmatpush1.bf16.msra.mxu0 0
    %1366 = vmatprep.subr.bf16.mxu0 0
    %1367 = vmatpush1.bf16.msra.mxu0 0
    %1368 = vmatprep.subr.bf16.mxu0 0
    %1369 = vmatpush1.bf16.msra.mxu0 0
    %1370 = vmatprep.subr.bf16.mxu0 0
    %1371 = vmatpush1.bf16.msra.mxu0 0
    %1372 = vmatprep.subr.bf16.mxu0 0
    %1373 = vmatpush1.bf16.msra.mxu0 0
    %1374 = vmatprep.subr.bf16.mxu0 %v268
    %1375 = vmatpush1.bf16.msra.mxu0 %v267
    %1376 = vmatprep.subr.bf16.mxu0 %v266
    %1377 = vmatpush1.bf16.msra.mxu0 %v265
    %1378 = vmatprep.subr.bf16.mxu0 0
    %1379 = vmatpush2.bf16.msra.mxu0 0
    %1380 = vmatprep.subr.bf16.mxu0 0
    %1381 = vmatpush2.bf16.msra.mxu0 0
    %1382 = vmatprep.subr.bf16.mxu0 0
    %1383 = vmatpush2.bf16.msra.mxu0 0
    %1384 = vmatprep.subr.bf16.mxu0 0
    %1385 = vmatpush2.bf16.msra.mxu0 0
    %1386 = vmatprep.subr.bf16.mxu0 0
    %1387 = vmatpush2.bf16.msra.mxu0 0
    %1388 = vmatprep.subr.bf16.mxu0 0
    %1389 = vmatpush2.bf16.msra.mxu0 0
    %1390 = vmatprep.subr.bf16.mxu0 0
    %1391 = vmatpush2.bf16.msra.mxu0 0
    %1392 = vmatprep.subr.bf16.mxu0 0
    %1393 = vmatpush2.bf16.msra.mxu0 0
    %1394 = vmatprep.mubr.bf16.mxu0 0
    %1395 = vmatmul.mubr.bf16.gmra.mxu0 %v1267
    %v1396 = vpop.f32.mrf.mxu0
    %v1397 = vadd.f32 0.0, %v1396
    %v1398 = vpop.f32.mrf.mxu0
    %v1399 = vadd.f32 0.0, %v1398
    %v1400 = vpop.f32.mrf.mxu0
    %v1401 = vadd.f32 0.0, %v1400
    %v1402 = vpop.f32.mrf.mxu0
    %v1403 = vadd.f32 0.0, %v1402
    %1404 = vmatprep.mubr.bf16.mxu0 0
    %1405 = vmatmul.mubr.bf16.gmra.mxu0 %v1270
    %v1406 = vpop.f32.mrf.mxu0
    %v1407 = vadd.f32 0.0, %v1406
    %v1408 = vpop.f32.mrf.mxu0
    %v1409 = vadd.f32 0.0, %v1408
    %v1410 = vpop.f32.mrf.mxu0
    %v1411 = vadd.f32 0.0, %v1410
    %v1412 = vpop.f32.mrf.mxu0
    %v1413 = vadd.f32 0.0, %v1412
    %1414 = vmatprep.mubr.bf16.mxu0 0
    %1415 = vmatmul.mubr.bf16.gmra.mxu0 %v1273
    %v1416 = vpop.f32.mrf.mxu0
    %v1417 = vadd.f32 0.0, %v1416
    %v1418 = vpop.f32.mrf.mxu0
    %v1419 = vadd.f32 0.0, %v1418
    %v1420 = vpop.f32.mrf.mxu0
    %v1421 = vadd.f32 0.0, %v1420
    %v1422 = vpop.f32.mrf.mxu0
    %v1423 = vadd.f32 0.0, %v1422
    %1424 = vmatprep.mubr.bf16.mxu0 0
    %1425 = vmatmul.mubr.bf16.gmra.mxu0 %v1276
    %v1426 = vpop.f32.mrf.mxu0
    %v1427 = vadd.f32 0.0, %v1426
    %v1428 = vpop.f32.mrf.mxu0
    %v1429 = vadd.f32 0.0, %v1428
    %v1430 = vpop.f32.mrf.mxu0
    %v1431 = vadd.f32 0.0, %v1430
    %v1432 = vpop.f32.mrf.mxu0
    %v1433 = vadd.f32 0.0, %v1432
    %1434 = vmatprep.mubr.bf16.mxu0 0
    %1435 = vmatmul.mubr.bf16.gmra.mxu0 %v1279
    %v1436 = vpop.f32.mrf.mxu0
    %v1437 = vadd.f32 0.0, %v1436
    %v1438 = vpop.f32.mrf.mxu0
    %v1439 = vadd.f32 0.0, %v1438
    %v1440 = vpop.f32.mrf.mxu0
    %v1441 = vadd.f32 0.0, %v1440
    %v1442 = vpop.f32.mrf.mxu0
    %v1443 = vadd.f32 0.0, %v1442
    %1444 = vmatprep.mubr.bf16.mxu0 0
    %1445 = vmatmul.mubr.bf16.gmra.mxu0 %v1282
    %v1446 = vpop.f32.mrf.mxu0
    %v1447 = vadd.f32 0.0, %v1446
    %v1448 = vpop.f32.mrf.mxu0
    %v1449 = vadd.f32 0.0, %v1448
    %v1450 = vpop.f32.mrf.mxu0
    %v1451 = vadd.f32 0.0, %v1450
    %v1452 = vpop.f32.mrf.mxu0
    %v1453 = vadd.f32 0.0, %v1452
    %1454 = vmatprep.mubr.bf16.mxu0 0
    %1455 = vmatmul.mubr.bf16.gmra.mxu0 %v1285
    %v1456 = vpop.f32.mrf.mxu0
    %v1457 = vadd.f32 0.0, %v1456
    %v1458 = vpop.f32.mrf.mxu0
    %v1459 = vadd.f32 0.0, %v1458
    %v1460 = vpop.f32.mrf.mxu0
    %v1461 = vadd.f32 0.0, %v1460
    %v1462 = vpop.f32.mrf.mxu0
    %v1463 = vadd.f32 0.0, %v1462
    %1464 = vmatprep.mubr.bf16.mxu0 0
    %1465 = vmatmul.mubr.bf16.gmra.mxu0 %v1288
    %v1466 = vpop.f32.mrf.mxu0
    %v1467 = vadd.f32 0.0, %v1466
    %v1468 = vpop.f32.mrf.mxu0
    %v1469 = vadd.f32 0.0, %v1468
    %v1470 = vpop.f32.mrf.mxu0
    %v1471 = vadd.f32 0.0, %v1470
    %v1472 = vpop.f32.mrf.mxu0
    %v1473 = vadd.f32 0.0, %v1472
    %1474 = vmatprep.mubr.bf16.mxu0 0
    %1475 = vmatmul.mubr.bf16.gmra.mxu0 %v1291
    %v1476 = vpop.f32.mrf.mxu0
    %v1477 = vadd.f32 0.0, %v1476
    %v1478 = vpop.f32.mrf.mxu0
    %v1479 = vadd.f32 0.0, %v1478
    %v1480 = vpop.f32.mrf.mxu0
    %v1481 = vadd.f32 0.0, %v1480
    %v1482 = vpop.f32.mrf.mxu0
    %v1483 = vadd.f32 0.0, %v1482
    %1484 = vmatprep.mubr.bf16.mxu0 0
    %1485 = vmatmul.mubr.bf16.gmra.mxu0 %v1294
    %v1486 = vpop.f32.mrf.mxu0
    %v1487 = vadd.f32 0.0, %v1486
    %v1488 = vpop.f32.mrf.mxu0
    %v1489 = vadd.f32 0.0, %v1488
    %v1490 = vpop.f32.mrf.mxu0
    %v1491 = vadd.f32 0.0, %v1490
    %v1492 = vpop.f32.mrf.mxu0
    %v1493 = vadd.f32 0.0, %v1492
    %1494 = vmatprep.mubr.bf16.mxu0 0
    %1495 = vmatmul.mubr.bf16.gmra.mxu0 %v1297
    %v1496 = vpop.f32.mrf.mxu0
    %v1497 = vadd.f32 0.0, %v1496
    %v1498 = vpop.f32.mrf.mxu0
    %v1499 = vadd.f32 0.0, %v1498
    %v1500 = vpop.f32.mrf.mxu0
    %v1501 = vadd.f32 0.0, %v1500
    %v1502 = vpop.f32.mrf.mxu0
    %v1503 = vadd.f32 0.0, %v1502
    %1504 = vmatprep.mubr.bf16.mxu0 0
    %1505 = vmatmul.mubr.bf16.gmra.mxu0 %v1300
    %v1506 = vpop.f32.mrf.mxu0
    %v1507 = vadd.f32 0.0, %v1506
    %v1508 = vpop.f32.mrf.mxu0
    %v1509 = vadd.f32 0.0, %v1508
    %v1510 = vpop.f32.mrf.mxu0
    %v1511 = vadd.f32 0.0, %v1510
    %v1512 = vpop.f32.mrf.mxu0
    %v1513 = vadd.f32 0.0, %v1512
    %1514 = vmatprep.mubr.bf16.mxu0 0
    %1515 = vmatmul.mubr.bf16.gmra.mxu0 %v1303
    %v1516 = vpop.f32.mrf.mxu0
    %v1517 = vadd.f32 0.0, %v1516
    %v1518 = vpop.f32.mrf.mxu0
    %v1519 = vadd.f32 0.0, %v1518
    %v1520 = vpop.f32.mrf.mxu0
    %v1521 = vadd.f32 0.0, %v1520
    %v1522 = vpop.f32.mrf.mxu0
    %v1523 = vadd.f32 0.0, %v1522
    %1524 = vmatprep.mubr.bf16.mxu0 0
    %1525 = vmatmul.mubr.bf16.gmra.mxu0 %v1306
    %v1526 = vpop.f32.mrf.mxu0
    %v1527 = vadd.f32 0.0, %v1526
    %v1528 = vpop.f32.mrf.mxu0
    %v1529 = vadd.f32 0.0, %v1528
    %v1530 = vpop.f32.mrf.mxu0
    %v1531 = vadd.f32 0.0, %v1530
    %v1532 = vpop.f32.mrf.mxu0
    %v1533 = vadd.f32 0.0, %v1532
    %1534 = vmatprep.mubr.bf16.mxu0 0
    %1535 = vmatmul.mubr.bf16.gmra.mxu0 %v1309
    %v1536 = vpop.f32.mrf.mxu0
    %v1537 = vadd.f32 0.0, %v1536
    %v1538 = vpop.f32.mrf.mxu0
    %v1539 = vadd.f32 0.0, %v1538
    %v1540 = vpop.f32.mrf.mxu0
    %v1541 = vadd.f32 0.0, %v1540
    %v1542 = vpop.f32.mrf.mxu0
    %v1543 = vadd.f32 0.0, %v1542
    %1544 = vmatprep.mubr.bf16.mxu0 0
    %1545 = vmatmul.mubr.bf16.gmra.mxu0 %v1312
    %v1546 = vpop.f32.mrf.mxu0
    %v1547 = vadd.f32 0.0, %v1546
    %v1548 = vpop.f32.mrf.mxu0
    %v1549 = vadd.f32 0.0, %v1548
    %v1550 = vpop.f32.mrf.mxu0
    %v1551 = vadd.f32 0.0, %v1550
    %v1552 = vpop.f32.mrf.mxu0
    %v1553 = vadd.f32 0.0, %v1552
    %1554 = vmatprep.mubr.bf16.mxu0 0
    %1555 = vmatmul.mubr.bf16.gmra.mxu0 %v1315
    %v1556 = vpop.f32.mrf.mxu0
    %v1557 = vadd.f32 0.0, %v1556
    %v1558 = vpop.f32.mrf.mxu0
    %v1559 = vadd.f32 0.0, %v1558
    %v1560 = vpop.f32.mrf.mxu0
    %v1561 = vadd.f32 0.0, %v1560
    %v1562 = vpop.f32.mrf.mxu0
    %v1563 = vadd.f32 0.0, %v1562
    %1564 = vmatprep.mubr.bf16.mxu0 0
    %1565 = vmatmul.mubr.bf16.gmra.mxu0 %v1318
    %v1566 = vpop.f32.mrf.mxu0
    %v1567 = vadd.f32 0.0, %v1566
    %v1568 = vpop.f32.mrf.mxu0
    %v1569 = vadd.f32 0.0, %v1568
    %v1570 = vpop.f32.mrf.mxu0
    %v1571 = vadd.f32 0.0, %v1570
    %v1572 = vpop.f32.mrf.mxu0
    %v1573 = vadd.f32 0.0, %v1572
    %1574 = vmatprep.mubr.bf16.mxu0 0
    %1575 = vmatmul.mubr.bf16.gmra.mxu0 %v1321
    %v1576 = vpop.f32.mrf.mxu0
    %v1577 = vadd.f32 0.0, %v1576
    %v1578 = vpop.f32.mrf.mxu0
    %v1579 = vadd.f32 0.0, %v1578
    %v1580 = vpop.f32.mrf.mxu0
    %v1581 = vadd.f32 0.0, %v1580
    %v1582 = vpop.f32.mrf.mxu0
    %v1583 = vadd.f32 0.0, %v1582
    %1584 = vmatprep.mubr.bf16.mxu0 0
    %1585 = vmatmul.mubr.bf16.gmra.mxu0 %v1324
    %v1586 = vpop.f32.mrf.mxu0
    %v1587 = vadd.f32 0.0, %v1586
    %v1588 = vpop.f32.mrf.mxu0
    %v1589 = vadd.f32 0.0, %v1588
    %v1590 = vpop.f32.mrf.mxu0
    %v1591 = vadd.f32 0.0, %v1590
    %v1592 = vpop.f32.mrf.mxu0
    %v1593 = vadd.f32 0.0, %v1592
    %1594 = vmatprep.mubr.bf16.mxu0 0
    %1595 = vmatmul.mubr.bf16.gmra.mxu0 %v1327
    %v1596 = vpop.f32.mrf.mxu0
    %v1597 = vadd.f32 0.0, %v1596
    %v1598 = vpop.f32.mrf.mxu0
    %v1599 = vadd.f32 0.0, %v1598
    %v1600 = vpop.f32.mrf.mxu0
    %v1601 = vadd.f32 0.0, %v1600
    %v1602 = vpop.f32.mrf.mxu0
    %v1603 = vadd.f32 0.0, %v1602
    %1604 = vmatprep.mubr.bf16.mxu0 0
    %1605 = vmatmul.mubr.bf16.gmra.mxu0 %v1330
    %v1606 = vpop.f32.mrf.mxu0
    %v1607 = vadd.f32 0.0, %v1606
    %v1608 = vpop.f32.mrf.mxu0
    %v1609 = vadd.f32 0.0, %v1608
    %v1610 = vpop.f32.mrf.mxu0
    %v1611 = vadd.f32 0.0, %v1610
    %v1612 = vpop.f32.mrf.mxu0
    %v1613 = vadd.f32 0.0, %v1612
    %1614 = vmatprep.mubr.bf16.mxu0 0
    %1615 = vmatmul.mubr.bf16.gmra.mxu0 %v1333
    %v1616 = vpop.f32.mrf.mxu0
    %v1617 = vadd.f32 0.0, %v1616
    %v1618 = vpop.f32.mrf.mxu0
    %v1619 = vadd.f32 0.0, %v1618
    %v1620 = vpop.f32.mrf.mxu0
    %v1621 = vadd.f32 0.0, %v1620
    %v1622 = vpop.f32.mrf.mxu0
    %v1623 = vadd.f32 0.0, %v1622
    %1624 = vmatprep.mubr.bf16.mxu0 0
    %1625 = vmatmul.mubr.bf16.gmra.mxu0 %v1336
    %v1626 = vpop.f32.mrf.mxu0
    %v1627 = vadd.f32 0.0, %v1626
    %v1628 = vpop.f32.mrf.mxu0
    %v1629 = vadd.f32 0.0, %v1628
    %v1630 = vpop.f32.mrf.mxu0
    %v1631 = vadd.f32 0.0, %v1630
    %v1632 = vpop.f32.mrf.mxu0
    %v1633 = vadd.f32 0.0, %v1632
    %1634 = vmatprep.mubr.bf16.mxu0 0
    %1635 = vmatmul.mubr.bf16.gmra.mxu0 %v1339
    %v1636 = vpop.f32.mrf.mxu0
    %v1637 = vadd.f32 0.0, %v1636
    %v1638 = vpop.f32.mrf.mxu0
    %v1639 = vadd.f32 0.0, %v1638
    %v1640 = vpop.f32.mrf.mxu0
    %v1641 = vadd.f32 0.0, %v1640
    %v1642 = vpop.f32.mrf.mxu0
    %v1643 = vadd.f32 0.0, %v1642
    %1644 = vmatprep.mubr.bf16.mxu0 0
    %1645 = vmatmul.mubr.bf16.gmra.mxu0 %v1342
    %v1646 = vpop.f32.mrf.mxu0
    %v1647 = vadd.f32 0.0, %v1646
    %v1648 = vpop.f32.mrf.mxu0
    %v1649 = vadd.f32 0.0, %v1648
    %v1650 = vpop.f32.mrf.mxu0
    %v1651 = vadd.f32 0.0, %v1650
    %v1652 = vpop.f32.mrf.mxu0
    %v1653 = vadd.f32 0.0, %v1652
    %1654 = vmatprep.mubr.bf16.mxu0 0
    %1655 = vmatmul.mubr.bf16.gmra.mxu0 %v1345
    %v1656 = vpop.f32.mrf.mxu0
    %v1657 = vadd.f32 0.0, %v1656
    %v1658 = vpop.f32.mrf.mxu0
    %v1659 = vadd.f32 0.0, %v1658
    %v1660 = vpop.f32.mrf.mxu0
    %v1661 = vadd.f32 0.0, %v1660
    %v1662 = vpop.f32.mrf.mxu0
    %v1663 = vadd.f32 0.0, %v1662
    %1664 = vmatprep.mubr.bf16.mxu0 0
    %1665 = vmatmul.mubr.bf16.gmra.mxu0 %v1348
    %v1666 = vpop.f32.mrf.mxu0
    %v1667 = vadd.f32 0.0, %v1666
    %v1668 = vpop.f32.mrf.mxu0
    %v1669 = vadd.f32 0.0, %v1668
    %v1670 = vpop.f32.mrf.mxu0
    %v1671 = vadd.f32 0.0, %v1670
    %v1672 = vpop.f32.mrf.mxu0
    %v1673 = vadd.f32 0.0, %v1672
    %1674 = vmatprep.mubr.bf16.mxu0 0
    %1675 = vmatmul.mubr.bf16.gmra.mxu0 %v1351
    %v1676 = vpop.f32.mrf.mxu0
    %v1677 = vadd.f32 0.0, %v1676
    %v1678 = vpop.f32.mrf.mxu0
    %v1679 = vadd.f32 0.0, %v1678
    %v1680 = vpop.f32.mrf.mxu0
    %v1681 = vadd.f32 0.0, %v1680
    %v1682 = vpop.f32.mrf.mxu0
    %v1683 = vadd.f32 0.0, %v1682
    %1684 = vmatprep.mubr.bf16.mxu0 0
    %1685 = vmatmul.mubr.bf16.gmra.mxu0 %v1354
    %v1686 = vpop.f32.mrf.mxu0
    %v1687 = vadd.f32 0.0, %v1686
    %v1688 = vpop.f32.mrf.mxu0
    %v1689 = vadd.f32 0.0, %v1688
    %v1690 = vpop.f32.mrf.mxu0
    %v1691 = vadd.f32 0.0, %v1690
    %v1692 = vpop.f32.mrf.mxu0
    %v1693 = vadd.f32 0.0, %v1692
    %1694 = vmatprep.mubr.bf16.mxu0 0
    %1695 = vmatmul.mubr.bf16.gmra.mxu0 %v1357
    %v1696 = vpop.f32.mrf.mxu0
    %v1697 = vadd.f32 0.0, %v1696
    %v1698 = vpop.f32.mrf.mxu0
    %v1699 = vadd.f32 0.0, %v1698
    %v1700 = vpop.f32.mrf.mxu0
    %v1701 = vadd.f32 0.0, %v1700
    %v1702 = vpop.f32.mrf.mxu0
    %v1703 = vadd.f32 0.0, %v1702
    %1704 = vmatprep.mubr.bf16.mxu0 0
    %1705 = vmatmul.mubr.bf16.gmra.mxu0 %v1360
    %v1706 = vpop.f32.mrf.mxu0
    %v1707 = vadd.f32 0.0, %v1706
    %v1708 = vpop.f32.mrf.mxu0
    %v1709 = vadd.f32 0.0, %v1708
    %v1710 = vpop.f32.mrf.mxu0
    %v1711 = vadd.f32 0.0, %v1710
    %v1712 = vpop.f32.mrf.mxu0
    %v1713 = vadd.f32 0.0, %v1712
    %1714 = vdwg.mxu0
    %v1715 = vmax.f32 %v1397, %v1401
    %v1716 = vmax.f32 %v1715, %v1407
    %v1717 = vmax.f32 %v1716, %v1411
    %v1718 = vmax.f32 %v1717, %v1417
    %v1719 = vmax.f32 %v1718, %v1421
    %v1720 = vmax.f32 %v1719, %v1427
    %v1721 = vmax.f32 %v1720, %v1431
    %v1722 = vrot.slane %v1721, 4
    %v1723 = vmax.f32 %v1721, %v1722
    %v1724 = vrot.slane %v1723, 2
    %v1725 = vmax.f32 %v1723, %v1724
    %v1726 = vrot.slane %v1725, 1
    %v1727 = vmax.f32 %v1725, %v1726
    %v1728 = vsel %vm736, %v1399, -inf
    %v1729 = vsel %vm736, %v1403, -inf
    %v1730 = vmax.f32 %v1728, %v1729
    %v1731 = vsel %vm736, %v1409, -inf
    %v1732 = vmax.f32 %v1730, %v1731
    %v1733 = vsel %vm736, %v1413, -inf
    %v1734 = vmax.f32 %v1732, %v1733
    %v1735 = vsel %vm736, %v1419, -inf
    %v1736 = vmax.f32 %v1734, %v1735
    %v1737 = vsel %vm736, %v1423, -inf
    %v1738 = vmax.f32 %v1736, %v1737
    %v1739 = vsel %vm736, %v1429, -inf
    %v1740 = vmax.f32 %v1738, %v1739
    %v1741 = vsel %vm736, %v1433, -inf
    %v1742 = vmax.f32 %v1740, %v1741
    %v1743 = vrot.slane %v1742, 4
    %v1744 = vmax.f32 %v1742, %v1743
    %v1745 = vrot.slane %v1744, 2
    %v1746 = vmax.f32 %v1744, %v1745
    %v1747 = vrot.slane %v1746, 1
    %v1748 = vmax.f32 %v1746, %v1747
    %v1749 = vmax.f32 %v1437, %v1441
    %v1750 = vmax.f32 %v1749, %v1447
    %v1751 = vmax.f32 %v1750, %v1451
    %v1752 = vmax.f32 %v1751, %v1457
    %v1753 = vmax.f32 %v1752, %v1461
    %v1754 = vmax.f32 %v1753, %v1467
    %v1755 = vmax.f32 %v1754, %v1471
    %v1756 = vrot.slane %v1755, 4
    %v1757 = vmax.f32 %v1755, %v1756
    %v1758 = vrot.slane %v1757, 2
    %v1759 = vmax.f32 %v1757, %v1758
    %v1760 = vrot.slane %v1759, 1
    %v1761 = vmax.f32 %v1759, %v1760
    %v1762 = vsel %vm736, %v1439, -inf
    %v1763 = vsel %vm736, %v1443, -inf
    %v1764 = vmax.f32 %v1762, %v1763
    %v1765 = vsel %vm736, %v1449, -inf
    %v1766 = vmax.f32 %v1764, %v1765
    %v1767 = vsel %vm736, %v1453, -inf
    %v1768 = vmax.f32 %v1766, %v1767
    %v1769 = vsel %vm736, %v1459, -inf
    %v1770 = vmax.f32 %v1768, %v1769
    %v1771 = vsel %vm736, %v1463, -inf
    %v1772 = vmax.f32 %v1770, %v1771
    %v1773 = vsel %vm736, %v1469, -inf
    %v1774 = vmax.f32 %v1772, %v1773
    %v1775 = vsel %vm736, %v1473, -inf
    %v1776 = vmax.f32 %v1774, %v1775
    %v1777 = vrot.slane %v1776, 4
    %v1778 = vmax.f32 %v1776, %v1777
    %v1779 = vrot.slane %v1778, 2
    %v1780 = vmax.f32 %v1778, %v1779
    %v1781 = vrot.slane %v1780, 1
    %v1782 = vmax.f32 %v1780, %v1781
    %v1783 = vmax.f32 %v1477, %v1481
    %v1784 = vmax.f32 %v1783, %v1487
    %v1785 = vmax.f32 %v1784, %v1491
    %v1786 = vmax.f32 %v1785, %v1497
    %v1787 = vmax.f32 %v1786, %v1501
    %v1788 = vmax.f32 %v1787, %v1507
    %v1789 = vmax.f32 %v1788, %v1511
    %v1790 = vrot.slane %v1789, 4
    %v1791 = vmax.f32 %v1789, %v1790
    %v1792 = vrot.slane %v1791, 2
    %v1793 = vmax.f32 %v1791, %v1792
    %v1794 = vrot.slane %v1793, 1
    %v1795 = vmax.f32 %v1793, %v1794
    %v1796 = vsel %vm736, %v1479, -inf
    %v1797 = vsel %vm736, %v1483, -inf
    %v1798 = vmax.f32 %v1796, %v1797
    %v1799 = vsel %vm736, %v1489, -inf
    %v1800 = vmax.f32 %v1798, %v1799
    %v1801 = vsel %vm736, %v1493, -inf
    %v1802 = vmax.f32 %v1800, %v1801
    %v1803 = vsel %vm736, %v1499, -inf
    %v1804 = vmax.f32 %v1802, %v1803
    %v1805 = vsel %vm736, %v1503, -inf
    %v1806 = vmax.f32 %v1804, %v1805
    %v1807 = vsel %vm736, %v1509, -inf
    %v1808 = vmax.f32 %v1806, %v1807
    %v1809 = vsel %vm736, %v1513, -inf
    %v1810 = vmax.f32 %v1808, %v1809
    %v1811 = vrot.slane %v1810, 4
    %v1812 = vmax.f32 %v1810, %v1811
    %v1813 = vrot.slane %v1812, 2
    %v1814 = vmax.f32 %v1812, %v1813
    %v1815 = vrot.slane %v1814, 1
    %v1816 = vmax.f32 %v1814, %v1815
    %v1817 = vmax.f32 %v1517, %v1521
    %v1818 = vmax.f32 %v1817, %v1527
    %v1819 = vmax.f32 %v1818, %v1531
    %v1820 = vmax.f32 %v1819, %v1537
    %v1821 = vmax.f32 %v1820, %v1541
    %v1822 = vmax.f32 %v1821, %v1547
    %v1823 = vmax.f32 %v1822, %v1551
    %v1824 = vrot.slane %v1823, 4
    %v1825 = vmax.f32 %v1823, %v1824
    %v1826 = vrot.slane %v1825, 2
    %v1827 = vmax.f32 %v1825, %v1826
    %v1828 = vrot.slane %v1827, 1
    %v1829 = vmax.f32 %v1827, %v1828
    %v1830 = vsel %vm736, %v1519, -inf
    %v1831 = vsel %vm736, %v1523, -inf
    %v1832 = vmax.f32 %v1830, %v1831
    %v1833 = vsel %vm736, %v1529, -inf
    %v1834 = vmax.f32 %v1832, %v1833
    %v1835 = vsel %vm736, %v1533, -inf
    %v1836 = vmax.f32 %v1834, %v1835
    %v1837 = vsel %vm736, %v1539, -inf
    %v1838 = vmax.f32 %v1836, %v1837
    %v1839 = vsel %vm736, %v1543, -inf
    %v1840 = vmax.f32 %v1838, %v1839
    %v1841 = vsel %vm736, %v1549, -inf
    %v1842 = vmax.f32 %v1840, %v1841
    %v1843 = vsel %vm736, %v1553, -inf
    %v1844 = vmax.f32 %v1842, %v1843
    %v1845 = vrot.slane %v1844, 4
    %v1846 = vmax.f32 %v1844, %v1845
    %v1847 = vrot.slane %v1846, 2
    %v1848 = vmax.f32 %v1846, %v1847
    %v1849 = vrot.slane %v1848, 1
    %v1850 = vmax.f32 %v1848, %v1849
    %v1851 = vmax.f32 %v1557, %v1561
    %v1852 = vmax.f32 %v1851, %v1567
    %v1853 = vmax.f32 %v1852, %v1571
    %v1854 = vmax.f32 %v1853, %v1577
    %v1855 = vmax.f32 %v1854, %v1581
    %v1856 = vmax.f32 %v1855, %v1587
    %v1857 = vmax.f32 %v1856, %v1591
    %v1858 = vrot.slane %v1857, 4
    %v1859 = vmax.f32 %v1857, %v1858
    %v1860 = vrot.slane %v1859, 2
    %v1861 = vmax.f32 %v1859, %v1860
    %v1862 = vrot.slane %v1861, 1
    %v1863 = vmax.f32 %v1861, %v1862
    %v1864 = vsel %vm736, %v1559, -inf
    %v1865 = vsel %vm736, %v1563, -inf
    %v1866 = vmax.f32 %v1864, %v1865
    %v1867 = vsel %vm736, %v1569, -inf
    %v1868 = vmax.f32 %v1866, %v1867
    %v1869 = vsel %vm736, %v1573, -inf
    %v1870 = vmax.f32 %v1868, %v1869
    %v1871 = vsel %vm736, %v1579, -inf
    %v1872 = vmax.f32 %v1870, %v1871
    %v1873 = vsel %vm736, %v1583, -inf
    %v1874 = vmax.f32 %v1872, %v1873
    %v1875 = vsel %vm736, %v1589, -inf
    %v1876 = vmax.f32 %v1874, %v1875
    %v1877 = vsel %vm736, %v1593, -inf
    %v1878 = vmax.f32 %v1876, %v1877
    %v1879 = vrot.slane %v1878, 4
    %v1880 = vmax.f32 %v1878, %v1879
    %v1881 = vrot.slane %v1880, 2
    %v1882 = vmax.f32 %v1880, %v1881
    %v1883 = vrot.slane %v1882, 1
    %v1884 = vmax.f32 %v1882, %v1883
    %v1885 = vmax.f32 %v1597, %v1601
    %v1886 = vmax.f32 %v1885, %v1607
    %v1887 = vmax.f32 %v1886, %v1611
    %v1888 = vmax.f32 %v1887, %v1617
    %v1889 = vmax.f32 %v1888, %v1621
    %v1890 = vmax.f32 %v1889, %v1627
    %v1891 = vmax.f32 %v1890, %v1631
    %v1892 = vrot.slane %v1891, 4
    %v1893 = vmax.f32 %v1891, %v1892
    %v1894 = vrot.slane %v1893, 2
    %v1895 = vmax.f32 %v1893, %v1894
    %v1896 = vrot.slane %v1895, 1
    %v1897 = vmax.f32 %v1895, %v1896
    %v1898 = vsel %vm736, %v1599, -inf
    %v1899 = vsel %vm736, %v1603, -inf
    %v1900 = vmax.f32 %v1898, %v1899
    %v1901 = vsel %vm736, %v1609, -inf
    %v1902 = vmax.f32 %v1900, %v1901
    %v1903 = vsel %vm736, %v1613, -inf
    %v1904 = vmax.f32 %v1902, %v1903
    %v1905 = vsel %vm736, %v1619, -inf
    %v1906 = vmax.f32 %v1904, %v1905
    %v1907 = vsel %vm736, %v1623, -inf
    %v1908 = vmax.f32 %v1906, %v1907
    %v1909 = vsel %vm736, %v1629, -inf
    %v1910 = vmax.f32 %v1908, %v1909
    %v1911 = vsel %vm736, %v1633, -inf
    %v1912 = vmax.f32 %v1910, %v1911
    %v1913 = vrot.slane %v1912, 4
    %v1914 = vmax.f32 %v1912, %v1913
    %v1915 = vrot.slane %v1914, 2
    %v1916 = vmax.f32 %v1914, %v1915
    %v1917 = vrot.slane %v1916, 1
    %v1918 = vmax.f32 %v1916, %v1917
    %v1919 = vmax.f32 %v1637, %v1641
    %v1920 = vmax.f32 %v1919, %v1647
    %v1921 = vmax.f32 %v1920, %v1651
    %v1922 = vmax.f32 %v1921, %v1657
    %v1923 = vmax.f32 %v1922, %v1661
    %v1924 = vmax.f32 %v1923, %v1667
    %v1925 = vmax.f32 %v1924, %v1671
    %v1926 = vrot.slane %v1925, 4
    %v1927 = vmax.f32 %v1925, %v1926
    %v1928 = vrot.slane %v1927, 2
    %v1929 = vmax.f32 %v1927, %v1928
    %v1930 = vrot.slane %v1929, 1
    %v1931 = vmax.f32 %v1929, %v1930
    %v1932 = vsel %vm736, %v1639, -inf
    %v1933 = vsel %vm736, %v1643, -inf
    %v1934 = vmax.f32 %v1932, %v1933
    %v1935 = vsel %vm736, %v1649, -inf
    %v1936 = vmax.f32 %v1934, %v1935
    %v1937 = vsel %vm736, %v1653, -inf
    %v1938 = vmax.f32 %v1936, %v1937
    %v1939 = vsel %vm736, %v1659, -inf
    %v1940 = vmax.f32 %v1938, %v1939
    %v1941 = vsel %vm736, %v1663, -inf
    %v1942 = vmax.f32 %v1940, %v1941
    %v1943 = vsel %vm736, %v1669, -inf
    %v1944 = vmax.f32 %v1942, %v1943
    %v1945 = vsel %vm736, %v1673, -inf
    %v1946 = vmax.f32 %v1944, %v1945
    %v1947 = vrot.slane %v1946, 4
    %v1948 = vmax.f32 %v1946, %v1947
    %v1949 = vrot.slane %v1948, 2
    %v1950 = vmax.f32 %v1948, %v1949
    %v1951 = vrot.slane %v1950, 1
    %v1952 = vmax.f32 %v1950, %v1951
    %v1953 = vmax.f32 %v1677, %v1681
    %v1954 = vmax.f32 %v1953, %v1687
    %v1955 = vmax.f32 %v1954, %v1691
    %v1956 = vmax.f32 %v1955, %v1697
    %v1957 = vmax.f32 %v1956, %v1701
    %v1958 = vmax.f32 %v1957, %v1707
    %v1959 = vmax.f32 %v1958, %v1711
    %v1960 = vrot.slane %v1959, 4
    %v1961 = vmax.f32 %v1959, %v1960
    %v1962 = vrot.slane %v1961, 2
    %v1963 = vmax.f32 %v1961, %v1962
    %v1964 = vrot.slane %v1963, 1
    %v1965 = vmax.f32 %v1963, %v1964
    %v1966 = vsel %vm736, %v1679, -inf
    %v1967 = vsel %vm736, %v1683, -inf
    %v1968 = vmax.f32 %v1966, %v1967
    %v1969 = vsel %vm736, %v1689, -inf
    %v1970 = vmax.f32 %v1968, %v1969
    %v1971 = vsel %vm736, %v1693, -inf
    %v1972 = vmax.f32 %v1970, %v1971
    %v1973 = vsel %vm736, %v1699, -inf
    %v1974 = vmax.f32 %v1972, %v1973
    %v1975 = vsel %vm736, %v1703, -inf
    %v1976 = vmax.f32 %v1974, %v1975
    %v1977 = vsel %vm736, %v1709, -inf
    %v1978 = vmax.f32 %v1976, %v1977
    %v1979 = vsel %vm736, %v1713, -inf
    %v1980 = vmax.f32 %v1978, %v1979
    %v1981 = vrot.slane %v1980, 4
    %v1982 = vmax.f32 %v1980, %v1981
    %v1983 = vrot.slane %v1982, 2
    %v1984 = vmax.f32 %v1982, %v1983
    %v1985 = vrot.slane %v1984, 1
    %v1986 = vmax.f32 %v1984, %v1985
    %v1987 = vpack.c.bf16 %v1727, %v1727
    %v1988 = vpack.c.bf16 %v1748, %v1748
    %v1989 = vpack.c.bf16 %v1761, %v1761
    %v1990 = vpack.c.bf16 %v1782, %v1782
    %v1991 = vpack.c.bf16 %v1795, %v1795
    %v1992 = vpack.c.bf16 %v1816, %v1816
    %v1993 = vpack.c.bf16 %v1829, %v1829
    %v1994 = vpack.c.bf16 %v1850, %v1850
    %v1995 = vpack.c.bf16 %v1863, %v1863
    %v1996 = vpack.c.bf16 %v1884, %v1884
    %v1997 = vpack.c.bf16 %v1897, %v1897
    %v1998 = vpack.c.bf16 %v1918, %v1918
    %v1999 = vpack.c.bf16 %v1931, %v1931
    %v2000 = vpack.c.bf16 %v1952, %v1952
    %v2001 = vpack.c.bf16 %v1965, %v1965
    %v2002 = vpack.c.bf16 %v1986, %v1986
    %s2003 = scalar_lea.vmem %s2, 120
    %v2004 = vld [vmem:[%s2003] sm:$0xf]
    %v2005 = vld [vmem:[%s2003 + $0x4] sm:$0xf]
    %v2006 = vld [vmem:[%s2003 + $0x8] sm:$0xf]
    %v2007 = vld [vmem:[%s2003 + $0xc] sm:$0xf]
    %v2008 = vld [vmem:[%s2003 + $0x10] sm:$0xf]
    %v2009 = vld [vmem:[%s2003 + $0x14] sm:$0xf]
    %v2010 = vld [vmem:[%s2003 + $0x18] sm:$0xf]
    %v2011 = vld [vmem:[%s2003 + $0x1c] sm:$0xf]
    %v2012 = vld [vmem:[%s2003 + $0x20] sm:$0xf]
    %v2013 = vld [vmem:[%s2003 + $0x24] sm:$0xf]
    %v2014 = vld [vmem:[%s2003 + $0x28] sm:$0xf]
    %v2015 = vld [vmem:[%s2003 + $0x2c] sm:$0xf]
    %v2016 = vld [vmem:[%s2003 + $0x30] sm:$0xf]
    %v2017 = vld [vmem:[%s2003 + $0x34] sm:$0xf]
    %v2018 = vld [vmem:[%s2003 + $0x38] sm:$0xf]
    %v2019 = vld [vmem:[%s2003 + $0x3c] sm:$0xf]
    %v2020 = vld [vmem:[%s2003 + $0x40] sm:$0xf]
    %v2021 = vld [vmem:[%s2003 + $0x44] sm:$0xf]
    %v2022 = vld [vmem:[%s2003 + $0x48] sm:$0xf]
    %v2023 = vld [vmem:[%s2003 + $0x4c] sm:$0xf]
    %v2024 = vld [vmem:[%s2003 + $0x50] sm:$0xf]
    %v2025 = vld [vmem:[%s2003 + $0x54] sm:$0xf]
    %v2026 = vld [vmem:[%s2003 + $0x58] sm:$0xf]
    %v2027 = vld [vmem:[%s2003 + $0x5c] sm:$0xf]
    %v2028 = vld [vmem:[%s2003 + $0x60] sm:$0xf]
    %v2029 = vld [vmem:[%s2003 + $0x64] sm:$0xf]
    %v2030 = vld [vmem:[%s2003 + $0x68] sm:$0xf]
    %v2031 = vld [vmem:[%s2003 + $0x6c] sm:$0xf]
    %v2032 = vld [vmem:[%s2003 + $0x70] sm:$0xf]
    %v2033 = vld [vmem:[%s2003 + $0x74] sm:$0xf]
    %v2050 = vunpack.c.l.b16 %v1987
    %v2051 = vunpack.c.l.b16 %v1988
    %v2052 = vunpack.c.l.b16 %v1989
    %v2053 = vunpack.c.l.b16 %v1990
    %v2054 = vunpack.c.l.b16 %v1991
    %v2055 = vunpack.c.l.b16 %v1992
    %v2056 = vunpack.c.l.b16 %v1993
    %v2057 = vunpack.c.l.b16 %v1994
    %v2058 = vunpack.c.l.b16 %v1995
    %v2059 = vunpack.c.l.b16 %v1996
    %v2060 = vunpack.c.l.b16 %v1997
    %v2061 = vunpack.c.l.b16 %v1998
    %v2062 = vunpack.c.l.b16 %v1999
    %v2063 = vunpack.c.l.b16 %v2000
    %v2064 = vunpack.c.l.b16 %v2001
    %v2065 = vunpack.c.l.b16 %v2002
    %vm2066 = vcmask 1041409
    %v2067 = vsel %vm2066, %v2052, %v2050
    %vm2068 = vcmask 1042434
    %v2069 = vsel %vm2068, %v2054, %v2067
    %vm2070 = vcmask 1043459
    %v2071 = vsel %vm2070, %v2056, %v2069
    %vm2072 = vcmask 1044484
    %v2073 = vsel %vm2072, %v2058, %v2071
    %vm2074 = vcmask 1045509
    %v2075 = vsel %vm2074, %v2060, %v2073
    %vm2076 = vcmask 1046534
    %v2077 = vsel %vm2076, %v2062, %v2075
    %vm2078 = vcmask 1047559
    %v2079 = vsel %vm2078, %v2064, %v2077
    %v2080 = vsel %vm2066, %v2053, %v2051
    %v2081 = vsel %vm2068, %v2055, %v2080
    %v2082 = vsel %vm2070, %v2057, %v2081
    %v2083 = vsel %vm2072, %v2059, %v2082
    %v2084 = vsel %vm2074, %v2061, %v2083
    %v2085 = vsel %vm2076, %v2063, %v2084
    %v2086 = vsel %vm2078, %v2065, %v2085
    %v2087 = vpack.c.b16 %v2079, %v2079
    %v2088 = vpack.c.b16 %v2086, %v2086
    %v2120 = vunpack.c.l.b16 %v2004
    %v2121 = vunpack.c.l.b16 %v2005
    %v2122 = vunpack.c.l.b16 %v2006
    %v2123 = vunpack.c.l.b16 %v2007
    %v2124 = vunpack.c.l.b16 %v2008
    %v2125 = vunpack.c.l.b16 %v2009
    %v2126 = vunpack.c.l.b16 %v2010
    %v2127 = vunpack.c.l.b16 %v2011
    %v2128 = vunpack.c.l.b16 %v2012
    %v2129 = vunpack.c.l.b16 %v2013
    %v2130 = vunpack.c.l.b16 %v2014
    %v2131 = vunpack.c.l.b16 %v2015
    %v2132 = vunpack.c.l.b16 %v2016
    %v2133 = vunpack.c.l.b16 %v2017
    %v2134 = vunpack.c.l.b16 %v2018
    %v2135 = vunpack.c.l.b16 %v2019
    %v2136 = vunpack.c.l.b16 %v2020
    %v2137 = vunpack.c.l.b16 %v2021
    %v2138 = vunpack.c.l.b16 %v2022
    %v2139 = vunpack.c.l.b16 %v2023
    %v2140 = vunpack.c.l.b16 %v2024
    %v2141 = vunpack.c.l.b16 %v2025
    %v2142 = vunpack.c.l.b16 %v2026
    %v2143 = vunpack.c.l.b16 %v2027
    %v2144 = vunpack.c.l.b16 %v2028
    %v2145 = vunpack.c.l.b16 %v2029
    %v2146 = vunpack.c.l.b16 %v2030
    %v2147 = vunpack.c.l.b16 %v2031
    %v2148 = vunpack.c.l.b16 %v2032
    %v2149 = vunpack.c.l.b16 %v2033
    %v2150 = vpack.c.b16 %v2121, %v2120
    %v2151 = vpack.c.b16 %v2123, %v2122
    %v2152 = vpack.c.b16 %v2125, %v2124
    %v2153 = vpack.c.b16 %v2127, %v2126
    %v2154 = vpack.c.b16 %v2129, %v2128
    %v2155 = vpack.c.b16 %v2131, %v2130
    %v2156 = vpack.c.b16 %v2133, %v2132
    %v2157 = vpack.c.b16 %v2135, %v2134
    %v2158 = vpack.c.b16 %v2137, %v2136
    %v2159 = vpack.c.b16 %v2139, %v2138
    %v2160 = vpack.c.b16 %v2141, %v2140
    %v2161 = vpack.c.b16 %v2143, %v2142
    %v2162 = vpack.c.b16 %v2145, %v2144
    %v2163 = vpack.c.b16 %v2147, %v2146
    %v2164 = vpack.c.b16 %v2149, %v2148
    %v2181 = vsel %vm736, %v2088, 0
    %2183 = vmatprep.subr.bf16.mxu0 0
    %2184 = vmatpush1.bf16.msra.mxu0 %v2157
    %2185 = vmatprep.subr.bf16.mxu0 0
    %2186 = vmatpush1.bf16.msra.mxu0 %v2156
    %2187 = vmatprep.subr.bf16.mxu0 0
    %2188 = vmatpush1.bf16.msra.mxu0 %v2155
    %2189 = vmatprep.subr.bf16.mxu0 0
    %2190 = vmatpush1.bf16.msra.mxu0 %v2154
    %2191 = vmatprep.subr.bf16.mxu0 0
    %2192 = vmatpush1.bf16.msra.mxu0 %v2153
    %2193 = vmatprep.subr.bf16.mxu0 0
    %2194 = vmatpush1.bf16.msra.mxu0 %v2152
    %2195 = vmatprep.subr.bf16.mxu0 0
    %2196 = vmatpush1.bf16.msra.mxu0 %v2151
    %2197 = vmatprep.subr.bf16.mxu0 0
    %2198 = vmatpush1.bf16.msra.mxu0 %v2150
    %2199 = vmatprep.subr.bf16.mxu0 0
    %2200 = vmatpush2.bf16.msra.mxu0 0
    %2201 = vmatprep.subr.bf16.mxu0 0
    %2202 = vmatpush2.bf16.msra.mxu0 %v2164
    %2203 = vmatprep.subr.bf16.mxu0 0
    %2204 = vmatpush2.bf16.msra.mxu0 %v2163
    %2205 = vmatprep.subr.bf16.mxu0 0
    %2206 = vmatpush2.bf16.msra.mxu0 %v2162
    %2207 = vmatprep.subr.bf16.mxu0 0
    %2208 = vmatpush2.bf16.msra.mxu0 %v2161
    %2209 = vmatprep.subr.bf16.mxu0 0
    %2210 = vmatpush2.bf16.msra.mxu0 %v2160
    %2211 = vmatprep.subr.bf16.mxu0 0
    %2212 = vmatpush2.bf16.msra.mxu0 %v2159
    %2213 = vmatprep.subr.bf16.mxu0 0
    %2214 = vmatpush2.bf16.msra.mxu0 %v2158
    %2215 = vmatprep.mubr.bf16.mxu0 %v2181
    %2216 = vmatmul.mubr.bf16.gmra.mxu0 %v2087
    %v2217 = vpop.f32.mrf.mxu0
    %v2218 = vadd.f32 0.0, %v2217
    %v2219 = vpop.f32.mrf.mxu0
    %v2220 = vpop.f32.mrf.mxu0
    %v2221 = vpop.f32.mrf.mxu0
    %2222 = vdwg.mxu0
    %v2239 = vunpack.c.l.b16 %v996
    %v2240 = vunpack.c.l.b16 %v997
    %v2241 = vunpack.c.l.b16 %v998
    %v2242 = vunpack.c.l.b16 %v999
    %v2243 = vunpack.c.l.b16 %v1000
    %v2244 = vunpack.c.l.b16 %v1001
    %v2245 = vunpack.c.l.b16 %v1002
    %v2246 = vunpack.c.l.b16 %v1003
    %v2247 = vunpack.c.l.b16 %v1004
    %v2248 = vunpack.c.l.b16 %v1005
    %v2249 = vunpack.c.l.b16 %v1006
    %v2250 = vunpack.c.l.b16 %v1007
    %v2251 = vunpack.c.l.b16 %v1008
    %v2252 = vunpack.c.l.b16 %v1009
    %v2253 = vunpack.c.l.b16 %v1010
    %v2254 = vunpack.c.l.b16 %v1011
    %v2255 = vsel %vm2066, %v2241, %v2239
    %v2256 = vsel %vm2068, %v2243, %v2255
    %v2257 = vsel %vm2070, %v2245, %v2256
    %v2258 = vsel %vm2072, %v2247, %v2257
    %v2259 = vsel %vm2074, %v2249, %v2258
    %v2260 = vsel %vm2076, %v2251, %v2259
    %v2261 = vsel %vm2078, %v2253, %v2260
    %v2262 = vsel %vm2066, %v2242, %v2240
    %v2263 = vsel %vm2068, %v2244, %v2262
    %v2264 = vsel %vm2070, %v2246, %v2263
    %v2265 = vsel %vm2072, %v2248, %v2264
    %v2266 = vsel %vm2074, %v2250, %v2265
    %v2267 = vsel %vm2076, %v2252, %v2266
    %v2268 = vsel %vm2078, %v2254, %v2267
    %v2269 = vpack.c.b16 %v2261, %v2261
    %v2270 = vpack.c.b16 %v2268, %v2268
    %v2302 = vunpack.c.l.b16 %v1012
    %v2303 = vunpack.c.l.b16 %v1013
    %v2304 = vunpack.c.l.b16 %v1014
    %v2305 = vunpack.c.l.b16 %v1015
    %v2306 = vunpack.c.l.b16 %v1016
    %v2307 = vunpack.c.l.b16 %v1017
    %v2308 = vunpack.c.l.b16 %v1018
    %v2309 = vunpack.c.l.b16 %v1019
    %v2310 = vunpack.c.l.b16 %v1020
    %v2311 = vunpack.c.l.b16 %v1021
    %v2312 = vunpack.c.l.b16 %v1022
    %v2313 = vunpack.c.l.b16 %v1023
    %v2314 = vunpack.c.l.b16 %v1024
    %v2315 = vunpack.c.l.b16 %v1025
    %v2316 = vunpack.c.l.b16 %v1026
    %v2317 = vunpack.c.l.b16 %v1027
    %v2318 = vunpack.c.l.b16 %v1028
    %v2319 = vunpack.c.l.b16 %v1029
    %v2320 = vunpack.c.l.b16 %v1030
    %v2321 = vunpack.c.l.b16 %v1031
    %v2322 = vunpack.c.l.b16 %v1032
    %v2323 = vunpack.c.l.b16 %v1033
    %v2324 = vunpack.c.l.b16 %v1034
    %v2325 = vunpack.c.l.b16 %v1035
    %v2326 = vunpack.c.l.b16 %v1036
    %v2327 = vunpack.c.l.b16 %v1037
    %v2328 = vunpack.c.l.b16 %v1038
    %v2329 = vunpack.c.l.b16 %v1039
    %v2330 = vunpack.c.l.b16 %v1040
    %v2331 = vunpack.c.l.b16 %v1041
    %v2332 = vpack.c.b16 %v2303, %v2302
    %v2333 = vpack.c.b16 %v2305, %v2304
    %v2334 = vpack.c.b16 %v2307, %v2306
    %v2335 = vpack.c.b16 %v2309, %v2308
    %v2336 = vpack.c.b16 %v2311, %v2310
    %v2337 = vpack.c.b16 %v2313, %v2312
    %v2338 = vpack.c.b16 %v2315, %v2314
    %v2339 = vpack.c.b16 %v2317, %v2316
    %v2340 = vpack.c.b16 %v2319, %v2318
    %v2341 = vpack.c.b16 %v2321, %v2320
    %v2342 = vpack.c.b16 %v2323, %v2322
    %v2343 = vpack.c.b16 %v2325, %v2324
    %v2344 = vpack.c.b16 %v2327, %v2326
    %v2345 = vpack.c.b16 %v2329, %v2328
    %v2346 = vpack.c.b16 %v2331, %v2330
    %v2363 = vsel %vm736, %v2270, 0
    %2365 = vmatprep.subr.bf16.mxu0 0
    %2366 = vmatpush1.bf16.msra.mxu0 %v2339
    %2367 = vmatprep.subr.bf16.mxu0 0
    %2368 = vmatpush1.bf16.msra.mxu0 %v2338
    %2369 = vmatprep.subr.bf16.mxu0 0
    %2370 = vmatpush1.bf16.msra.mxu0 %v2337
    %2371 = vmatprep.subr.bf16.mxu0 0
    %2372 = vmatpush1.bf16.msra.mxu0 %v2336
    %2373 = vmatprep.subr.bf16.mxu0 0
    %2374 = vmatpush1.bf16.msra.mxu0 %v2335
    %2375 = vmatprep.subr.bf16.mxu0 0
    %2376 = vmatpush1.bf16.msra.mxu0 %v2334
    %2377 = vmatprep.subr.bf16.mxu0 0
    %2378 = vmatpush1.bf16.msra.mxu0 %v2333
    %2379 = vmatprep.subr.bf16.mxu0 0
    %2380 = vmatpush1.bf16.msra.mxu0 %v2332
    %2381 = vmatprep.subr.bf16.mxu0 0
    %2382 = vmatpush2.bf16.msra.mxu0 0
    %2383 = vmatprep.subr.bf16.mxu0 0
    %2384 = vmatpush2.bf16.msra.mxu0 %v2346
    %2385 = vmatprep.subr.bf16.mxu0 0
    %2386 = vmatpush2.bf16.msra.mxu0 %v2345
    %2387 = vmatprep.subr.bf16.mxu0 0
    %2388 = vmatpush2.bf16.msra.mxu0 %v2344
    %2389 = vmatprep.subr.bf16.mxu0 0
    %2390 = vmatpush2.bf16.msra.mxu0 %v2343
    %2391 = vmatprep.subr.bf16.mxu0 0
    %2392 = vmatpush2.bf16.msra.mxu0 %v2342
    %2393 = vmatprep.subr.bf16.mxu0 0
    %2394 = vmatpush2.bf16.msra.mxu0 %v2341
    %2395 = vmatprep.subr.bf16.mxu0 0
    %2396 = vmatpush2.bf16.msra.mxu0 %v2340
    %2397 = vmatprep.mubr.bf16.mxu0 %v2363
    %2398 = vmatmul.mubr.bf16.gmra.mxu0 %v2269
    %v2399 = vpop.f32.mrf.mxu0
    %v2400 = vadd.f32 %v2218, %v2399
    %v2401 = vpop.f32.mrf.mxu0
    %v2402 = vpop.f32.mrf.mxu0
    %v2403 = vpop.f32.mrf.mxu0
    %2404 = vdwg.mxu0
    %v2405 = vld [vmem:[%s0 + $0x40] sm:$0xf]
    %v2406 = vld [vmem:[%s0 + $0x44] sm:$0xf]
    %v2407 = vld [vmem:[%s0 + $0x48] sm:$0xf]
    %v2408 = vld [vmem:[%s0 + $0x4c] sm:$0xf]
    %v2409 = vld [vmem:[%s0 + $0x50] sm:$0xf]
    %v2410 = vld [vmem:[%s0 + $0x54] sm:$0xf]
    %v2411 = vld [vmem:[%s0 + $0x58] sm:$0xf]
    %v2412 = vld [vmem:[%s0 + $0x5c] sm:$0xf]
    %v2413 = vld [vmem:[%s0 + $0x160] sm:$0xf]
    %v2414 = vld [vmem:[%s0 + $0x164] sm:$0xf]
    %v2415 = vld [vmem:[%s0 + $0x168] sm:$0xf]
    %v2416 = vld [vmem:[%s0 + $0x16c] sm:$0xf]
    %v2417 = vld [vmem:[%s0 + $0x170] sm:$0xf]
    %v2418 = vld [vmem:[%s0 + $0x174] sm:$0xf]
    %v2419 = vld [vmem:[%s0 + $0x178] sm:$0xf]
    %v2420 = vld [vmem:[%s0 + $0x17c] sm:$0xf]
    %v2421 = vld [vmem:[%s0 + $0x280] sm:$0xf]
    %v2422 = vld [vmem:[%s0 + $0x284] sm:$0xf]
    %v2423 = vld [vmem:[%s0 + $0x288] sm:$0xf]
    %v2424 = vld [vmem:[%s0 + $0x28c] sm:$0xf]
    %v2425 = vld [vmem:[%s0 + $0x290] sm:$0xf]
    %v2426 = vld [vmem:[%s0 + $0x294] sm:$0xf]
    %v2427 = vld [vmem:[%s0 + $0x298] sm:$0xf]
    %v2428 = vld [vmem:[%s0 + $0x29c] sm:$0xf]
    %v2429 = vld [vmem:[%s0 + $0x3a0] sm:$0xf]
    %v2430 = vld [vmem:[%s0 + $0x3a4] sm:$0xf]
    %v2431 = vld [vmem:[%s0 + $0x3a8] sm:$0xf]
    %v2432 = vld [vmem:[%s0 + $0x3ac] sm:$0xf]
    %v2433 = vld [vmem:[%s0 + $0x3b0] sm:$0xf]
    %v2434 = vld [vmem:[%s0 + $0x3b4] sm:$0xf]
    %v2435 = vld [vmem:[%s0 + $0x3b8] sm:$0xf]
    %v2436 = vld [vmem:[%s0 + $0x3bc] sm:$0xf]
    %v2437 = vld [vmem:[%s0 + $0x4c0] sm:$0xf]
    %v2438 = vld [vmem:[%s0 + $0x4c4] sm:$0xf]
    %v2439 = vld [vmem:[%s0 + $0x4c8] sm:$0xf]
    %v2440 = vld [vmem:[%s0 + $0x4cc] sm:$0xf]
    %v2441 = vld [vmem:[%s0 + $0x4d0] sm:$0xf]
    %v2442 = vld [vmem:[%s0 + $0x4d4] sm:$0xf]
    %v2443 = vld [vmem:[%s0 + $0x4d8] sm:$0xf]
    %v2444 = vld [vmem:[%s0 + $0x4dc] sm:$0xf]
    %v2445 = vld [vmem:[%s0 + $0x5e0] sm:$0xf]
    %v2446 = vld [vmem:[%s0 + $0x5e4] sm:$0xf]
    %v2447 = vld [vmem:[%s0 + $0x5e8] sm:$0xf]
    %v2448 = vld [vmem:[%s0 + $0x5ec] sm:$0xf]
    %v2449 = vld [vmem:[%s0 + $0x5f0] sm:$0xf]
    %v2450 = vld [vmem:[%s0 + $0x5f4] sm:$0xf]
    %v2451 = vld [vmem:[%s0 + $0x5f8] sm:$0xf]
    %v2452 = vld [vmem:[%s0 + $0x5fc] sm:$0xf]
    %v2453 = vld [vmem:[%s0 + $0x700] sm:$0xf]
    %v2454 = vld [vmem:[%s0 + $0x704] sm:$0xf]
    %v2455 = vld [vmem:[%s0 + $0x708] sm:$0xf]
    %v2456 = vld [vmem:[%s0 + $0x70c] sm:$0xf]
    %v2457 = vld [vmem:[%s0 + $0x710] sm:$0xf]
    %v2458 = vld [vmem:[%s0 + $0x714] sm:$0xf]
    %v2459 = vld [vmem:[%s0 + $0x718] sm:$0xf]
    %v2460 = vld [vmem:[%s0 + $0x71c] sm:$0xf]
    %v2461 = vld [vmem:[%s0 + $0x820] sm:$0xf]
    %v2462 = vld [vmem:[%s0 + $0x824] sm:$0xf]
    %v2463 = vld [vmem:[%s0 + $0x828] sm:$0xf]
    %v2464 = vld [vmem:[%s0 + $0x82c] sm:$0xf]
    %v2465 = vld [vmem:[%s0 + $0x830] sm:$0xf]
    %v2466 = vld [vmem:[%s0 + $0x834] sm:$0xf]
    %v2467 = vld [vmem:[%s0 + $0x838] sm:$0xf]
    %v2468 = vld [vmem:[%s0 + $0x83c] sm:$0xf]
    %v2533 = vunpack.c.l.b16 %v2405
    %v2534 = vunpack.c.l.b16 %v2406
    %v2535 = vunpack.c.l.b16 %v2407
    %v2536 = vunpack.c.l.b16 %v2408
    %v2537 = vunpack.c.l.b16 %v2409
    %v2538 = vunpack.c.l.b16 %v2410
    %v2539 = vunpack.c.l.b16 %v2411
    %v2540 = vunpack.c.l.b16 %v2412
    %v2541 = vunpack.c.l.b16 %v2413
    %v2542 = vunpack.c.l.b16 %v2414
    %v2543 = vunpack.c.l.b16 %v2415
    %v2544 = vunpack.c.l.b16 %v2416
    %v2545 = vunpack.c.l.b16 %v2417
    %v2546 = vunpack.c.l.b16 %v2418
    %v2547 = vunpack.c.l.b16 %v2419
    %v2548 = vunpack.c.l.b16 %v2420
    %v2549 = vunpack.c.l.b16 %v2421
    %v2550 = vunpack.c.l.b16 %v2422
    %v2551 = vunpack.c.l.b16 %v2423
    %v2552 = vunpack.c.l.b16 %v2424
    %v2553 = vunpack.c.l.b16 %v2425
    %v2554 = vunpack.c.l.b16 %v2426
    %v2555 = vunpack.c.l.b16 %v2427
    %v2556 = vunpack.c.l.b16 %v2428
    %v2557 = vunpack.c.l.b16 %v2429
    %v2558 = vunpack.c.l.b16 %v2430
    %v2559 = vunpack.c.l.b16 %v2431
    %v2560 = vunpack.c.l.b16 %v2432
    %v2561 = vunpack.c.l.b16 %v2433
    %v2562 = vunpack.c.l.b16 %v2434
    %v2563 = vunpack.c.l.b16 %v2435
    %v2564 = vunpack.c.l.b16 %v2436
    %v2565 = vunpack.c.l.b16 %v2437
    %v2566 = vunpack.c.l.b16 %v2438
    %v2567 = vunpack.c.l.b16 %v2439
    %v2568 = vunpack.c.l.b16 %v2440
    %v2569 = vunpack.c.l.b16 %v2441
    %v2570 = vunpack.c.l.b16 %v2442
    %v2571 = vunpack.c.l.b16 %v2443
    %v2572 = vunpack.c.l.b16 %v2444
    %v2573 = vunpack.c.l.b16 %v2445
    %v2574 = vunpack.c.l.b16 %v2446
    %v2575 = vunpack.c.l.b16 %v2447
    %v2576 = vunpack.c.l.b16 %v2448
    %v2577 = vunpack.c.l.b16 %v2449
    %v2578 = vunpack.c.l.b16 %v2450
    %v2579 = vunpack.c.l.b16 %v2451
    %v2580 = vunpack.c.l.b16 %v2452
    %v2581 = vunpack.c.l.b16 %v2453
    %v2582 = vunpack.c.l.b16 %v2454
    %v2583 = vunpack.c.l.b16 %v2455
    %v2584 = vunpack.c.l.b16 %v2456
    %v2585 = vunpack.c.l.b16 %v2457
    %v2586 = vunpack.c.l.b16 %v2458
    %v2587 = vunpack.c.l.b16 %v2459
    %v2588 = vunpack.c.l.b16 %v2460
    %v2589 = vunpack.c.l.b16 %v2461
    %v2590 = vunpack.c.l.b16 %v2462
    %v2591 = vunpack.c.l.b16 %v2463
    %v2592 = vunpack.c.l.b16 %v2464
    %v2593 = vunpack.c.l.b16 %v2465
    %v2594 = vunpack.c.l.b16 %v2466
    %v2595 = vunpack.c.l.b16 %v2467
    %v2596 = vunpack.c.l.b16 %v2468
    %v2597 = vpack.c.b16 %v2534, %v2533
    %v2598 = vpack.c.b16 %v2536, %v2535
    %v2599 = vpack.c.b16 %v2538, %v2537
    %v2600 = vpack.c.b16 %v2540, %v2539
    %v2601 = vpack.c.b16 %v2542, %v2541
    %v2602 = vpack.c.b16 %v2544, %v2543
    %v2603 = vpack.c.b16 %v2546, %v2545
    %v2604 = vpack.c.b16 %v2548, %v2547
    %v2605 = vpack.c.b16 %v2550, %v2549
    %v2606 = vpack.c.b16 %v2552, %v2551
    %v2607 = vpack.c.b16 %v2554, %v2553
    %v2608 = vpack.c.b16 %v2556, %v2555
    %v2609 = vpack.c.b16 %v2558, %v2557
    %v2610 = vpack.c.b16 %v2560, %v2559
    %v2611 = vpack.c.b16 %v2562, %v2561
    %v2612 = vpack.c.b16 %v2564, %v2563
    %v2613 = vpack.c.b16 %v2566, %v2565
    %v2614 = vpack.c.b16 %v2568, %v2567
    %v2615 = vpack.c.b16 %v2570, %v2569
    %v2616 = vpack.c.b16 %v2572, %v2571
    %v2617 = vpack.c.b16 %v2574, %v2573
    %v2618 = vpack.c.b16 %v2576, %v2575
    %v2619 = vpack.c.b16 %v2578, %v2577
    %v2620 = vpack.c.b16 %v2580, %v2579
    %v2621 = vpack.c.b16 %v2582, %v2581
    %v2622 = vpack.c.b16 %v2584, %v2583
    %v2623 = vpack.c.b16 %v2586, %v2585
    %v2624 = vpack.c.b16 %v2588, %v2587
    %v2625 = vpack.c.b16 %v2590, %v2589
    %v2626 = vpack.c.b16 %v2592, %v2591
    %v2627 = vpack.c.b16 %v2594, %v2593
    %v2628 = vpack.c.b16 %v2596, %v2595
    %v2630 = vsel %vm273, %v2597, 0
    %v2633 = vsel %vm273, %v2598, 0
    %v2636 = vsel %vm273, %v2599, 0
    %v2639 = vsel %vm273, %v2600, 0
    %v2642 = vsel %vm273, %v2601, 0
    %v2645 = vsel %vm273, %v2602, 0
    %v2648 = vsel %vm273, %v2603, 0
    %v2651 = vsel %vm273, %v2604, 0
    %v2654 = vsel %vm273, %v2605, 0
    %v2657 = vsel %vm273, %v2606, 0
    %v2660 = vsel %vm273, %v2607, 0
    %v2663 = vsel %vm273, %v2608, 0
    %v2666 = vsel %vm273, %v2609, 0
    %v2669 = vsel %vm273, %v2610, 0
    %v2672 = vsel %vm273, %v2611, 0
    %v2675 = vsel %vm273, %v2612, 0
    %v2678 = vsel %vm273, %v2613, 0
    %v2681 = vsel %vm273, %v2614, 0
    %v2684 = vsel %vm273, %v2615, 0
    %v2687 = vsel %vm273, %v2616, 0
    %v2690 = vsel %vm273, %v2617, 0
    %v2693 = vsel %vm273, %v2618, 0
    %v2696 = vsel %vm273, %v2619, 0
    %v2699 = vsel %vm273, %v2620, 0
    %v2702 = vsel %vm273, %v2621, 0
    %v2705 = vsel %vm273, %v2622, 0
    %v2708 = vsel %vm273, %v2623, 0
    %v2711 = vsel %vm273, %v2624, 0
    %v2714 = vsel %vm273, %v2625, 0
    %v2717 = vsel %vm273, %v2626, 0
    %v2720 = vsel %vm273, %v2627, 0
    %v2723 = vsel %vm273, %v2628, 0
    %2725 = vmatprep.subr.bf16.mxu0 0
    %2726 = vmatpush1.bf16.msra.mxu0 0
    %2727 = vmatprep.subr.bf16.mxu0 0
    %2728 = vmatpush1.bf16.msra.mxu0 0
    %2729 = vmatprep.subr.bf16.mxu0 0
    %2730 = vmatpush1.bf16.msra.mxu0 0
    %2731 = vmatprep.subr.bf16.mxu0 0
    %2732 = vmatpush1.bf16.msra.mxu0 0
    %2733 = vmatprep.subr.bf16.mxu0 0
    %2734 = vmatpush1.bf16.msra.mxu0 0
    %2735 = vmatprep.subr.bf16.mxu0 0
    %2736 = vmatpush1.bf16.msra.mxu0 0
    %2737 = vmatprep.subr.bf16.mxu0 %v268
    %2738 = vmatpush1.bf16.msra.mxu0 %v267
    %2739 = vmatprep.subr.bf16.mxu0 %v266
    %2740 = vmatpush1.bf16.msra.mxu0 %v265
    %2741 = vmatprep.subr.bf16.mxu0 0
    %2742 = vmatpush2.bf16.msra.mxu0 0
    %2743 = vmatprep.subr.bf16.mxu0 0
    %2744 = vmatpush2.bf16.msra.mxu0 0
    %2745 = vmatprep.subr.bf16.mxu0 0
    %2746 = vmatpush2.bf16.msra.mxu0 0
    %2747 = vmatprep.subr.bf16.mxu0 0
    %2748 = vmatpush2.bf16.msra.mxu0 0
    %2749 = vmatprep.subr.bf16.mxu0 0
    %2750 = vmatpush2.bf16.msra.mxu0 0
    %2751 = vmatprep.subr.bf16.mxu0 0
    %2752 = vmatpush2.bf16.msra.mxu0 0
    %2753 = vmatprep.subr.bf16.mxu0 0
    %2754 = vmatpush2.bf16.msra.mxu0 0
    %2755 = vmatprep.subr.bf16.mxu0 0
    %2756 = vmatpush2.bf16.msra.mxu0 0
    %2757 = vmatprep.mubr.bf16.mxu0 0
    %2758 = vmatmul.mubr.bf16.gmra.mxu0 %v2630
    %v2759 = vpop.f32.mrf.mxu0
    %v2760 = vadd.f32 0.0, %v2759
    %v2761 = vpop.f32.mrf.mxu0
    %v2762 = vadd.f32 0.0, %v2761
    %v2763 = vpop.f32.mrf.mxu0
    %v2764 = vadd.f32 0.0, %v2763
    %v2765 = vpop.f32.mrf.mxu0
    %v2766 = vadd.f32 0.0, %v2765
    %2767 = vmatprep.mubr.bf16.mxu0 0
    %2768 = vmatmul.mubr.bf16.gmra.mxu0 %v2633
    %v2769 = vpop.f32.mrf.mxu0
    %v2770 = vadd.f32 0.0, %v2769
    %v2771 = vpop.f32.mrf.mxu0
    %v2772 = vadd.f32 0.0, %v2771
    %v2773 = vpop.f32.mrf.mxu0
    %v2774 = vadd.f32 0.0, %v2773
    %v2775 = vpop.f32.mrf.mxu0
    %v2776 = vadd.f32 0.0, %v2775
    %2777 = vmatprep.mubr.bf16.mxu0 0
    %2778 = vmatmul.mubr.bf16.gmra.mxu0 %v2636
    %v2779 = vpop.f32.mrf.mxu0
    %v2780 = vadd.f32 0.0, %v2779
    %v2781 = vpop.f32.mrf.mxu0
    %v2782 = vadd.f32 0.0, %v2781
    %v2783 = vpop.f32.mrf.mxu0
    %v2784 = vadd.f32 0.0, %v2783
    %v2785 = vpop.f32.mrf.mxu0
    %v2786 = vadd.f32 0.0, %v2785
    %2787 = vmatprep.mubr.bf16.mxu0 0
    %2788 = vmatmul.mubr.bf16.gmra.mxu0 %v2639
    %v2789 = vpop.f32.mrf.mxu0
    %v2790 = vadd.f32 0.0, %v2789
    %v2791 = vpop.f32.mrf.mxu0
    %v2792 = vadd.f32 0.0, %v2791
    %v2793 = vpop.f32.mrf.mxu0
    %v2794 = vadd.f32 0.0, %v2793
    %v2795 = vpop.f32.mrf.mxu0
    %v2796 = vadd.f32 0.0, %v2795
    %2797 = vmatprep.mubr.bf16.mxu0 0
    %2798 = vmatmul.mubr.bf16.gmra.mxu0 %v2642
    %v2799 = vpop.f32.mrf.mxu0
    %v2800 = vadd.f32 0.0, %v2799
    %v2801 = vpop.f32.mrf.mxu0
    %v2802 = vadd.f32 0.0, %v2801
    %v2803 = vpop.f32.mrf.mxu0
    %v2804 = vadd.f32 0.0, %v2803
    %v2805 = vpop.f32.mrf.mxu0
    %v2806 = vadd.f32 0.0, %v2805
    %2807 = vmatprep.mubr.bf16.mxu0 0
    %2808 = vmatmul.mubr.bf16.gmra.mxu0 %v2645
    %v2809 = vpop.f32.mrf.mxu0
    %v2810 = vadd.f32 0.0, %v2809
    %v2811 = vpop.f32.mrf.mxu0
    %v2812 = vadd.f32 0.0, %v2811
    %v2813 = vpop.f32.mrf.mxu0
    %v2814 = vadd.f32 0.0, %v2813
    %v2815 = vpop.f32.mrf.mxu0
    %v2816 = vadd.f32 0.0, %v2815
    %2817 = vmatprep.mubr.bf16.mxu0 0
    %2818 = vmatmul.mubr.bf16.gmra.mxu0 %v2648
    %v2819 = vpop.f32.mrf.mxu0
    %v2820 = vadd.f32 0.0, %v2819
    %v2821 = vpop.f32.mrf.mxu0
    %v2822 = vadd.f32 0.0, %v2821
    %v2823 = vpop.f32.mrf.mxu0
    %v2824 = vadd.f32 0.0, %v2823
    %v2825 = vpop.f32.mrf.mxu0
    %v2826 = vadd.f32 0.0, %v2825
    %2827 = vmatprep.mubr.bf16.mxu0 0
    %2828 = vmatmul.mubr.bf16.gmra.mxu0 %v2651
    %v2829 = vpop.f32.mrf.mxu0
    %v2830 = vadd.f32 0.0, %v2829
    %v2831 = vpop.f32.mrf.mxu0
    %v2832 = vadd.f32 0.0, %v2831
    %v2833 = vpop.f32.mrf.mxu0
    %v2834 = vadd.f32 0.0, %v2833
    %v2835 = vpop.f32.mrf.mxu0
    %v2836 = vadd.f32 0.0, %v2835
    %2837 = vmatprep.mubr.bf16.mxu0 0
    %2838 = vmatmul.mubr.bf16.gmra.mxu0 %v2654
    %v2839 = vpop.f32.mrf.mxu0
    %v2840 = vadd.f32 0.0, %v2839
    %v2841 = vpop.f32.mrf.mxu0
    %v2842 = vadd.f32 0.0, %v2841
    %v2843 = vpop.f32.mrf.mxu0
    %v2844 = vadd.f32 0.0, %v2843
    %v2845 = vpop.f32.mrf.mxu0
    %v2846 = vadd.f32 0.0, %v2845
    %2847 = vmatprep.mubr.bf16.mxu0 0
    %2848 = vmatmul.mubr.bf16.gmra.mxu0 %v2657
    %v2849 = vpop.f32.mrf.mxu0
    %v2850 = vadd.f32 0.0, %v2849
    %v2851 = vpop.f32.mrf.mxu0
    %v2852 = vadd.f32 0.0, %v2851
    %v2853 = vpop.f32.mrf.mxu0
    %v2854 = vadd.f32 0.0, %v2853
    %v2855 = vpop.f32.mrf.mxu0
    %v2856 = vadd.f32 0.0, %v2855
    %2857 = vmatprep.mubr.bf16.mxu0 0
    %2858 = vmatmul.mubr.bf16.gmra.mxu0 %v2660
    %v2859 = vpop.f32.mrf.mxu0
    %v2860 = vadd.f32 0.0, %v2859
    %v2861 = vpop.f32.mrf.mxu0
    %v2862 = vadd.f32 0.0, %v2861
    %v2863 = vpop.f32.mrf.mxu0
    %v2864 = vadd.f32 0.0, %v2863
    %v2865 = vpop.f32.mrf.mxu0
    %v2866 = vadd.f32 0.0, %v2865
    %2867 = vmatprep.mubr.bf16.mxu0 0
    %2868 = vmatmul.mubr.bf16.gmra.mxu0 %v2663
    %v2869 = vpop.f32.mrf.mxu0
    %v2870 = vadd.f32 0.0, %v2869
    %v2871 = vpop.f32.mrf.mxu0
    %v2872 = vadd.f32 0.0, %v2871
    %v2873 = vpop.f32.mrf.mxu0
    %v2874 = vadd.f32 0.0, %v2873
    %v2875 = vpop.f32.mrf.mxu0
    %v2876 = vadd.f32 0.0, %v2875
    %2877 = vmatprep.mubr.bf16.mxu0 0
    %2878 = vmatmul.mubr.bf16.gmra.mxu0 %v2666
    %v2879 = vpop.f32.mrf.mxu0
    %v2880 = vadd.f32 0.0, %v2879
    %v2881 = vpop.f32.mrf.mxu0
    %v2882 = vadd.f32 0.0, %v2881
    %v2883 = vpop.f32.mrf.mxu0
    %v2884 = vadd.f32 0.0, %v2883
    %v2885 = vpop.f32.mrf.mxu0
    %v2886 = vadd.f32 0.0, %v2885
    %2887 = vmatprep.mubr.bf16.mxu0 0
    %2888 = vmatmul.mubr.bf16.gmra.mxu0 %v2669
    %v2889 = vpop.f32.mrf.mxu0
    %v2890 = vadd.f32 0.0, %v2889
    %v2891 = vpop.f32.mrf.mxu0
    %v2892 = vadd.f32 0.0, %v2891
    %v2893 = vpop.f32.mrf.mxu0
    %v2894 = vadd.f32 0.0, %v2893
    %v2895 = vpop.f32.mrf.mxu0
    %v2896 = vadd.f32 0.0, %v2895
    %2897 = vmatprep.mubr.bf16.mxu0 0
    %2898 = vmatmul.mubr.bf16.gmra.mxu0 %v2672
    %v2899 = vpop.f32.mrf.mxu0
    %v2900 = vadd.f32 0.0, %v2899
    %v2901 = vpop.f32.mrf.mxu0
    %v2902 = vadd.f32 0.0, %v2901
    %v2903 = vpop.f32.mrf.mxu0
    %v2904 = vadd.f32 0.0, %v2903
    %v2905 = vpop.f32.mrf.mxu0
    %v2906 = vadd.f32 0.0, %v2905
    %2907 = vmatprep.mubr.bf16.mxu0 0
    %2908 = vmatmul.mubr.bf16.gmra.mxu0 %v2675
    %v2909 = vpop.f32.mrf.mxu0
    %v2910 = vadd.f32 0.0, %v2909
    %v2911 = vpop.f32.mrf.mxu0
    %v2912 = vadd.f32 0.0, %v2911
    %v2913 = vpop.f32.mrf.mxu0
    %v2914 = vadd.f32 0.0, %v2913
    %v2915 = vpop.f32.mrf.mxu0
    %v2916 = vadd.f32 0.0, %v2915
    %2917 = vmatprep.mubr.bf16.mxu0 0
    %2918 = vmatmul.mubr.bf16.gmra.mxu0 %v2678
    %v2919 = vpop.f32.mrf.mxu0
    %v2920 = vadd.f32 0.0, %v2919
    %v2921 = vpop.f32.mrf.mxu0
    %v2922 = vadd.f32 0.0, %v2921
    %v2923 = vpop.f32.mrf.mxu0
    %v2924 = vadd.f32 0.0, %v2923
    %v2925 = vpop.f32.mrf.mxu0
    %v2926 = vadd.f32 0.0, %v2925
    %2927 = vmatprep.mubr.bf16.mxu0 0
    %2928 = vmatmul.mubr.bf16.gmra.mxu0 %v2681
    %v2929 = vpop.f32.mrf.mxu0
    %v2930 = vadd.f32 0.0, %v2929
    %v2931 = vpop.f32.mrf.mxu0
    %v2932 = vadd.f32 0.0, %v2931
    %v2933 = vpop.f32.mrf.mxu0
    %v2934 = vadd.f32 0.0, %v2933
    %v2935 = vpop.f32.mrf.mxu0
    %v2936 = vadd.f32 0.0, %v2935
    %2937 = vmatprep.mubr.bf16.mxu0 0
    %2938 = vmatmul.mubr.bf16.gmra.mxu0 %v2684
    %v2939 = vpop.f32.mrf.mxu0
    %v2940 = vadd.f32 0.0, %v2939
    %v2941 = vpop.f32.mrf.mxu0
    %v2942 = vadd.f32 0.0, %v2941
    %v2943 = vpop.f32.mrf.mxu0
    %v2944 = vadd.f32 0.0, %v2943
    %v2945 = vpop.f32.mrf.mxu0
    %v2946 = vadd.f32 0.0, %v2945
    %2947 = vmatprep.mubr.bf16.mxu0 0
    %2948 = vmatmul.mubr.bf16.gmra.mxu0 %v2687
    %v2949 = vpop.f32.mrf.mxu0
    %v2950 = vadd.f32 0.0, %v2949
    %v2951 = vpop.f32.mrf.mxu0
    %v2952 = vadd.f32 0.0, %v2951
    %v2953 = vpop.f32.mrf.mxu0
    %v2954 = vadd.f32 0.0, %v2953
    %v2955 = vpop.f32.mrf.mxu0
    %v2956 = vadd.f32 0.0, %v2955
    %2957 = vmatprep.mubr.bf16.mxu0 0
    %2958 = vmatmul.mubr.bf16.gmra.mxu0 %v2690
    %v2959 = vpop.f32.mrf.mxu0
    %v2960 = vadd.f32 0.0, %v2959
    %v2961 = vpop.f32.mrf.mxu0
    %v2962 = vadd.f32 0.0, %v2961
    %v2963 = vpop.f32.mrf.mxu0
    %v2964 = vadd.f32 0.0, %v2963
    %v2965 = vpop.f32.mrf.mxu0
    %v2966 = vadd.f32 0.0, %v2965
    %2967 = vmatprep.mubr.bf16.mxu0 0
    %2968 = vmatmul.mubr.bf16.gmra.mxu0 %v2693
    %v2969 = vpop.f32.mrf.mxu0
    %v2970 = vadd.f32 0.0, %v2969
    %v2971 = vpop.f32.mrf.mxu0
    %v2972 = vadd.f32 0.0, %v2971
    %v2973 = vpop.f32.mrf.mxu0
    %v2974 = vadd.f32 0.0, %v2973
    %v2975 = vpop.f32.mrf.mxu0
    %v2976 = vadd.f32 0.0, %v2975
    %2977 = vmatprep.mubr.bf16.mxu0 0
    %2978 = vmatmul.mubr.bf16.gmra.mxu0 %v2696
    %v2979 = vpop.f32.mrf.mxu0
    %v2980 = vadd.f32 0.0, %v2979
    %v2981 = vpop.f32.mrf.mxu0
    %v2982 = vadd.f32 0.0, %v2981
    %v2983 = vpop.f32.mrf.mxu0
    %v2984 = vadd.f32 0.0, %v2983
    %v2985 = vpop.f32.mrf.mxu0
    %v2986 = vadd.f32 0.0, %v2985
    %2987 = vmatprep.mubr.bf16.mxu0 0
    %2988 = vmatmul.mubr.bf16.gmra.mxu0 %v2699
    %v2989 = vpop.f32.mrf.mxu0
    %v2990 = vadd.f32 0.0, %v2989
    %v2991 = vpop.f32.mrf.mxu0
    %v2992 = vadd.f32 0.0, %v2991
    %v2993 = vpop.f32.mrf.mxu0
    %v2994 = vadd.f32 0.0, %v2993
    %v2995 = vpop.f32.mrf.mxu0
    %v2996 = vadd.f32 0.0, %v2995
    %2997 = vmatprep.mubr.bf16.mxu0 0
    %2998 = vmatmul.mubr.bf16.gmra.mxu0 %v2702
    %v2999 = vpop.f32.mrf.mxu0
    %v3000 = vadd.f32 0.0, %v2999
    %v3001 = vpop.f32.mrf.mxu0
    %v3002 = vadd.f32 0.0, %v3001
    %v3003 = vpop.f32.mrf.mxu0
    %v3004 = vadd.f32 0.0, %v3003
    %v3005 = vpop.f32.mrf.mxu0
    %v3006 = vadd.f32 0.0, %v3005
    %3007 = vmatprep.mubr.bf16.mxu0 0
    %3008 = vmatmul.mubr.bf16.gmra.mxu0 %v2705
    %v3009 = vpop.f32.mrf.mxu0
    %v3010 = vadd.f32 0.0, %v3009
    %v3011 = vpop.f32.mrf.mxu0
    %v3012 = vadd.f32 0.0, %v3011
    %v3013 = vpop.f32.mrf.mxu0
    %v3014 = vadd.f32 0.0, %v3013
    %v3015 = vpop.f32.mrf.mxu0
    %v3016 = vadd.f32 0.0, %v3015
    %3017 = vmatprep.mubr.bf16.mxu0 0
    %3018 = vmatmul.mubr.bf16.gmra.mxu0 %v2708
    %v3019 = vpop.f32.mrf.mxu0
    %v3020 = vadd.f32 0.0, %v3019
    %v3021 = vpop.f32.mrf.mxu0
    %v3022 = vadd.f32 0.0, %v3021
    %v3023 = vpop.f32.mrf.mxu0
    %v3024 = vadd.f32 0.0, %v3023
    %v3025 = vpop.f32.mrf.mxu0
    %v3026 = vadd.f32 0.0, %v3025
    %3027 = vmatprep.mubr.bf16.mxu0 0
    %3028 = vmatmul.mubr.bf16.gmra.mxu0 %v2711
    %v3029 = vpop.f32.mrf.mxu0
    %v3030 = vadd.f32 0.0, %v3029
    %v3031 = vpop.f32.mrf.mxu0
    %v3032 = vadd.f32 0.0, %v3031
    %v3033 = vpop.f32.mrf.mxu0
    %v3034 = vadd.f32 0.0, %v3033
    %v3035 = vpop.f32.mrf.mxu0
    %v3036 = vadd.f32 0.0, %v3035
    %3037 = vmatprep.mubr.bf16.mxu0 0
    %3038 = vmatmul.mubr.bf16.gmra.mxu0 %v2714
    %v3039 = vpop.f32.mrf.mxu0
    %v3040 = vadd.f32 0.0, %v3039
    %v3041 = vpop.f32.mrf.mxu0
    %v3042 = vadd.f32 0.0, %v3041
    %v3043 = vpop.f32.mrf.mxu0
    %v3044 = vadd.f32 0.0, %v3043
    %v3045 = vpop.f32.mrf.mxu0
    %v3046 = vadd.f32 0.0, %v3045
    %3047 = vmatprep.mubr.bf16.mxu0 0
    %3048 = vmatmul.mubr.bf16.gmra.mxu0 %v2717
    %v3049 = vpop.f32.mrf.mxu0
    %v3050 = vadd.f32 0.0, %v3049
    %v3051 = vpop.f32.mrf.mxu0
    %v3052 = vadd.f32 0.0, %v3051
    %v3053 = vpop.f32.mrf.mxu0
    %v3054 = vadd.f32 0.0, %v3053
    %v3055 = vpop.f32.mrf.mxu0
    %v3056 = vadd.f32 0.0, %v3055
    %3057 = vmatprep.mubr.bf16.mxu0 0
    %3058 = vmatmul.mubr.bf16.gmra.mxu0 %v2720
    %v3059 = vpop.f32.mrf.mxu0
    %v3060 = vadd.f32 0.0, %v3059
    %v3061 = vpop.f32.mrf.mxu0
    %v3062 = vadd.f32 0.0, %v3061
    %v3063 = vpop.f32.mrf.mxu0
    %v3064 = vadd.f32 0.0, %v3063
    %v3065 = vpop.f32.mrf.mxu0
    %v3066 = vadd.f32 0.0, %v3065
    %3067 = vmatprep.mubr.bf16.mxu0 0
    %3068 = vmatmul.mubr.bf16.gmra.mxu0 %v2723
    %v3069 = vpop.f32.mrf.mxu0
    %v3070 = vadd.f32 0.0, %v3069
    %v3071 = vpop.f32.mrf.mxu0
    %v3072 = vadd.f32 0.0, %v3071
    %v3073 = vpop.f32.mrf.mxu0
    %v3074 = vadd.f32 0.0, %v3073
    %v3075 = vpop.f32.mrf.mxu0
    %v3076 = vadd.f32 0.0, %v3075
    %3077 = vdwg.mxu0
    %v3078 = vmax.f32 %v2760, %v2764
    %v3079 = vmax.f32 %v3078, %v2770
    %v3080 = vmax.f32 %v3079, %v2774
    %v3081 = vmax.f32 %v3080, %v2780
    %v3082 = vmax.f32 %v3081, %v2784
    %v3083 = vmax.f32 %v3082, %v2790
    %v3084 = vmax.f32 %v3083, %v2794
    %v3085 = vrot.slane %v3084, 4
    %v3086 = vmax.f32 %v3084, %v3085
    %v3087 = vrot.slane %v3086, 2
    %v3088 = vmax.f32 %v3086, %v3087
    %v3089 = vrot.slane %v3088, 1
    %v3090 = vmax.f32 %v3088, %v3089
    %v3091 = vsel %vm736, %v2762, -inf
    %v3092 = vsel %vm736, %v2766, -inf
    %v3093 = vmax.f32 %v3091, %v3092
    %v3094 = vsel %vm736, %v2772, -inf
    %v3095 = vmax.f32 %v3093, %v3094
    %v3096 = vsel %vm736, %v2776, -inf
    %v3097 = vmax.f32 %v3095, %v3096
    %v3098 = vsel %vm736, %v2782, -inf
    %v3099 = vmax.f32 %v3097, %v3098
    %v3100 = vsel %vm736, %v2786, -inf
    %v3101 = vmax.f32 %v3099, %v3100
    %v3102 = vsel %vm736, %v2792, -inf
    %v3103 = vmax.f32 %v3101, %v3102
    %v3104 = vsel %vm736, %v2796, -inf
    %v3105 = vmax.f32 %v3103, %v3104
    %v3106 = vrot.slane %v3105, 4
    %v3107 = vmax.f32 %v3105, %v3106
    %v3108 = vrot.slane %v3107, 2
    %v3109 = vmax.f32 %v3107, %v3108
    %v3110 = vrot.slane %v3109, 1
    %v3111 = vmax.f32 %v3109, %v3110
    %v3112 = vmax.f32 %v2800, %v2804
    %v3113 = vmax.f32 %v3112, %v2810
    %v3114 = vmax.f32 %v3113, %v2814
    %v3115 = vmax.f32 %v3114, %v2820
    %v3116 = vmax.f32 %v3115, %v2824
    %v3117 = vmax.f32 %v3116, %v2830
    %v3118 = vmax.f32 %v3117, %v2834
    %v3119 = vrot.slane %v3118, 4
    %v3120 = vmax.f32 %v3118, %v3119
    %v3121 = vrot.slane %v3120, 2
    %v3122 = vmax.f32 %v3120, %v3121
    %v3123 = vrot.slane %v3122, 1
    %v3124 = vmax.f32 %v3122, %v3123
    %v3125 = vsel %vm736, %v2802, -inf
    %v3126 = vsel %vm736, %v2806, -inf
    %v3127 = vmax.f32 %v3125, %v3126
    %v3128 = vsel %vm736, %v2812, -inf
    %v3129 = vmax.f32 %v3127, %v3128
    %v3130 = vsel %vm736, %v2816, -inf
    %v3131 = vmax.f32 %v3129, %v3130
    %v3132 = vsel %vm736, %v2822, -inf
    %v3133 = vmax.f32 %v3131, %v3132
    %v3134 = vsel %vm736, %v2826, -inf
    %v3135 = vmax.f32 %v3133, %v3134
    %v3136 = vsel %vm736, %v2832, -inf
    %v3137 = vmax.f32 %v3135, %v3136
    %v3138 = vsel %vm736, %v2836, -inf
    %v3139 = vmax.f32 %v3137, %v3138
    %v3140 = vrot.slane %v3139, 4
    %v3141 = vmax.f32 %v3139, %v3140
    %v3142 = vrot.slane %v3141, 2
    %v3143 = vmax.f32 %v3141, %v3142
    %v3144 = vrot.slane %v3143, 1
    %v3145 = vmax.f32 %v3143, %v3144
    %v3146 = vmax.f32 %v2840, %v2844
    %v3147 = vmax.f32 %v3146, %v2850
    %v3148 = vmax.f32 %v3147, %v2854
    %v3149 = vmax.f32 %v3148, %v2860
    %v3150 = vmax.f32 %v3149, %v2864
    %v3151 = vmax.f32 %v3150, %v2870
    %v3152 = vmax.f32 %v3151, %v2874
    %v3153 = vrot.slane %v3152, 4
    %v3154 = vmax.f32 %v3152, %v3153
    %v3155 = vrot.slane %v3154, 2
    %v3156 = vmax.f32 %v3154, %v3155
    %v3157 = vrot.slane %v3156, 1
    %v3158 = vmax.f32 %v3156, %v3157
    %v3159 = vsel %vm736, %v2842, -inf
    %v3160 = vsel %vm736, %v2846, -inf
    %v3161 = vmax.f32 %v3159, %v3160
    %v3162 = vsel %vm736, %v2852, -inf
    %v3163 = vmax.f32 %v3161, %v3162
    %v3164 = vsel %vm736, %v2856, -inf
    %v3165 = vmax.f32 %v3163, %v3164
    %v3166 = vsel %vm736, %v2862, -inf
    %v3167 = vmax.f32 %v3165, %v3166
    %v3168 = vsel %vm736, %v2866, -inf
    %v3169 = vmax.f32 %v3167, %v3168
    %v3170 = vsel %vm736, %v2872, -inf
    %v3171 = vmax.f32 %v3169, %v3170
    %v3172 = vsel %vm736, %v2876, -inf
    %v3173 = vmax.f32 %v3171, %v3172
    %v3174 = vrot.slane %v3173, 4
    %v3175 = vmax.f32 %v3173, %v3174
    %v3176 = vrot.slane %v3175, 2
    %v3177 = vmax.f32 %v3175, %v3176
    %v3178 = vrot.slane %v3177, 1
    %v3179 = vmax.f32 %v3177, %v3178
    %v3180 = vmax.f32 %v2880, %v2884
    %v3181 = vmax.f32 %v3180, %v2890
    %v3182 = vmax.f32 %v3181, %v2894
    %v3183 = vmax.f32 %v3182, %v2900
    %v3184 = vmax.f32 %v3183, %v2904
    %v3185 = vmax.f32 %v3184, %v2910
    %v3186 = vmax.f32 %v3185, %v2914
    %v3187 = vrot.slane %v3186, 4
    %v3188 = vmax.f32 %v3186, %v3187
    %v3189 = vrot.slane %v3188, 2
    %v3190 = vmax.f32 %v3188, %v3189
    %v3191 = vrot.slane %v3190, 1
    %v3192 = vmax.f32 %v3190, %v3191
    %v3193 = vsel %vm736, %v2882, -inf
    %v3194 = vsel %vm736, %v2886, -inf
    %v3195 = vmax.f32 %v3193, %v3194
    %v3196 = vsel %vm736, %v2892, -inf
    %v3197 = vmax.f32 %v3195, %v3196
    %v3198 = vsel %vm736, %v2896, -inf
    %v3199 = vmax.f32 %v3197, %v3198
    %v3200 = vsel %vm736, %v2902, -inf
    %v3201 = vmax.f32 %v3199, %v3200
    %v3202 = vsel %vm736, %v2906, -inf
    %v3203 = vmax.f32 %v3201, %v3202
    %v3204 = vsel %vm736, %v2912, -inf
    %v3205 = vmax.f32 %v3203, %v3204
    %v3206 = vsel %vm736, %v2916, -inf
    %v3207 = vmax.f32 %v3205, %v3206
    %v3208 = vrot.slane %v3207, 4
    %v3209 = vmax.f32 %v3207, %v3208
    %v3210 = vrot.slane %v3209, 2
    %v3211 = vmax.f32 %v3209, %v3210
    %v3212 = vrot.slane %v3211, 1
    %v3213 = vmax.f32 %v3211, %v3212
    %v3214 = vmax.f32 %v2920, %v2924
    %v3215 = vmax.f32 %v3214, %v2930
    %v3216 = vmax.f32 %v3215, %v2934
    %v3217 = vmax.f32 %v3216, %v2940
    %v3218 = vmax.f32 %v3217, %v2944
    %v3219 = vmax.f32 %v3218, %v2950
    %v3220 = vmax.f32 %v3219, %v2954
    %v3221 = vrot.slane %v3220, 4
    %v3222 = vmax.f32 %v3220, %v3221
    %v3223 = vrot.slane %v3222, 2
    %v3224 = vmax.f32 %v3222, %v3223
    %v3225 = vrot.slane %v3224, 1
    %v3226 = vmax.f32 %v3224, %v3225
    %v3227 = vsel %vm736, %v2922, -inf
    %v3228 = vsel %vm736, %v2926, -inf
    %v3229 = vmax.f32 %v3227, %v3228
    %v3230 = vsel %vm736, %v2932, -inf
    %v3231 = vmax.f32 %v3229, %v3230
    %v3232 = vsel %vm736, %v2936, -inf
    %v3233 = vmax.f32 %v3231, %v3232
    %v3234 = vsel %vm736, %v2942, -inf
    %v3235 = vmax.f32 %v3233, %v3234
    %v3236 = vsel %vm736, %v2946, -inf
    %v3237 = vmax.f32 %v3235, %v3236
    %v3238 = vsel %vm736, %v2952, -inf
    %v3239 = vmax.f32 %v3237, %v3238
    %v3240 = vsel %vm736, %v2956, -inf
    %v3241 = vmax.f32 %v3239, %v3240
    %v3242 = vrot.slane %v3241, 4
    %v3243 = vmax.f32 %v3241, %v3242
    %v3244 = vrot.slane %v3243, 2
    %v3245 = vmax.f32 %v3243, %v3244
    %v3246 = vrot.slane %v3245, 1
    %v3247 = vmax.f32 %v3245, %v3246
    %v3248 = vmax.f32 %v2960, %v2964
    %v3249 = vmax.f32 %v3248, %v2970
    %v3250 = vmax.f32 %v3249, %v2974
    %v3251 = vmax.f32 %v3250, %v2980
    %v3252 = vmax.f32 %v3251, %v2984
    %v3253 = vmax.f32 %v3252, %v2990
    %v3254 = vmax.f32 %v3253, %v2994
    %v3255 = vrot.slane %v3254, 4
    %v3256 = vmax.f32 %v3254, %v3255
    %v3257 = vrot.slane %v3256, 2
    %v3258 = vmax.f32 %v3256, %v3257
    %v3259 = vrot.slane %v3258, 1
    %v3260 = vmax.f32 %v3258, %v3259
    %v3261 = vsel %vm736, %v2962, -inf
    %v3262 = vsel %vm736, %v2966, -inf
    %v3263 = vmax.f32 %v3261, %v3262
    %v3264 = vsel %vm736, %v2972, -inf
    %v3265 = vmax.f32 %v3263, %v3264
    %v3266 = vsel %vm736, %v2976, -inf
    %v3267 = vmax.f32 %v3265, %v3266
    %v3268 = vsel %vm736, %v2982, -inf
    %v3269 = vmax.f32 %v3267, %v3268
    %v3270 = vsel %vm736, %v2986, -inf
    %v3271 = vmax.f32 %v3269, %v3270
    %v3272 = vsel %vm736, %v2992, -inf
    %v3273 = vmax.f32 %v3271, %v3272
    %v3274 = vsel %vm736, %v2996, -inf
    %v3275 = vmax.f32 %v3273, %v3274
    %v3276 = vrot.slane %v3275, 4
    %v3277 = vmax.f32 %v3275, %v3276
    %v3278 = vrot.slane %v3277, 2
    %v3279 = vmax.f32 %v3277, %v3278
    %v3280 = vrot.slane %v3279, 1
    %v3281 = vmax.f32 %v3279, %v3280
    %v3282 = vmax.f32 %v3000, %v3004
    %v3283 = vmax.f32 %v3282, %v3010
    %v3284 = vmax.f32 %v3283, %v3014
    %v3285 = vmax.f32 %v3284, %v3020
    %v3286 = vmax.f32 %v3285, %v3024
    %v3287 = vmax.f32 %v3286, %v3030
    %v3288 = vmax.f32 %v3287, %v3034
    %v3289 = vrot.slane %v3288, 4
    %v3290 = vmax.f32 %v3288, %v3289
    %v3291 = vrot.slane %v3290, 2
    %v3292 = vmax.f32 %v3290, %v3291
    %v3293 = vrot.slane %v3292, 1
    %v3294 = vmax.f32 %v3292, %v3293
    %v3295 = vsel %vm736, %v3002, -inf
    %v3296 = vsel %vm736, %v3006, -inf
    %v3297 = vmax.f32 %v3295, %v3296
    %v3298 = vsel %vm736, %v3012, -inf
    %v3299 = vmax.f32 %v3297, %v3298
    %v3300 = vsel %vm736, %v3016, -inf
    %v3301 = vmax.f32 %v3299, %v3300
    %v3302 = vsel %vm736, %v3022, -inf
    %v3303 = vmax.f32 %v3301, %v3302
    %v3304 = vsel %vm736, %v3026, -inf
    %v3305 = vmax.f32 %v3303, %v3304
    %v3306 = vsel %vm736, %v3032, -inf
    %v3307 = vmax.f32 %v3305, %v3306
    %v3308 = vsel %vm736, %v3036, -inf
    %v3309 = vmax.f32 %v3307, %v3308
    %v3310 = vrot.slane %v3309, 4
    %v3311 = vmax.f32 %v3309, %v3310
    %v3312 = vrot.slane %v3311, 2
    %v3313 = vmax.f32 %v3311, %v3312
    %v3314 = vrot.slane %v3313, 1
    %v3315 = vmax.f32 %v3313, %v3314
    %v3316 = vmax.f32 %v3040, %v3044
    %v3317 = vmax.f32 %v3316, %v3050
    %v3318 = vmax.f32 %v3317, %v3054
    %v3319 = vmax.f32 %v3318, %v3060
    %v3320 = vmax.f32 %v3319, %v3064
    %v3321 = vmax.f32 %v3320, %v3070
    %v3322 = vmax.f32 %v3321, %v3074
    %v3323 = vrot.slane %v3322, 4
    %v3324 = vmax.f32 %v3322, %v3323
    %v3325 = vrot.slane %v3324, 2
    %v3326 = vmax.f32 %v3324, %v3325
    %v3327 = vrot.slane %v3326, 1
    %v3328 = vmax.f32 %v3326, %v3327
    %v3329 = vsel %vm736, %v3042, -inf
    %v3330 = vsel %vm736, %v3046, -inf
    %v3331 = vmax.f32 %v3329, %v3330
    %v3332 = vsel %vm736, %v3052, -inf
    %v3333 = vmax.f32 %v3331, %v3332
    %v3334 = vsel %vm736, %v3056, -inf
    %v3335 = vmax.f32 %v3333, %v3334
    %v3336 = vsel %vm736, %v3062, -inf
    %v3337 = vmax.f32 %v3335, %v3336
    %v3338 = vsel %vm736, %v3066, -inf
    %v3339 = vmax.f32 %v3337, %v3338
    %v3340 = vsel %vm736, %v3072, -inf
    %v3341 = vmax.f32 %v3339, %v3340
    %v3342 = vsel %vm736, %v3076, -inf
    %v3343 = vmax.f32 %v3341, %v3342
    %v3344 = vrot.slane %v3343, 4
    %v3345 = vmax.f32 %v3343, %v3344
    %v3346 = vrot.slane %v3345, 2
    %v3347 = vmax.f32 %v3345, %v3346
    %v3348 = vrot.slane %v3347, 1
    %v3349 = vmax.f32 %v3347, %v3348
    %v3350 = vpack.c.bf16 %v3090, %v3090
    %v3351 = vpack.c.bf16 %v3111, %v3111
    %v3352 = vpack.c.bf16 %v3124, %v3124
    %v3353 = vpack.c.bf16 %v3145, %v3145
    %v3354 = vpack.c.bf16 %v3158, %v3158
    %v3355 = vpack.c.bf16 %v3179, %v3179
    %v3356 = vpack.c.bf16 %v3192, %v3192
    %v3357 = vpack.c.bf16 %v3213, %v3213
    %v3358 = vpack.c.bf16 %v3226, %v3226
    %v3359 = vpack.c.bf16 %v3247, %v3247
    %v3360 = vpack.c.bf16 %v3260, %v3260
    %v3361 = vpack.c.bf16 %v3281, %v3281
    %v3362 = vpack.c.bf16 %v3294, %v3294
    %v3363 = vpack.c.bf16 %v3315, %v3315
    %v3364 = vpack.c.bf16 %v3328, %v3328
    %v3365 = vpack.c.bf16 %v3349, %v3349
    %s3366 = scalar_lea.vmem %s2, 240
    %v3367 = vld [vmem:[%s3366] sm:$0xf]
    %v3368 = vld [vmem:[%s3366 + $0x4] sm:$0xf]
    %v3369 = vld [vmem:[%s3366 + $0x8] sm:$0xf]
    %v3370 = vld [vmem:[%s3366 + $0xc] sm:$0xf]
    %v3371 = vld [vmem:[%s3366 + $0x10] sm:$0xf]
    %v3372 = vld [vmem:[%s3366 + $0x14] sm:$0xf]
    %v3373 = vld [vmem:[%s3366 + $0x18] sm:$0xf]
    %v3374 = vld [vmem:[%s3366 + $0x1c] sm:$0xf]
    %v3375 = vld [vmem:[%s3366 + $0x20] sm:$0xf]
    %v3376 = vld [vmem:[%s3366 + $0x24] sm:$0xf]
    %v3377 = vld [vmem:[%s3366 + $0x28] sm:$0xf]
    %v3378 = vld [vmem:[%s3366 + $0x2c] sm:$0xf]
    %v3379 = vld [vmem:[%s3366 + $0x30] sm:$0xf]
    %v3380 = vld [vmem:[%s3366 + $0x34] sm:$0xf]
    %v3381 = vld [vmem:[%s3366 + $0x38] sm:$0xf]
    %v3382 = vld [vmem:[%s3366 + $0x3c] sm:$0xf]
    %v3383 = vld [vmem:[%s3366 + $0x40] sm:$0xf]
    %v3384 = vld [vmem:[%s3366 + $0x44] sm:$0xf]
    %v3385 = vld [vmem:[%s3366 + $0x48] sm:$0xf]
    %v3386 = vld [vmem:[%s3366 + $0x4c] sm:$0xf]
    %v3387 = vld [vmem:[%s3366 + $0x50] sm:$0xf]
    %v3388 = vld [vmem:[%s3366 + $0x54] sm:$0xf]
    %v3389 = vld [vmem:[%s3366 + $0x58] sm:$0xf]
    %v3390 = vld [vmem:[%s3366 + $0x5c] sm:$0xf]
    %v3391 = vld [vmem:[%s3366 + $0x60] sm:$0xf]
    %v3392 = vld [vmem:[%s3366 + $0x64] sm:$0xf]
    %v3393 = vld [vmem:[%s3366 + $0x68] sm:$0xf]
    %v3394 = vld [vmem:[%s3366 + $0x6c] sm:$0xf]
    %v3395 = vld [vmem:[%s3366 + $0x70] sm:$0xf]
    %v3396 = vld [vmem:[%s3366 + $0x74] sm:$0xf]
    %v3413 = vunpack.c.l.b16 %v3350
    %v3414 = vunpack.c.l.b16 %v3351
    %v3415 = vunpack.c.l.b16 %v3352
    %v3416 = vunpack.c.l.b16 %v3353
    %v3417 = vunpack.c.l.b16 %v3354
    %v3418 = vunpack.c.l.b16 %v3355
    %v3419 = vunpack.c.l.b16 %v3356
    %v3420 = vunpack.c.l.b16 %v3357
    %v3421 = vunpack.c.l.b16 %v3358
    %v3422 = vunpack.c.l.b16 %v3359
    %v3423 = vunpack.c.l.b16 %v3360
    %v3424 = vunpack.c.l.b16 %v3361
    %v3425 = vunpack.c.l.b16 %v3362
    %v3426 = vunpack.c.l.b16 %v3363
    %v3427 = vunpack.c.l.b16 %v3364
    %v3428 = vunpack.c.l.b16 %v3365
    %v3429 = vsel %vm2066, %v3415, %v3413
    %v3430 = vsel %vm2068, %v3417, %v3429
    %v3431 = vsel %vm2070, %v3419, %v3430
    %v3432 = vsel %vm2072, %v3421, %v3431
    %v3433 = vsel %vm2074, %v3423, %v3432
    %v3434 = vsel %vm2076, %v3425, %v3433
    %v3435 = vsel %vm2078, %v3427, %v3434
    %v3436 = vsel %vm2066, %v3416, %v3414
    %v3437 = vsel %vm2068, %v3418, %v3436
    %v3438 = vsel %vm2070, %v3420, %v3437
    %v3439 = vsel %vm2072, %v3422, %v3438
    %v3440 = vsel %vm2074, %v3424, %v3439
    %v3441 = vsel %vm2076, %v3426, %v3440
    %v3442 = vsel %vm2078, %v3428, %v3441
    %v3443 = vpack.c.b16 %v3435, %v3435
    %v3444 = vpack.c.b16 %v3442, %v3442
    %v3476 = vunpack.c.l.b16 %v3367
    %v3477 = vunpack.c.l.b16 %v3368
    %v3478 = vunpack.c.l.b16 %v3369
    %v3479 = vunpack.c.l.b16 %v3370
    %v3480 = vunpack.c.l.b16 %v3371
    %v3481 = vunpack.c.l.b16 %v3372
    %v3482 = vunpack.c.l.b16 %v3373
    %v3483 = vunpack.c.l.b16 %v3374
    %v3484 = vunpack.c.l.b16 %v3375
    %v3485 = vunpack.c.l.b16 %v3376
    %v3486 = vunpack.c.l.b16 %v3377
    %v3487 = vunpack.c.l.b16 %v3378
    %v3488 = vunpack.c.l.b16 %v3379
    %v3489 = vunpack.c.l.b16 %v3380
    %v3490 = vunpack.c.l.b16 %v3381
    %v3491 = vunpack.c.l.b16 %v3382
    %v3492 = vunpack.c.l.b16 %v3383
    %v3493 = vunpack.c.l.b16 %v3384
    %v3494 = vunpack.c.l.b16 %v3385
    %v3495 = vunpack.c.l.b16 %v3386
    %v3496 = vunpack.c.l.b16 %v3387
    %v3497 = vunpack.c.l.b16 %v3388
    %v3498 = vunpack.c.l.b16 %v3389
    %v3499 = vunpack.c.l.b16 %v3390
    %v3500 = vunpack.c.l.b16 %v3391
    %v3501 = vunpack.c.l.b16 %v3392
    %v3502 = vunpack.c.l.b16 %v3393
    %v3503 = vunpack.c.l.b16 %v3394
    %v3504 = vunpack.c.l.b16 %v3395
    %v3505 = vunpack.c.l.b16 %v3396
    %v3506 = vpack.c.b16 %v3477, %v3476
    %v3507 = vpack.c.b16 %v3479, %v3478
    %v3508 = vpack.c.b16 %v3481, %v3480
    %v3509 = vpack.c.b16 %v3483, %v3482
    %v3510 = vpack.c.b16 %v3485, %v3484
    %v3511 = vpack.c.b16 %v3487, %v3486
    %v3512 = vpack.c.b16 %v3489, %v3488
    %v3513 = vpack.c.b16 %v3491, %v3490
    %v3514 = vpack.c.b16 %v3493, %v3492
    %v3515 = vpack.c.b16 %v3495, %v3494
    %v3516 = vpack.c.b16 %v3497, %v3496
    %v3517 = vpack.c.b16 %v3499, %v3498
    %v3518 = vpack.c.b16 %v3501, %v3500
    %v3519 = vpack.c.b16 %v3503, %v3502
    %v3520 = vpack.c.b16 %v3505, %v3504
    %v3537 = vsel %vm736, %v3444, 0
    %3539 = vmatprep.subr.bf16.mxu0 0
    %3540 = vmatpush1.bf16.msra.mxu0 %v3513
    %3541 = vmatprep.subr.bf16.mxu0 0
    %3542 = vmatpush1.bf16.msra.mxu0 %v3512
    %3543 = vmatprep.subr.bf16.mxu0 0
    %3544 = vmatpush1.bf16.msra.mxu0 %v3511
    %3545 = vmatprep.subr.bf16.mxu0 0
    %3546 = vmatpush1.bf16.msra.mxu0 %v3510
    %3547 = vmatprep.subr.bf16.mxu0 0
    %3548 = vmatpush1.bf16.msra.mxu0 %v3509
    %3549 = vmatprep.subr.bf16.mxu0 0
    %3550 = vmatpush1.bf16.msra.mxu0 %v3508
    %3551 = vmatprep.subr.bf16.mxu0 0
    %3552 = vmatpush1.bf16.msra.mxu0 %v3507
    %3553 = vmatprep.subr.bf16.mxu0 0
    %3554 = vmatpush1.bf16.msra.mxu0 %v3506
    %3555 = vmatprep.subr.bf16.mxu0 0
    %3556 = vmatpush2.bf16.msra.mxu0 0
    %3557 = vmatprep.subr.bf16.mxu0 0
    %3558 = vmatpush2.bf16.msra.mxu0 %v3520
    %3559 = vmatprep.subr.bf16.mxu0 0
    %3560 = vmatpush2.bf16.msra.mxu0 %v3519
    %3561 = vmatprep.subr.bf16.mxu0 0
    %3562 = vmatpush2.bf16.msra.mxu0 %v3518
    %3563 = vmatprep.subr.bf16.mxu0 0
    %3564 = vmatpush2.bf16.msra.mxu0 %v3517
    %3565 = vmatprep.subr.bf16.mxu0 0
    %3566 = vmatpush2.bf16.msra.mxu0 %v3516
    %3567 = vmatprep.subr.bf16.mxu0 0
    %3568 = vmatpush2.bf16.msra.mxu0 %v3515
    %3569 = vmatprep.subr.bf16.mxu0 0
    %3570 = vmatpush2.bf16.msra.mxu0 %v3514
    %3571 = vmatprep.mubr.bf16.mxu0 %v3537
    %3572 = vmatmul.mubr.bf16.gmra.mxu0 %v3443
    %v3573 = vpop.f32.mrf.mxu0
    %v3574 = vadd.f32 0.0, %v3573
    %v3575 = vpop.f32.mrf.mxu0
    %v3576 = vpop.f32.mrf.mxu0
    %v3577 = vpop.f32.mrf.mxu0
    %3578 = vdwg.mxu0
    %v3579 = vadd.f32 %v2400, %v3574
    %v3580 = vld [vmem:[%s0 + $0x60] sm:$0xf]
    %v3581 = vld [vmem:[%s0 + $0x64] sm:$0xf]
    %v3582 = vld [vmem:[%s0 + $0x68] sm:$0xf]
    %v3583 = vld [vmem:[%s0 + $0x6c] sm:$0xf]
    %v3584 = vld [vmem:[%s0 + $0x70] sm:$0xf]
    %v3585 = vld [vmem:[%s0 + $0x74] sm:$0xf]
    %v3586 = vld [vmem:[%s0 + $0x78] sm:$0xf]
    %v3587 = vld [vmem:[%s0 + $0x7c] sm:$0xf]
    %v3588 = vld [vmem:[%s0 + $0x180] sm:$0xf]
    %v3589 = vld [vmem:[%s0 + $0x184] sm:$0xf]
    %v3590 = vld [vmem:[%s0 + $0x188] sm:$0xf]
    %v3591 = vld [vmem:[%s0 + $0x18c] sm:$0xf]
    %v3592 = vld [vmem:[%s0 + $0x190] sm:$0xf]
    %v3593 = vld [vmem:[%s0 + $0x194] sm:$0xf]
    %v3594 = vld [vmem:[%s0 + $0x198] sm:$0xf]
    %v3595 = vld [vmem:[%s0 + $0x19c] sm:$0xf]
    %v3596 = vld [vmem:[%s0 + $0x2a0] sm:$0xf]
    %v3597 = vld [vmem:[%s0 + $0x2a4] sm:$0xf]
    %v3598 = vld [vmem:[%s0 + $0x2a8] sm:$0xf]
    %v3599 = vld [vmem:[%s0 + $0x2ac] sm:$0xf]
    %v3600 = vld [vmem:[%s0 + $0x2b0] sm:$0xf]
    %v3601 = vld [vmem:[%s0 + $0x2b4] sm:$0xf]
    %v3602 = vld [vmem:[%s0 + $0x2b8] sm:$0xf]
    %v3603 = vld [vmem:[%s0 + $0x2bc] sm:$0xf]
    %v3604 = vld [vmem:[%s0 + $0x3c0] sm:$0xf]
    %v3605 = vld [vmem:[%s0 + $0x3c4] sm:$0xf]
    %v3606 = vld [vmem:[%s0 + $0x3c8] sm:$0xf]
    %v3607 = vld [vmem:[%s0 + $0x3cc] sm:$0xf]
    %v3608 = vld [vmem:[%s0 + $0x3d0] sm:$0xf]
    %v3609 = vld [vmem:[%s0 + $0x3d4] sm:$0xf]
    %v3610 = vld [vmem:[%s0 + $0x3d8] sm:$0xf]
    %v3611 = vld [vmem:[%s0 + $0x3dc] sm:$0xf]
    %v3612 = vld [vmem:[%s0 + $0x4e0] sm:$0xf]
    %v3613 = vld [vmem:[%s0 + $0x4e4] sm:$0xf]
    %v3614 = vld [vmem:[%s0 + $0x4e8] sm:$0xf]
    %v3615 = vld [vmem:[%s0 + $0x4ec] sm:$0xf]
    %v3616 = vld [vmem:[%s0 + $0x4f0] sm:$0xf]
    %v3617 = vld [vmem:[%s0 + $0x4f4] sm:$0xf]
    %v3618 = vld [vmem:[%s0 + $0x4f8] sm:$0xf]
    %v3619 = vld [vmem:[%s0 + $0x4fc] sm:$0xf]
    %v3620 = vld [vmem:[%s0 + $0x600] sm:$0xf]
    %v3621 = vld [vmem:[%s0 + $0x604] sm:$0xf]
    %v3622 = vld [vmem:[%s0 + $0x608] sm:$0xf]
    %v3623 = vld [vmem:[%s0 + $0x60c] sm:$0xf]
    %v3624 = vld [vmem:[%s0 + $0x610] sm:$0xf]
    %v3625 = vld [vmem:[%s0 + $0x614] sm:$0xf]
    %v3626 = vld [vmem:[%s0 + $0x618] sm:$0xf]
    %v3627 = vld [vmem:[%s0 + $0x61c] sm:$0xf]
    %v3628 = vld [vmem:[%s0 + $0x720] sm:$0xf]
    %v3629 = vld [vmem:[%s0 + $0x724] sm:$0xf]
    %v3630 = vld [vmem:[%s0 + $0x728] sm:$0xf]
    %v3631 = vld [vmem:[%s0 + $0x72c] sm:$0xf]
    %v3632 = vld [vmem:[%s0 + $0x730] sm:$0xf]
    %v3633 = vld [vmem:[%s0 + $0x734] sm:$0xf]
    %v3634 = vld [vmem:[%s0 + $0x738] sm:$0xf]
    %v3635 = vld [vmem:[%s0 + $0x73c] sm:$0xf]
    %v3636 = vld [vmem:[%s0 + $0x840] sm:$0xf]
    %v3637 = vld [vmem:[%s0 + $0x844] sm:$0xf]
    %v3638 = vld [vmem:[%s0 + $0x848] sm:$0xf]
    %v3639 = vld [vmem:[%s0 + $0x84c] sm:$0xf]
    %v3640 = vld [vmem:[%s0 + $0x850] sm:$0xf]
    %v3641 = vld [vmem:[%s0 + $0x854] sm:$0xf]
    %v3642 = vld [vmem:[%s0 + $0x858] sm:$0xf]
    %v3643 = vld [vmem:[%s0 + $0x85c] sm:$0xf]
    %v3708 = vunpack.c.l.b16 %v3580
    %v3709 = vunpack.c.l.b16 %v3581
    %v3710 = vunpack.c.l.b16 %v3582
    %v3711 = vunpack.c.l.b16 %v3583
    %v3712 = vunpack.c.l.b16 %v3584
    %v3713 = vunpack.c.l.b16 %v3585
    %v3714 = vunpack.c.l.b16 %v3586
    %v3715 = vunpack.c.l.b16 %v3587
    %v3716 = vunpack.c.l.b16 %v3588
    %v3717 = vunpack.c.l.b16 %v3589
    %v3718 = vunpack.c.l.b16 %v3590
    %v3719 = vunpack.c.l.b16 %v3591
    %v3720 = vunpack.c.l.b16 %v3592
    %v3721 = vunpack.c.l.b16 %v3593
    %v3722 = vunpack.c.l.b16 %v3594
    %v3723 = vunpack.c.l.b16 %v3595
    %v3724 = vunpack.c.l.b16 %v3596
    %v3725 = vunpack.c.l.b16 %v3597
    %v3726 = vunpack.c.l.b16 %v3598
    %v3727 = vunpack.c.l.b16 %v3599
    %v3728 = vunpack.c.l.b16 %v3600
    %v3729 = vunpack.c.l.b16 %v3601
    %v3730 = vunpack.c.l.b16 %v3602
    %v3731 = vunpack.c.l.b16 %v3603
    %v3732 = vunpack.c.l.b16 %v3604
    %v3733 = vunpack.c.l.b16 %v3605
    %v3734 = vunpack.c.l.b16 %v3606
    %v3735 = vunpack.c.l.b16 %v3607
    %v3736 = vunpack.c.l.b16 %v3608
    %v3737 = vunpack.c.l.b16 %v3609
    %v3738 = vunpack.c.l.b16 %v3610
    %v3739 = vunpack.c.l.b16 %v3611
    %v3740 = vunpack.c.l.b16 %v3612
    %v3741 = vunpack.c.l.b16 %v3613
    %v3742 = vunpack.c.l.b16 %v3614
    %v3743 = vunpack.c.l.b16 %v3615
    %v3744 = vunpack.c.l.b16 %v3616
    %v3745 = vunpack.c.l.b16 %v3617
    %v3746 = vunpack.c.l.b16 %v3618
    %v3747 = vunpack.c.l.b16 %v3619
    %v3748 = vunpack.c.l.b16 %v3620
    %v3749 = vunpack.c.l.b16 %v3621
    %v3750 = vunpack.c.l.b16 %v3622
    %v3751 = vunpack.c.l.b16 %v3623
    %v3752 = vunpack.c.l.b16 %v3624
    %v3753 = vunpack.c.l.b16 %v3625
    %v3754 = vunpack.c.l.b16 %v3626
    %v3755 = vunpack.c.l.b16 %v3627
    %v3756 = vunpack.c.l.b16 %v3628
    %v3757 = vunpack.c.l.b16 %v3629
    %v3758 = vunpack.c.l.b16 %v3630
    %v3759 = vunpack.c.l.b16 %v3631
    %v3760 = vunpack.c.l.b16 %v3632
    %v3761 = vunpack.c.l.b16 %v3633
    %v3762 = vunpack.c.l.b16 %v3634
    %v3763 = vunpack.c.l.b16 %v3635
    %v3764 = vunpack.c.l.b16 %v3636
    %v3765 = vunpack.c.l.b16 %v3637
    %v3766 = vunpack.c.l.b16 %v3638
    %v3767 = vunpack.c.l.b16 %v3639
    %v3768 = vunpack.c.l.b16 %v3640
    %v3769 = vunpack.c.l.b16 %v3641
    %v3770 = vunpack.c.l.b16 %v3642
    %v3771 = vunpack.c.l.b16 %v3643
    %v3772 = vpack.c.b16 %v3709, %v3708
    %v3773 = vpack.c.b16 %v3711, %v3710
    %v3774 = vpack.c.b16 %v3713, %v3712
    %v3775 = vpack.c.b16 %v3715, %v3714
    %v3776 = vpack.c.b16 %v3717, %v3716
    %v3777 = vpack.c.b16 %v3719, %v3718
    %v3778 = vpack.c.b16 %v3721, %v3720
    %v3779 = vpack.c.b16 %v3723, %v3722
    %v3780 = vpack.c.b16 %v3725, %v3724
    %v3781 = vpack.c.b16 %v3727, %v3726
    %v3782 = vpack.c.b16 %v3729, %v3728
    %v3783 = vpack.c.b16 %v3731, %v3730
    %v3784 = vpack.c.b16 %v3733, %v3732
    %v3785 = vpack.c.b16 %v3735, %v3734
    %v3786 = vpack.c.b16 %v3737, %v3736
    %v3787 = vpack.c.b16 %v3739, %v3738
    %v3788 = vpack.c.b16 %v3741, %v3740
    %v3789 = vpack.c.b16 %v3743, %v3742
    %v3790 = vpack.c.b16 %v3745, %v3744
    %v3791 = vpack.c.b16 %v3747, %v3746
    %v3792 = vpack.c.b16 %v3749, %v3748
    %v3793 = vpack.c.b16 %v3751, %v3750
    %v3794 = vpack.c.b16 %v3753, %v3752
    %v3795 = vpack.c.b16 %v3755, %v3754
    %v3796 = vpack.c.b16 %v3757, %v3756
    %v3797 = vpack.c.b16 %v3759, %v3758
    %v3798 = vpack.c.b16 %v3761, %v3760
    %v3799 = vpack.c.b16 %v3763, %v3762
    %v3800 = vpack.c.b16 %v3765, %v3764
    %v3801 = vpack.c.b16 %v3767, %v3766
    %v3802 = vpack.c.b16 %v3769, %v3768
    %v3803 = vpack.c.b16 %v3771, %v3770
    %v3805 = vsel %vm273, %v3772, 0
    %v3808 = vsel %vm273, %v3773, 0
    %v3811 = vsel %vm273, %v3774, 0
    %v3814 = vsel %vm273, %v3775, 0
    %v3817 = vsel %vm273, %v3776, 0
    %v3820 = vsel %vm273, %v3777, 0
    %v3823 = vsel %vm273, %v3778, 0
    %v3826 = vsel %vm273, %v3779, 0
    %v3829 = vsel %vm273, %v3780, 0
    %v3832 = vsel %vm273, %v3781, 0
    %v3835 = vsel %vm273, %v3782, 0
    %v3838 = vsel %vm273, %v3783, 0
    %v3841 = vsel %vm273, %v3784, 0
    %v3844 = vsel %vm273, %v3785, 0
    %v3847 = vsel %vm273, %v3786, 0
    %v3850 = vsel %vm273, %v3787, 0
    %v3853 = vsel %vm273, %v3788, 0
    %v3856 = vsel %vm273, %v3789, 0
    %v3859 = vsel %vm273, %v3790, 0
    %v3862 = vsel %vm273, %v3791, 0
    %v3865 = vsel %vm273, %v3792, 0
    %v3868 = vsel %vm273, %v3793, 0
    %v3871 = vsel %vm273, %v3794, 0
    %v3874 = vsel %vm273, %v3795, 0
    %v3877 = vsel %vm273, %v3796, 0
    %v3880 = vsel %vm273, %v3797, 0
    %v3883 = vsel %vm273, %v3798, 0
    %v3886 = vsel %vm273, %v3799, 0
    %v3889 = vsel %vm273, %v3800, 0
    %v3892 = vsel %vm273, %v3801, 0
    %v3895 = vsel %vm273, %v3802, 0
    %v3898 = vsel %vm273, %v3803, 0
    %3900 = vmatprep.subr.bf16.mxu0 0
    %3901 = vmatpush1.bf16.msra.mxu0 0
    %3902 = vmatprep.subr.bf16.mxu0 0
    %3903 = vmatpush1.bf16.msra.mxu0 0
    %3904 = vmatprep.subr.bf16.mxu0 0
    %3905 = vmatpush1.bf16.msra.mxu0 0
    %3906 = vmatprep.subr.bf16.mxu0 0
    %3907 = vmatpush1.bf16.msra.mxu0 0
    %3908 = vmatprep.subr.bf16.mxu0 0
    %3909 = vmatpush1.bf16.msra.mxu0 0
    %3910 = vmatprep.subr.bf16.mxu0 0
    %3911 = vmatpush1.bf16.msra.mxu0 0
    %3912 = vmatprep.subr.bf16.mxu0 %v268
    %3913 = vmatpush1.bf16.msra.mxu0 %v267
    %3914 = vmatprep.subr.bf16.mxu0 %v266
    %3915 = vmatpush1.bf16.msra.mxu0 %v265
    %3916 = vmatprep.subr.bf16.mxu0 0
    %3917 = vmatpush2.bf16.msra.mxu0 0
    %3918 = vmatprep.subr.bf16.mxu0 0
    %3919 = vmatpush2.bf16.msra.mxu0 0
    %3920 = vmatprep.subr.bf16.mxu0 0
    %3921 = vmatpush2.bf16.msra.mxu0 0
    %3922 = vmatprep.subr.bf16.mxu0 0
    %3923 = vmatpush2.bf16.msra.mxu0 0
    %3924 = vmatprep.subr.bf16.mxu0 0
    %3925 = vmatpush2.bf16.msra.mxu0 0
    %3926 = vmatprep.subr.bf16.mxu0 0
    %3927 = vmatpush2.bf16.msra.mxu0 0
    %3928 = vmatprep.subr.bf16.mxu0 0
    %3929 = vmatpush2.bf16.msra.mxu0 0
    %3930 = vmatprep.subr.bf16.mxu0 0
    %3931 = vmatpush2.bf16.msra.mxu0 0
    %3932 = vmatprep.mubr.bf16.mxu0 0
    %3933 = vmatmul.mubr.bf16.gmra.mxu0 %v3805
    %v3934 = vpop.f32.mrf.mxu0
    %v3935 = vadd.f32 0.0, %v3934
    %v3936 = vpop.f32.mrf.mxu0
    %v3937 = vadd.f32 0.0, %v3936
    %v3938 = vpop.f32.mrf.mxu0
    %v3939 = vadd.f32 0.0, %v3938
    %v3940 = vpop.f32.mrf.mxu0
    %v3941 = vadd.f32 0.0, %v3940
    %3942 = vmatprep.mubr.bf16.mxu0 0
    %3943 = vmatmul.mubr.bf16.gmra.mxu0 %v3808
    %v3944 = vpop.f32.mrf.mxu0
    %v3945 = vadd.f32 0.0, %v3944
    %v3946 = vpop.f32.mrf.mxu0
    %v3947 = vadd.f32 0.0, %v3946
    %v3948 = vpop.f32.mrf.mxu0
    %v3949 = vadd.f32 0.0, %v3948
    %v3950 = vpop.f32.mrf.mxu0
    %v3951 = vadd.f32 0.0, %v3950
    %3952 = vmatprep.mubr.bf16.mxu0 0
    %3953 = vmatmul.mubr.bf16.gmra.mxu0 %v3811
    %v3954 = vpop.f32.mrf.mxu0
    %v3955 = vadd.f32 0.0, %v3954
    %v3956 = vpop.f32.mrf.mxu0
    %v3957 = vadd.f32 0.0, %v3956
    %v3958 = vpop.f32.mrf.mxu0
    %v3959 = vadd.f32 0.0, %v3958
    %v3960 = vpop.f32.mrf.mxu0
    %v3961 = vadd.f32 0.0, %v3960
    %3962 = vmatprep.mubr.bf16.mxu0 0
    %3963 = vmatmul.mubr.bf16.gmra.mxu0 %v3814
    %v3964 = vpop.f32.mrf.mxu0
    %v3965 = vadd.f32 0.0, %v3964
    %v3966 = vpop.f32.mrf.mxu0
    %v3967 = vadd.f32 0.0, %v3966
    %v3968 = vpop.f32.mrf.mxu0
    %v3969 = vadd.f32 0.0, %v3968
    %v3970 = vpop.f32.mrf.mxu0
    %v3971 = vadd.f32 0.0, %v3970
    %3972 = vmatprep.mubr.bf16.mxu0 0
    %3973 = vmatmul.mubr.bf16.gmra.mxu0 %v3817
    %v3974 = vpop.f32.mrf.mxu0
    %v3975 = vadd.f32 0.0, %v3974
    %v3976 = vpop.f32.mrf.mxu0
    %v3977 = vadd.f32 0.0, %v3976
    %v3978 = vpop.f32.mrf.mxu0
    %v3979 = vadd.f32 0.0, %v3978
    %v3980 = vpop.f32.mrf.mxu0
    %v3981 = vadd.f32 0.0, %v3980
    %3982 = vmatprep.mubr.bf16.mxu0 0
    %3983 = vmatmul.mubr.bf16.gmra.mxu0 %v3820
    %v3984 = vpop.f32.mrf.mxu0
    %v3985 = vadd.f32 0.0, %v3984
    %v3986 = vpop.f32.mrf.mxu0
    %v3987 = vadd.f32 0.0, %v3986
    %v3988 = vpop.f32.mrf.mxu0
    %v3989 = vadd.f32 0.0, %v3988
    %v3990 = vpop.f32.mrf.mxu0
    %v3991 = vadd.f32 0.0, %v3990
    %3992 = vmatprep.mubr.bf16.mxu0 0
    %3993 = vmatmul.mubr.bf16.gmra.mxu0 %v3823
    %v3994 = vpop.f32.mrf.mxu0
    %v3995 = vadd.f32 0.0, %v3994
    %v3996 = vpop.f32.mrf.mxu0
    %v3997 = vadd.f32 0.0, %v3996
    %v3998 = vpop.f32.mrf.mxu0
    %v3999 = vadd.f32 0.0, %v3998
    %v4000 = vpop.f32.mrf.mxu0
    %v4001 = vadd.f32 0.0, %v4000
    %4002 = vmatprep.mubr.bf16.mxu0 0
    %4003 = vmatmul.mubr.bf16.gmra.mxu0 %v3826
    %v4004 = vpop.f32.mrf.mxu0
    %v4005 = vadd.f32 0.0, %v4004
    %v4006 = vpop.f32.mrf.mxu0
    %v4007 = vadd.f32 0.0, %v4006
    %v4008 = vpop.f32.mrf.mxu0
    %v4009 = vadd.f32 0.0, %v4008
    %v4010 = vpop.f32.mrf.mxu0
    %v4011 = vadd.f32 0.0, %v4010
    %4012 = vmatprep.mubr.bf16.mxu0 0
    %4013 = vmatmul.mubr.bf16.gmra.mxu0 %v3829
    %v4014 = vpop.f32.mrf.mxu0
    %v4015 = vadd.f32 0.0, %v4014
    %v4016 = vpop.f32.mrf.mxu0
    %v4017 = vadd.f32 0.0, %v4016
    %v4018 = vpop.f32.mrf.mxu0
    %v4019 = vadd.f32 0.0, %v4018
    %v4020 = vpop.f32.mrf.mxu0
    %v4021 = vadd.f32 0.0, %v4020
    %4022 = vmatprep.mubr.bf16.mxu0 0
    %4023 = vmatmul.mubr.bf16.gmra.mxu0 %v3832
    %v4024 = vpop.f32.mrf.mxu0
    %v4025 = vadd.f32 0.0, %v4024
    %v4026 = vpop.f32.mrf.mxu0
    %v4027 = vadd.f32 0.0, %v4026
    %v4028 = vpop.f32.mrf.mxu0
    %v4029 = vadd.f32 0.0, %v4028
    %v4030 = vpop.f32.mrf.mxu0
    %v4031 = vadd.f32 0.0, %v4030
    %4032 = vmatprep.mubr.bf16.mxu0 0
    %4033 = vmatmul.mubr.bf16.gmra.mxu0 %v3835
    %v4034 = vpop.f32.mrf.mxu0
    %v4035 = vadd.f32 0.0, %v4034
    %v4036 = vpop.f32.mrf.mxu0
    %v4037 = vadd.f32 0.0, %v4036
    %v4038 = vpop.f32.mrf.mxu0
    %v4039 = vadd.f32 0.0, %v4038
    %v4040 = vpop.f32.mrf.mxu0
    %v4041 = vadd.f32 0.0, %v4040
    %4042 = vmatprep.mubr.bf16.mxu0 0
    %4043 = vmatmul.mubr.bf16.gmra.mxu0 %v3838
    %v4044 = vpop.f32.mrf.mxu0
    %v4045 = vadd.f32 0.0, %v4044
    %v4046 = vpop.f32.mrf.mxu0
    %v4047 = vadd.f32 0.0, %v4046
    %v4048 = vpop.f32.mrf.mxu0
    %v4049 = vadd.f32 0.0, %v4048
    %v4050 = vpop.f32.mrf.mxu0
    %v4051 = vadd.f32 0.0, %v4050
    %4052 = vmatprep.mubr.bf16.mxu0 0
    %4053 = vmatmul.mubr.bf16.gmra.mxu0 %v3841
    %v4054 = vpop.f32.mrf.mxu0
    %v4055 = vadd.f32 0.0, %v4054
    %v4056 = vpop.f32.mrf.mxu0
    %v4057 = vadd.f32 0.0, %v4056
    %v4058 = vpop.f32.mrf.mxu0
    %v4059 = vadd.f32 0.0, %v4058
    %v4060 = vpop.f32.mrf.mxu0
    %v4061 = vadd.f32 0.0, %v4060
    %4062 = vmatprep.mubr.bf16.mxu0 0
    %4063 = vmatmul.mubr.bf16.gmra.mxu0 %v3844
    %v4064 = vpop.f32.mrf.mxu0
    %v4065 = vadd.f32 0.0, %v4064
    %v4066 = vpop.f32.mrf.mxu0
    %v4067 = vadd.f32 0.0, %v4066
    %v4068 = vpop.f32.mrf.mxu0
    %v4069 = vadd.f32 0.0, %v4068
    %v4070 = vpop.f32.mrf.mxu0
    %v4071 = vadd.f32 0.0, %v4070
    %4072 = vmatprep.mubr.bf16.mxu0 0
    %4073 = vmatmul.mubr.bf16.gmra.mxu0 %v3847
    %v4074 = vpop.f32.mrf.mxu0
    %v4075 = vadd.f32 0.0, %v4074
    %v4076 = vpop.f32.mrf.mxu0
    %v4077 = vadd.f32 0.0, %v4076
    %v4078 = vpop.f32.mrf.mxu0
    %v4079 = vadd.f32 0.0, %v4078
    %v4080 = vpop.f32.mrf.mxu0
    %v4081 = vadd.f32 0.0, %v4080
    %4082 = vmatprep.mubr.bf16.mxu0 0
    %4083 = vmatmul.mubr.bf16.gmra.mxu0 %v3850
    %v4084 = vpop.f32.mrf.mxu0
    %v4085 = vadd.f32 0.0, %v4084
    %v4086 = vpop.f32.mrf.mxu0
    %v4087 = vadd.f32 0.0, %v4086
    %v4088 = vpop.f32.mrf.mxu0
    %v4089 = vadd.f32 0.0, %v4088
    %v4090 = vpop.f32.mrf.mxu0
    %v4091 = vadd.f32 0.0, %v4090
    %4092 = vmatprep.mubr.bf16.mxu0 0
    %4093 = vmatmul.mubr.bf16.gmra.mxu0 %v3853
    %v4094 = vpop.f32.mrf.mxu0
    %v4095 = vadd.f32 0.0, %v4094
    %v4096 = vpop.f32.mrf.mxu0
    %v4097 = vadd.f32 0.0, %v4096
    %v4098 = vpop.f32.mrf.mxu0
    %v4099 = vadd.f32 0.0, %v4098
    %v4100 = vpop.f32.mrf.mxu0
    %v4101 = vadd.f32 0.0, %v4100
    %4102 = vmatprep.mubr.bf16.mxu0 0
    %4103 = vmatmul.mubr.bf16.gmra.mxu0 %v3856
    %v4104 = vpop.f32.mrf.mxu0
    %v4105 = vadd.f32 0.0, %v4104
    %v4106 = vpop.f32.mrf.mxu0
    %v4107 = vadd.f32 0.0, %v4106
    %v4108 = vpop.f32.mrf.mxu0
    %v4109 = vadd.f32 0.0, %v4108
    %v4110 = vpop.f32.mrf.mxu0
    %v4111 = vadd.f32 0.0, %v4110
    %4112 = vmatprep.mubr.bf16.mxu0 0
    %4113 = vmatmul.mubr.bf16.gmra.mxu0 %v3859
    %v4114 = vpop.f32.mrf.mxu0
    %v4115 = vadd.f32 0.0, %v4114
    %v4116 = vpop.f32.mrf.mxu0
    %v4117 = vadd.f32 0.0, %v4116
    %v4118 = vpop.f32.mrf.mxu0
    %v4119 = vadd.f32 0.0, %v4118
    %v4120 = vpop.f32.mrf.mxu0
    %v4121 = vadd.f32 0.0, %v4120
    %4122 = vmatprep.mubr.bf16.mxu0 0
    %4123 = vmatmul.mubr.bf16.gmra.mxu0 %v3862
    %v4124 = vpop.f32.mrf.mxu0
    %v4125 = vadd.f32 0.0, %v4124
    %v4126 = vpop.f32.mrf.mxu0
    %v4127 = vadd.f32 0.0, %v4126
    %v4128 = vpop.f32.mrf.mxu0
    %v4129 = vadd.f32 0.0, %v4128
    %v4130 = vpop.f32.mrf.mxu0
    %v4131 = vadd.f32 0.0, %v4130
    %4132 = vmatprep.mubr.bf16.mxu0 0
    %4133 = vmatmul.mubr.bf16.gmra.mxu0 %v3865
    %v4134 = vpop.f32.mrf.mxu0
    %v4135 = vadd.f32 0.0, %v4134
    %v4136 = vpop.f32.mrf.mxu0
    %v4137 = vadd.f32 0.0, %v4136
    %v4138 = vpop.f32.mrf.mxu0
    %v4139 = vadd.f32 0.0, %v4138
    %v4140 = vpop.f32.mrf.mxu0
    %v4141 = vadd.f32 0.0, %v4140
    %4142 = vmatprep.mubr.bf16.mxu0 0
    %4143 = vmatmul.mubr.bf16.gmra.mxu0 %v3868
    %v4144 = vpop.f32.mrf.mxu0
    %v4145 = vadd.f32 0.0, %v4144
    %v4146 = vpop.f32.mrf.mxu0
    %v4147 = vadd.f32 0.0, %v4146
    %v4148 = vpop.f32.mrf.mxu0
    %v4149 = vadd.f32 0.0, %v4148
    %v4150 = vpop.f32.mrf.mxu0
    %v4151 = vadd.f32 0.0, %v4150
    %4152 = vmatprep.mubr.bf16.mxu0 0
    %4153 = vmatmul.mubr.bf16.gmra.mxu0 %v3871
    %v4154 = vpop.f32.mrf.mxu0
    %v4155 = vadd.f32 0.0, %v4154
    %v4156 = vpop.f32.mrf.mxu0
    %v4157 = vadd.f32 0.0, %v4156
    %v4158 = vpop.f32.mrf.mxu0
    %v4159 = vadd.f32 0.0, %v4158
    %v4160 = vpop.f32.mrf.mxu0
    %v4161 = vadd.f32 0.0, %v4160
    %4162 = vmatprep.mubr.bf16.mxu0 0
    %4163 = vmatmul.mubr.bf16.gmra.mxu0 %v3874
    %v4164 = vpop.f32.mrf.mxu0
    %v4165 = vadd.f32 0.0, %v4164
    %v4166 = vpop.f32.mrf.mxu0
    %v4167 = vadd.f32 0.0, %v4166
    %v4168 = vpop.f32.mrf.mxu0
    %v4169 = vadd.f32 0.0, %v4168
    %v4170 = vpop.f32.mrf.mxu0
    %v4171 = vadd.f32 0.0, %v4170
    %4172 = vmatprep.mubr.bf16.mxu0 0
    %4173 = vmatmul.mubr.bf16.gmra.mxu0 %v3877
    %v4174 = vpop.f32.mrf.mxu0
    %v4175 = vadd.f32 0.0, %v4174
    %v4176 = vpop.f32.mrf.mxu0
    %v4177 = vadd.f32 0.0, %v4176
    %v4178 = vpop.f32.mrf.mxu0
    %v4179 = vadd.f32 0.0, %v4178
    %v4180 = vpop.f32.mrf.mxu0
    %v4181 = vadd.f32 0.0, %v4180
    %4182 = vmatprep.mubr.bf16.mxu0 0
    %4183 = vmatmul.mubr.bf16.gmra.mxu0 %v3880
    %v4184 = vpop.f32.mrf.mxu0
    %v4185 = vadd.f32 0.0, %v4184
    %v4186 = vpop.f32.mrf.mxu0
    %v4187 = vadd.f32 0.0, %v4186
    %v4188 = vpop.f32.mrf.mxu0
    %v4189 = vadd.f32 0.0, %v4188
    %v4190 = vpop.f32.mrf.mxu0
    %v4191 = vadd.f32 0.0, %v4190
    %4192 = vmatprep.mubr.bf16.mxu0 0
    %4193 = vmatmul.mubr.bf16.gmra.mxu0 %v3883
    %v4194 = vpop.f32.mrf.mxu0
    %v4195 = vadd.f32 0.0, %v4194
    %v4196 = vpop.f32.mrf.mxu0
    %v4197 = vadd.f32 0.0, %v4196
    %v4198 = vpop.f32.mrf.mxu0
    %v4199 = vadd.f32 0.0, %v4198
    %v4200 = vpop.f32.mrf.mxu0
    %v4201 = vadd.f32 0.0, %v4200
    %4202 = vmatprep.mubr.bf16.mxu0 0
    %4203 = vmatmul.mubr.bf16.gmra.mxu0 %v3886
    %v4204 = vpop.f32.mrf.mxu0
    %v4205 = vadd.f32 0.0, %v4204
    %v4206 = vpop.f32.mrf.mxu0
    %v4207 = vadd.f32 0.0, %v4206
    %v4208 = vpop.f32.mrf.mxu0
    %v4209 = vadd.f32 0.0, %v4208
    %v4210 = vpop.f32.mrf.mxu0
    %v4211 = vadd.f32 0.0, %v4210
    %4212 = vmatprep.mubr.bf16.mxu0 0
    %4213 = vmatmul.mubr.bf16.gmra.mxu0 %v3889
    %v4214 = vpop.f32.mrf.mxu0
    %v4215 = vadd.f32 0.0, %v4214
    %v4216 = vpop.f32.mrf.mxu0
    %v4217 = vadd.f32 0.0, %v4216
    %v4218 = vpop.f32.mrf.mxu0
    %v4219 = vadd.f32 0.0, %v4218
    %v4220 = vpop.f32.mrf.mxu0
    %v4221 = vadd.f32 0.0, %v4220
    %4222 = vmatprep.mubr.bf16.mxu0 0
    %4223 = vmatmul.mubr.bf16.gmra.mxu0 %v3892
    %v4224 = vpop.f32.mrf.mxu0
    %v4225 = vadd.f32 0.0, %v4224
    %v4226 = vpop.f32.mrf.mxu0
    %v4227 = vadd.f32 0.0, %v4226
    %v4228 = vpop.f32.mrf.mxu0
    %v4229 = vadd.f32 0.0, %v4228
    %v4230 = vpop.f32.mrf.mxu0
    %v4231 = vadd.f32 0.0, %v4230
    %4232 = vmatprep.mubr.bf16.mxu0 0
    %4233 = vmatmul.mubr.bf16.gmra.mxu0 %v3895
    %v4234 = vpop.f32.mrf.mxu0
    %v4235 = vadd.f32 0.0, %v4234
    %v4236 = vpop.f32.mrf.mxu0
    %v4237 = vadd.f32 0.0, %v4236
    %v4238 = vpop.f32.mrf.mxu0
    %v4239 = vadd.f32 0.0, %v4238
    %v4240 = vpop.f32.mrf.mxu0
    %v4241 = vadd.f32 0.0, %v4240
    %4242 = vmatprep.mubr.bf16.mxu0 0
    %4243 = vmatmul.mubr.bf16.gmra.mxu0 %v3898
    %v4244 = vpop.f32.mrf.mxu0
    %v4245 = vadd.f32 0.0, %v4244
    %v4246 = vpop.f32.mrf.mxu0
    %v4247 = vadd.f32 0.0, %v4246
    %v4248 = vpop.f32.mrf.mxu0
    %v4249 = vadd.f32 0.0, %v4248
    %v4250 = vpop.f32.mrf.mxu0
    %v4251 = vadd.f32 0.0, %v4250
    %4252 = vdwg.mxu0
    %v4253 = vmax.f32 %v3935, %v3939
    %v4254 = vmax.f32 %v4253, %v3945
    %v4255 = vmax.f32 %v4254, %v3949
    %v4256 = vmax.f32 %v4255, %v3955
    %v4257 = vmax.f32 %v4256, %v3959
    %v4258 = vmax.f32 %v4257, %v3965
    %v4259 = vmax.f32 %v4258, %v3969
    %v4260 = vrot.slane %v4259, 4
    %v4261 = vmax.f32 %v4259, %v4260
    %v4262 = vrot.slane %v4261, 2
    %v4263 = vmax.f32 %v4261, %v4262
    %v4264 = vrot.slane %v4263, 1
    %v4265 = vmax.f32 %v4263, %v4264
    %v4266 = vsel %vm736, %v3937, -inf
    %v4267 = vsel %vm736, %v3941, -inf
    %v4268 = vmax.f32 %v4266, %v4267
    %v4269 = vsel %vm736, %v3947, -inf
    %v4270 = vmax.f32 %v4268, %v4269
    %v4271 = vsel %vm736, %v3951, -inf
    %v4272 = vmax.f32 %v4270, %v4271
    %v4273 = vsel %vm736, %v3957, -inf
    %v4274 = vmax.f32 %v4272, %v4273
    %v4275 = vsel %vm736, %v3961, -inf
    %v4276 = vmax.f32 %v4274, %v4275
    %v4277 = vsel %vm736, %v3967, -inf
    %v4278 = vmax.f32 %v4276, %v4277
    %v4279 = vsel %vm736, %v3971, -inf
    %v4280 = vmax.f32 %v4278, %v4279
    %v4281 = vrot.slane %v4280, 4
    %v4282 = vmax.f32 %v4280, %v4281
    %v4283 = vrot.slane %v4282, 2
    %v4284 = vmax.f32 %v4282, %v4283
    %v4285 = vrot.slane %v4284, 1
    %v4286 = vmax.f32 %v4284, %v4285
    %v4287 = vmax.f32 %v3975, %v3979
    %v4288 = vmax.f32 %v4287, %v3985
    %v4289 = vmax.f32 %v4288, %v3989
    %v4290 = vmax.f32 %v4289, %v3995
    %v4291 = vmax.f32 %v4290, %v3999
    %v4292 = vmax.f32 %v4291, %v4005
    %v4293 = vmax.f32 %v4292, %v4009
    %v4294 = vrot.slane %v4293, 4
    %v4295 = vmax.f32 %v4293, %v4294
    %v4296 = vrot.slane %v4295, 2
    %v4297 = vmax.f32 %v4295, %v4296
    %v4298 = vrot.slane %v4297, 1
    %v4299 = vmax.f32 %v4297, %v4298
    %v4300 = vsel %vm736, %v3977, -inf
    %v4301 = vsel %vm736, %v3981, -inf
    %v4302 = vmax.f32 %v4300, %v4301
    %v4303 = vsel %vm736, %v3987, -inf
    %v4304 = vmax.f32 %v4302, %v4303
    %v4305 = vsel %vm736, %v3991, -inf
    %v4306 = vmax.f32 %v4304, %v4305
    %v4307 = vsel %vm736, %v3997, -inf
    %v4308 = vmax.f32 %v4306, %v4307
    %v4309 = vsel %vm736, %v4001, -inf
    %v4310 = vmax.f32 %v4308, %v4309
    %v4311 = vsel %vm736, %v4007, -inf
    %v4312 = vmax.f32 %v4310, %v4311
    %v4313 = vsel %vm736, %v4011, -inf
    %v4314 = vmax.f32 %v4312, %v4313
    %v4315 = vrot.slane %v4314, 4
    %v4316 = vmax.f32 %v4314, %v4315
    %v4317 = vrot.slane %v4316, 2
    %v4318 = vmax.f32 %v4316, %v4317
    %v4319 = vrot.slane %v4318, 1
    %v4320 = vmax.f32 %v4318, %v4319
    %v4321 = vmax.f32 %v4015, %v4019
    %v4322 = vmax.f32 %v4321, %v4025
    %v4323 = vmax.f32 %v4322, %v4029
    %v4324 = vmax.f32 %v4323, %v4035
    %v4325 = vmax.f32 %v4324, %v4039
    %v4326 = vmax.f32 %v4325, %v4045
    %v4327 = vmax.f32 %v4326, %v4049
    %v4328 = vrot.slane %v4327, 4
    %v4329 = vmax.f32 %v4327, %v4328
    %v4330 = vrot.slane %v4329, 2
    %v4331 = vmax.f32 %v4329, %v4330
    %v4332 = vrot.slane %v4331, 1
    %v4333 = vmax.f32 %v4331, %v4332
    %v4334 = vsel %vm736, %v4017, -inf
    %v4335 = vsel %vm736, %v4021, -inf
    %v4336 = vmax.f32 %v4334, %v4335
    %v4337 = vsel %vm736, %v4027, -inf
    %v4338 = vmax.f32 %v4336, %v4337
    %v4339 = vsel %vm736, %v4031, -inf
    %v4340 = vmax.f32 %v4338, %v4339
    %v4341 = vsel %vm736, %v4037, -inf
    %v4342 = vmax.f32 %v4340, %v4341
    %v4343 = vsel %vm736, %v4041, -inf
    %v4344 = vmax.f32 %v4342, %v4343
    %v4345 = vsel %vm736, %v4047, -inf
    %v4346 = vmax.f32 %v4344, %v4345
    %v4347 = vsel %vm736, %v4051, -inf
    %v4348 = vmax.f32 %v4346, %v4347
    %v4349 = vrot.slane %v4348, 4
    %v4350 = vmax.f32 %v4348, %v4349
    %v4351 = vrot.slane %v4350, 2
    %v4352 = vmax.f32 %v4350, %v4351
    %v4353 = vrot.slane %v4352, 1
    %v4354 = vmax.f32 %v4352, %v4353
    %v4355 = vmax.f32 %v4055, %v4059
    %v4356 = vmax.f32 %v4355, %v4065
    %v4357 = vmax.f32 %v4356, %v4069
    %v4358 = vmax.f32 %v4357, %v4075
    %v4359 = vmax.f32 %v4358, %v4079
    %v4360 = vmax.f32 %v4359, %v4085
    %v4361 = vmax.f32 %v4360, %v4089
    %v4362 = vrot.slane %v4361, 4
    %v4363 = vmax.f32 %v4361, %v4362
    %v4364 = vrot.slane %v4363, 2
    %v4365 = vmax.f32 %v4363, %v4364
    %v4366 = vrot.slane %v4365, 1
    %v4367 = vmax.f32 %v4365, %v4366
    %v4368 = vsel %vm736, %v4057, -inf
    %v4369 = vsel %vm736, %v4061, -inf
    %v4370 = vmax.f32 %v4368, %v4369
    %v4371 = vsel %vm736, %v4067, -inf
    %v4372 = vmax.f32 %v4370, %v4371
    %v4373 = vsel %vm736, %v4071, -inf
    %v4374 = vmax.f32 %v4372, %v4373
    %v4375 = vsel %vm736, %v4077, -inf
    %v4376 = vmax.f32 %v4374, %v4375
    %v4377 = vsel %vm736, %v4081, -inf
    %v4378 = vmax.f32 %v4376, %v4377
    %v4379 = vsel %vm736, %v4087, -inf
    %v4380 = vmax.f32 %v4378, %v4379
    %v4381 = vsel %vm736, %v4091, -inf
    %v4382 = vmax.f32 %v4380, %v4381
    %v4383 = vrot.slane %v4382, 4
    %v4384 = vmax.f32 %v4382, %v4383
    %v4385 = vrot.slane %v4384, 2
    %v4386 = vmax.f32 %v4384, %v4385
    %v4387 = vrot.slane %v4386, 1
    %v4388 = vmax.f32 %v4386, %v4387
    %v4389 = vmax.f32 %v4095, %v4099
    %v4390 = vmax.f32 %v4389, %v4105
    %v4391 = vmax.f32 %v4390, %v4109
    %v4392 = vmax.f32 %v4391, %v4115
    %v4393 = vmax.f32 %v4392, %v4119
    %v4394 = vmax.f32 %v4393, %v4125
    %v4395 = vmax.f32 %v4394, %v4129
    %v4396 = vrot.slane %v4395, 4
    %v4397 = vmax.f32 %v4395, %v4396
    %v4398 = vrot.slane %v4397, 2
    %v4399 = vmax.f32 %v4397, %v4398
    %v4400 = vrot.slane %v4399, 1
    %v4401 = vmax.f32 %v4399, %v4400
    %v4402 = vsel %vm736, %v4097, -inf
    %v4403 = vsel %vm736, %v4101, -inf
    %v4404 = vmax.f32 %v4402, %v4403
    %v4405 = vsel %vm736, %v4107, -inf
    %v4406 = vmax.f32 %v4404, %v4405
    %v4407 = vsel %vm736, %v4111, -inf
    %v4408 = vmax.f32 %v4406, %v4407
    %v4409 = vsel %vm736, %v4117, -inf
    %v4410 = vmax.f32 %v4408, %v4409
    %v4411 = vsel %vm736, %v4121, -inf
    %v4412 = vmax.f32 %v4410, %v4411
    %v4413 = vsel %vm736, %v4127, -inf
    %v4414 = vmax.f32 %v4412, %v4413
    %v4415 = vsel %vm736, %v4131, -inf
    %v4416 = vmax.f32 %v4414, %v4415
    %v4417 = vrot.slane %v4416, 4
    %v4418 = vmax.f32 %v4416, %v4417
    %v4419 = vrot.slane %v4418, 2
    %v4420 = vmax.f32 %v4418, %v4419
    %v4421 = vrot.slane %v4420, 1
    %v4422 = vmax.f32 %v4420, %v4421
    %v4423 = vmax.f32 %v4135, %v4139
    %v4424 = vmax.f32 %v4423, %v4145
    %v4425 = vmax.f32 %v4424, %v4149
    %v4426 = vmax.f32 %v4425, %v4155
    %v4427 = vmax.f32 %v4426, %v4159
    %v4428 = vmax.f32 %v4427, %v4165
    %v4429 = vmax.f32 %v4428, %v4169
    %v4430 = vrot.slane %v4429, 4
    %v4431 = vmax.f32 %v4429, %v4430
    %v4432 = vrot.slane %v4431, 2
    %v4433 = vmax.f32 %v4431, %v4432
    %v4434 = vrot.slane %v4433, 1
    %v4435 = vmax.f32 %v4433, %v4434
    %v4436 = vsel %vm736, %v4137, -inf
    %v4437 = vsel %vm736, %v4141, -inf
    %v4438 = vmax.f32 %v4436, %v4437
    %v4439 = vsel %vm736, %v4147, -inf
    %v4440 = vmax.f32 %v4438, %v4439
    %v4441 = vsel %vm736, %v4151, -inf
    %v4442 = vmax.f32 %v4440, %v4441
    %v4443 = vsel %vm736, %v4157, -inf
    %v4444 = vmax.f32 %v4442, %v4443
    %v4445 = vsel %vm736, %v4161, -inf
    %v4446 = vmax.f32 %v4444, %v4445
    %v4447 = vsel %vm736, %v4167, -inf
    %v4448 = vmax.f32 %v4446, %v4447
    %v4449 = vsel %vm736, %v4171, -inf
    %v4450 = vmax.f32 %v4448, %v4449
    %v4451 = vrot.slane %v4450, 4
    %v4452 = vmax.f32 %v4450, %v4451
    %v4453 = vrot.slane %v4452, 2
    %v4454 = vmax.f32 %v4452, %v4453
    %v4455 = vrot.slane %v4454, 1
    %v4456 = vmax.f32 %v4454, %v4455
    %v4457 = vmax.f32 %v4175, %v4179
    %v4458 = vmax.f32 %v4457, %v4185
    %v4459 = vmax.f32 %v4458, %v4189
    %v4460 = vmax.f32 %v4459, %v4195
    %v4461 = vmax.f32 %v4460, %v4199
    %v4462 = vmax.f32 %v4461, %v4205
    %v4463 = vmax.f32 %v4462, %v4209
    %v4464 = vrot.slane %v4463, 4
    %v4465 = vmax.f32 %v4463, %v4464
    %v4466 = vrot.slane %v4465, 2
    %v4467 = vmax.f32 %v4465, %v4466
    %v4468 = vrot.slane %v4467, 1
    %v4469 = vmax.f32 %v4467, %v4468
    %v4470 = vsel %vm736, %v4177, -inf
    %v4471 = vsel %vm736, %v4181, -inf
    %v4472 = vmax.f32 %v4470, %v4471
    %v4473 = vsel %vm736, %v4187, -inf
    %v4474 = vmax.f32 %v4472, %v4473
    %v4475 = vsel %vm736, %v4191, -inf
    %v4476 = vmax.f32 %v4474, %v4475
    %v4477 = vsel %vm736, %v4197, -inf
    %v4478 = vmax.f32 %v4476, %v4477
    %v4479 = vsel %vm736, %v4201, -inf
    %v4480 = vmax.f32 %v4478, %v4479
    %v4481 = vsel %vm736, %v4207, -inf
    %v4482 = vmax.f32 %v4480, %v4481
    %v4483 = vsel %vm736, %v4211, -inf
    %v4484 = vmax.f32 %v4482, %v4483
    %v4485 = vrot.slane %v4484, 4
    %v4486 = vmax.f32 %v4484, %v4485
    %v4487 = vrot.slane %v4486, 2
    %v4488 = vmax.f32 %v4486, %v4487
    %v4489 = vrot.slane %v4488, 1
    %v4490 = vmax.f32 %v4488, %v4489
    %v4491 = vmax.f32 %v4215, %v4219
    %v4492 = vmax.f32 %v4491, %v4225
    %v4493 = vmax.f32 %v4492, %v4229
    %v4494 = vmax.f32 %v4493, %v4235
    %v4495 = vmax.f32 %v4494, %v4239
    %v4496 = vmax.f32 %v4495, %v4245
    %v4497 = vmax.f32 %v4496, %v4249
    %v4498 = vrot.slane %v4497, 4
    %v4499 = vmax.f32 %v4497, %v4498
    %v4500 = vrot.slane %v4499, 2
    %v4501 = vmax.f32 %v4499, %v4500
    %v4502 = vrot.slane %v4501, 1
    %v4503 = vmax.f32 %v4501, %v4502
    %v4504 = vsel %vm736, %v4217, -inf
    %v4505 = vsel %vm736, %v4221, -inf
    %v4506 = vmax.f32 %v4504, %v4505
    %v4507 = vsel %vm736, %v4227, -inf
    %v4508 = vmax.f32 %v4506, %v4507
    %v4509 = vsel %vm736, %v4231, -inf
    %v4510 = vmax.f32 %v4508, %v4509
    %v4511 = vsel %vm736, %v4237, -inf
    %v4512 = vmax.f32 %v4510, %v4511
    %v4513 = vsel %vm736, %v4241, -inf
    %v4514 = vmax.f32 %v4512, %v4513
    %v4515 = vsel %vm736, %v4247, -inf
    %v4516 = vmax.f32 %v4514, %v4515
    %v4517 = vsel %vm736, %v4251, -inf
    %v4518 = vmax.f32 %v4516, %v4517
    %v4519 = vrot.slane %v4518, 4
    %v4520 = vmax.f32 %v4518, %v4519
    %v4521 = vrot.slane %v4520, 2
    %v4522 = vmax.f32 %v4520, %v4521
    %v4523 = vrot.slane %v4522, 1
    %v4524 = vmax.f32 %v4522, %v4523
    %v4525 = vpack.c.bf16 %v4265, %v4265
    %v4526 = vpack.c.bf16 %v4286, %v4286
    %v4527 = vpack.c.bf16 %v4299, %v4299
    %v4528 = vpack.c.bf16 %v4320, %v4320
    %v4529 = vpack.c.bf16 %v4333, %v4333
    %v4530 = vpack.c.bf16 %v4354, %v4354
    %v4531 = vpack.c.bf16 %v4367, %v4367
    %v4532 = vpack.c.bf16 %v4388, %v4388
    %v4533 = vpack.c.bf16 %v4401, %v4401
    %v4534 = vpack.c.bf16 %v4422, %v4422
    %v4535 = vpack.c.bf16 %v4435, %v4435
    %v4536 = vpack.c.bf16 %v4456, %v4456
    %v4537 = vpack.c.bf16 %v4469, %v4469
    %v4538 = vpack.c.bf16 %v4490, %v4490
    %v4539 = vpack.c.bf16 %v4503, %v4503
    %v4540 = vpack.c.bf16 %v4524, %v4524
    %s4541 = scalar_lea.vmem %s2, 360
    %v4542 = vld [vmem:[%s4541] sm:$0xf]
    %v4543 = vld [vmem:[%s4541 + $0x4] sm:$0xf]
    %v4544 = vld [vmem:[%s4541 + $0x8] sm:$0xf]
    %v4545 = vld [vmem:[%s4541 + $0xc] sm:$0xf]
    %v4546 = vld [vmem:[%s4541 + $0x10] sm:$0xf]
    %v4547 = vld [vmem:[%s4541 + $0x14] sm:$0xf]
    %v4548 = vld [vmem:[%s4541 + $0x18] sm:$0xf]
    %v4549 = vld [vmem:[%s4541 + $0x1c] sm:$0xf]
    %v4550 = vld [vmem:[%s4541 + $0x20] sm:$0xf]
    %v4551 = vld [vmem:[%s4541 + $0x24] sm:$0xf]
    %v4552 = vld [vmem:[%s4541 + $0x28] sm:$0xf]
    %v4553 = vld [vmem:[%s4541 + $0x2c] sm:$0xf]
    %v4554 = vld [vmem:[%s4541 + $0x30] sm:$0xf]
    %v4555 = vld [vmem:[%s4541 + $0x34] sm:$0xf]
    %v4556 = vld [vmem:[%s4541 + $0x38] sm:$0xf]
    %v4557 = vld [vmem:[%s4541 + $0x3c] sm:$0xf]
    %v4558 = vld [vmem:[%s4541 + $0x40] sm:$0xf]
    %v4559 = vld [vmem:[%s4541 + $0x44] sm:$0xf]
    %v4560 = vld [vmem:[%s4541 + $0x48] sm:$0xf]
    %v4561 = vld [vmem:[%s4541 + $0x4c] sm:$0xf]
    %v4562 = vld [vmem:[%s4541 + $0x50] sm:$0xf]
    %v4563 = vld [vmem:[%s4541 + $0x54] sm:$0xf]
    %v4564 = vld [vmem:[%s4541 + $0x58] sm:$0xf]
    %v4565 = vld [vmem:[%s4541 + $0x5c] sm:$0xf]
    %v4566 = vld [vmem:[%s4541 + $0x60] sm:$0xf]
    %v4567 = vld [vmem:[%s4541 + $0x64] sm:$0xf]
    %v4568 = vld [vmem:[%s4541 + $0x68] sm:$0xf]
    %v4569 = vld [vmem:[%s4541 + $0x6c] sm:$0xf]
    %v4570 = vld [vmem:[%s4541 + $0x70] sm:$0xf]
    %v4571 = vld [vmem:[%s4541 + $0x74] sm:$0xf]
    %v4588 = vunpack.c.l.b16 %v4525
    %v4589 = vunpack.c.l.b16 %v4526
    %v4590 = vunpack.c.l.b16 %v4527
    %v4591 = vunpack.c.l.b16 %v4528
    %v4592 = vunpack.c.l.b16 %v4529
    %v4593 = vunpack.c.l.b16 %v4530
    %v4594 = vunpack.c.l.b16 %v4531
    %v4595 = vunpack.c.l.b16 %v4532
    %v4596 = vunpack.c.l.b16 %v4533
    %v4597 = vunpack.c.l.b16 %v4534
    %v4598 = vunpack.c.l.b16 %v4535
    %v4599 = vunpack.c.l.b16 %v4536
    %v4600 = vunpack.c.l.b16 %v4537
    %v4601 = vunpack.c.l.b16 %v4538
    %v4602 = vunpack.c.l.b16 %v4539
    %v4603 = vunpack.c.l.b16 %v4540
    %v4604 = vsel %vm2066, %v4590, %v4588
    %v4605 = vsel %vm2068, %v4592, %v4604
    %v4606 = vsel %vm2070, %v4594, %v4605
    %v4607 = vsel %vm2072, %v4596, %v4606
    %v4608 = vsel %vm2074, %v4598, %v4607
    %v4609 = vsel %vm2076, %v4600, %v4608
    %v4610 = vsel %vm2078, %v4602, %v4609
    %v4611 = vsel %vm2066, %v4591, %v4589
    %v4612 = vsel %vm2068, %v4593, %v4611
    %v4613 = vsel %vm2070, %v4595, %v4612
    %v4614 = vsel %vm2072, %v4597, %v4613
    %v4615 = vsel %vm2074, %v4599, %v4614
    %v4616 = vsel %vm2076, %v4601, %v4615
    %v4617 = vsel %vm2078, %v4603, %v4616
    %v4618 = vpack.c.b16 %v4610, %v4610
    %v4619 = vpack.c.b16 %v4617, %v4617
    %v4651 = vunpack.c.l.b16 %v4542
    %v4652 = vunpack.c.l.b16 %v4543
    %v4653 = vunpack.c.l.b16 %v4544
    %v4654 = vunpack.c.l.b16 %v4545
    %v4655 = vunpack.c.l.b16 %v4546
    %v4656 = vunpack.c.l.b16 %v4547
    %v4657 = vunpack.c.l.b16 %v4548
    %v4658 = vunpack.c.l.b16 %v4549
    %v4659 = vunpack.c.l.b16 %v4550
    %v4660 = vunpack.c.l.b16 %v4551
    %v4661 = vunpack.c.l.b16 %v4552
    %v4662 = vunpack.c.l.b16 %v4553
    %v4663 = vunpack.c.l.b16 %v4554
    %v4664 = vunpack.c.l.b16 %v4555
    %v4665 = vunpack.c.l.b16 %v4556
    %v4666 = vunpack.c.l.b16 %v4557
    %v4667 = vunpack.c.l.b16 %v4558
    %v4668 = vunpack.c.l.b16 %v4559
    %v4669 = vunpack.c.l.b16 %v4560
    %v4670 = vunpack.c.l.b16 %v4561
    %v4671 = vunpack.c.l.b16 %v4562
    %v4672 = vunpack.c.l.b16 %v4563
    %v4673 = vunpack.c.l.b16 %v4564
    %v4674 = vunpack.c.l.b16 %v4565
    %v4675 = vunpack.c.l.b16 %v4566
    %v4676 = vunpack.c.l.b16 %v4567
    %v4677 = vunpack.c.l.b16 %v4568
    %v4678 = vunpack.c.l.b16 %v4569
    %v4679 = vunpack.c.l.b16 %v4570
    %v4680 = vunpack.c.l.b16 %v4571
    %v4681 = vpack.c.b16 %v4652, %v4651
    %v4682 = vpack.c.b16 %v4654, %v4653
    %v4683 = vpack.c.b16 %v4656, %v4655
    %v4684 = vpack.c.b16 %v4658, %v4657
    %v4685 = vpack.c.b16 %v4660, %v4659
    %v4686 = vpack.c.b16 %v4662, %v4661
    %v4687 = vpack.c.b16 %v4664, %v4663
    %v4688 = vpack.c.b16 %v4666, %v4665
    %v4689 = vpack.c.b16 %v4668, %v4667
    %v4690 = vpack.c.b16 %v4670, %v4669
    %v4691 = vpack.c.b16 %v4672, %v4671
    %v4692 = vpack.c.b16 %v4674, %v4673
    %v4693 = vpack.c.b16 %v4676, %v4675
    %v4694 = vpack.c.b16 %v4678, %v4677
    %v4695 = vpack.c.b16 %v4680, %v4679
    %v4712 = vsel %vm736, %v4619, 0
    %4714 = vmatprep.subr.bf16.mxu0 0
    %4715 = vmatpush1.bf16.msra.mxu0 %v4688
    %4716 = vmatprep.subr.bf16.mxu0 0
    %4717 = vmatpush1.bf16.msra.mxu0 %v4687
    %4718 = vmatprep.subr.bf16.mxu0 0
    %4719 = vmatpush1.bf16.msra.mxu0 %v4686
    %4720 = vmatprep.subr.bf16.mxu0 0
    %4721 = vmatpush1.bf16.msra.mxu0 %v4685
    %4722 = vmatprep.subr.bf16.mxu0 0
    %4723 = vmatpush1.bf16.msra.mxu0 %v4684
    %4724 = vmatprep.subr.bf16.mxu0 0
    %4725 = vmatpush1.bf16.msra.mxu0 %v4683
    %4726 = vmatprep.subr.bf16.mxu0 0
    %4727 = vmatpush1.bf16.msra.mxu0 %v4682
    %4728 = vmatprep.subr.bf16.mxu0 0
    %4729 = vmatpush1.bf16.msra.mxu0 %v4681
    %4730 = vmatprep.subr.bf16.mxu0 0
    %4731 = vmatpush2.bf16.msra.mxu0 0
    %4732 = vmatprep.subr.bf16.mxu0 0
    %4733 = vmatpush2.bf16.msra.mxu0 %v4695
    %4734 = vmatprep.subr.bf16.mxu0 0
    %4735 = vmatpush2.bf16.msra.mxu0 %v4694
    %4736 = vmatprep.subr.bf16.mxu0 0
    %4737 = vmatpush2.bf16.msra.mxu0 %v4693
    %4738 = vmatprep.subr.bf16.mxu0 0
    %4739 = vmatpush2.bf16.msra.mxu0 %v4692
    %4740 = vmatprep.subr.bf16.mxu0 0
    %4741 = vmatpush2.bf16.msra.mxu0 %v4691
    %4742 = vmatprep.subr.bf16.mxu0 0
    %4743 = vmatpush2.bf16.msra.mxu0 %v4690
    %4744 = vmatprep.subr.bf16.mxu0 0
    %4745 = vmatpush2.bf16.msra.mxu0 %v4689
    %4746 = vmatprep.mubr.bf16.mxu0 %v4712
    %4747 = vmatmul.mubr.bf16.gmra.mxu0 %v4618
    %v4748 = vpop.f32.mrf.mxu0
    %v4749 = vadd.f32 0.0, %v4748
    %v4750 = vpop.f32.mrf.mxu0
    %v4751 = vpop.f32.mrf.mxu0
    %v4752 = vpop.f32.mrf.mxu0
    %4753 = vdwg.mxu0
    %v4754 = vadd.f32 %v3579, %v4749
    %v4755 = vld [vmem:[%s0 + $0x80] sm:$0xf]
    %v4756 = vld [vmem:[%s0 + $0x84] sm:$0xf]
    %v4757 = vld [vmem:[%s0 + $0x88] sm:$0xf]
    %v4758 = vld [vmem:[%s0 + $0x8c] sm:$0xf]
    %v4759 = vld [vmem:[%s0 + $0x90] sm:$0xf]
    %v4760 = vld [vmem:[%s0 + $0x94] sm:$0xf]
    %v4761 = vld [vmem:[%s0 + $0x98] sm:$0xf]
    %v4762 = vld [vmem:[%s0 + $0x9c] sm:$0xf]
    %v4763 = vld [vmem:[%s0 + $0x1a0] sm:$0xf]
    %v4764 = vld [vmem:[%s0 + $0x1a4] sm:$0xf]
    %v4765 = vld [vmem:[%s0 + $0x1a8] sm:$0xf]
    %v4766 = vld [vmem:[%s0 + $0x1ac] sm:$0xf]
    %v4767 = vld [vmem:[%s0 + $0x1b0] sm:$0xf]
    %v4768 = vld [vmem:[%s0 + $0x1b4] sm:$0xf]
    %v4769 = vld [vmem:[%s0 + $0x1b8] sm:$0xf]
    %v4770 = vld [vmem:[%s0 + $0x1bc] sm:$0xf]
    %v4771 = vld [vmem:[%s0 + $0x2c0] sm:$0xf]
    %v4772 = vld [vmem:[%s0 + $0x2c4] sm:$0xf]
    %v4773 = vld [vmem:[%s0 + $0x2c8] sm:$0xf]
    %v4774 = vld [vmem:[%s0 + $0x2cc] sm:$0xf]
    %v4775 = vld [vmem:[%s0 + $0x2d0] sm:$0xf]
    %v4776 = vld [vmem:[%s0 + $0x2d4] sm:$0xf]
    %v4777 = vld [vmem:[%s0 + $0x2d8] sm:$0xf]
    %v4778 = vld [vmem:[%s0 + $0x2dc] sm:$0xf]
    %v4779 = vld [vmem:[%s0 + $0x3e0] sm:$0xf]
    %v4780 = vld [vmem:[%s0 + $0x3e4] sm:$0xf]
    %v4781 = vld [vmem:[%s0 + $0x3e8] sm:$0xf]
    %v4782 = vld [vmem:[%s0 + $0x3ec] sm:$0xf]
    %v4783 = vld [vmem:[%s0 + $0x3f0] sm:$0xf]
    %v4784 = vld [vmem:[%s0 + $0x3f4] sm:$0xf]
    %v4785 = vld [vmem:[%s0 + $0x3f8] sm:$0xf]
    %v4786 = vld [vmem:[%s0 + $0x3fc] sm:$0xf]
    %v4787 = vld [vmem:[%s0 + $0x500] sm:$0xf]
    %v4788 = vld [vmem:[%s0 + $0x504] sm:$0xf]
    %v4789 = vld [vmem:[%s0 + $0x508] sm:$0xf]
    %v4790 = vld [vmem:[%s0 + $0x50c] sm:$0xf]
    %v4791 = vld [vmem:[%s0 + $0x510] sm:$0xf]
    %v4792 = vld [vmem:[%s0 + $0x514] sm:$0xf]
    %v4793 = vld [vmem:[%s0 + $0x518] sm:$0xf]
    %v4794 = vld [vmem:[%s0 + $0x51c] sm:$0xf]
    %v4795 = vld [vmem:[%s0 + $0x620] sm:$0xf]
    %v4796 = vld [vmem:[%s0 + $0x624] sm:$0xf]
    %v4797 = vld [vmem:[%s0 + $0x628] sm:$0xf]
    %v4798 = vld [vmem:[%s0 + $0x62c] sm:$0xf]
    %v4799 = vld [vmem:[%s0 + $0x630] sm:$0xf]
    %v4800 = vld [vmem:[%s0 + $0x634] sm:$0xf]
    %v4801 = vld [vmem:[%s0 + $0x638] sm:$0xf]
    %v4802 = vld [vmem:[%s0 + $0x63c] sm:$0xf]
    %v4803 = vld [vmem:[%s0 + $0x740] sm:$0xf]
    %v4804 = vld [vmem:[%s0 + $0x744] sm:$0xf]
    %v4805 = vld [vmem:[%s0 + $0x748] sm:$0xf]
    %v4806 = vld [vmem:[%s0 + $0x74c] sm:$0xf]
    %v4807 = vld [vmem:[%s0 + $0x750] sm:$0xf]
    %v4808 = vld [vmem:[%s0 + $0x754] sm:$0xf]
    %v4809 = vld [vmem:[%s0 + $0x758] sm:$0xf]
    %v4810 = vld [vmem:[%s0 + $0x75c] sm:$0xf]
    %v4811 = vld [vmem:[%s0 + $0x860] sm:$0xf]
    %v4812 = vld [vmem:[%s0 + $0x864] sm:$0xf]
    %v4813 = vld [vmem:[%s0 + $0x868] sm:$0xf]
    %v4814 = vld [vmem:[%s0 + $0x86c] sm:$0xf]
    %v4815 = vld [vmem:[%s0 + $0x870] sm:$0xf]
    %v4816 = vld [vmem:[%s0 + $0x874] sm:$0xf]
    %v4817 = vld [vmem:[%s0 + $0x878] sm:$0xf]
    %v4818 = vld [vmem:[%s0 + $0x87c] sm:$0xf]
    %v4883 = vunpack.c.l.b16 %v4755
    %v4884 = vunpack.c.l.b16 %v4756
    %v4885 = vunpack.c.l.b16 %v4757
    %v4886 = vunpack.c.l.b16 %v4758
    %v4887 = vunpack.c.l.b16 %v4759
    %v4888 = vunpack.c.l.b16 %v4760
    %v4889 = vunpack.c.l.b16 %v4761
    %v4890 = vunpack.c.l.b16 %v4762
    %v4891 = vunpack.c.l.b16 %v4763
    %v4892 = vunpack.c.l.b16 %v4764
    %v4893 = vunpack.c.l.b16 %v4765
    %v4894 = vunpack.c.l.b16 %v4766
    %v4895 = vunpack.c.l.b16 %v4767
    %v4896 = vunpack.c.l.b16 %v4768
    %v4897 = vunpack.c.l.b16 %v4769
    %v4898 = vunpack.c.l.b16 %v4770
    %v4899 = vunpack.c.l.b16 %v4771
    %v4900 = vunpack.c.l.b16 %v4772
    %v4901 = vunpack.c.l.b16 %v4773
    %v4902 = vunpack.c.l.b16 %v4774
    %v4903 = vunpack.c.l.b16 %v4775
    %v4904 = vunpack.c.l.b16 %v4776
    %v4905 = vunpack.c.l.b16 %v4777
    %v4906 = vunpack.c.l.b16 %v4778
    %v4907 = vunpack.c.l.b16 %v4779
    %v4908 = vunpack.c.l.b16 %v4780
    %v4909 = vunpack.c.l.b16 %v4781
    %v4910 = vunpack.c.l.b16 %v4782
    %v4911 = vunpack.c.l.b16 %v4783
    %v4912 = vunpack.c.l.b16 %v4784
    %v4913 = vunpack.c.l.b16 %v4785
    %v4914 = vunpack.c.l.b16 %v4786
    %v4915 = vunpack.c.l.b16 %v4787
    %v4916 = vunpack.c.l.b16 %v4788
    %v4917 = vunpack.c.l.b16 %v4789
    %v4918 = vunpack.c.l.b16 %v4790
    %v4919 = vunpack.c.l.b16 %v4791
    %v4920 = vunpack.c.l.b16 %v4792
    %v4921 = vunpack.c.l.b16 %v4793
    %v4922 = vunpack.c.l.b16 %v4794
    %v4923 = vunpack.c.l.b16 %v4795
    %v4924 = vunpack.c.l.b16 %v4796
    %v4925 = vunpack.c.l.b16 %v4797
    %v4926 = vunpack.c.l.b16 %v4798
    %v4927 = vunpack.c.l.b16 %v4799
    %v4928 = vunpack.c.l.b16 %v4800
    %v4929 = vunpack.c.l.b16 %v4801
    %v4930 = vunpack.c.l.b16 %v4802
    %v4931 = vunpack.c.l.b16 %v4803
    %v4932 = vunpack.c.l.b16 %v4804
    %v4933 = vunpack.c.l.b16 %v4805
    %v4934 = vunpack.c.l.b16 %v4806
    %v4935 = vunpack.c.l.b16 %v4807
    %v4936 = vunpack.c.l.b16 %v4808
    %v4937 = vunpack.c.l.b16 %v4809
    %v4938 = vunpack.c.l.b16 %v4810
    %v4939 = vunpack.c.l.b16 %v4811
    %v4940 = vunpack.c.l.b16 %v4812
    %v4941 = vunpack.c.l.b16 %v4813
    %v4942 = vunpack.c.l.b16 %v4814
    %v4943 = vunpack.c.l.b16 %v4815
    %v4944 = vunpack.c.l.b16 %v4816
    %v4945 = vunpack.c.l.b16 %v4817
    %v4946 = vunpack.c.l.b16 %v4818
    %v4947 = vpack.c.b16 %v4884, %v4883
    %v4948 = vpack.c.b16 %v4886, %v4885
    %v4949 = vpack.c.b16 %v4888, %v4887
    %v4950 = vpack.c.b16 %v4890, %v4889
    %v4951 = vpack.c.b16 %v4892, %v4891
    %v4952 = vpack.c.b16 %v4894, %v4893
    %v4953 = vpack.c.b16 %v4896, %v4895
    %v4954 = vpack.c.b16 %v4898, %v4897
    %v4955 = vpack.c.b16 %v4900, %v4899
    %v4956 = vpack.c.b16 %v4902, %v4901
    %v4957 = vpack.c.b16 %v4904, %v4903
    %v4958 = vpack.c.b16 %v4906, %v4905
    %v4959 = vpack.c.b16 %v4908, %v4907
    %v4960 = vpack.c.b16 %v4910, %v4909
    %v4961 = vpack.c.b16 %v4912, %v4911
    %v4962 = vpack.c.b16 %v4914, %v4913
    %v4963 = vpack.c.b16 %v4916, %v4915
    %v4964 = vpack.c.b16 %v4918, %v4917
    %v4965 = vpack.c.b16 %v4920, %v4919
    %v4966 = vpack.c.b16 %v4922, %v4921
    %v4967 = vpack.c.b16 %v4924, %v4923
    %v4968 = vpack.c.b16 %v4926, %v4925
    %v4969 = vpack.c.b16 %v4928, %v4927
    %v4970 = vpack.c.b16 %v4930, %v4929
    %v4971 = vpack.c.b16 %v4932, %v4931
    %v4972 = vpack.c.b16 %v4934, %v4933
    %v4973 = vpack.c.b16 %v4936, %v4935
    %v4974 = vpack.c.b16 %v4938, %v4937
    %v4975 = vpack.c.b16 %v4940, %v4939
    %v4976 = vpack.c.b16 %v4942, %v4941
    %v4977 = vpack.c.b16 %v4944, %v4943
    %v4978 = vpack.c.b16 %v4946, %v4945
    %v4980 = vsel %vm273, %v4947, 0
    %v4983 = vsel %vm273, %v4948, 0
    %v4986 = vsel %vm273, %v4949, 0
    %v4989 = vsel %vm273, %v4950, 0
    %v4992 = vsel %vm273, %v4951, 0
    %v4995 = vsel %vm273, %v4952, 0
    %v4998 = vsel %vm273, %v4953, 0
    %v5001 = vsel %vm273, %v4954, 0
    %v5004 = vsel %vm273, %v4955, 0
    %v5007 = vsel %vm273, %v4956, 0
    %v5010 = vsel %vm273, %v4957, 0
    %v5013 = vsel %vm273, %v4958, 0
    %v5016 = vsel %vm273, %v4959, 0
    %v5019 = vsel %vm273, %v4960, 0
    %v5022 = vsel %vm273, %v4961, 0
    %v5025 = vsel %vm273, %v4962, 0
    %v5028 = vsel %vm273, %v4963, 0
    %v5031 = vsel %vm273, %v4964, 0
    %v5034 = vsel %vm273, %v4965, 0
    %v5037 = vsel %vm273, %v4966, 0
    %v5040 = vsel %vm273, %v4967, 0
    %v5043 = vsel %vm273, %v4968, 0
    %v5046 = vsel %vm273, %v4969, 0
    %v5049 = vsel %vm273, %v4970, 0
    %v5052 = vsel %vm273, %v4971, 0
    %v5055 = vsel %vm273, %v4972, 0
    %v5058 = vsel %vm273, %v4973, 0
    %v5061 = vsel %vm273, %v4974, 0
    %v5064 = vsel %vm273, %v4975, 0
    %v5067 = vsel %vm273, %v4976, 0
    %v5070 = vsel %vm273, %v4977, 0
    %v5073 = vsel %vm273, %v4978, 0
    %5075 = vmatprep.subr.bf16.mxu0 0
    %5076 = vmatpush1.bf16.msra.mxu0 0
    %5077 = vmatprep.subr.bf16.mxu0 0
    %5078 = vmatpush1.bf16.msra.mxu0 0
    %5079 = vmatprep.subr.bf16.mxu0 0
    %5080 = vmatpush1.bf16.msra.mxu0 0
    %5081 = vmatprep.subr.bf16.mxu0 0
    %5082 = vmatpush1.bf16.msra.mxu0 0
    %5083 = vmatprep.subr.bf16.mxu0 0
    %5084 = vmatpush1.bf16.msra.mxu0 0
    %5085 = vmatprep.subr.bf16.mxu0 0
    %5086 = vmatpush1.bf16.msra.mxu0 0
    %5087 = vmatprep.subr.bf16.mxu0 %v268
    %5088 = vmatpush1.bf16.msra.mxu0 %v267
    %5089 = vmatprep.subr.bf16.mxu0 %v266
    %5090 = vmatpush1.bf16.msra.mxu0 %v265
    %5091 = vmatprep.subr.bf16.mxu0 0
    %5092 = vmatpush2.bf16.msra.mxu0 0
    %5093 = vmatprep.subr.bf16.mxu0 0
    %5094 = vmatpush2.bf16.msra.mxu0 0
    %5095 = vmatprep.subr.bf16.mxu0 0
    %5096 = vmatpush2.bf16.msra.mxu0 0
    %5097 = vmatprep.subr.bf16.mxu0 0
    %5098 = vmatpush2.bf16.msra.mxu0 0
    %5099 = vmatprep.subr.bf16.mxu0 0
    %5100 = vmatpush2.bf16.msra.mxu0 0
    %5101 = vmatprep.subr.bf16.mxu0 0
    %5102 = vmatpush2.bf16.msra.mxu0 0
    %5103 = vmatprep.subr.bf16.mxu0 0
    %5104 = vmatpush2.bf16.msra.mxu0 0
    %5105 = vmatprep.subr.bf16.mxu0 0
    %5106 = vmatpush2.bf16.msra.mxu0 0
    %5107 = vmatprep.mubr.bf16.mxu0 0
    %5108 = vmatmul.mubr.bf16.gmra.mxu0 %v4980
    %v5109 = vpop.f32.mrf.mxu0
    %v5110 = vadd.f32 0.0, %v5109
    %v5111 = vpop.f32.mrf.mxu0
    %v5112 = vadd.f32 0.0, %v5111
    %v5113 = vpop.f32.mrf.mxu0
    %v5114 = vadd.f32 0.0, %v5113
    %v5115 = vpop.f32.mrf.mxu0
    %v5116 = vadd.f32 0.0, %v5115
    %5117 = vmatprep.mubr.bf16.mxu0 0
    %5118 = vmatmul.mubr.bf16.gmra.mxu0 %v4983
    %v5119 = vpop.f32.mrf.mxu0
    %v5120 = vadd.f32 0.0, %v5119
    %v5121 = vpop.f32.mrf.mxu0
    %v5122 = vadd.f32 0.0, %v5121
    %v5123 = vpop.f32.mrf.mxu0
    %v5124 = vadd.f32 0.0, %v5123
    %v5125 = vpop.f32.mrf.mxu0
    %v5126 = vadd.f32 0.0, %v5125
    %5127 = vmatprep.mubr.bf16.mxu0 0
    %5128 = vmatmul.mubr.bf16.gmra.mxu0 %v4986
    %v5129 = vpop.f32.mrf.mxu0
    %v5130 = vadd.f32 0.0, %v5129
    %v5131 = vpop.f32.mrf.mxu0
    %v5132 = vadd.f32 0.0, %v5131
    %v5133 = vpop.f32.mrf.mxu0
    %v5134 = vadd.f32 0.0, %v5133
    %v5135 = vpop.f32.mrf.mxu0
    %v5136 = vadd.f32 0.0, %v5135
    %5137 = vmatprep.mubr.bf16.mxu0 0
    %5138 = vmatmul.mubr.bf16.gmra.mxu0 %v4989
    %v5139 = vpop.f32.mrf.mxu0
    %v5140 = vadd.f32 0.0, %v5139
    %v5141 = vpop.f32.mrf.mxu0
    %v5142 = vadd.f32 0.0, %v5141
    %v5143 = vpop.f32.mrf.mxu0
    %v5144 = vadd.f32 0.0, %v5143
    %v5145 = vpop.f32.mrf.mxu0
    %v5146 = vadd.f32 0.0, %v5145
    %5147 = vmatprep.mubr.bf16.mxu0 0
    %5148 = vmatmul.mubr.bf16.gmra.mxu0 %v4992
    %v5149 = vpop.f32.mrf.mxu0
    %v5150 = vadd.f32 0.0, %v5149
    %v5151 = vpop.f32.mrf.mxu0
    %v5152 = vadd.f32 0.0, %v5151
    %v5153 = vpop.f32.mrf.mxu0
    %v5154 = vadd.f32 0.0, %v5153
    %v5155 = vpop.f32.mrf.mxu0
    %v5156 = vadd.f32 0.0, %v5155
    %5157 = vmatprep.mubr.bf16.mxu0 0
    %5158 = vmatmul.mubr.bf16.gmra.mxu0 %v4995
    %v5159 = vpop.f32.mrf.mxu0
    %v5160 = vadd.f32 0.0, %v5159
    %v5161 = vpop.f32.mrf.mxu0
    %v5162 = vadd.f32 0.0, %v5161
    %v5163 = vpop.f32.mrf.mxu0
    %v5164 = vadd.f32 0.0, %v5163
    %v5165 = vpop.f32.mrf.mxu0
    %v5166 = vadd.f32 0.0, %v5165
    %5167 = vmatprep.mubr.bf16.mxu0 0
    %5168 = vmatmul.mubr.bf16.gmra.mxu0 %v4998
    %v5169 = vpop.f32.mrf.mxu0
    %v5170 = vadd.f32 0.0, %v5169
    %v5171 = vpop.f32.mrf.mxu0
    %v5172 = vadd.f32 0.0, %v5171
    %v5173 = vpop.f32.mrf.mxu0
    %v5174 = vadd.f32 0.0, %v5173
    %v5175 = vpop.f32.mrf.mxu0
    %v5176 = vadd.f32 0.0, %v5175
    %5177 = vmatprep.mubr.bf16.mxu0 0
    %5178 = vmatmul.mubr.bf16.gmra.mxu0 %v5001
    %v5179 = vpop.f32.mrf.mxu0
    %v5180 = vadd.f32 0.0, %v5179
    %v5181 = vpop.f32.mrf.mxu0
    %v5182 = vadd.f32 0.0, %v5181
    %v5183 = vpop.f32.mrf.mxu0
    %v5184 = vadd.f32 0.0, %v5183
    %v5185 = vpop.f32.mrf.mxu0
    %v5186 = vadd.f32 0.0, %v5185
    %5187 = vmatprep.mubr.bf16.mxu0 0
    %5188 = vmatmul.mubr.bf16.gmra.mxu0 %v5004
    %v5189 = vpop.f32.mrf.mxu0
    %v5190 = vadd.f32 0.0, %v5189
    %v5191 = vpop.f32.mrf.mxu0
    %v5192 = vadd.f32 0.0, %v5191
    %v5193 = vpop.f32.mrf.mxu0
    %v5194 = vadd.f32 0.0, %v5193
    %v5195 = vpop.f32.mrf.mxu0
    %v5196 = vadd.f32 0.0, %v5195
    %5197 = vmatprep.mubr.bf16.mxu0 0
    %5198 = vmatmul.mubr.bf16.gmra.mxu0 %v5007
    %v5199 = vpop.f32.mrf.mxu0
    %v5200 = vadd.f32 0.0, %v5199
    %v5201 = vpop.f32.mrf.mxu0
    %v5202 = vadd.f32 0.0, %v5201
    %v5203 = vpop.f32.mrf.mxu0
    %v5204 = vadd.f32 0.0, %v5203
    %v5205 = vpop.f32.mrf.mxu0
    %v5206 = vadd.f32 0.0, %v5205
    %5207 = vmatprep.mubr.bf16.mxu0 0
    %5208 = vmatmul.mubr.bf16.gmra.mxu0 %v5010
    %v5209 = vpop.f32.mrf.mxu0
    %v5210 = vadd.f32 0.0, %v5209
    %v5211 = vpop.f32.mrf.mxu0
    %v5212 = vadd.f32 0.0, %v5211
    %v5213 = vpop.f32.mrf.mxu0
    %v5214 = vadd.f32 0.0, %v5213
    %v5215 = vpop.f32.mrf.mxu0
    %v5216 = vadd.f32 0.0, %v5215
    %5217 = vmatprep.mubr.bf16.mxu0 0
    %5218 = vmatmul.mubr.bf16.gmra.mxu0 %v5013
    %v5219 = vpop.f32.mrf.mxu0
    %v5220 = vadd.f32 0.0, %v5219
    %v5221 = vpop.f32.mrf.mxu0
    %v5222 = vadd.f32 0.0, %v5221
    %v5223 = vpop.f32.mrf.mxu0
    %v5224 = vadd.f32 0.0, %v5223
    %v5225 = vpop.f32.mrf.mxu0
    %v5226 = vadd.f32 0.0, %v5225
    %5227 = vmatprep.mubr.bf16.mxu0 0
    %5228 = vmatmul.mubr.bf16.gmra.mxu0 %v5016
    %v5229 = vpop.f32.mrf.mxu0
    %v5230 = vadd.f32 0.0, %v5229
    %v5231 = vpop.f32.mrf.mxu0
    %v5232 = vadd.f32 0.0, %v5231
    %v5233 = vpop.f32.mrf.mxu0
    %v5234 = vadd.f32 0.0, %v5233
    %v5235 = vpop.f32.mrf.mxu0
    %v5236 = vadd.f32 0.0, %v5235
    %5237 = vmatprep.mubr.bf16.mxu0 0
    %5238 = vmatmul.mubr.bf16.gmra.mxu0 %v5019
    %v5239 = vpop.f32.mrf.mxu0
    %v5240 = vadd.f32 0.0, %v5239
    %v5241 = vpop.f32.mrf.mxu0
    %v5242 = vadd.f32 0.0, %v5241
    %v5243 = vpop.f32.mrf.mxu0
    %v5244 = vadd.f32 0.0, %v5243
    %v5245 = vpop.f32.mrf.mxu0
    %v5246 = vadd.f32 0.0, %v5245
    %5247 = vmatprep.mubr.bf16.mxu0 0
    %5248 = vmatmul.mubr.bf16.gmra.mxu0 %v5022
    %v5249 = vpop.f32.mrf.mxu0
    %v5250 = vadd.f32 0.0, %v5249
    %v5251 = vpop.f32.mrf.mxu0
    %v5252 = vadd.f32 0.0, %v5251
    %v5253 = vpop.f32.mrf.mxu0
    %v5254 = vadd.f32 0.0, %v5253
    %v5255 = vpop.f32.mrf.mxu0
    %v5256 = vadd.f32 0.0, %v5255
    %5257 = vmatprep.mubr.bf16.mxu0 0
    %5258 = vmatmul.mubr.bf16.gmra.mxu0 %v5025
    %v5259 = vpop.f32.mrf.mxu0
    %v5260 = vadd.f32 0.0, %v5259
    %v5261 = vpop.f32.mrf.mxu0
    %v5262 = vadd.f32 0.0, %v5261
    %v5263 = vpop.f32.mrf.mxu0
    %v5264 = vadd.f32 0.0, %v5263
    %v5265 = vpop.f32.mrf.mxu0
    %v5266 = vadd.f32 0.0, %v5265
    %5267 = vmatprep.mubr.bf16.mxu0 0
    %5268 = vmatmul.mubr.bf16.gmra.mxu0 %v5028
    %v5269 = vpop.f32.mrf.mxu0
    %v5270 = vadd.f32 0.0, %v5269
    %v5271 = vpop.f32.mrf.mxu0
    %v5272 = vadd.f32 0.0, %v5271
    %v5273 = vpop.f32.mrf.mxu0
    %v5274 = vadd.f32 0.0, %v5273
    %v5275 = vpop.f32.mrf.mxu0
    %v5276 = vadd.f32 0.0, %v5275
    %5277 = vmatprep.mubr.bf16.mxu0 0
    %5278 = vmatmul.mubr.bf16.gmra.mxu0 %v5031
    %v5279 = vpop.f32.mrf.mxu0
    %v5280 = vadd.f32 0.0, %v5279
    %v5281 = vpop.f32.mrf.mxu0
    %v5282 = vadd.f32 0.0, %v5281
    %v5283 = vpop.f32.mrf.mxu0
    %v5284 = vadd.f32 0.0, %v5283
    %v5285 = vpop.f32.mrf.mxu0
    %v5286 = vadd.f32 0.0, %v5285
    %5287 = vmatprep.mubr.bf16.mxu0 0
    %5288 = vmatmul.mubr.bf16.gmra.mxu0 %v5034
    %v5289 = vpop.f32.mrf.mxu0
    %v5290 = vadd.f32 0.0, %v5289
    %v5291 = vpop.f32.mrf.mxu0
    %v5292 = vadd.f32 0.0, %v5291
    %v5293 = vpop.f32.mrf.mxu0
    %v5294 = vadd.f32 0.0, %v5293
    %v5295 = vpop.f32.mrf.mxu0
    %v5296 = vadd.f32 0.0, %v5295
    %5297 = vmatprep.mubr.bf16.mxu0 0
    %5298 = vmatmul.mubr.bf16.gmra.mxu0 %v5037
    %v5299 = vpop.f32.mrf.mxu0
    %v5300 = vadd.f32 0.0, %v5299
    %v5301 = vpop.f32.mrf.mxu0
    %v5302 = vadd.f32 0.0, %v5301
    %v5303 = vpop.f32.mrf.mxu0
    %v5304 = vadd.f32 0.0, %v5303
    %v5305 = vpop.f32.mrf.mxu0
    %v5306 = vadd.f32 0.0, %v5305
    %5307 = vmatprep.mubr.bf16.mxu0 0
    %5308 = vmatmul.mubr.bf16.gmra.mxu0 %v5040
    %v5309 = vpop.f32.mrf.mxu0
    %v5310 = vadd.f32 0.0, %v5309
    %v5311 = vpop.f32.mrf.mxu0
    %v5312 = vadd.f32 0.0, %v5311
    %v5313 = vpop.f32.mrf.mxu0
    %v5314 = vadd.f32 0.0, %v5313
    %v5315 = vpop.f32.mrf.mxu0
    %v5316 = vadd.f32 0.0, %v5315
    %5317 = vmatprep.mubr.bf16.mxu0 0
    %5318 = vmatmul.mubr.bf16.gmra.mxu0 %v5043
    %v5319 = vpop.f32.mrf.mxu0
    %v5320 = vadd.f32 0.0, %v5319
    %v5321 = vpop.f32.mrf.mxu0
    %v5322 = vadd.f32 0.0, %v5321
    %v5323 = vpop.f32.mrf.mxu0
    %v5324 = vadd.f32 0.0, %v5323
    %v5325 = vpop.f32.mrf.mxu0
    %v5326 = vadd.f32 0.0, %v5325
    %5327 = vmatprep.mubr.bf16.mxu0 0
    %5328 = vmatmul.mubr.bf16.gmra.mxu0 %v5046
    %v5329 = vpop.f32.mrf.mxu0
    %v5330 = vadd.f32 0.0, %v5329
    %v5331 = vpop.f32.mrf.mxu0
    %v5332 = vadd.f32 0.0, %v5331
    %v5333 = vpop.f32.mrf.mxu0
    %v5334 = vadd.f32 0.0, %v5333
    %v5335 = vpop.f32.mrf.mxu0
    %v5336 = vadd.f32 0.0, %v5335
    %5337 = vmatprep.mubr.bf16.mxu0 0
    %5338 = vmatmul.mubr.bf16.gmra.mxu0 %v5049
    %v5339 = vpop.f32.mrf.mxu0
    %v5340 = vadd.f32 0.0, %v5339
    %v5341 = vpop.f32.mrf.mxu0
    %v5342 = vadd.f32 0.0, %v5341
    %v5343 = vpop.f32.mrf.mxu0
    %v5344 = vadd.f32 0.0, %v5343
    %v5345 = vpop.f32.mrf.mxu0
    %v5346 = vadd.f32 0.0, %v5345
    %5347 = vmatprep.mubr.bf16.mxu0 0
    %5348 = vmatmul.mubr.bf16.gmra.mxu0 %v5052
    %v5349 = vpop.f32.mrf.mxu0
    %v5350 = vadd.f32 0.0, %v5349
    %v5351 = vpop.f32.mrf.mxu0
    %v5352 = vadd.f32 0.0, %v5351
    %v5353 = vpop.f32.mrf.mxu0
    %v5354 = vadd.f32 0.0, %v5353
    %v5355 = vpop.f32.mrf.mxu0
    %v5356 = vadd.f32 0.0, %v5355
    %5357 = vmatprep.mubr.bf16.mxu0 0
    %5358 = vmatmul.mubr.bf16.gmra.mxu0 %v5055
    %v5359 = vpop.f32.mrf.mxu0
    %v5360 = vadd.f32 0.0, %v5359
    %v5361 = vpop.f32.mrf.mxu0
    %v5362 = vadd.f32 0.0, %v5361
    %v5363 = vpop.f32.mrf.mxu0
    %v5364 = vadd.f32 0.0, %v5363
    %v5365 = vpop.f32.mrf.mxu0
    %v5366 = vadd.f32 0.0, %v5365
    %5367 = vmatprep.mubr.bf16.mxu0 0
    %5368 = vmatmul.mubr.bf16.gmra.mxu0 %v5058
    %v5369 = vpop.f32.mrf.mxu0
    %v5370 = vadd.f32 0.0, %v5369
    %v5371 = vpop.f32.mrf.mxu0
    %v5372 = vadd.f32 0.0, %v5371
    %v5373 = vpop.f32.mrf.mxu0
    %v5374 = vadd.f32 0.0, %v5373
    %v5375 = vpop.f32.mrf.mxu0
    %v5376 = vadd.f32 0.0, %v5375
    %5377 = vmatprep.mubr.bf16.mxu0 0
    %5378 = vmatmul.mubr.bf16.gmra.mxu0 %v5061
    %v5379 = vpop.f32.mrf.mxu0
    %v5380 = vadd.f32 0.0, %v5379
    %v5381 = vpop.f32.mrf.mxu0
    %v5382 = vadd.f32 0.0, %v5381
    %v5383 = vpop.f32.mrf.mxu0
    %v5384 = vadd.f32 0.0, %v5383
    %v5385 = vpop.f32.mrf.mxu0
    %v5386 = vadd.f32 0.0, %v5385
    %5387 = vmatprep.mubr.bf16.mxu0 0
    %5388 = vmatmul.mubr.bf16.gmra.mxu0 %v5064
    %v5389 = vpop.f32.mrf.mxu0
    %v5390 = vadd.f32 0.0, %v5389
    %v5391 = vpop.f32.mrf.mxu0
    %v5392 = vadd.f32 0.0, %v5391
    %v5393 = vpop.f32.mrf.mxu0
    %v5394 = vadd.f32 0.0, %v5393
    %v5395 = vpop.f32.mrf.mxu0
    %v5396 = vadd.f32 0.0, %v5395
    %5397 = vmatprep.mubr.bf16.mxu0 0
    %5398 = vmatmul.mubr.bf16.gmra.mxu0 %v5067
    %v5399 = vpop.f32.mrf.mxu0
    %v5400 = vadd.f32 0.0, %v5399
    %v5401 = vpop.f32.mrf.mxu0
    %v5402 = vadd.f32 0.0, %v5401
    %v5403 = vpop.f32.mrf.mxu0
    %v5404 = vadd.f32 0.0, %v5403
    %v5405 = vpop.f32.mrf.mxu0
    %v5406 = vadd.f32 0.0, %v5405
    %5407 = vmatprep.mubr.bf16.mxu0 0
    %5408 = vmatmul.mubr.bf16.gmra.mxu0 %v5070
    %v5409 = vpop.f32.mrf.mxu0
    %v5410 = vadd.f32 0.0, %v5409
    %v5411 = vpop.f32.mrf.mxu0
    %v5412 = vadd.f32 0.0, %v5411
    %v5413 = vpop.f32.mrf.mxu0
    %v5414 = vadd.f32 0.0, %v5413
    %v5415 = vpop.f32.mrf.mxu0
    %v5416 = vadd.f32 0.0, %v5415
    %5417 = vmatprep.mubr.bf16.mxu0 0
    %5418 = vmatmul.mubr.bf16.gmra.mxu0 %v5073
    %v5419 = vpop.f32.mrf.mxu0
    %v5420 = vadd.f32 0.0, %v5419
    %v5421 = vpop.f32.mrf.mxu0
    %v5422 = vadd.f32 0.0, %v5421
    %v5423 = vpop.f32.mrf.mxu0
    %v5424 = vadd.f32 0.0, %v5423
    %v5425 = vpop.f32.mrf.mxu0
    %v5426 = vadd.f32 0.0, %v5425
    %5427 = vdwg.mxu0
    %v5428 = vmax.f32 %v5110, %v5114
    %v5429 = vmax.f32 %v5428, %v5120
    %v5430 = vmax.f32 %v5429, %v5124
    %v5431 = vmax.f32 %v5430, %v5130
    %v5432 = vmax.f32 %v5431, %v5134
    %v5433 = vmax.f32 %v5432, %v5140
    %v5434 = vmax.f32 %v5433, %v5144
    %v5435 = vrot.slane %v5434, 4
    %v5436 = vmax.f32 %v5434, %v5435
    %v5437 = vrot.slane %v5436, 2
    %v5438 = vmax.f32 %v5436, %v5437
    %v5439 = vrot.slane %v5438, 1
    %v5440 = vmax.f32 %v5438, %v5439
    %v5441 = vsel %vm736, %v5112, -inf
    %v5442 = vsel %vm736, %v5116, -inf
    %v5443 = vmax.f32 %v5441, %v5442
    %v5444 = vsel %vm736, %v5122, -inf
    %v5445 = vmax.f32 %v5443, %v5444
    %v5446 = vsel %vm736, %v5126, -inf
    %v5447 = vmax.f32 %v5445, %v5446
    %v5448 = vsel %vm736, %v5132, -inf
    %v5449 = vmax.f32 %v5447, %v5448
    %v5450 = vsel %vm736, %v5136, -inf
    %v5451 = vmax.f32 %v5449, %v5450
    %v5452 = vsel %vm736, %v5142, -inf
    %v5453 = vmax.f32 %v5451, %v5452
    %v5454 = vsel %vm736, %v5146, -inf
    %v5455 = vmax.f32 %v5453, %v5454
    %v5456 = vrot.slane %v5455, 4
    %v5457 = vmax.f32 %v5455, %v5456
    %v5458 = vrot.slane %v5457, 2
    %v5459 = vmax.f32 %v5457, %v5458
    %v5460 = vrot.slane %v5459, 1
    %v5461 = vmax.f32 %v5459, %v5460
    %v5462 = vmax.f32 %v5150, %v5154
    %v5463 = vmax.f32 %v5462, %v5160
    %v5464 = vmax.f32 %v5463, %v5164
    %v5465 = vmax.f32 %v5464, %v5170
    %v5466 = vmax.f32 %v5465, %v5174
    %v5467 = vmax.f32 %v5466, %v5180
    %v5468 = vmax.f32 %v5467, %v5184
    %v5469 = vrot.slane %v5468, 4
    %v5470 = vmax.f32 %v5468, %v5469
    %v5471 = vrot.slane %v5470, 2
    %v5472 = vmax.f32 %v5470, %v5471
    %v5473 = vrot.slane %v5472, 1
    %v5474 = vmax.f32 %v5472, %v5473
    %v5475 = vsel %vm736, %v5152, -inf
    %v5476 = vsel %vm736, %v5156, -inf
    %v5477 = vmax.f32 %v5475, %v5476
    %v5478 = vsel %vm736, %v5162, -inf
    %v5479 = vmax.f32 %v5477, %v5478
    %v5480 = vsel %vm736, %v5166, -inf
    %v5481 = vmax.f32 %v5479, %v5480
    %v5482 = vsel %vm736, %v5172, -inf
    %v5483 = vmax.f32 %v5481, %v5482
    %v5484 = vsel %vm736, %v5176, -inf
    %v5485 = vmax.f32 %v5483, %v5484
    %v5486 = vsel %vm736, %v5182, -inf
    %v5487 = vmax.f32 %v5485, %v5486
    %v5488 = vsel %vm736, %v5186, -inf
    %v5489 = vmax.f32 %v5487, %v5488
    %v5490 = vrot.slane %v5489, 4
    %v5491 = vmax.f32 %v5489, %v5490
    %v5492 = vrot.slane %v5491, 2
    %v5493 = vmax.f32 %v5491, %v5492
    %v5494 = vrot.slane %v5493, 1
    %v5495 = vmax.f32 %v5493, %v5494
    %v5496 = vmax.f32 %v5190, %v5194
    %v5497 = vmax.f32 %v5496, %v5200
    %v5498 = vmax.f32 %v5497, %v5204
    %v5499 = vmax.f32 %v5498, %v5210
    %v5500 = vmax.f32 %v5499, %v5214
    %v5501 = vmax.f32 %v5500, %v5220
    %v5502 = vmax.f32 %v5501, %v5224
    %v5503 = vrot.slane %v5502, 4
    %v5504 = vmax.f32 %v5502, %v5503
    %v5505 = vrot.slane %v5504, 2
    %v5506 = vmax.f32 %v5504, %v5505
    %v5507 = vrot.slane %v5506, 1
    %v5508 = vmax.f32 %v5506, %v5507
    %v5509 = vsel %vm736, %v5192, -inf
    %v5510 = vsel %vm736, %v5196, -inf
    %v5511 = vmax.f32 %v5509, %v5510
    %v5512 = vsel %vm736, %v5202, -inf
    %v5513 = vmax.f32 %v5511, %v5512
    %v5514 = vsel %vm736, %v5206, -inf
    %v5515 = vmax.f32 %v5513, %v5514
    %v5516 = vsel %vm736, %v5212, -inf
    %v5517 = vmax.f32 %v5515, %v5516
    %v5518 = vsel %vm736, %v5216, -inf
    %v5519 = vmax.f32 %v5517, %v5518
    %v5520 = vsel %vm736, %v5222, -inf
    %v5521 = vmax.f32 %v5519, %v5520
    %v5522 = vsel %vm736, %v5226, -inf
    %v5523 = vmax.f32 %v5521, %v5522
    %v5524 = vrot.slane %v5523, 4
    %v5525 = vmax.f32 %v5523, %v5524
    %v5526 = vrot.slane %v5525, 2
    %v5527 = vmax.f32 %v5525, %v5526
    %v5528 = vrot.slane %v5527, 1
    %v5529 = vmax.f32 %v5527, %v5528
    %v5530 = vmax.f32 %v5230, %v5234
    %v5531 = vmax.f32 %v5530, %v5240
    %v5532 = vmax.f32 %v5531, %v5244
    %v5533 = vmax.f32 %v5532, %v5250
    %v5534 = vmax.f32 %v5533, %v5254
    %v5535 = vmax.f32 %v5534, %v5260
    %v5536 = vmax.f32 %v5535, %v5264
    %v5537 = vrot.slane %v5536, 4
    %v5538 = vmax.f32 %v5536, %v5537
    %v5539 = vrot.slane %v5538, 2
    %v5540 = vmax.f32 %v5538, %v5539
    %v5541 = vrot.slane %v5540, 1
    %v5542 = vmax.f32 %v5540, %v5541
    %v5543 = vsel %vm736, %v5232, -inf
    %v5544 = vsel %vm736, %v5236, -inf
    %v5545 = vmax.f32 %v5543, %v5544
    %v5546 = vsel %vm736, %v5242, -inf
    %v5547 = vmax.f32 %v5545, %v5546
    %v5548 = vsel %vm736, %v5246, -inf
    %v5549 = vmax.f32 %v5547, %v5548
    %v5550 = vsel %vm736, %v5252, -inf
    %v5551 = vmax.f32 %v5549, %v5550
    %v5552 = vsel %vm736, %v5256, -inf
    %v5553 = vmax.f32 %v5551, %v5552
    %v5554 = vsel %vm736, %v5262, -inf
    %v5555 = vmax.f32 %v5553, %v5554
    %v5556 = vsel %vm736, %v5266, -inf
    %v5557 = vmax.f32 %v5555, %v5556
    %v5558 = vrot.slane %v5557, 4
    %v5559 = vmax.f32 %v5557, %v5558
    %v5560 = vrot.slane %v5559, 2
    %v5561 = vmax.f32 %v5559, %v5560
    %v5562 = vrot.slane %v5561, 1
    %v5563 = vmax.f32 %v5561, %v5562
    %v5564 = vmax.f32 %v5270, %v5274
    %v5565 = vmax.f32 %v5564, %v5280
    %v5566 = vmax.f32 %v5565, %v5284
    %v5567 = vmax.f32 %v5566, %v5290
    %v5568 = vmax.f32 %v5567, %v5294
    %v5569 = vmax.f32 %v5568, %v5300
    %v5570 = vmax.f32 %v5569, %v5304
    %v5571 = vrot.slane %v5570, 4
    %v5572 = vmax.f32 %v5570, %v5571
    %v5573 = vrot.slane %v5572, 2
    %v5574 = vmax.f32 %v5572, %v5573
    %v5575 = vrot.slane %v5574, 1
    %v5576 = vmax.f32 %v5574, %v5575
    %v5577 = vsel %vm736, %v5272, -inf
    %v5578 = vsel %vm736, %v5276, -inf
    %v5579 = vmax.f32 %v5577, %v5578
    %v5580 = vsel %vm736, %v5282, -inf
    %v5581 = vmax.f32 %v5579, %v5580
    %v5582 = vsel %vm736, %v5286, -inf
    %v5583 = vmax.f32 %v5581, %v5582
    %v5584 = vsel %vm736, %v5292, -inf
    %v5585 = vmax.f32 %v5583, %v5584
    %v5586 = vsel %vm736, %v5296, -inf
    %v5587 = vmax.f32 %v5585, %v5586
    %v5588 = vsel %vm736, %v5302, -inf
    %v5589 = vmax.f32 %v5587, %v5588
    %v5590 = vsel %vm736, %v5306, -inf
    %v5591 = vmax.f32 %v5589, %v5590
    %v5592 = vrot.slane %v5591, 4
    %v5593 = vmax.f32 %v5591, %v5592
    %v5594 = vrot.slane %v5593, 2
    %v5595 = vmax.f32 %v5593, %v5594
    %v5596 = vrot.slane %v5595, 1
    %v5597 = vmax.f32 %v5595, %v5596
    %v5598 = vmax.f32 %v5310, %v5314
    %v5599 = vmax.f32 %v5598, %v5320
    %v5600 = vmax.f32 %v5599, %v5324
    %v5601 = vmax.f32 %v5600, %v5330
    %v5602 = vmax.f32 %v5601, %v5334
    %v5603 = vmax.f32 %v5602, %v5340
    %v5604 = vmax.f32 %v5603, %v5344
    %v5605 = vrot.slane %v5604, 4
    %v5606 = vmax.f32 %v5604, %v5605
    %v5607 = vrot.slane %v5606, 2
    %v5608 = vmax.f32 %v5606, %v5607
    %v5609 = vrot.slane %v5608, 1
    %v5610 = vmax.f32 %v5608, %v5609
    %v5611 = vsel %vm736, %v5312, -inf
    %v5612 = vsel %vm736, %v5316, -inf
    %v5613 = vmax.f32 %v5611, %v5612
    %v5614 = vsel %vm736, %v5322, -inf
    %v5615 = vmax.f32 %v5613, %v5614
    %v5616 = vsel %vm736, %v5326, -inf
    %v5617 = vmax.f32 %v5615, %v5616
    %v5618 = vsel %vm736, %v5332, -inf
    %v5619 = vmax.f32 %v5617, %v5618
    %v5620 = vsel %vm736, %v5336, -inf
    %v5621 = vmax.f32 %v5619, %v5620
    %v5622 = vsel %vm736, %v5342, -inf
    %v5623 = vmax.f32 %v5621, %v5622
    %v5624 = vsel %vm736, %v5346, -inf
    %v5625 = vmax.f32 %v5623, %v5624
    %v5626 = vrot.slane %v5625, 4
    %v5627 = vmax.f32 %v5625, %v5626
    %v5628 = vrot.slane %v5627, 2
    %v5629 = vmax.f32 %v5627, %v5628
    %v5630 = vrot.slane %v5629, 1
    %v5631 = vmax.f32 %v5629, %v5630
    %v5632 = vmax.f32 %v5350, %v5354
    %v5633 = vmax.f32 %v5632, %v5360
    %v5634 = vmax.f32 %v5633, %v5364
    %v5635 = vmax.f32 %v5634, %v5370
    %v5636 = vmax.f32 %v5635, %v5374
    %v5637 = vmax.f32 %v5636, %v5380
    %v5638 = vmax.f32 %v5637, %v5384
    %v5639 = vrot.slane %v5638, 4
    %v5640 = vmax.f32 %v5638, %v5639
    %v5641 = vrot.slane %v5640, 2
    %v5642 = vmax.f32 %v5640, %v5641
    %v5643 = vrot.slane %v5642, 1
    %v5644 = vmax.f32 %v5642, %v5643
    %v5645 = vsel %vm736, %v5352, -inf
    %v5646 = vsel %vm736, %v5356, -inf
    %v5647 = vmax.f32 %v5645, %v5646
    %v5648 = vsel %vm736, %v5362, -inf
    %v5649 = vmax.f32 %v5647, %v5648
    %v5650 = vsel %vm736, %v5366, -inf
    %v5651 = vmax.f32 %v5649, %v5650
    %v5652 = vsel %vm736, %v5372, -inf
    %v5653 = vmax.f32 %v5651, %v5652
    %v5654 = vsel %vm736, %v5376, -inf
    %v5655 = vmax.f32 %v5653, %v5654
    %v5656 = vsel %vm736, %v5382, -inf
    %v5657 = vmax.f32 %v5655, %v5656
    %v5658 = vsel %vm736, %v5386, -inf
    %v5659 = vmax.f32 %v5657, %v5658
    %v5660 = vrot.slane %v5659, 4
    %v5661 = vmax.f32 %v5659, %v5660
    %v5662 = vrot.slane %v5661, 2
    %v5663 = vmax.f32 %v5661, %v5662
    %v5664 = vrot.slane %v5663, 1
    %v5665 = vmax.f32 %v5663, %v5664
    %v5666 = vmax.f32 %v5390, %v5394
    %v5667 = vmax.f32 %v5666, %v5400
    %v5668 = vmax.f32 %v5667, %v5404
    %v5669 = vmax.f32 %v5668, %v5410
    %v5670 = vmax.f32 %v5669, %v5414
    %v5671 = vmax.f32 %v5670, %v5420
    %v5672 = vmax.f32 %v5671, %v5424
    %v5673 = vrot.slane %v5672, 4
    %v5674 = vmax.f32 %v5672, %v5673
    %v5675 = vrot.slane %v5674, 2
    %v5676 = vmax.f32 %v5674, %v5675
    %v5677 = vrot.slane %v5676, 1
    %v5678 = vmax.f32 %v5676, %v5677
    %v5679 = vsel %vm736, %v5392, -inf
    %v5680 = vsel %vm736, %v5396, -inf
    %v5681 = vmax.f32 %v5679, %v5680
    %v5682 = vsel %vm736, %v5402, -inf
    %v5683 = vmax.f32 %v5681, %v5682
    %v5684 = vsel %vm736, %v5406, -inf
    %v5685 = vmax.f32 %v5683, %v5684
    %v5686 = vsel %vm736, %v5412, -inf
    %v5687 = vmax.f32 %v5685, %v5686
    %v5688 = vsel %vm736, %v5416, -inf
    %v5689 = vmax.f32 %v5687, %v5688
    %v5690 = vsel %vm736, %v5422, -inf
    %v5691 = vmax.f32 %v5689, %v5690
    %v5692 = vsel %vm736, %v5426, -inf
    %v5693 = vmax.f32 %v5691, %v5692
    %v5694 = vrot.slane %v5693, 4
    %v5695 = vmax.f32 %v5693, %v5694
    %v5696 = vrot.slane %v5695, 2
    %v5697 = vmax.f32 %v5695, %v5696
    %v5698 = vrot.slane %v5697, 1
    %v5699 = vmax.f32 %v5697, %v5698
    %v5700 = vpack.c.bf16 %v5440, %v5440
    %v5701 = vpack.c.bf16 %v5461, %v5461
    %v5702 = vpack.c.bf16 %v5474, %v5474
    %v5703 = vpack.c.bf16 %v5495, %v5495
    %v5704 = vpack.c.bf16 %v5508, %v5508
    %v5705 = vpack.c.bf16 %v5529, %v5529
    %v5706 = vpack.c.bf16 %v5542, %v5542
    %v5707 = vpack.c.bf16 %v5563, %v5563
    %v5708 = vpack.c.bf16 %v5576, %v5576
    %v5709 = vpack.c.bf16 %v5597, %v5597
    %v5710 = vpack.c.bf16 %v5610, %v5610
    %v5711 = vpack.c.bf16 %v5631, %v5631
    %v5712 = vpack.c.bf16 %v5644, %v5644
    %v5713 = vpack.c.bf16 %v5665, %v5665
    %v5714 = vpack.c.bf16 %v5678, %v5678
    %v5715 = vpack.c.bf16 %v5699, %v5699
    %s5716 = scalar_lea.vmem %s2, 480
    %v5717 = vld [vmem:[%s5716] sm:$0xf]
    %v5718 = vld [vmem:[%s5716 + $0x4] sm:$0xf]
    %v5719 = vld [vmem:[%s5716 + $0x8] sm:$0xf]
    %v5720 = vld [vmem:[%s5716 + $0xc] sm:$0xf]
    %v5721 = vld [vmem:[%s5716 + $0x10] sm:$0xf]
    %v5722 = vld [vmem:[%s5716 + $0x14] sm:$0xf]
    %v5723 = vld [vmem:[%s5716 + $0x18] sm:$0xf]
    %v5724 = vld [vmem:[%s5716 + $0x1c] sm:$0xf]
    %v5725 = vld [vmem:[%s5716 + $0x20] sm:$0xf]
    %v5726 = vld [vmem:[%s5716 + $0x24] sm:$0xf]
    %v5727 = vld [vmem:[%s5716 + $0x28] sm:$0xf]
    %v5728 = vld [vmem:[%s5716 + $0x2c] sm:$0xf]
    %v5729 = vld [vmem:[%s5716 + $0x30] sm:$0xf]
    %v5730 = vld [vmem:[%s5716 + $0x34] sm:$0xf]
    %v5731 = vld [vmem:[%s5716 + $0x38] sm:$0xf]
    %v5732 = vld [vmem:[%s5716 + $0x3c] sm:$0xf]
    %v5733 = vld [vmem:[%s5716 + $0x40] sm:$0xf]
    %v5734 = vld [vmem:[%s5716 + $0x44] sm:$0xf]
    %v5735 = vld [vmem:[%s5716 + $0x48] sm:$0xf]
    %v5736 = vld [vmem:[%s5716 + $0x4c] sm:$0xf]
    %v5737 = vld [vmem:[%s5716 + $0x50] sm:$0xf]
    %v5738 = vld [vmem:[%s5716 + $0x54] sm:$0xf]
    %v5739 = vld [vmem:[%s5716 + $0x58] sm:$0xf]
    %v5740 = vld [vmem:[%s5716 + $0x5c] sm:$0xf]
    %v5741 = vld [vmem:[%s5716 + $0x60] sm:$0xf]
    %v5742 = vld [vmem:[%s5716 + $0x64] sm:$0xf]
    %v5743 = vld [vmem:[%s5716 + $0x68] sm:$0xf]
    %v5744 = vld [vmem:[%s5716 + $0x6c] sm:$0xf]
    %v5745 = vld [vmem:[%s5716 + $0x70] sm:$0xf]
    %v5746 = vld [vmem:[%s5716 + $0x74] sm:$0xf]
    %v5763 = vunpack.c.l.b16 %v5700
    %v5764 = vunpack.c.l.b16 %v5701
    %v5765 = vunpack.c.l.b16 %v5702
    %v5766 = vunpack.c.l.b16 %v5703
    %v5767 = vunpack.c.l.b16 %v5704
    %v5768 = vunpack.c.l.b16 %v5705
    %v5769 = vunpack.c.l.b16 %v5706
    %v5770 = vunpack.c.l.b16 %v5707
    %v5771 = vunpack.c.l.b16 %v5708
    %v5772 = vunpack.c.l.b16 %v5709
    %v5773 = vunpack.c.l.b16 %v5710
    %v5774 = vunpack.c.l.b16 %v5711
    %v5775 = vunpack.c.l.b16 %v5712
    %v5776 = vunpack.c.l.b16 %v5713
    %v5777 = vunpack.c.l.b16 %v5714
    %v5778 = vunpack.c.l.b16 %v5715
    %v5779 = vsel %vm2066, %v5765, %v5763
    %v5780 = vsel %vm2068, %v5767, %v5779
    %v5781 = vsel %vm2070, %v5769, %v5780
    %v5782 = vsel %vm2072, %v5771, %v5781
    %v5783 = vsel %vm2074, %v5773, %v5782
    %v5784 = vsel %vm2076, %v5775, %v5783
    %v5785 = vsel %vm2078, %v5777, %v5784
    %v5786 = vsel %vm2066, %v5766, %v5764
    %v5787 = vsel %vm2068, %v5768, %v5786
    %v5788 = vsel %vm2070, %v5770, %v5787
    %v5789 = vsel %vm2072, %v5772, %v5788
    %v5790 = vsel %vm2074, %v5774, %v5789
    %v5791 = vsel %vm2076, %v5776, %v5790
    %v5792 = vsel %vm2078, %v5778, %v5791
    %v5793 = vpack.c.b16 %v5785, %v5785
    %v5794 = vpack.c.b16 %v5792, %v5792
    %v5826 = vunpack.c.l.b16 %v5717
    %v5827 = vunpack.c.l.b16 %v5718
    %v5828 = vunpack.c.l.b16 %v5719
    %v5829 = vunpack.c.l.b16 %v5720
    %v5830 = vunpack.c.l.b16 %v5721
    %v5831 = vunpack.c.l.b16 %v5722
    %v5832 = vunpack.c.l.b16 %v5723
    %v5833 = vunpack.c.l.b16 %v5724
    %v5834 = vunpack.c.l.b16 %v5725
    %v5835 = vunpack.c.l.b16 %v5726
    %v5836 = vunpack.c.l.b16 %v5727
    %v5837 = vunpack.c.l.b16 %v5728
    %v5838 = vunpack.c.l.b16 %v5729
    %v5839 = vunpack.c.l.b16 %v5730
    %v5840 = vunpack.c.l.b16 %v5731
    %v5841 = vunpack.c.l.b16 %v5732
    %v5842 = vunpack.c.l.b16 %v5733
    %v5843 = vunpack.c.l.b16 %v5734
    %v5844 = vunpack.c.l.b16 %v5735
    %v5845 = vunpack.c.l.b16 %v5736
    %v5846 = vunpack.c.l.b16 %v5737
    %v5847 = vunpack.c.l.b16 %v5738
    %v5848 = vunpack.c.l.b16 %v5739
    %v5849 = vunpack.c.l.b16 %v5740
    %v5850 = vunpack.c.l.b16 %v5741
    %v5851 = vunpack.c.l.b16 %v5742
    %v5852 = vunpack.c.l.b16 %v5743
    %v5853 = vunpack.c.l.b16 %v5744
    %v5854 = vunpack.c.l.b16 %v5745
    %v5855 = vunpack.c.l.b16 %v5746
    %v5856 = vpack.c.b16 %v5827, %v5826
    %v5857 = vpack.c.b16 %v5829, %v5828
    %v5858 = vpack.c.b16 %v5831, %v5830
    %v5859 = vpack.c.b16 %v5833, %v5832
    %v5860 = vpack.c.b16 %v5835, %v5834
    %v5861 = vpack.c.b16 %v5837, %v5836
    %v5862 = vpack.c.b16 %v5839, %v5838
    %v5863 = vpack.c.b16 %v5841, %v5840
    %v5864 = vpack.c.b16 %v5843, %v5842
    %v5865 = vpack.c.b16 %v5845, %v5844
    %v5866 = vpack.c.b16 %v5847, %v5846
    %v5867 = vpack.c.b16 %v5849, %v5848
    %v5868 = vpack.c.b16 %v5851, %v5850
    %v5869 = vpack.c.b16 %v5853, %v5852
    %v5870 = vpack.c.b16 %v5855, %v5854
    %v5887 = vsel %vm736, %v5794, 0
    %5889 = vmatprep.subr.bf16.mxu0 0
    %5890 = vmatpush1.bf16.msra.mxu0 %v5863
    %5891 = vmatprep.subr.bf16.mxu0 0
    %5892 = vmatpush1.bf16.msra.mxu0 %v5862
    %5893 = vmatprep.subr.bf16.mxu0 0
    %5894 = vmatpush1.bf16.msra.mxu0 %v5861
    %5895 = vmatprep.subr.bf16.mxu0 0
    %5896 = vmatpush1.bf16.msra.mxu0 %v5860
    %5897 = vmatprep.subr.bf16.mxu0 0
    %5898 = vmatpush1.bf16.msra.mxu0 %v5859
    %5899 = vmatprep.subr.bf16.mxu0 0
    %5900 = vmatpush1.bf16.msra.mxu0 %v5858
    %5901 = vmatprep.subr.bf16.mxu0 0
    %5902 = vmatpush1.bf16.msra.mxu0 %v5857
    %5903 = vmatprep.subr.bf16.mxu0 0
    %5904 = vmatpush1.bf16.msra.mxu0 %v5856
    %5905 = vmatprep.subr.bf16.mxu0 0
    %5906 = vmatpush2.bf16.msra.mxu0 0
    %5907 = vmatprep.subr.bf16.mxu0 0
    %5908 = vmatpush2.bf16.msra.mxu0 %v5870
    %5909 = vmatprep.subr.bf16.mxu0 0
    %5910 = vmatpush2.bf16.msra.mxu0 %v5869
    %5911 = vmatprep.subr.bf16.mxu0 0
    %5912 = vmatpush2.bf16.msra.mxu0 %v5868
    %5913 = vmatprep.subr.bf16.mxu0 0
    %5914 = vmatpush2.bf16.msra.mxu0 %v5867
    %5915 = vmatprep.subr.bf16.mxu0 0
    %5916 = vmatpush2.bf16.msra.mxu0 %v5866
    %5917 = vmatprep.subr.bf16.mxu0 0
    %5918 = vmatpush2.bf16.msra.mxu0 %v5865
    %5919 = vmatprep.subr.bf16.mxu0 0
    %5920 = vmatpush2.bf16.msra.mxu0 %v5864
    %5921 = vmatprep.mubr.bf16.mxu0 %v5887
    %5922 = vmatmul.mubr.bf16.gmra.mxu0 %v5793
    %v5923 = vpop.f32.mrf.mxu0
    %v5924 = vadd.f32 0.0, %v5923
    %v5925 = vpop.f32.mrf.mxu0
    %v5926 = vpop.f32.mrf.mxu0
    %v5927 = vpop.f32.mrf.mxu0
    %5928 = vdwg.mxu0
    %v5929 = vadd.f32 %v4754, %v5924
    %v5930 = vld [vmem:[%s0 + $0xa0] sm:$0xf]
    %v5931 = vld [vmem:[%s0 + $0xa4] sm:$0xf]
    %v5932 = vld [vmem:[%s0 + $0xa8] sm:$0xf]
    %v5933 = vld [vmem:[%s0 + $0xac] sm:$0xf]
    %v5934 = vld [vmem:[%s0 + $0xb0] sm:$0xf]
    %v5935 = vld [vmem:[%s0 + $0xb4] sm:$0xf]
    %v5936 = vld [vmem:[%s0 + $0xb8] sm:$0xf]
    %v5937 = vld [vmem:[%s0 + $0xbc] sm:$0xf]
    %v5938 = vld [vmem:[%s0 + $0x1c0] sm:$0xf]
    %v5939 = vld [vmem:[%s0 + $0x1c4] sm:$0xf]
    %v5940 = vld [vmem:[%s0 + $0x1c8] sm:$0xf]
    %v5941 = vld [vmem:[%s0 + $0x1cc] sm:$0xf]
    %v5942 = vld [vmem:[%s0 + $0x1d0] sm:$0xf]
    %v5943 = vld [vmem:[%s0 + $0x1d4] sm:$0xf]
    %v5944 = vld [vmem:[%s0 + $0x1d8] sm:$0xf]
    %v5945 = vld [vmem:[%s0 + $0x1dc] sm:$0xf]
    %v5946 = vld [vmem:[%s0 + $0x2e0] sm:$0xf]
    %v5947 = vld [vmem:[%s0 + $0x2e4] sm:$0xf]
    %v5948 = vld [vmem:[%s0 + $0x2e8] sm:$0xf]
    %v5949 = vld [vmem:[%s0 + $0x2ec] sm:$0xf]
    %v5950 = vld [vmem:[%s0 + $0x2f0] sm:$0xf]
    %v5951 = vld [vmem:[%s0 + $0x2f4] sm:$0xf]
    %v5952 = vld [vmem:[%s0 + $0x2f8] sm:$0xf]
    %v5953 = vld [vmem:[%s0 + $0x2fc] sm:$0xf]
    %v5954 = vld [vmem:[%s0 + $0x400] sm:$0xf]
    %v5955 = vld [vmem:[%s0 + $0x404] sm:$0xf]
    %v5956 = vld [vmem:[%s0 + $0x408] sm:$0xf]
    %v5957 = vld [vmem:[%s0 + $0x40c] sm:$0xf]
    %v5958 = vld [vmem:[%s0 + $0x410] sm:$0xf]
    %v5959 = vld [vmem:[%s0 + $0x414] sm:$0xf]
    %v5960 = vld [vmem:[%s0 + $0x418] sm:$0xf]
    %v5961 = vld [vmem:[%s0 + $0x41c] sm:$0xf]
    %v5962 = vld [vmem:[%s0 + $0x520] sm:$0xf]
    %v5963 = vld [vmem:[%s0 + $0x524] sm:$0xf]
    %v5964 = vld [vmem:[%s0 + $0x528] sm:$0xf]
    %v5965 = vld [vmem:[%s0 + $0x52c] sm:$0xf]
    %v5966 = vld [vmem:[%s0 + $0x530] sm:$0xf]
    %v5967 = vld [vmem:[%s0 + $0x534] sm:$0xf]
    %v5968 = vld [vmem:[%s0 + $0x538] sm:$0xf]
    %v5969 = vld [vmem:[%s0 + $0x53c] sm:$0xf]
    %v5970 = vld [vmem:[%s0 + $0x640] sm:$0xf]
    %v5971 = vld [vmem:[%s0 + $0x644] sm:$0xf]
    %v5972 = vld [vmem:[%s0 + $0x648] sm:$0xf]
    %v5973 = vld [vmem:[%s0 + $0x64c] sm:$0xf]
    %v5974 = vld [vmem:[%s0 + $0x650] sm:$0xf]
    %v5975 = vld [vmem:[%s0 + $0x654] sm:$0xf]
    %v5976 = vld [vmem:[%s0 + $0x658] sm:$0xf]
    %v5977 = vld [vmem:[%s0 + $0x65c] sm:$0xf]
    %v5978 = vld [vmem:[%s0 + $0x760] sm:$0xf]
    %v5979 = vld [vmem:[%s0 + $0x764] sm:$0xf]
    %v5980 = vld [vmem:[%s0 + $0x768] sm:$0xf]
    %v5981 = vld [vmem:[%s0 + $0x76c] sm:$0xf]
    %v5982 = vld [vmem:[%s0 + $0x770] sm:$0xf]
    %v5983 = vld [vmem:[%s0 + $0x774] sm:$0xf]
    %v5984 = vld [vmem:[%s0 + $0x778] sm:$0xf]
    %v5985 = vld [vmem:[%s0 + $0x77c] sm:$0xf]
    %v5986 = vld [vmem:[%s0 + $0x880] sm:$0xf]
    %v5987 = vld [vmem:[%s0 + $0x884] sm:$0xf]
    %v5988 = vld [vmem:[%s0 + $0x888] sm:$0xf]
    %v5989 = vld [vmem:[%s0 + $0x88c] sm:$0xf]
    %v5990 = vld [vmem:[%s0 + $0x890] sm:$0xf]
    %v5991 = vld [vmem:[%s0 + $0x894] sm:$0xf]
    %v5992 = vld [vmem:[%s0 + $0x898] sm:$0xf]
    %v5993 = vld [vmem:[%s0 + $0x89c] sm:$0xf]
    %v6058 = vunpack.c.l.b16 %v5930
    %v6059 = vunpack.c.l.b16 %v5931
    %v6060 = vunpack.c.l.b16 %v5932
    %v6061 = vunpack.c.l.b16 %v5933
    %v6062 = vunpack.c.l.b16 %v5934
    %v6063 = vunpack.c.l.b16 %v5935
    %v6064 = vunpack.c.l.b16 %v5936
    %v6065 = vunpack.c.l.b16 %v5937
    %v6066 = vunpack.c.l.b16 %v5938
    %v6067 = vunpack.c.l.b16 %v5939
    %v6068 = vunpack.c.l.b16 %v5940
    %v6069 = vunpack.c.l.b16 %v5941
    %v6070 = vunpack.c.l.b16 %v5942
    %v6071 = vunpack.c.l.b16 %v5943
    %v6072 = vunpack.c.l.b16 %v5944
    %v6073 = vunpack.c.l.b16 %v5945
    %v6074 = vunpack.c.l.b16 %v5946
    %v6075 = vunpack.c.l.b16 %v5947
    %v6076 = vunpack.c.l.b16 %v5948
    %v6077 = vunpack.c.l.b16 %v5949
    %v6078 = vunpack.c.l.b16 %v5950
    %v6079 = vunpack.c.l.b16 %v5951
    %v6080 = vunpack.c.l.b16 %v5952
    %v6081 = vunpack.c.l.b16 %v5953
    %v6082 = vunpack.c.l.b16 %v5954
    %v6083 = vunpack.c.l.b16 %v5955
    %v6084 = vunpack.c.l.b16 %v5956
    %v6085 = vunpack.c.l.b16 %v5957
    %v6086 = vunpack.c.l.b16 %v5958
    %v6087 = vunpack.c.l.b16 %v5959
    %v6088 = vunpack.c.l.b16 %v5960
    %v6089 = vunpack.c.l.b16 %v5961
    %v6090 = vunpack.c.l.b16 %v5962
    %v6091 = vunpack.c.l.b16 %v5963
    %v6092 = vunpack.c.l.b16 %v5964
    %v6093 = vunpack.c.l.b16 %v5965
    %v6094 = vunpack.c.l.b16 %v5966
    %v6095 = vunpack.c.l.b16 %v5967
    %v6096 = vunpack.c.l.b16 %v5968
    %v6097 = vunpack.c.l.b16 %v5969
    %v6098 = vunpack.c.l.b16 %v5970
    %v6099 = vunpack.c.l.b16 %v5971
    %v6100 = vunpack.c.l.b16 %v5972
    %v6101 = vunpack.c.l.b16 %v5973
    %v6102 = vunpack.c.l.b16 %v5974
    %v6103 = vunpack.c.l.b16 %v5975
    %v6104 = vunpack.c.l.b16 %v5976
    %v6105 = vunpack.c.l.b16 %v5977
    %v6106 = vunpack.c.l.b16 %v5978
    %v6107 = vunpack.c.l.b16 %v5979
    %v6108 = vunpack.c.l.b16 %v5980
    %v6109 = vunpack.c.l.b16 %v5981
    %v6110 = vunpack.c.l.b16 %v5982
    %v6111 = vunpack.c.l.b16 %v5983
    %v6112 = vunpack.c.l.b16 %v5984
    %v6113 = vunpack.c.l.b16 %v5985
    %v6114 = vunpack.c.l.b16 %v5986
    %v6115 = vunpack.c.l.b16 %v5987
    %v6116 = vunpack.c.l.b16 %v5988
    %v6117 = vunpack.c.l.b16 %v5989
    %v6118 = vunpack.c.l.b16 %v5990
    %v6119 = vunpack.c.l.b16 %v5991
    %v6120 = vunpack.c.l.b16 %v5992
    %v6121 = vunpack.c.l.b16 %v5993
    %v6122 = vpack.c.b16 %v6059, %v6058
    %v6123 = vpack.c.b16 %v6061, %v6060
    %v6124 = vpack.c.b16 %v6063, %v6062
    %v6125 = vpack.c.b16 %v6065, %v6064
    %v6126 = vpack.c.b16 %v6067, %v6066
    %v6127 = vpack.c.b16 %v6069, %v6068
    %v6128 = vpack.c.b16 %v6071, %v6070
    %v6129 = vpack.c.b16 %v6073, %v6072
    %v6130 = vpack.c.b16 %v6075, %v6074
    %v6131 = vpack.c.b16 %v6077, %v6076
    %v6132 = vpack.c.b16 %v6079, %v6078
    %v6133 = vpack.c.b16 %v6081, %v6080
    %v6134 = vpack.c.b16 %v6083, %v6082
    %v6135 = vpack.c.b16 %v6085, %v6084
    %v6136 = vpack.c.b16 %v6087, %v6086
    %v6137 = vpack.c.b16 %v6089, %v6088
    %v6138 = vpack.c.b16 %v6091, %v6090
    %v6139 = vpack.c.b16 %v6093, %v6092
    %v6140 = vpack.c.b16 %v6095, %v6094
    %v6141 = vpack.c.b16 %v6097, %v6096
    %v6142 = vpack.c.b16 %v6099, %v6098
    %v6143 = vpack.c.b16 %v6101, %v6100
    %v6144 = vpack.c.b16 %v6103, %v6102
    %v6145 = vpack.c.b16 %v6105, %v6104
    %v6146 = vpack.c.b16 %v6107, %v6106
    %v6147 = vpack.c.b16 %v6109, %v6108
    %v6148 = vpack.c.b16 %v6111, %v6110
    %v6149 = vpack.c.b16 %v6113, %v6112
    %v6150 = vpack.c.b16 %v6115, %v6114
    %v6151 = vpack.c.b16 %v6117, %v6116
    %v6152 = vpack.c.b16 %v6119, %v6118
    %v6153 = vpack.c.b16 %v6121, %v6120
    %v6155 = vsel %vm273, %v6122, 0
    %v6158 = vsel %vm273, %v6123, 0
    %v6161 = vsel %vm273, %v6124, 0
    %v6164 = vsel %vm273, %v6125, 0
    %v6167 = vsel %vm273, %v6126, 0
    %v6170 = vsel %vm273, %v6127, 0
    %v6173 = vsel %vm273, %v6128, 0
    %v6176 = vsel %vm273, %v6129, 0
    %v6179 = vsel %vm273, %v6130, 0
    %v6182 = vsel %vm273, %v6131, 0
    %v6185 = vsel %vm273, %v6132, 0
    %v6188 = vsel %vm273, %v6133, 0
    %v6191 = vsel %vm273, %v6134, 0
    %v6194 = vsel %vm273, %v6135, 0
    %v6197 = vsel %vm273, %v6136, 0
    %v6200 = vsel %vm273, %v6137, 0
    %v6203 = vsel %vm273, %v6138, 0
    %v6206 = vsel %vm273, %v6139, 0
    %v6209 = vsel %vm273, %v6140, 0
    %v6212 = vsel %vm273, %v6141, 0
    %v6215 = vsel %vm273, %v6142, 0
    %v6218 = vsel %vm273, %v6143, 0
    %v6221 = vsel %vm273, %v6144, 0
    %v6224 = vsel %vm273, %v6145, 0
    %v6227 = vsel %vm273, %v6146, 0
    %v6230 = vsel %vm273, %v6147, 0
    %v6233 = vsel %vm273, %v6148, 0
    %v6236 = vsel %vm273, %v6149, 0
    %v6239 = vsel %vm273, %v6150, 0
    %v6242 = vsel %vm273, %v6151, 0
    %v6245 = vsel %vm273, %v6152, 0
    %v6248 = vsel %vm273, %v6153, 0
    %6250 = vmatprep.subr.bf16.mxu0 0
    %6251 = vmatpush1.bf16.msra.mxu0 0
    %6252 = vmatprep.subr.bf16.mxu0 0
    %6253 = vmatpush1.bf16.msra.mxu0 0
    %6254 = vmatprep.subr.bf16.mxu0 0
    %6255 = vmatpush1.bf16.msra.mxu0 0
    %6256 = vmatprep.subr.bf16.mxu0 0
    %6257 = vmatpush1.bf16.msra.mxu0 0
    %6258 = vmatprep.subr.bf16.mxu0 0
    %6259 = vmatpush1.bf16.msra.mxu0 0
    %6260 = vmatprep.subr.bf16.mxu0 0
    %6261 = vmatpush1.bf16.msra.mxu0 0
    %6262 = vmatprep.subr.bf16.mxu0 %v268
    %6263 = vmatpush1.bf16.msra.mxu0 %v267
    %6264 = vmatprep.subr.bf16.mxu0 %v266
    %6265 = vmatpush1.bf16.msra.mxu0 %v265
    %6266 = vmatprep.subr.bf16.mxu0 0
    %6267 = vmatpush2.bf16.msra.mxu0 0
    %6268 = vmatprep.subr.bf16.mxu0 0
    %6269 = vmatpush2.bf16.msra.mxu0 0
    %6270 = vmatprep.subr.bf16.mxu0 0
    %6271 = vmatpush2.bf16.msra.mxu0 0
    %6272 = vmatprep.subr.bf16.mxu0 0
    %6273 = vmatpush2.bf16.msra.mxu0 0
    %6274 = vmatprep.subr.bf16.mxu0 0
    %6275 = vmatpush2.bf16.msra.mxu0 0
    %6276 = vmatprep.subr.bf16.mxu0 0
    %6277 = vmatpush2.bf16.msra.mxu0 0
    %6278 = vmatprep.subr.bf16.mxu0 0
    %6279 = vmatpush2.bf16.msra.mxu0 0
    %6280 = vmatprep.subr.bf16.mxu0 0
    %6281 = vmatpush2.bf16.msra.mxu0 0
    %6282 = vmatprep.mubr.bf16.mxu0 0
    %6283 = vmatmul.mubr.bf16.gmra.mxu0 %v6155
    %v6284 = vpop.f32.mrf.mxu0
    %v6285 = vadd.f32 0.0, %v6284
    %v6286 = vpop.f32.mrf.mxu0
    %v6287 = vadd.f32 0.0, %v6286
    %v6288 = vpop.f32.mrf.mxu0
    %v6289 = vadd.f32 0.0, %v6288
    %v6290 = vpop.f32.mrf.mxu0
    %v6291 = vadd.f32 0.0, %v6290
    %6292 = vmatprep.mubr.bf16.mxu0 0
    %6293 = vmatmul.mubr.bf16.gmra.mxu0 %v6158
    %v6294 = vpop.f32.mrf.mxu0
    %v6295 = vadd.f32 0.0, %v6294
    %v6296 = vpop.f32.mrf.mxu0
    %v6297 = vadd.f32 0.0, %v6296
    %v6298 = vpop.f32.mrf.mxu0
    %v6299 = vadd.f32 0.0, %v6298
    %v6300 = vpop.f32.mrf.mxu0
    %v6301 = vadd.f32 0.0, %v6300
    %6302 = vmatprep.mubr.bf16.mxu0 0
    %6303 = vmatmul.mubr.bf16.gmra.mxu0 %v6161
    %v6304 = vpop.f32.mrf.mxu0
    %v6305 = vadd.f32 0.0, %v6304
    %v6306 = vpop.f32.mrf.mxu0
    %v6307 = vadd.f32 0.0, %v6306
    %v6308 = vpop.f32.mrf.mxu0
    %v6309 = vadd.f32 0.0, %v6308
    %v6310 = vpop.f32.mrf.mxu0
    %v6311 = vadd.f32 0.0, %v6310
    %6312 = vmatprep.mubr.bf16.mxu0 0
    %6313 = vmatmul.mubr.bf16.gmra.mxu0 %v6164
    %v6314 = vpop.f32.mrf.mxu0
    %v6315 = vadd.f32 0.0, %v6314
    %v6316 = vpop.f32.mrf.mxu0
    %v6317 = vadd.f32 0.0, %v6316
    %v6318 = vpop.f32.mrf.mxu0
    %v6319 = vadd.f32 0.0, %v6318
    %v6320 = vpop.f32.mrf.mxu0
    %v6321 = vadd.f32 0.0, %v6320
    %6322 = vmatprep.mubr.bf16.mxu0 0
    %6323 = vmatmul.mubr.bf16.gmra.mxu0 %v6167
    %v6324 = vpop.f32.mrf.mxu0
    %v6325 = vadd.f32 0.0, %v6324
    %v6326 = vpop.f32.mrf.mxu0
    %v6327 = vadd.f32 0.0, %v6326
    %v6328 = vpop.f32.mrf.mxu0
    %v6329 = vadd.f32 0.0, %v6328
    %v6330 = vpop.f32.mrf.mxu0
    %v6331 = vadd.f32 0.0, %v6330
    %6332 = vmatprep.mubr.bf16.mxu0 0
    %6333 = vmatmul.mubr.bf16.gmra.mxu0 %v6170
    %v6334 = vpop.f32.mrf.mxu0
    %v6335 = vadd.f32 0.0, %v6334
    %v6336 = vpop.f32.mrf.mxu0
    %v6337 = vadd.f32 0.0, %v6336
    %v6338 = vpop.f32.mrf.mxu0
    %v6339 = vadd.f32 0.0, %v6338
    %v6340 = vpop.f32.mrf.mxu0
    %v6341 = vadd.f32 0.0, %v6340
    %6342 = vmatprep.mubr.bf16.mxu0 0
    %6343 = vmatmul.mubr.bf16.gmra.mxu0 %v6173
    %v6344 = vpop.f32.mrf.mxu0
    %v6345 = vadd.f32 0.0, %v6344
    %v6346 = vpop.f32.mrf.mxu0
    %v6347 = vadd.f32 0.0, %v6346
    %v6348 = vpop.f32.mrf.mxu0
    %v6349 = vadd.f32 0.0, %v6348
    %v6350 = vpop.f32.mrf.mxu0
    %v6351 = vadd.f32 0.0, %v6350
    %6352 = vmatprep.mubr.bf16.mxu0 0
    %6353 = vmatmul.mubr.bf16.gmra.mxu0 %v6176
    %v6354 = vpop.f32.mrf.mxu0
    %v6355 = vadd.f32 0.0, %v6354
    %v6356 = vpop.f32.mrf.mxu0
    %v6357 = vadd.f32 0.0, %v6356
    %v6358 = vpop.f32.mrf.mxu0
    %v6359 = vadd.f32 0.0, %v6358
    %v6360 = vpop.f32.mrf.mxu0
    %v6361 = vadd.f32 0.0, %v6360
    %6362 = vmatprep.mubr.bf16.mxu0 0
    %6363 = vmatmul.mubr.bf16.gmra.mxu0 %v6179
    %v6364 = vpop.f32.mrf.mxu0
    %v6365 = vadd.f32 0.0, %v6364
    %v6366 = vpop.f32.mrf.mxu0
    %v6367 = vadd.f32 0.0, %v6366
    %v6368 = vpop.f32.mrf.mxu0
    %v6369 = vadd.f32 0.0, %v6368
    %v6370 = vpop.f32.mrf.mxu0
    %v6371 = vadd.f32 0.0, %v6370
    %6372 = vmatprep.mubr.bf16.mxu0 0
    %6373 = vmatmul.mubr.bf16.gmra.mxu0 %v6182
    %v6374 = vpop.f32.mrf.mxu0
    %v6375 = vadd.f32 0.0, %v6374
    %v6376 = vpop.f32.mrf.mxu0
    %v6377 = vadd.f32 0.0, %v6376
    %v6378 = vpop.f32.mrf.mxu0
    %v6379 = vadd.f32 0.0, %v6378
    %v6380 = vpop.f32.mrf.mxu0
    %v6381 = vadd.f32 0.0, %v6380
    %6382 = vmatprep.mubr.bf16.mxu0 0
    %6383 = vmatmul.mubr.bf16.gmra.mxu0 %v6185
    %v6384 = vpop.f32.mrf.mxu0
    %v6385 = vadd.f32 0.0, %v6384
    %v6386 = vpop.f32.mrf.mxu0
    %v6387 = vadd.f32 0.0, %v6386
    %v6388 = vpop.f32.mrf.mxu0
    %v6389 = vadd.f32 0.0, %v6388
    %v6390 = vpop.f32.mrf.mxu0
    %v6391 = vadd.f32 0.0, %v6390
    %6392 = vmatprep.mubr.bf16.mxu0 0
    %6393 = vmatmul.mubr.bf16.gmra.mxu0 %v6188
    %v6394 = vpop.f32.mrf.mxu0
    %v6395 = vadd.f32 0.0, %v6394
    %v6396 = vpop.f32.mrf.mxu0
    %v6397 = vadd.f32 0.0, %v6396
    %v6398 = vpop.f32.mrf.mxu0
    %v6399 = vadd.f32 0.0, %v6398
    %v6400 = vpop.f32.mrf.mxu0
    %v6401 = vadd.f32 0.0, %v6400
    %6402 = vmatprep.mubr.bf16.mxu0 0
    %6403 = vmatmul.mubr.bf16.gmra.mxu0 %v6191
    %v6404 = vpop.f32.mrf.mxu0
    %v6405 = vadd.f32 0.0, %v6404
    %v6406 = vpop.f32.mrf.mxu0
    %v6407 = vadd.f32 0.0, %v6406
    %v6408 = vpop.f32.mrf.mxu0
    %v6409 = vadd.f32 0.0, %v6408
    %v6410 = vpop.f32.mrf.mxu0
    %v6411 = vadd.f32 0.0, %v6410
    %6412 = vmatprep.mubr.bf16.mxu0 0
    %6413 = vmatmul.mubr.bf16.gmra.mxu0 %v6194
    %v6414 = vpop.f32.mrf.mxu0
    %v6415 = vadd.f32 0.0, %v6414
    %v6416 = vpop.f32.mrf.mxu0
    %v6417 = vadd.f32 0.0, %v6416
    %v6418 = vpop.f32.mrf.mxu0
    %v6419 = vadd.f32 0.0, %v6418
    %v6420 = vpop.f32.mrf.mxu0
    %v6421 = vadd.f32 0.0, %v6420
    %6422 = vmatprep.mubr.bf16.mxu0 0
    %6423 = vmatmul.mubr.bf16.gmra.mxu0 %v6197
    %v6424 = vpop.f32.mrf.mxu0
    %v6425 = vadd.f32 0.0, %v6424
    %v6426 = vpop.f32.mrf.mxu0
    %v6427 = vadd.f32 0.0, %v6426
    %v6428 = vpop.f32.mrf.mxu0
    %v6429 = vadd.f32 0.0, %v6428
    %v6430 = vpop.f32.mrf.mxu0
    %v6431 = vadd.f32 0.0, %v6430
    %6432 = vmatprep.mubr.bf16.mxu0 0
    %6433 = vmatmul.mubr.bf16.gmra.mxu0 %v6200
    %v6434 = vpop.f32.mrf.mxu0
    %v6435 = vadd.f32 0.0, %v6434
    %v6436 = vpop.f32.mrf.mxu0
    %v6437 = vadd.f32 0.0, %v6436
    %v6438 = vpop.f32.mrf.mxu0
    %v6439 = vadd.f32 0.0, %v6438
    %v6440 = vpop.f32.mrf.mxu0
    %v6441 = vadd.f32 0.0, %v6440
    %6442 = vmatprep.mubr.bf16.mxu0 0
    %6443 = vmatmul.mubr.bf16.gmra.mxu0 %v6203
    %v6444 = vpop.f32.mrf.mxu0
    %v6445 = vadd.f32 0.0, %v6444
    %v6446 = vpop.f32.mrf.mxu0
    %v6447 = vadd.f32 0.0, %v6446
    %v6448 = vpop.f32.mrf.mxu0
    %v6449 = vadd.f32 0.0, %v6448
    %v6450 = vpop.f32.mrf.mxu0
    %v6451 = vadd.f32 0.0, %v6450
    %6452 = vmatprep.mubr.bf16.mxu0 0
    %6453 = vmatmul.mubr.bf16.gmra.mxu0 %v6206
    %v6454 = vpop.f32.mrf.mxu0
    %v6455 = vadd.f32 0.0, %v6454
    %v6456 = vpop.f32.mrf.mxu0
    %v6457 = vadd.f32 0.0, %v6456
    %v6458 = vpop.f32.mrf.mxu0
    %v6459 = vadd.f32 0.0, %v6458
    %v6460 = vpop.f32.mrf.mxu0
    %v6461 = vadd.f32 0.0, %v6460
    %6462 = vmatprep.mubr.bf16.mxu0 0
    %6463 = vmatmul.mubr.bf16.gmra.mxu0 %v6209
    %v6464 = vpop.f32.mrf.mxu0
    %v6465 = vadd.f32 0.0, %v6464
    %v6466 = vpop.f32.mrf.mxu0
    %v6467 = vadd.f32 0.0, %v6466
    %v6468 = vpop.f32.mrf.mxu0
    %v6469 = vadd.f32 0.0, %v6468
    %v6470 = vpop.f32.mrf.mxu0
    %v6471 = vadd.f32 0.0, %v6470
    %6472 = vmatprep.mubr.bf16.mxu0 0
    %6473 = vmatmul.mubr.bf16.gmra.mxu0 %v6212
    %v6474 = vpop.f32.mrf.mxu0
    %v6475 = vadd.f32 0.0, %v6474
    %v6476 = vpop.f32.mrf.mxu0
    %v6477 = vadd.f32 0.0, %v6476
    %v6478 = vpop.f32.mrf.mxu0
    %v6479 = vadd.f32 0.0, %v6478
    %v6480 = vpop.f32.mrf.mxu0
    %v6481 = vadd.f32 0.0, %v6480
    %6482 = vmatprep.mubr.bf16.mxu0 0
    %6483 = vmatmul.mubr.bf16.gmra.mxu0 %v6215
    %v6484 = vpop.f32.mrf.mxu0
    %v6485 = vadd.f32 0.0, %v6484
    %v6486 = vpop.f32.mrf.mxu0
    %v6487 = vadd.f32 0.0, %v6486
    %v6488 = vpop.f32.mrf.mxu0
    %v6489 = vadd.f32 0.0, %v6488
    %v6490 = vpop.f32.mrf.mxu0
    %v6491 = vadd.f32 0.0, %v6490
    %6492 = vmatprep.mubr.bf16.mxu0 0
    %6493 = vmatmul.mubr.bf16.gmra.mxu0 %v6218
    %v6494 = vpop.f32.mrf.mxu0
    %v6495 = vadd.f32 0.0, %v6494
    %v6496 = vpop.f32.mrf.mxu0
    %v6497 = vadd.f32 0.0, %v6496
    %v6498 = vpop.f32.mrf.mxu0
    %v6499 = vadd.f32 0.0, %v6498
    %v6500 = vpop.f32.mrf.mxu0
    %v6501 = vadd.f32 0.0, %v6500
    %6502 = vmatprep.mubr.bf16.mxu0 0
    %6503 = vmatmul.mubr.bf16.gmra.mxu0 %v6221
    %v6504 = vpop.f32.mrf.mxu0
    %v6505 = vadd.f32 0.0, %v6504
    %v6506 = vpop.f32.mrf.mxu0
    %v6507 = vadd.f32 0.0, %v6506
    %v6508 = vpop.f32.mrf.mxu0
    %v6509 = vadd.f32 0.0, %v6508
    %v6510 = vpop.f32.mrf.mxu0
    %v6511 = vadd.f32 0.0, %v6510
    %6512 = vmatprep.mubr.bf16.mxu0 0
    %6513 = vmatmul.mubr.bf16.gmra.mxu0 %v6224
    %v6514 = vpop.f32.mrf.mxu0
    %v6515 = vadd.f32 0.0, %v6514
    %v6516 = vpop.f32.mrf.mxu0
    %v6517 = vadd.f32 0.0, %v6516
    %v6518 = vpop.f32.mrf.mxu0
    %v6519 = vadd.f32 0.0, %v6518
    %v6520 = vpop.f32.mrf.mxu0
    %v6521 = vadd.f32 0.0, %v6520
    %6522 = vmatprep.mubr.bf16.mxu0 0
    %6523 = vmatmul.mubr.bf16.gmra.mxu0 %v6227
    %v6524 = vpop.f32.mrf.mxu0
    %v6525 = vadd.f32 0.0, %v6524
    %v6526 = vpop.f32.mrf.mxu0
    %v6527 = vadd.f32 0.0, %v6526
    %v6528 = vpop.f32.mrf.mxu0
    %v6529 = vadd.f32 0.0, %v6528
    %v6530 = vpop.f32.mrf.mxu0
    %v6531 = vadd.f32 0.0, %v6530
    %6532 = vmatprep.mubr.bf16.mxu0 0
    %6533 = vmatmul.mubr.bf16.gmra.mxu0 %v6230
    %v6534 = vpop.f32.mrf.mxu0
    %v6535 = vadd.f32 0.0, %v6534
    %v6536 = vpop.f32.mrf.mxu0
    %v6537 = vadd.f32 0.0, %v6536
    %v6538 = vpop.f32.mrf.mxu0
    %v6539 = vadd.f32 0.0, %v6538
    %v6540 = vpop.f32.mrf.mxu0
    %v6541 = vadd.f32 0.0, %v6540
    %6542 = vmatprep.mubr.bf16.mxu0 0
    %6543 = vmatmul.mubr.bf16.gmra.mxu0 %v6233
    %v6544 = vpop.f32.mrf.mxu0
    %v6545 = vadd.f32 0.0, %v6544
    %v6546 = vpop.f32.mrf.mxu0
    %v6547 = vadd.f32 0.0, %v6546
    %v6548 = vpop.f32.mrf.mxu0
    %v6549 = vadd.f32 0.0, %v6548
    %v6550 = vpop.f32.mrf.mxu0
    %v6551 = vadd.f32 0.0, %v6550
    %6552 = vmatprep.mubr.bf16.mxu0 0
    %6553 = vmatmul.mubr.bf16.gmra.mxu0 %v6236
    %v6554 = vpop.f32.mrf.mxu0
    %v6555 = vadd.f32 0.0, %v6554
    %v6556 = vpop.f32.mrf.mxu0
    %v6557 = vadd.f32 0.0, %v6556
    %v6558 = vpop.f32.mrf.mxu0
    %v6559 = vadd.f32 0.0, %v6558
    %v6560 = vpop.f32.mrf.mxu0
    %v6561 = vadd.f32 0.0, %v6560
    %6562 = vmatprep.mubr.bf16.mxu0 0
    %6563 = vmatmul.mubr.bf16.gmra.mxu0 %v6239
    %v6564 = vpop.f32.mrf.mxu0
    %v6565 = vadd.f32 0.0, %v6564
    %v6566 = vpop.f32.mrf.mxu0
    %v6567 = vadd.f32 0.0, %v6566
    %v6568 = vpop.f32.mrf.mxu0
    %v6569 = vadd.f32 0.0, %v6568
    %v6570 = vpop.f32.mrf.mxu0
    %v6571 = vadd.f32 0.0, %v6570
    %6572 = vmatprep.mubr.bf16.mxu0 0
    %6573 = vmatmul.mubr.bf16.gmra.mxu0 %v6242
    %v6574 = vpop.f32.mrf.mxu0
    %v6575 = vadd.f32 0.0, %v6574
    %v6576 = vpop.f32.mrf.mxu0
    %v6577 = vadd.f32 0.0, %v6576
    %v6578 = vpop.f32.mrf.mxu0
    %v6579 = vadd.f32 0.0, %v6578
    %v6580 = vpop.f32.mrf.mxu0
    %v6581 = vadd.f32 0.0, %v6580
    %6582 = vmatprep.mubr.bf16.mxu0 0
    %6583 = vmatmul.mubr.bf16.gmra.mxu0 %v6245
    %v6584 = vpop.f32.mrf.mxu0
    %v6585 = vadd.f32 0.0, %v6584
    %v6586 = vpop.f32.mrf.mxu0
    %v6587 = vadd.f32 0.0, %v6586
    %v6588 = vpop.f32.mrf.mxu0
    %v6589 = vadd.f32 0.0, %v6588
    %v6590 = vpop.f32.mrf.mxu0
    %v6591 = vadd.f32 0.0, %v6590
    %6592 = vmatprep.mubr.bf16.mxu0 0
    %6593 = vmatmul.mubr.bf16.gmra.mxu0 %v6248
    %v6594 = vpop.f32.mrf.mxu0
    %v6595 = vadd.f32 0.0, %v6594
    %v6596 = vpop.f32.mrf.mxu0
    %v6597 = vadd.f32 0.0, %v6596
    %v6598 = vpop.f32.mrf.mxu0
    %v6599 = vadd.f32 0.0, %v6598
    %v6600 = vpop.f32.mrf.mxu0
    %v6601 = vadd.f32 0.0, %v6600
    %6602 = vdwg.mxu0
    %v6603 = vmax.f32 %v6285, %v6289
    %v6604 = vmax.f32 %v6603, %v6295
    %v6605 = vmax.f32 %v6604, %v6299
    %v6606 = vmax.f32 %v6605, %v6305
    %v6607 = vmax.f32 %v6606, %v6309
    %v6608 = vmax.f32 %v6607, %v6315
    %v6609 = vmax.f32 %v6608, %v6319
    %v6610 = vrot.slane %v6609, 4
    %v6611 = vmax.f32 %v6609, %v6610
    %v6612 = vrot.slane %v6611, 2
    %v6613 = vmax.f32 %v6611, %v6612
    %v6614 = vrot.slane %v6613, 1
    %v6615 = vmax.f32 %v6613, %v6614
    %v6616 = vsel %vm736, %v6287, -inf
    %v6617 = vsel %vm736, %v6291, -inf
    %v6618 = vmax.f32 %v6616, %v6617
    %v6619 = vsel %vm736, %v6297, -inf
    %v6620 = vmax.f32 %v6618, %v6619
    %v6621 = vsel %vm736, %v6301, -inf
    %v6622 = vmax.f32 %v6620, %v6621
    %v6623 = vsel %vm736, %v6307, -inf
    %v6624 = vmax.f32 %v6622, %v6623
    %v6625 = vsel %vm736, %v6311, -inf
    %v6626 = vmax.f32 %v6624, %v6625
    %v6627 = vsel %vm736, %v6317, -inf
    %v6628 = vmax.f32 %v6626, %v6627
    %v6629 = vsel %vm736, %v6321, -inf
    %v6630 = vmax.f32 %v6628, %v6629
    %v6631 = vrot.slane %v6630, 4
    %v6632 = vmax.f32 %v6630, %v6631
    %v6633 = vrot.slane %v6632, 2
    %v6634 = vmax.f32 %v6632, %v6633
    %v6635 = vrot.slane %v6634, 1
    %v6636 = vmax.f32 %v6634, %v6635
    %v6637 = vmax.f32 %v6325, %v6329
    %v6638 = vmax.f32 %v6637, %v6335
    %v6639 = vmax.f32 %v6638, %v6339
    %v6640 = vmax.f32 %v6639, %v6345
    %v6641 = vmax.f32 %v6640, %v6349
    %v6642 = vmax.f32 %v6641, %v6355
    %v6643 = vmax.f32 %v6642, %v6359
    %v6644 = vrot.slane %v6643, 4
    %v6645 = vmax.f32 %v6643, %v6644
    %v6646 = vrot.slane %v6645, 2
    %v6647 = vmax.f32 %v6645, %v6646
    %v6648 = vrot.slane %v6647, 1
    %v6649 = vmax.f32 %v6647, %v6648
    %v6650 = vsel %vm736, %v6327, -inf
    %v6651 = vsel %vm736, %v6331, -inf
    %v6652 = vmax.f32 %v6650, %v6651
    %v6653 = vsel %vm736, %v6337, -inf
    %v6654 = vmax.f32 %v6652, %v6653
    %v6655 = vsel %vm736, %v6341, -inf
    %v6656 = vmax.f32 %v6654, %v6655
    %v6657 = vsel %vm736, %v6347, -inf
    %v6658 = vmax.f32 %v6656, %v6657
    %v6659 = vsel %vm736, %v6351, -inf
    %v6660 = vmax.f32 %v6658, %v6659
    %v6661 = vsel %vm736, %v6357, -inf
    %v6662 = vmax.f32 %v6660, %v6661
    %v6663 = vsel %vm736, %v6361, -inf
    %v6664 = vmax.f32 %v6662, %v6663
    %v6665 = vrot.slane %v6664, 4
    %v6666 = vmax.f32 %v6664, %v6665
    %v6667 = vrot.slane %v6666, 2
    %v6668 = vmax.f32 %v6666, %v6667
    %v6669 = vrot.slane %v6668, 1
    %v6670 = vmax.f32 %v6668, %v6669
    %v6671 = vmax.f32 %v6365, %v6369
    %v6672 = vmax.f32 %v6671, %v6375
    %v6673 = vmax.f32 %v6672, %v6379
    %v6674 = vmax.f32 %v6673, %v6385
    %v6675 = vmax.f32 %v6674, %v6389
    %v6676 = vmax.f32 %v6675, %v6395
    %v6677 = vmax.f32 %v6676, %v6399
    %v6678 = vrot.slane %v6677, 4
    %v6679 = vmax.f32 %v6677, %v6678
    %v6680 = vrot.slane %v6679, 2
    %v6681 = vmax.f32 %v6679, %v6680
    %v6682 = vrot.slane %v6681, 1
    %v6683 = vmax.f32 %v6681, %v6682
    %v6684 = vsel %vm736, %v6367, -inf
    %v6685 = vsel %vm736, %v6371, -inf
    %v6686 = vmax.f32 %v6684, %v6685
    %v6687 = vsel %vm736, %v6377, -inf
    %v6688 = vmax.f32 %v6686, %v6687
    %v6689 = vsel %vm736, %v6381, -inf
    %v6690 = vmax.f32 %v6688, %v6689
    %v6691 = vsel %vm736, %v6387, -inf
    %v6692 = vmax.f32 %v6690, %v6691
    %v6693 = vsel %vm736, %v6391, -inf
    %v6694 = vmax.f32 %v6692, %v6693
    %v6695 = vsel %vm736, %v6397, -inf
    %v6696 = vmax.f32 %v6694, %v6695
    %v6697 = vsel %vm736, %v6401, -inf
    %v6698 = vmax.f32 %v6696, %v6697
    %v6699 = vrot.slane %v6698, 4
    %v6700 = vmax.f32 %v6698, %v6699
    %v6701 = vrot.slane %v6700, 2
    %v6702 = vmax.f32 %v6700, %v6701
    %v6703 = vrot.slane %v6702, 1
    %v6704 = vmax.f32 %v6702, %v6703
    %v6705 = vmax.f32 %v6405, %v6409
    %v6706 = vmax.f32 %v6705, %v6415
    %v6707 = vmax.f32 %v6706, %v6419
    %v6708 = vmax.f32 %v6707, %v6425
    %v6709 = vmax.f32 %v6708, %v6429
    %v6710 = vmax.f32 %v6709, %v6435
    %v6711 = vmax.f32 %v6710, %v6439
    %v6712 = vrot.slane %v6711, 4
    %v6713 = vmax.f32 %v6711, %v6712
    %v6714 = vrot.slane %v6713, 2
    %v6715 = vmax.f32 %v6713, %v6714
    %v6716 = vrot.slane %v6715, 1
    %v6717 = vmax.f32 %v6715, %v6716
    %v6718 = vsel %vm736, %v6407, -inf
    %v6719 = vsel %vm736, %v6411, -inf
    %v6720 = vmax.f32 %v6718, %v6719
    %v6721 = vsel %vm736, %v6417, -inf
    %v6722 = vmax.f32 %v6720, %v6721
    %v6723 = vsel %vm736, %v6421, -inf
    %v6724 = vmax.f32 %v6722, %v6723
    %v6725 = vsel %vm736, %v6427, -inf
    %v6726 = vmax.f32 %v6724, %v6725
    %v6727 = vsel %vm736, %v6431, -inf
    %v6728 = vmax.f32 %v6726, %v6727
    %v6729 = vsel %vm736, %v6437, -inf
    %v6730 = vmax.f32 %v6728, %v6729
    %v6731 = vsel %vm736, %v6441, -inf
    %v6732 = vmax.f32 %v6730, %v6731
    %v6733 = vrot.slane %v6732, 4
    %v6734 = vmax.f32 %v6732, %v6733
    %v6735 = vrot.slane %v6734, 2
    %v6736 = vmax.f32 %v6734, %v6735
    %v6737 = vrot.slane %v6736, 1
    %v6738 = vmax.f32 %v6736, %v6737
    %v6739 = vmax.f32 %v6445, %v6449
    %v6740 = vmax.f32 %v6739, %v6455
    %v6741 = vmax.f32 %v6740, %v6459
    %v6742 = vmax.f32 %v6741, %v6465
    %v6743 = vmax.f32 %v6742, %v6469
    %v6744 = vmax.f32 %v6743, %v6475
    %v6745 = vmax.f32 %v6744, %v6479
    %v6746 = vrot.slane %v6745, 4
    %v6747 = vmax.f32 %v6745, %v6746
    %v6748 = vrot.slane %v6747, 2
    %v6749 = vmax.f32 %v6747, %v6748
    %v6750 = vrot.slane %v6749, 1
    %v6751 = vmax.f32 %v6749, %v6750
    %v6752 = vsel %vm736, %v6447, -inf
    %v6753 = vsel %vm736, %v6451, -inf
    %v6754 = vmax.f32 %v6752, %v6753
    %v6755 = vsel %vm736, %v6457, -inf
    %v6756 = vmax.f32 %v6754, %v6755
    %v6757 = vsel %vm736, %v6461, -inf
    %v6758 = vmax.f32 %v6756, %v6757
    %v6759 = vsel %vm736, %v6467, -inf
    %v6760 = vmax.f32 %v6758, %v6759
    %v6761 = vsel %vm736, %v6471, -inf
    %v6762 = vmax.f32 %v6760, %v6761
    %v6763 = vsel %vm736, %v6477, -inf
    %v6764 = vmax.f32 %v6762, %v6763
    %v6765 = vsel %vm736, %v6481, -inf
    %v6766 = vmax.f32 %v6764, %v6765
    %v6767 = vrot.slane %v6766, 4
    %v6768 = vmax.f32 %v6766, %v6767
    %v6769 = vrot.slane %v6768, 2
    %v6770 = vmax.f32 %v6768, %v6769
    %v6771 = vrot.slane %v6770, 1
    %v6772 = vmax.f32 %v6770, %v6771
    %v6773 = vmax.f32 %v6485, %v6489
    %v6774 = vmax.f32 %v6773, %v6495
    %v6775 = vmax.f32 %v6774, %v6499
    %v6776 = vmax.f32 %v6775, %v6505
    %v6777 = vmax.f32 %v6776, %v6509
    %v6778 = vmax.f32 %v6777, %v6515
    %v6779 = vmax.f32 %v6778, %v6519
    %v6780 = vrot.slane %v6779, 4
    %v6781 = vmax.f32 %v6779, %v6780
    %v6782 = vrot.slane %v6781, 2
    %v6783 = vmax.f32 %v6781, %v6782
    %v6784 = vrot.slane %v6783, 1
    %v6785 = vmax.f32 %v6783, %v6784
    %v6786 = vsel %vm736, %v6487, -inf
    %v6787 = vsel %vm736, %v6491, -inf
    %v6788 = vmax.f32 %v6786, %v6787
    %v6789 = vsel %vm736, %v6497, -inf
    %v6790 = vmax.f32 %v6788, %v6789
    %v6791 = vsel %vm736, %v6501, -inf
    %v6792 = vmax.f32 %v6790, %v6791
    %v6793 = vsel %vm736, %v6507, -inf
    %v6794 = vmax.f32 %v6792, %v6793
    %v6795 = vsel %vm736, %v6511, -inf
    %v6796 = vmax.f32 %v6794, %v6795
    %v6797 = vsel %vm736, %v6517, -inf
    %v6798 = vmax.f32 %v6796, %v6797
    %v6799 = vsel %vm736, %v6521, -inf
    %v6800 = vmax.f32 %v6798, %v6799
    %v6801 = vrot.slane %v6800, 4
    %v6802 = vmax.f32 %v6800, %v6801
    %v6803 = vrot.slane %v6802, 2
    %v6804 = vmax.f32 %v6802, %v6803
    %v6805 = vrot.slane %v6804, 1
    %v6806 = vmax.f32 %v6804, %v6805
    %v6807 = vmax.f32 %v6525, %v6529
    %v6808 = vmax.f32 %v6807, %v6535
    %v6809 = vmax.f32 %v6808, %v6539
    %v6810 = vmax.f32 %v6809, %v6545
    %v6811 = vmax.f32 %v6810, %v6549
    %v6812 = vmax.f32 %v6811, %v6555
    %v6813 = vmax.f32 %v6812, %v6559
    %v6814 = vrot.slane %v6813, 4
    %v6815 = vmax.f32 %v6813, %v6814
    %v6816 = vrot.slane %v6815, 2
    %v6817 = vmax.f32 %v6815, %v6816
    %v6818 = vrot.slane %v6817, 1
    %v6819 = vmax.f32 %v6817, %v6818
    %v6820 = vsel %vm736, %v6527, -inf
    %v6821 = vsel %vm736, %v6531, -inf
    %v6822 = vmax.f32 %v6820, %v6821
    %v6823 = vsel %vm736, %v6537, -inf
    %v6824 = vmax.f32 %v6822, %v6823
    %v6825 = vsel %vm736, %v6541, -inf
    %v6826 = vmax.f32 %v6824, %v6825
    %v6827 = vsel %vm736, %v6547, -inf
    %v6828 = vmax.f32 %v6826, %v6827
    %v6829 = vsel %vm736, %v6551, -inf
    %v6830 = vmax.f32 %v6828, %v6829
    %v6831 = vsel %vm736, %v6557, -inf
    %v6832 = vmax.f32 %v6830, %v6831
    %v6833 = vsel %vm736, %v6561, -inf
    %v6834 = vmax.f32 %v6832, %v6833
    %v6835 = vrot.slane %v6834, 4
    %v6836 = vmax.f32 %v6834, %v6835
    %v6837 = vrot.slane %v6836, 2
    %v6838 = vmax.f32 %v6836, %v6837
    %v6839 = vrot.slane %v6838, 1
    %v6840 = vmax.f32 %v6838, %v6839
    %v6841 = vmax.f32 %v6565, %v6569
    %v6842 = vmax.f32 %v6841, %v6575
    %v6843 = vmax.f32 %v6842, %v6579
    %v6844 = vmax.f32 %v6843, %v6585
    %v6845 = vmax.f32 %v6844, %v6589
    %v6846 = vmax.f32 %v6845, %v6595
    %v6847 = vmax.f32 %v6846, %v6599
    %v6848 = vrot.slane %v6847, 4
    %v6849 = vmax.f32 %v6847, %v6848
    %v6850 = vrot.slane %v6849, 2
    %v6851 = vmax.f32 %v6849, %v6850
    %v6852 = vrot.slane %v6851, 1
    %v6853 = vmax.f32 %v6851, %v6852
    %v6854 = vsel %vm736, %v6567, -inf
    %v6855 = vsel %vm736, %v6571, -inf
    %v6856 = vmax.f32 %v6854, %v6855
    %v6857 = vsel %vm736, %v6577, -inf
    %v6858 = vmax.f32 %v6856, %v6857
    %v6859 = vsel %vm736, %v6581, -inf
    %v6860 = vmax.f32 %v6858, %v6859
    %v6861 = vsel %vm736, %v6587, -inf
    %v6862 = vmax.f32 %v6860, %v6861
    %v6863 = vsel %vm736, %v6591, -inf
    %v6864 = vmax.f32 %v6862, %v6863
    %v6865 = vsel %vm736, %v6597, -inf
    %v6866 = vmax.f32 %v6864, %v6865
    %v6867 = vsel %vm736, %v6601, -inf
    %v6868 = vmax.f32 %v6866, %v6867
    %v6869 = vrot.slane %v6868, 4
    %v6870 = vmax.f32 %v6868, %v6869
    %v6871 = vrot.slane %v6870, 2
    %v6872 = vmax.f32 %v6870, %v6871
    %v6873 = vrot.slane %v6872, 1
    %v6874 = vmax.f32 %v6872, %v6873
    %v6875 = vpack.c.bf16 %v6615, %v6615
    %v6876 = vpack.c.bf16 %v6636, %v6636
    %v6877 = vpack.c.bf16 %v6649, %v6649
    %v6878 = vpack.c.bf16 %v6670, %v6670
    %v6879 = vpack.c.bf16 %v6683, %v6683
    %v6880 = vpack.c.bf16 %v6704, %v6704
    %v6881 = vpack.c.bf16 %v6717, %v6717
    %v6882 = vpack.c.bf16 %v6738, %v6738
    %v6883 = vpack.c.bf16 %v6751, %v6751
    %v6884 = vpack.c.bf16 %v6772, %v6772
    %v6885 = vpack.c.bf16 %v6785, %v6785
    %v6886 = vpack.c.bf16 %v6806, %v6806
    %v6887 = vpack.c.bf16 %v6819, %v6819
    %v6888 = vpack.c.bf16 %v6840, %v6840
    %v6889 = vpack.c.bf16 %v6853, %v6853
    %v6890 = vpack.c.bf16 %v6874, %v6874
    %s6891 = scalar_lea.vmem %s2, 600
    %v6892 = vld [vmem:[%s6891] sm:$0xf]
    %v6893 = vld [vmem:[%s6891 + $0x4] sm:$0xf]
    %v6894 = vld [vmem:[%s6891 + $0x8] sm:$0xf]
    %v6895 = vld [vmem:[%s6891 + $0xc] sm:$0xf]
    %v6896 = vld [vmem:[%s6891 + $0x10] sm:$0xf]
    %v6897 = vld [vmem:[%s6891 + $0x14] sm:$0xf]
    %v6898 = vld [vmem:[%s6891 + $0x18] sm:$0xf]
    %v6899 = vld [vmem:[%s6891 + $0x1c] sm:$0xf]
    %v6900 = vld [vmem:[%s6891 + $0x20] sm:$0xf]
    %v6901 = vld [vmem:[%s6891 + $0x24] sm:$0xf]
    %v6902 = vld [vmem:[%s6891 + $0x28] sm:$0xf]
    %v6903 = vld [vmem:[%s6891 + $0x2c] sm:$0xf]
    %v6904 = vld [vmem:[%s6891 + $0x30] sm:$0xf]
    %v6905 = vld [vmem:[%s6891 + $0x34] sm:$0xf]
    %v6906 = vld [vmem:[%s6891 + $0x38] sm:$0xf]
    %v6907 = vld [vmem:[%s6891 + $0x3c] sm:$0xf]
    %v6908 = vld [vmem:[%s6891 + $0x40] sm:$0xf]
    %v6909 = vld [vmem:[%s6891 + $0x44] sm:$0xf]
    %v6910 = vld [vmem:[%s6891 + $0x48] sm:$0xf]
    %v6911 = vld [vmem:[%s6891 + $0x4c] sm:$0xf]
    %v6912 = vld [vmem:[%s6891 + $0x50] sm:$0xf]
    %v6913 = vld [vmem:[%s6891 + $0x54] sm:$0xf]
    %v6914 = vld [vmem:[%s6891 + $0x58] sm:$0xf]
    %v6915 = vld [vmem:[%s6891 + $0x5c] sm:$0xf]
    %v6916 = vld [vmem:[%s6891 + $0x60] sm:$0xf]
    %v6917 = vld [vmem:[%s6891 + $0x64] sm:$0xf]
    %v6918 = vld [vmem:[%s6891 + $0x68] sm:$0xf]
    %v6919 = vld [vmem:[%s6891 + $0x6c] sm:$0xf]
    %v6920 = vld [vmem:[%s6891 + $0x70] sm:$0xf]
    %v6921 = vld [vmem:[%s6891 + $0x74] sm:$0xf]
    %v6938 = vunpack.c.l.b16 %v6875
    %v6939 = vunpack.c.l.b16 %v6876
    %v6940 = vunpack.c.l.b16 %v6877
    %v6941 = vunpack.c.l.b16 %v6878
    %v6942 = vunpack.c.l.b16 %v6879
    %v6943 = vunpack.c.l.b16 %v6880
    %v6944 = vunpack.c.l.b16 %v6881
    %v6945 = vunpack.c.l.b16 %v6882
    %v6946 = vunpack.c.l.b16 %v6883
    %v6947 = vunpack.c.l.b16 %v6884
    %v6948 = vunpack.c.l.b16 %v6885
    %v6949 = vunpack.c.l.b16 %v6886
    %v6950 = vunpack.c.l.b16 %v6887
    %v6951 = vunpack.c.l.b16 %v6888
    %v6952 = vunpack.c.l.b16 %v6889
    %v6953 = vunpack.c.l.b16 %v6890
    %v6954 = vsel %vm2066, %v6940, %v6938
    %v6955 = vsel %vm2068, %v6942, %v6954
    %v6956 = vsel %vm2070, %v6944, %v6955
    %v6957 = vsel %vm2072, %v6946, %v6956
    %v6958 = vsel %vm2074, %v6948, %v6957
    %v6959 = vsel %vm2076, %v6950, %v6958
    %v6960 = vsel %vm2078, %v6952, %v6959
    %v6961 = vsel %vm2066, %v6941, %v6939
    %v6962 = vsel %vm2068, %v6943, %v6961
    %v6963 = vsel %vm2070, %v6945, %v6962
    %v6964 = vsel %vm2072, %v6947, %v6963
    %v6965 = vsel %vm2074, %v6949, %v6964
    %v6966 = vsel %vm2076, %v6951, %v6965
    %v6967 = vsel %vm2078, %v6953, %v6966
    %v6968 = vpack.c.b16 %v6960, %v6960
    %v6969 = vpack.c.b16 %v6967, %v6967
    %v7001 = vunpack.c.l.b16 %v6892
    %v7002 = vunpack.c.l.b16 %v6893
    %v7003 = vunpack.c.l.b16 %v6894
    %v7004 = vunpack.c.l.b16 %v6895
    %v7005 = vunpack.c.l.b16 %v6896
    %v7006 = vunpack.c.l.b16 %v6897
    %v7007 = vunpack.c.l.b16 %v6898
    %v7008 = vunpack.c.l.b16 %v6899
    %v7009 = vunpack.c.l.b16 %v6900
    %v7010 = vunpack.c.l.b16 %v6901
    %v7011 = vunpack.c.l.b16 %v6902
    %v7012 = vunpack.c.l.b16 %v6903
    %v7013 = vunpack.c.l.b16 %v6904
    %v7014 = vunpack.c.l.b16 %v6905
    %v7015 = vunpack.c.l.b16 %v6906
    %v7016 = vunpack.c.l.b16 %v6907
    %v7017 = vunpack.c.l.b16 %v6908
    %v7018 = vunpack.c.l.b16 %v6909
    %v7019 = vunpack.c.l.b16 %v6910
    %v7020 = vunpack.c.l.b16 %v6911
    %v7021 = vunpack.c.l.b16 %v6912
    %v7022 = vunpack.c.l.b16 %v6913
    %v7023 = vunpack.c.l.b16 %v6914
    %v7024 = vunpack.c.l.b16 %v6915
    %v7025 = vunpack.c.l.b16 %v6916
    %v7026 = vunpack.c.l.b16 %v6917
    %v7027 = vunpack.c.l.b16 %v6918
    %v7028 = vunpack.c.l.b16 %v6919
    %v7029 = vunpack.c.l.b16 %v6920
    %v7030 = vunpack.c.l.b16 %v6921
    %v7031 = vpack.c.b16 %v7002, %v7001
    %v7032 = vpack.c.b16 %v7004, %v7003
    %v7033 = vpack.c.b16 %v7006, %v7005
    %v7034 = vpack.c.b16 %v7008, %v7007
    %v7035 = vpack.c.b16 %v7010, %v7009
    %v7036 = vpack.c.b16 %v7012, %v7011
    %v7037 = vpack.c.b16 %v7014, %v7013
    %v7038 = vpack.c.b16 %v7016, %v7015
    %v7039 = vpack.c.b16 %v7018, %v7017
    %v7040 = vpack.c.b16 %v7020, %v7019
    %v7041 = vpack.c.b16 %v7022, %v7021
    %v7042 = vpack.c.b16 %v7024, %v7023
    %v7043 = vpack.c.b16 %v7026, %v7025
    %v7044 = vpack.c.b16 %v7028, %v7027
    %v7045 = vpack.c.b16 %v7030, %v7029
    %v7062 = vsel %vm736, %v6969, 0
    %7064 = vmatprep.subr.bf16.mxu0 0
    %7065 = vmatpush1.bf16.msra.mxu0 %v7038
    %7066 = vmatprep.subr.bf16.mxu0 0
    %7067 = vmatpush1.bf16.msra.mxu0 %v7037
    %7068 = vmatprep.subr.bf16.mxu0 0
    %7069 = vmatpush1.bf16.msra.mxu0 %v7036
    %7070 = vmatprep.subr.bf16.mxu0 0
    %7071 = vmatpush1.bf16.msra.mxu0 %v7035
    %7072 = vmatprep.subr.bf16.mxu0 0
    %7073 = vmatpush1.bf16.msra.mxu0 %v7034
    %7074 = vmatprep.subr.bf16.mxu0 0
    %7075 = vmatpush1.bf16.msra.mxu0 %v7033
    %7076 = vmatprep.subr.bf16.mxu0 0
    %7077 = vmatpush1.bf16.msra.mxu0 %v7032
    %7078 = vmatprep.subr.bf16.mxu0 0
    %7079 = vmatpush1.bf16.msra.mxu0 %v7031
    %7080 = vmatprep.subr.bf16.mxu0 0
    %7081 = vmatpush2.bf16.msra.mxu0 0
    %7082 = vmatprep.subr.bf16.mxu0 0
    %7083 = vmatpush2.bf16.msra.mxu0 %v7045
    %7084 = vmatprep.subr.bf16.mxu0 0
    %7085 = vmatpush2.bf16.msra.mxu0 %v7044
    %7086 = vmatprep.subr.bf16.mxu0 0
    %7087 = vmatpush2.bf16.msra.mxu0 %v7043
    %7088 = vmatprep.subr.bf16.mxu0 0
    %7089 = vmatpush2.bf16.msra.mxu0 %v7042
    %7090 = vmatprep.subr.bf16.mxu0 0
    %7091 = vmatpush2.bf16.msra.mxu0 %v7041
    %7092 = vmatprep.subr.bf16.mxu0 0
    %7093 = vmatpush2.bf16.msra.mxu0 %v7040
    %7094 = vmatprep.subr.bf16.mxu0 0
    %7095 = vmatpush2.bf16.msra.mxu0 %v7039
    %7096 = vmatprep.mubr.bf16.mxu0 %v7062
    %7097 = vmatmul.mubr.bf16.gmra.mxu0 %v6968
    %v7098 = vpop.f32.mrf.mxu0
    %v7099 = vadd.f32 0.0, %v7098
    %v7100 = vpop.f32.mrf.mxu0
    %v7101 = vpop.f32.mrf.mxu0
    %v7102 = vpop.f32.mrf.mxu0
    %7103 = vdwg.mxu0
    %v7104 = vadd.f32 %v5929, %v7099
    %v7105 = vld [vmem:[%s0 + $0xc0] sm:$0xf]
    %v7106 = vld [vmem:[%s0 + $0xc4] sm:$0xf]
    %v7107 = vld [vmem:[%s0 + $0xc8] sm:$0xf]
    %v7108 = vld [vmem:[%s0 + $0xcc] sm:$0xf]
    %v7109 = vld [vmem:[%s0 + $0xd0] sm:$0xf]
    %v7110 = vld [vmem:[%s0 + $0xd4] sm:$0xf]
    %v7111 = vld [vmem:[%s0 + $0xd8] sm:$0xf]
    %v7112 = vld [vmem:[%s0 + $0xdc] sm:$0xf]
    %v7113 = vld [vmem:[%s0 + $0x1e0] sm:$0xf]
    %v7114 = vld [vmem:[%s0 + $0x1e4] sm:$0xf]
    %v7115 = vld [vmem:[%s0 + $0x1e8] sm:$0xf]
    %v7116 = vld [vmem:[%s0 + $0x1ec] sm:$0xf]
    %v7117 = vld [vmem:[%s0 + $0x1f0] sm:$0xf]
    %v7118 = vld [vmem:[%s0 + $0x1f4] sm:$0xf]
    %v7119 = vld [vmem:[%s0 + $0x1f8] sm:$0xf]
    %v7120 = vld [vmem:[%s0 + $0x1fc] sm:$0xf]
    %v7121 = vld [vmem:[%s0 + $0x300] sm:$0xf]
    %v7122 = vld [vmem:[%s0 + $0x304] sm:$0xf]
    %v7123 = vld [vmem:[%s0 + $0x308] sm:$0xf]
    %v7124 = vld [vmem:[%s0 + $0x30c] sm:$0xf]
    %v7125 = vld [vmem:[%s0 + $0x310] sm:$0xf]
    %v7126 = vld [vmem:[%s0 + $0x314] sm:$0xf]
    %v7127 = vld [vmem:[%s0 + $0x318] sm:$0xf]
    %v7128 = vld [vmem:[%s0 + $0x31c] sm:$0xf]
    %v7129 = vld [vmem:[%s0 + $0x420] sm:$0xf]
    %v7130 = vld [vmem:[%s0 + $0x424] sm:$0xf]
    %v7131 = vld [vmem:[%s0 + $0x428] sm:$0xf]
    %v7132 = vld [vmem:[%s0 + $0x42c] sm:$0xf]
    %v7133 = vld [vmem:[%s0 + $0x430] sm:$0xf]
    %v7134 = vld [vmem:[%s0 + $0x434] sm:$0xf]
    %v7135 = vld [vmem:[%s0 + $0x438] sm:$0xf]
    %v7136 = vld [vmem:[%s0 + $0x43c] sm:$0xf]
    %v7137 = vld [vmem:[%s0 + $0x540] sm:$0xf]
    %v7138 = vld [vmem:[%s0 + $0x544] sm:$0xf]
    %v7139 = vld [vmem:[%s0 + $0x548] sm:$0xf]
    %v7140 = vld [vmem:[%s0 + $0x54c] sm:$0xf]
    %v7141 = vld [vmem:[%s0 + $0x550] sm:$0xf]
    %v7142 = vld [vmem:[%s0 + $0x554] sm:$0xf]
    %v7143 = vld [vmem:[%s0 + $0x558] sm:$0xf]
    %v7144 = vld [vmem:[%s0 + $0x55c] sm:$0xf]
    %v7145 = vld [vmem:[%s0 + $0x660] sm:$0xf]
    %v7146 = vld [vmem:[%s0 + $0x664] sm:$0xf]
    %v7147 = vld [vmem:[%s0 + $0x668] sm:$0xf]
    %v7148 = vld [vmem:[%s0 + $0x66c] sm:$0xf]
    %v7149 = vld [vmem:[%s0 + $0x670] sm:$0xf]
    %v7150 = vld [vmem:[%s0 + $0x674] sm:$0xf]
    %v7151 = vld [vmem:[%s0 + $0x678] sm:$0xf]
    %v7152 = vld [vmem:[%s0 + $0x67c] sm:$0xf]
    %v7153 = vld [vmem:[%s0 + $0x780] sm:$0xf]
    %v7154 = vld [vmem:[%s0 + $0x784] sm:$0xf]
    %v7155 = vld [vmem:[%s0 + $0x788] sm:$0xf]
    %v7156 = vld [vmem:[%s0 + $0x78c] sm:$0xf]
    %v7157 = vld [vmem:[%s0 + $0x790] sm:$0xf]
    %v7158 = vld [vmem:[%s0 + $0x794] sm:$0xf]
    %v7159 = vld [vmem:[%s0 + $0x798] sm:$0xf]
    %v7160 = vld [vmem:[%s0 + $0x79c] sm:$0xf]
    %v7161 = vld [vmem:[%s0 + $0x8a0] sm:$0xf]
    %v7162 = vld [vmem:[%s0 + $0x8a4] sm:$0xf]
    %v7163 = vld [vmem:[%s0 + $0x8a8] sm:$0xf]
    %v7164 = vld [vmem:[%s0 + $0x8ac] sm:$0xf]
    %v7165 = vld [vmem:[%s0 + $0x8b0] sm:$0xf]
    %v7166 = vld [vmem:[%s0 + $0x8b4] sm:$0xf]
    %v7167 = vld [vmem:[%s0 + $0x8b8] sm:$0xf]
    %v7168 = vld [vmem:[%s0 + $0x8bc] sm:$0xf]
    %v7233 = vunpack.c.l.b16 %v7105
    %v7234 = vunpack.c.l.b16 %v7106
    %v7235 = vunpack.c.l.b16 %v7107
    %v7236 = vunpack.c.l.b16 %v7108
    %v7237 = vunpack.c.l.b16 %v7109
    %v7238 = vunpack.c.l.b16 %v7110
    %v7239 = vunpack.c.l.b16 %v7111
    %v7240 = vunpack.c.l.b16 %v7112
    %v7241 = vunpack.c.l.b16 %v7113
    %v7242 = vunpack.c.l.b16 %v7114
    %v7243 = vunpack.c.l.b16 %v7115
    %v7244 = vunpack.c.l.b16 %v7116
    %v7245 = vunpack.c.l.b16 %v7117
    %v7246 = vunpack.c.l.b16 %v7118
    %v7247 = vunpack.c.l.b16 %v7119
    %v7248 = vunpack.c.l.b16 %v7120
    %v7249 = vunpack.c.l.b16 %v7121
    %v7250 = vunpack.c.l.b16 %v7122
    %v7251 = vunpack.c.l.b16 %v7123
    %v7252 = vunpack.c.l.b16 %v7124
    %v7253 = vunpack.c.l.b16 %v7125
    %v7254 = vunpack.c.l.b16 %v7126
    %v7255 = vunpack.c.l.b16 %v7127
    %v7256 = vunpack.c.l.b16 %v7128
    %v7257 = vunpack.c.l.b16 %v7129
    %v7258 = vunpack.c.l.b16 %v7130
    %v7259 = vunpack.c.l.b16 %v7131
    %v7260 = vunpack.c.l.b16 %v7132
    %v7261 = vunpack.c.l.b16 %v7133
    %v7262 = vunpack.c.l.b16 %v7134
    %v7263 = vunpack.c.l.b16 %v7135
    %v7264 = vunpack.c.l.b16 %v7136
    %v7265 = vunpack.c.l.b16 %v7137
    %v7266 = vunpack.c.l.b16 %v7138
    %v7267 = vunpack.c.l.b16 %v7139
    %v7268 = vunpack.c.l.b16 %v7140
    %v7269 = vunpack.c.l.b16 %v7141
    %v7270 = vunpack.c.l.b16 %v7142
    %v7271 = vunpack.c.l.b16 %v7143
    %v7272 = vunpack.c.l.b16 %v7144
    %v7273 = vunpack.c.l.b16 %v7145
    %v7274 = vunpack.c.l.b16 %v7146
    %v7275 = vunpack.c.l.b16 %v7147
    %v7276 = vunpack.c.l.b16 %v7148
    %v7277 = vunpack.c.l.b16 %v7149
    %v7278 = vunpack.c.l.b16 %v7150
    %v7279 = vunpack.c.l.b16 %v7151
    %v7280 = vunpack.c.l.b16 %v7152
    %v7281 = vunpack.c.l.b16 %v7153
    %v7282 = vunpack.c.l.b16 %v7154
    %v7283 = vunpack.c.l.b16 %v7155
    %v7284 = vunpack.c.l.b16 %v7156
    %v7285 = vunpack.c.l.b16 %v7157
    %v7286 = vunpack.c.l.b16 %v7158
    %v7287 = vunpack.c.l.b16 %v7159
    %v7288 = vunpack.c.l.b16 %v7160
    %v7289 = vunpack.c.l.b16 %v7161
    %v7290 = vunpack.c.l.b16 %v7162
    %v7291 = vunpack.c.l.b16 %v7163
    %v7292 = vunpack.c.l.b16 %v7164
    %v7293 = vunpack.c.l.b16 %v7165
    %v7294 = vunpack.c.l.b16 %v7166
    %v7295 = vunpack.c.l.b16 %v7167
    %v7296 = vunpack.c.l.b16 %v7168
    %v7297 = vpack.c.b16 %v7234, %v7233
    %v7298 = vpack.c.b16 %v7236, %v7235
    %v7299 = vpack.c.b16 %v7238, %v7237
    %v7300 = vpack.c.b16 %v7240, %v7239
    %v7301 = vpack.c.b16 %v7242, %v7241
    %v7302 = vpack.c.b16 %v7244, %v7243
    %v7303 = vpack.c.b16 %v7246, %v7245
    %v7304 = vpack.c.b16 %v7248, %v7247
    %v7305 = vpack.c.b16 %v7250, %v7249
    %v7306 = vpack.c.b16 %v7252, %v7251
    %v7307 = vpack.c.b16 %v7254, %v7253
    %v7308 = vpack.c.b16 %v7256, %v7255
    %v7309 = vpack.c.b16 %v7258, %v7257
    %v7310 = vpack.c.b16 %v7260, %v7259
    %v7311 = vpack.c.b16 %v7262, %v7261
    %v7312 = vpack.c.b16 %v7264, %v7263
    %v7313 = vpack.c.b16 %v7266, %v7265
    %v7314 = vpack.c.b16 %v7268, %v7267
    %v7315 = vpack.c.b16 %v7270, %v7269
    %v7316 = vpack.c.b16 %v7272, %v7271
    %v7317 = vpack.c.b16 %v7274, %v7273
    %v7318 = vpack.c.b16 %v7276, %v7275
    %v7319 = vpack.c.b16 %v7278, %v7277
    %v7320 = vpack.c.b16 %v7280, %v7279
    %v7321 = vpack.c.b16 %v7282, %v7281
    %v7322 = vpack.c.b16 %v7284, %v7283
    %v7323 = vpack.c.b16 %v7286, %v7285
    %v7324 = vpack.c.b16 %v7288, %v7287
    %v7325 = vpack.c.b16 %v7290, %v7289
    %v7326 = vpack.c.b16 %v7292, %v7291
    %v7327 = vpack.c.b16 %v7294, %v7293
    %v7328 = vpack.c.b16 %v7296, %v7295
    %v7330 = vsel %vm273, %v7297, 0
    %v7333 = vsel %vm273, %v7298, 0
    %v7336 = vsel %vm273, %v7299, 0
    %v7339 = vsel %vm273, %v7300, 0
    %v7342 = vsel %vm273, %v7301, 0
    %v7345 = vsel %vm273, %v7302, 0
    %v7348 = vsel %vm273, %v7303, 0
    %v7351 = vsel %vm273, %v7304, 0
    %v7354 = vsel %vm273, %v7305, 0
    %v7357 = vsel %vm273, %v7306, 0
    %v7360 = vsel %vm273, %v7307, 0
    %v7363 = vsel %vm273, %v7308, 0
    %v7366 = vsel %vm273, %v7309, 0
    %v7369 = vsel %vm273, %v7310, 0
    %v7372 = vsel %vm273, %v7311, 0
    %v7375 = vsel %vm273, %v7312, 0
    %v7378 = vsel %vm273, %v7313, 0
    %v7381 = vsel %vm273, %v7314, 0
    %v7384 = vsel %vm273, %v7315, 0
    %v7387 = vsel %vm273, %v7316, 0
    %v7390 = vsel %vm273, %v7317, 0
    %v7393 = vsel %vm273, %v7318, 0
    %v7396 = vsel %vm273, %v7319, 0
    %v7399 = vsel %vm273, %v7320, 0
    %v7402 = vsel %vm273, %v7321, 0
    %v7405 = vsel %vm273, %v7322, 0
    %v7408 = vsel %vm273, %v7323, 0
    %v7411 = vsel %vm273, %v7324, 0
    %v7414 = vsel %vm273, %v7325, 0
    %v7417 = vsel %vm273, %v7326, 0
    %v7420 = vsel %vm273, %v7327, 0
    %v7423 = vsel %vm273, %v7328, 0
    %7425 = vmatprep.subr.bf16.mxu0 0
    %7426 = vmatpush1.bf16.msra.mxu0 0
    %7427 = vmatprep.subr.bf16.mxu0 0
    %7428 = vmatpush1.bf16.msra.mxu0 0
    %7429 = vmatprep.subr.bf16.mxu0 0
    %7430 = vmatpush1.bf16.msra.mxu0 0
    %7431 = vmatprep.subr.bf16.mxu0 0
    %7432 = vmatpush1.bf16.msra.mxu0 0
    %7433 = vmatprep.subr.bf16.mxu0 0
    %7434 = vmatpush1.bf16.msra.mxu0 0
    %7435 = vmatprep.subr.bf16.mxu0 0
    %7436 = vmatpush1.bf16.msra.mxu0 0
    %7437 = vmatprep.subr.bf16.mxu0 %v268
    %7438 = vmatpush1.bf16.msra.mxu0 %v267
    %7439 = vmatprep.subr.bf16.mxu0 %v266
    %7440 = vmatpush1.bf16.msra.mxu0 %v265
    %7441 = vmatprep.subr.bf16.mxu0 0
    %7442 = vmatpush2.bf16.msra.mxu0 0
    %7443 = vmatprep.subr.bf16.mxu0 0
    %7444 = vmatpush2.bf16.msra.mxu0 0
    %7445 = vmatprep.subr.bf16.mxu0 0
    %7446 = vmatpush2.bf16.msra.mxu0 0
    %7447 = vmatprep.subr.bf16.mxu0 0
    %7448 = vmatpush2.bf16.msra.mxu0 0
    %7449 = vmatprep.subr.bf16.mxu0 0
    %7450 = vmatpush2.bf16.msra.mxu0 0
    %7451 = vmatprep.subr.bf16.mxu0 0
    %7452 = vmatpush2.bf16.msra.mxu0 0
    %7453 = vmatprep.subr.bf16.mxu0 0
    %7454 = vmatpush2.bf16.msra.mxu0 0
    %7455 = vmatprep.subr.bf16.mxu0 0
    %7456 = vmatpush2.bf16.msra.mxu0 0
    %7457 = vmatprep.mubr.bf16.mxu0 0
    %7458 = vmatmul.mubr.bf16.gmra.mxu0 %v7330
    %v7459 = vpop.f32.mrf.mxu0
    %v7460 = vadd.f32 0.0, %v7459
    %v7461 = vpop.f32.mrf.mxu0
    %v7462 = vadd.f32 0.0, %v7461
    %v7463 = vpop.f32.mrf.mxu0
    %v7464 = vadd.f32 0.0, %v7463
    %v7465 = vpop.f32.mrf.mxu0
    %v7466 = vadd.f32 0.0, %v7465
    %7467 = vmatprep.mubr.bf16.mxu0 0
    %7468 = vmatmul.mubr.bf16.gmra.mxu0 %v7333
    %v7469 = vpop.f32.mrf.mxu0
    %v7470 = vadd.f32 0.0, %v7469
    %v7471 = vpop.f32.mrf.mxu0
    %v7472 = vadd.f32 0.0, %v7471
    %v7473 = vpop.f32.mrf.mxu0
    %v7474 = vadd.f32 0.0, %v7473
    %v7475 = vpop.f32.mrf.mxu0
    %v7476 = vadd.f32 0.0, %v7475
    %7477 = vmatprep.mubr.bf16.mxu0 0
    %7478 = vmatmul.mubr.bf16.gmra.mxu0 %v7336
    %v7479 = vpop.f32.mrf.mxu0
    %v7480 = vadd.f32 0.0, %v7479
    %v7481 = vpop.f32.mrf.mxu0
    %v7482 = vadd.f32 0.0, %v7481
    %v7483 = vpop.f32.mrf.mxu0
    %v7484 = vadd.f32 0.0, %v7483
    %v7485 = vpop.f32.mrf.mxu0
    %v7486 = vadd.f32 0.0, %v7485
    %7487 = vmatprep.mubr.bf16.mxu0 0
    %7488 = vmatmul.mubr.bf16.gmra.mxu0 %v7339
    %v7489 = vpop.f32.mrf.mxu0
    %v7490 = vadd.f32 0.0, %v7489
    %v7491 = vpop.f32.mrf.mxu0
    %v7492 = vadd.f32 0.0, %v7491
    %v7493 = vpop.f32.mrf.mxu0
    %v7494 = vadd.f32 0.0, %v7493
    %v7495 = vpop.f32.mrf.mxu0
    %v7496 = vadd.f32 0.0, %v7495
    %7497 = vmatprep.mubr.bf16.mxu0 0
    %7498 = vmatmul.mubr.bf16.gmra.mxu0 %v7342
    %v7499 = vpop.f32.mrf.mxu0
    %v7500 = vadd.f32 0.0, %v7499
    %v7501 = vpop.f32.mrf.mxu0
    %v7502 = vadd.f32 0.0, %v7501
    %v7503 = vpop.f32.mrf.mxu0
    %v7504 = vadd.f32 0.0, %v7503
    %v7505 = vpop.f32.mrf.mxu0
    %v7506 = vadd.f32 0.0, %v7505
    %7507 = vmatprep.mubr.bf16.mxu0 0
    %7508 = vmatmul.mubr.bf16.gmra.mxu0 %v7345
    %v7509 = vpop.f32.mrf.mxu0
    %v7510 = vadd.f32 0.0, %v7509
    %v7511 = vpop.f32.mrf.mxu0
    %v7512 = vadd.f32 0.0, %v7511
    %v7513 = vpop.f32.mrf.mxu0
    %v7514 = vadd.f32 0.0, %v7513
    %v7515 = vpop.f32.mrf.mxu0
    %v7516 = vadd.f32 0.0, %v7515
    %7517 = vmatprep.mubr.bf16.mxu0 0
    %7518 = vmatmul.mubr.bf16.gmra.mxu0 %v7348
    %v7519 = vpop.f32.mrf.mxu0
    %v7520 = vadd.f32 0.0, %v7519
    %v7521 = vpop.f32.mrf.mxu0
    %v7522 = vadd.f32 0.0, %v7521
    %v7523 = vpop.f32.mrf.mxu0
    %v7524 = vadd.f32 0.0, %v7523
    %v7525 = vpop.f32.mrf.mxu0
    %v7526 = vadd.f32 0.0, %v7525
    %7527 = vmatprep.mubr.bf16.mxu0 0
    %7528 = vmatmul.mubr.bf16.gmra.mxu0 %v7351
    %v7529 = vpop.f32.mrf.mxu0
    %v7530 = vadd.f32 0.0, %v7529
    %v7531 = vpop.f32.mrf.mxu0
    %v7532 = vadd.f32 0.0, %v7531
    %v7533 = vpop.f32.mrf.mxu0
    %v7534 = vadd.f32 0.0, %v7533
    %v7535 = vpop.f32.mrf.mxu0
    %v7536 = vadd.f32 0.0, %v7535
    %7537 = vmatprep.mubr.bf16.mxu0 0
    %7538 = vmatmul.mubr.bf16.gmra.mxu0 %v7354
    %v7539 = vpop.f32.mrf.mxu0
    %v7540 = vadd.f32 0.0, %v7539
    %v7541 = vpop.f32.mrf.mxu0
    %v7542 = vadd.f32 0.0, %v7541
    %v7543 = vpop.f32.mrf.mxu0
    %v7544 = vadd.f32 0.0, %v7543
    %v7545 = vpop.f32.mrf.mxu0
    %v7546 = vadd.f32 0.0, %v7545
    %7547 = vmatprep.mubr.bf16.mxu0 0
    %7548 = vmatmul.mubr.bf16.gmra.mxu0 %v7357
    %v7549 = vpop.f32.mrf.mxu0
    %v7550 = vadd.f32 0.0, %v7549
    %v7551 = vpop.f32.mrf.mxu0
    %v7552 = vadd.f32 0.0, %v7551
    %v7553 = vpop.f32.mrf.mxu0
    %v7554 = vadd.f32 0.0, %v7553
    %v7555 = vpop.f32.mrf.mxu0
    %v7556 = vadd.f32 0.0, %v7555
    %7557 = vmatprep.mubr.bf16.mxu0 0
    %7558 = vmatmul.mubr.bf16.gmra.mxu0 %v7360
    %v7559 = vpop.f32.mrf.mxu0
    %v7560 = vadd.f32 0.0, %v7559
    %v7561 = vpop.f32.mrf.mxu0
    %v7562 = vadd.f32 0.0, %v7561
    %v7563 = vpop.f32.mrf.mxu0
    %v7564 = vadd.f32 0.0, %v7563
    %v7565 = vpop.f32.mrf.mxu0
    %v7566 = vadd.f32 0.0, %v7565
    %7567 = vmatprep.mubr.bf16.mxu0 0
    %7568 = vmatmul.mubr.bf16.gmra.mxu0 %v7363
    %v7569 = vpop.f32.mrf.mxu0
    %v7570 = vadd.f32 0.0, %v7569
    %v7571 = vpop.f32.mrf.mxu0
    %v7572 = vadd.f32 0.0, %v7571
    %v7573 = vpop.f32.mrf.mxu0
    %v7574 = vadd.f32 0.0, %v7573
    %v7575 = vpop.f32.mrf.mxu0
    %v7576 = vadd.f32 0.0, %v7575
    %7577 = vmatprep.mubr.bf16.mxu0 0
    %7578 = vmatmul.mubr.bf16.gmra.mxu0 %v7366
    %v7579 = vpop.f32.mrf.mxu0
    %v7580 = vadd.f32 0.0, %v7579
    %v7581 = vpop.f32.mrf.mxu0
    %v7582 = vadd.f32 0.0, %v7581
    %v7583 = vpop.f32.mrf.mxu0
    %v7584 = vadd.f32 0.0, %v7583
    %v7585 = vpop.f32.mrf.mxu0
    %v7586 = vadd.f32 0.0, %v7585
    %7587 = vmatprep.mubr.bf16.mxu0 0
    %7588 = vmatmul.mubr.bf16.gmra.mxu0 %v7369
    %v7589 = vpop.f32.mrf.mxu0
    %v7590 = vadd.f32 0.0, %v7589
    %v7591 = vpop.f32.mrf.mxu0
    %v7592 = vadd.f32 0.0, %v7591
    %v7593 = vpop.f32.mrf.mxu0
    %v7594 = vadd.f32 0.0, %v7593
    %v7595 = vpop.f32.mrf.mxu0
    %v7596 = vadd.f32 0.0, %v7595
    %7597 = vmatprep.mubr.bf16.mxu0 0
    %7598 = vmatmul.mubr.bf16.gmra.mxu0 %v7372
    %v7599 = vpop.f32.mrf.mxu0
    %v7600 = vadd.f32 0.0, %v7599
    %v7601 = vpop.f32.mrf.mxu0
    %v7602 = vadd.f32 0.0, %v7601
    %v7603 = vpop.f32.mrf.mxu0
    %v7604 = vadd.f32 0.0, %v7603
    %v7605 = vpop.f32.mrf.mxu0
    %v7606 = vadd.f32 0.0, %v7605
    %7607 = vmatprep.mubr.bf16.mxu0 0
    %7608 = vmatmul.mubr.bf16.gmra.mxu0 %v7375
    %v7609 = vpop.f32.mrf.mxu0
    %v7610 = vadd.f32 0.0, %v7609
    %v7611 = vpop.f32.mrf.mxu0
    %v7612 = vadd.f32 0.0, %v7611
    %v7613 = vpop.f32.mrf.mxu0
    %v7614 = vadd.f32 0.0, %v7613
    %v7615 = vpop.f32.mrf.mxu0
    %v7616 = vadd.f32 0.0, %v7615
    %7617 = vmatprep.mubr.bf16.mxu0 0
    %7618 = vmatmul.mubr.bf16.gmra.mxu0 %v7378
    %v7619 = vpop.f32.mrf.mxu0
    %v7620 = vadd.f32 0.0, %v7619
    %v7621 = vpop.f32.mrf.mxu0
    %v7622 = vadd.f32 0.0, %v7621
    %v7623 = vpop.f32.mrf.mxu0
    %v7624 = vadd.f32 0.0, %v7623
    %v7625 = vpop.f32.mrf.mxu0
    %v7626 = vadd.f32 0.0, %v7625
    %7627 = vmatprep.mubr.bf16.mxu0 0
    %7628 = vmatmul.mubr.bf16.gmra.mxu0 %v7381
    %v7629 = vpop.f32.mrf.mxu0
    %v7630 = vadd.f32 0.0, %v7629
    %v7631 = vpop.f32.mrf.mxu0
    %v7632 = vadd.f32 0.0, %v7631
    %v7633 = vpop.f32.mrf.mxu0
    %v7634 = vadd.f32 0.0, %v7633
    %v7635 = vpop.f32.mrf.mxu0
    %v7636 = vadd.f32 0.0, %v7635
    %7637 = vmatprep.mubr.bf16.mxu0 0
    %7638 = vmatmul.mubr.bf16.gmra.mxu0 %v7384
    %v7639 = vpop.f32.mrf.mxu0
    %v7640 = vadd.f32 0.0, %v7639
    %v7641 = vpop.f32.mrf.mxu0
    %v7642 = vadd.f32 0.0, %v7641
    %v7643 = vpop.f32.mrf.mxu0
    %v7644 = vadd.f32 0.0, %v7643
    %v7645 = vpop.f32.mrf.mxu0
    %v7646 = vadd.f32 0.0, %v7645
    %7647 = vmatprep.mubr.bf16.mxu0 0
    %7648 = vmatmul.mubr.bf16.gmra.mxu0 %v7387
    %v7649 = vpop.f32.mrf.mxu0
    %v7650 = vadd.f32 0.0, %v7649
    %v7651 = vpop.f32.mrf.mxu0
    %v7652 = vadd.f32 0.0, %v7651
    %v7653 = vpop.f32.mrf.mxu0
    %v7654 = vadd.f32 0.0, %v7653
    %v7655 = vpop.f32.mrf.mxu0
    %v7656 = vadd.f32 0.0, %v7655
    %7657 = vmatprep.mubr.bf16.mxu0 0
    %7658 = vmatmul.mubr.bf16.gmra.mxu0 %v7390
    %v7659 = vpop.f32.mrf.mxu0
    %v7660 = vadd.f32 0.0, %v7659
    %v7661 = vpop.f32.mrf.mxu0
    %v7662 = vadd.f32 0.0, %v7661
    %v7663 = vpop.f32.mrf.mxu0
    %v7664 = vadd.f32 0.0, %v7663
    %v7665 = vpop.f32.mrf.mxu0
    %v7666 = vadd.f32 0.0, %v7665
    %7667 = vmatprep.mubr.bf16.mxu0 0
    %7668 = vmatmul.mubr.bf16.gmra.mxu0 %v7393
    %v7669 = vpop.f32.mrf.mxu0
    %v7670 = vadd.f32 0.0, %v7669
    %v7671 = vpop.f32.mrf.mxu0
    %v7672 = vadd.f32 0.0, %v7671
    %v7673 = vpop.f32.mrf.mxu0
    %v7674 = vadd.f32 0.0, %v7673
    %v7675 = vpop.f32.mrf.mxu0
    %v7676 = vadd.f32 0.0, %v7675
    %7677 = vmatprep.mubr.bf16.mxu0 0
    %7678 = vmatmul.mubr.bf16.gmra.mxu0 %v7396
    %v7679 = vpop.f32.mrf.mxu0
    %v7680 = vadd.f32 0.0, %v7679
    %v7681 = vpop.f32.mrf.mxu0
    %v7682 = vadd.f32 0.0, %v7681
    %v7683 = vpop.f32.mrf.mxu0
    %v7684 = vadd.f32 0.0, %v7683
    %v7685 = vpop.f32.mrf.mxu0
    %v7686 = vadd.f32 0.0, %v7685
    %7687 = vmatprep.mubr.bf16.mxu0 0
    %7688 = vmatmul.mubr.bf16.gmra.mxu0 %v7399
    %v7689 = vpop.f32.mrf.mxu0
    %v7690 = vadd.f32 0.0, %v7689
    %v7691 = vpop.f32.mrf.mxu0
    %v7692 = vadd.f32 0.0, %v7691
    %v7693 = vpop.f32.mrf.mxu0
    %v7694 = vadd.f32 0.0, %v7693
    %v7695 = vpop.f32.mrf.mxu0
    %v7696 = vadd.f32 0.0, %v7695
    %7697 = vmatprep.mubr.bf16.mxu0 0
    %7698 = vmatmul.mubr.bf16.gmra.mxu0 %v7402
    %v7699 = vpop.f32.mrf.mxu0
    %v7700 = vadd.f32 0.0, %v7699
    %v7701 = vpop.f32.mrf.mxu0
    %v7702 = vadd.f32 0.0, %v7701
    %v7703 = vpop.f32.mrf.mxu0
    %v7704 = vadd.f32 0.0, %v7703
    %v7705 = vpop.f32.mrf.mxu0
    %v7706 = vadd.f32 0.0, %v7705
    %7707 = vmatprep.mubr.bf16.mxu0 0
    %7708 = vmatmul.mubr.bf16.gmra.mxu0 %v7405
    %v7709 = vpop.f32.mrf.mxu0
    %v7710 = vadd.f32 0.0, %v7709
    %v7711 = vpop.f32.mrf.mxu0
    %v7712 = vadd.f32 0.0, %v7711
    %v7713 = vpop.f32.mrf.mxu0
    %v7714 = vadd.f32 0.0, %v7713
    %v7715 = vpop.f32.mrf.mxu0
    %v7716 = vadd.f32 0.0, %v7715
    %7717 = vmatprep.mubr.bf16.mxu0 0
    %7718 = vmatmul.mubr.bf16.gmra.mxu0 %v7408
    %v7719 = vpop.f32.mrf.mxu0
    %v7720 = vadd.f32 0.0, %v7719
    %v7721 = vpop.f32.mrf.mxu0
    %v7722 = vadd.f32 0.0, %v7721
    %v7723 = vpop.f32.mrf.mxu0
    %v7724 = vadd.f32 0.0, %v7723
    %v7725 = vpop.f32.mrf.mxu0
    %v7726 = vadd.f32 0.0, %v7725
    %7727 = vmatprep.mubr.bf16.mxu0 0
    %7728 = vmatmul.mubr.bf16.gmra.mxu0 %v7411
    %v7729 = vpop.f32.mrf.mxu0
    %v7730 = vadd.f32 0.0, %v7729
    %v7731 = vpop.f32.mrf.mxu0
    %v7732 = vadd.f32 0.0, %v7731
    %v7733 = vpop.f32.mrf.mxu0
    %v7734 = vadd.f32 0.0, %v7733
    %v7735 = vpop.f32.mrf.mxu0
    %v7736 = vadd.f32 0.0, %v7735
    %7737 = vmatprep.mubr.bf16.mxu0 0
    %7738 = vmatmul.mubr.bf16.gmra.mxu0 %v7414
    %v7739 = vpop.f32.mrf.mxu0
    %v7740 = vadd.f32 0.0, %v7739
    %v7741 = vpop.f32.mrf.mxu0
    %v7742 = vadd.f32 0.0, %v7741
    %v7743 = vpop.f32.mrf.mxu0
    %v7744 = vadd.f32 0.0, %v7743
    %v7745 = vpop.f32.mrf.mxu0
    %v7746 = vadd.f32 0.0, %v7745
    %7747 = vmatprep.mubr.bf16.mxu0 0
    %7748 = vmatmul.mubr.bf16.gmra.mxu0 %v7417
    %v7749 = vpop.f32.mrf.mxu0
    %v7750 = vadd.f32 0.0, %v7749
    %v7751 = vpop.f32.mrf.mxu0
    %v7752 = vadd.f32 0.0, %v7751
    %v7753 = vpop.f32.mrf.mxu0
    %v7754 = vadd.f32 0.0, %v7753
    %v7755 = vpop.f32.mrf.mxu0
    %v7756 = vadd.f32 0.0, %v7755
    %7757 = vmatprep.mubr.bf16.mxu0 0
    %7758 = vmatmul.mubr.bf16.gmra.mxu0 %v7420
    %v7759 = vpop.f32.mrf.mxu0
    %v7760 = vadd.f32 0.0, %v7759
    %v7761 = vpop.f32.mrf.mxu0
    %v7762 = vadd.f32 0.0, %v7761
    %v7763 = vpop.f32.mrf.mxu0
    %v7764 = vadd.f32 0.0, %v7763
    %v7765 = vpop.f32.mrf.mxu0
    %v7766 = vadd.f32 0.0, %v7765
    %7767 = vmatprep.mubr.bf16.mxu0 0
    %7768 = vmatmul.mubr.bf16.gmra.mxu0 %v7423
    %v7769 = vpop.f32.mrf.mxu0
    %v7770 = vadd.f32 0.0, %v7769
    %v7771 = vpop.f32.mrf.mxu0
    %v7772 = vadd.f32 0.0, %v7771
    %v7773 = vpop.f32.mrf.mxu0
    %v7774 = vadd.f32 0.0, %v7773
    %v7775 = vpop.f32.mrf.mxu0
    %v7776 = vadd.f32 0.0, %v7775
    %7777 = vdwg.mxu0
    %v7778 = vmax.f32 %v7460, %v7464
    %v7779 = vmax.f32 %v7778, %v7470
    %v7780 = vmax.f32 %v7779, %v7474
    %v7781 = vmax.f32 %v7780, %v7480
    %v7782 = vmax.f32 %v7781, %v7484
    %v7783 = vmax.f32 %v7782, %v7490
    %v7784 = vmax.f32 %v7783, %v7494
    %v7785 = vrot.slane %v7784, 4
    %v7786 = vmax.f32 %v7784, %v7785
    %v7787 = vrot.slane %v7786, 2
    %v7788 = vmax.f32 %v7786, %v7787
    %v7789 = vrot.slane %v7788, 1
    %v7790 = vmax.f32 %v7788, %v7789
    %v7791 = vsel %vm736, %v7462, -inf
    %v7792 = vsel %vm736, %v7466, -inf
    %v7793 = vmax.f32 %v7791, %v7792
    %v7794 = vsel %vm736, %v7472, -inf
    %v7795 = vmax.f32 %v7793, %v7794
    %v7796 = vsel %vm736, %v7476, -inf
    %v7797 = vmax.f32 %v7795, %v7796
    %v7798 = vsel %vm736, %v7482, -inf
    %v7799 = vmax.f32 %v7797, %v7798
    %v7800 = vsel %vm736, %v7486, -inf
    %v7801 = vmax.f32 %v7799, %v7800
    %v7802 = vsel %vm736, %v7492, -inf
    %v7803 = vmax.f32 %v7801, %v7802
    %v7804 = vsel %vm736, %v7496, -inf
    %v7805 = vmax.f32 %v7803, %v7804
    %v7806 = vrot.slane %v7805, 4
    %v7807 = vmax.f32 %v7805, %v7806
    %v7808 = vrot.slane %v7807, 2
    %v7809 = vmax.f32 %v7807, %v7808
    %v7810 = vrot.slane %v7809, 1
    %v7811 = vmax.f32 %v7809, %v7810
    %v7812 = vmax.f32 %v7500, %v7504
    %v7813 = vmax.f32 %v7812, %v7510
    %v7814 = vmax.f32 %v7813, %v7514
    %v7815 = vmax.f32 %v7814, %v7520
    %v7816 = vmax.f32 %v7815, %v7524
    %v7817 = vmax.f32 %v7816, %v7530
    %v7818 = vmax.f32 %v7817, %v7534
    %v7819 = vrot.slane %v7818, 4
    %v7820 = vmax.f32 %v7818, %v7819
    %v7821 = vrot.slane %v7820, 2
    %v7822 = vmax.f32 %v7820, %v7821
    %v7823 = vrot.slane %v7822, 1
    %v7824 = vmax.f32 %v7822, %v7823
    %v7825 = vsel %vm736, %v7502, -inf
    %v7826 = vsel %vm736, %v7506, -inf
    %v7827 = vmax.f32 %v7825, %v7826
    %v7828 = vsel %vm736, %v7512, -inf
    %v7829 = vmax.f32 %v7827, %v7828
    %v7830 = vsel %vm736, %v7516, -inf
    %v7831 = vmax.f32 %v7829, %v7830
    %v7832 = vsel %vm736, %v7522, -inf
    %v7833 = vmax.f32 %v7831, %v7832
    %v7834 = vsel %vm736, %v7526, -inf
    %v7835 = vmax.f32 %v7833, %v7834
    %v7836 = vsel %vm736, %v7532, -inf
    %v7837 = vmax.f32 %v7835, %v7836
    %v7838 = vsel %vm736, %v7536, -inf
    %v7839 = vmax.f32 %v7837, %v7838
    %v7840 = vrot.slane %v7839, 4
    %v7841 = vmax.f32 %v7839, %v7840
    %v7842 = vrot.slane %v7841, 2
    %v7843 = vmax.f32 %v7841, %v7842
    %v7844 = vrot.slane %v7843, 1
    %v7845 = vmax.f32 %v7843, %v7844
    %v7846 = vmax.f32 %v7540, %v7544
    %v7847 = vmax.f32 %v7846, %v7550
    %v7848 = vmax.f32 %v7847, %v7554
    %v7849 = vmax.f32 %v7848, %v7560
    %v7850 = vmax.f32 %v7849, %v7564
    %v7851 = vmax.f32 %v7850, %v7570
    %v7852 = vmax.f32 %v7851, %v7574
    %v7853 = vrot.slane %v7852, 4
    %v7854 = vmax.f32 %v7852, %v7853
    %v7855 = vrot.slane %v7854, 2
    %v7856 = vmax.f32 %v7854, %v7855
    %v7857 = vrot.slane %v7856, 1
    %v7858 = vmax.f32 %v7856, %v7857
    %v7859 = vsel %vm736, %v7542, -inf
    %v7860 = vsel %vm736, %v7546, -inf
    %v7861 = vmax.f32 %v7859, %v7860
    %v7862 = vsel %vm736, %v7552, -inf
    %v7863 = vmax.f32 %v7861, %v7862
    %v7864 = vsel %vm736, %v7556, -inf
    %v7865 = vmax.f32 %v7863, %v7864
    %v7866 = vsel %vm736, %v7562, -inf
    %v7867 = vmax.f32 %v7865, %v7866
    %v7868 = vsel %vm736, %v7566, -inf
    %v7869 = vmax.f32 %v7867, %v7868
    %v7870 = vsel %vm736, %v7572, -inf
    %v7871 = vmax.f32 %v7869, %v7870
    %v7872 = vsel %vm736, %v7576, -inf
    %v7873 = vmax.f32 %v7871, %v7872
    %v7874 = vrot.slane %v7873, 4
    %v7875 = vmax.f32 %v7873, %v7874
    %v7876 = vrot.slane %v7875, 2
    %v7877 = vmax.f32 %v7875, %v7876
    %v7878 = vrot.slane %v7877, 1
    %v7879 = vmax.f32 %v7877, %v7878
    %v7880 = vmax.f32 %v7580, %v7584
    %v7881 = vmax.f32 %v7880, %v7590
    %v7882 = vmax.f32 %v7881, %v7594
    %v7883 = vmax.f32 %v7882, %v7600
    %v7884 = vmax.f32 %v7883, %v7604
    %v7885 = vmax.f32 %v7884, %v7610
    %v7886 = vmax.f32 %v7885, %v7614
    %v7887 = vrot.slane %v7886, 4
    %v7888 = vmax.f32 %v7886, %v7887
    %v7889 = vrot.slane %v7888, 2
    %v7890 = vmax.f32 %v7888, %v7889
    %v7891 = vrot.slane %v7890, 1
    %v7892 = vmax.f32 %v7890, %v7891
    %v7893 = vsel %vm736, %v7582, -inf
    %v7894 = vsel %vm736, %v7586, -inf
    %v7895 = vmax.f32 %v7893, %v7894
    %v7896 = vsel %vm736, %v7592, -inf
    %v7897 = vmax.f32 %v7895, %v7896
    %v7898 = vsel %vm736, %v7596, -inf
    %v7899 = vmax.f32 %v7897, %v7898
    %v7900 = vsel %vm736, %v7602, -inf
    %v7901 = vmax.f32 %v7899, %v7900
    %v7902 = vsel %vm736, %v7606, -inf
    %v7903 = vmax.f32 %v7901, %v7902
    %v7904 = vsel %vm736, %v7612, -inf
    %v7905 = vmax.f32 %v7903, %v7904
    %v7906 = vsel %vm736, %v7616, -inf
    %v7907 = vmax.f32 %v7905, %v7906
    %v7908 = vrot.slane %v7907, 4
    %v7909 = vmax.f32 %v7907, %v7908
    %v7910 = vrot.slane %v7909, 2
    %v7911 = vmax.f32 %v7909, %v7910
    %v7912 = vrot.slane %v7911, 1
    %v7913 = vmax.f32 %v7911, %v7912
    %v7914 = vmax.f32 %v7620, %v7624
    %v7915 = vmax.f32 %v7914, %v7630
    %v7916 = vmax.f32 %v7915, %v7634
    %v7917 = vmax.f32 %v7916, %v7640
    %v7918 = vmax.f32 %v7917, %v7644
    %v7919 = vmax.f32 %v7918, %v7650
    %v7920 = vmax.f32 %v7919, %v7654
    %v7921 = vrot.slane %v7920, 4
    %v7922 = vmax.f32 %v7920, %v7921
    %v7923 = vrot.slane %v7922, 2
    %v7924 = vmax.f32 %v7922, %v7923
    %v7925 = vrot.slane %v7924, 1
    %v7926 = vmax.f32 %v7924, %v7925
    %v7927 = vsel %vm736, %v7622, -inf
    %v7928 = vsel %vm736, %v7626, -inf
    %v7929 = vmax.f32 %v7927, %v7928
    %v7930 = vsel %vm736, %v7632, -inf
    %v7931 = vmax.f32 %v7929, %v7930
    %v7932 = vsel %vm736, %v7636, -inf
    %v7933 = vmax.f32 %v7931, %v7932
    %v7934 = vsel %vm736, %v7642, -inf
    %v7935 = vmax.f32 %v7933, %v7934
    %v7936 = vsel %vm736, %v7646, -inf
    %v7937 = vmax.f32 %v7935, %v7936
    %v7938 = vsel %vm736, %v7652, -inf
    %v7939 = vmax.f32 %v7937, %v7938
    %v7940 = vsel %vm736, %v7656, -inf
    %v7941 = vmax.f32 %v7939, %v7940
    %v7942 = vrot.slane %v7941, 4
    %v7943 = vmax.f32 %v7941, %v7942
    %v7944 = vrot.slane %v7943, 2
    %v7945 = vmax.f32 %v7943, %v7944
    %v7946 = vrot.slane %v7945, 1
    %v7947 = vmax.f32 %v7945, %v7946
    %v7948 = vmax.f32 %v7660, %v7664
    %v7949 = vmax.f32 %v7948, %v7670
    %v7950 = vmax.f32 %v7949, %v7674
    %v7951 = vmax.f32 %v7950, %v7680
    %v7952 = vmax.f32 %v7951, %v7684
    %v7953 = vmax.f32 %v7952, %v7690
    %v7954 = vmax.f32 %v7953, %v7694
    %v7955 = vrot.slane %v7954, 4
    %v7956 = vmax.f32 %v7954, %v7955
    %v7957 = vrot.slane %v7956, 2
    %v7958 = vmax.f32 %v7956, %v7957
    %v7959 = vrot.slane %v7958, 1
    %v7960 = vmax.f32 %v7958, %v7959
    %v7961 = vsel %vm736, %v7662, -inf
    %v7962 = vsel %vm736, %v7666, -inf
    %v7963 = vmax.f32 %v7961, %v7962
    %v7964 = vsel %vm736, %v7672, -inf
    %v7965 = vmax.f32 %v7963, %v7964
    %v7966 = vsel %vm736, %v7676, -inf
    %v7967 = vmax.f32 %v7965, %v7966
    %v7968 = vsel %vm736, %v7682, -inf
    %v7969 = vmax.f32 %v7967, %v7968
    %v7970 = vsel %vm736, %v7686, -inf
    %v7971 = vmax.f32 %v7969, %v7970
    %v7972 = vsel %vm736, %v7692, -inf
    %v7973 = vmax.f32 %v7971, %v7972
    %v7974 = vsel %vm736, %v7696, -inf
    %v7975 = vmax.f32 %v7973, %v7974
    %v7976 = vrot.slane %v7975, 4
    %v7977 = vmax.f32 %v7975, %v7976
    %v7978 = vrot.slane %v7977, 2
    %v7979 = vmax.f32 %v7977, %v7978
    %v7980 = vrot.slane %v7979, 1
    %v7981 = vmax.f32 %v7979, %v7980
    %v7982 = vmax.f32 %v7700, %v7704
    %v7983 = vmax.f32 %v7982, %v7710
    %v7984 = vmax.f32 %v7983, %v7714
    %v7985 = vmax.f32 %v7984, %v7720
    %v7986 = vmax.f32 %v7985, %v7724
    %v7987 = vmax.f32 %v7986, %v7730
    %v7988 = vmax.f32 %v7987, %v7734
    %v7989 = vrot.slane %v7988, 4
    %v7990 = vmax.f32 %v7988, %v7989
    %v7991 = vrot.slane %v7990, 2
    %v7992 = vmax.f32 %v7990, %v7991
    %v7993 = vrot.slane %v7992, 1
    %v7994 = vmax.f32 %v7992, %v7993
    %v7995 = vsel %vm736, %v7702, -inf
    %v7996 = vsel %vm736, %v7706, -inf
    %v7997 = vmax.f32 %v7995, %v7996
    %v7998 = vsel %vm736, %v7712, -inf
    %v7999 = vmax.f32 %v7997, %v7998
    %v8000 = vsel %vm736, %v7716, -inf
    %v8001 = vmax.f32 %v7999, %v8000
    %v8002 = vsel %vm736, %v7722, -inf
    %v8003 = vmax.f32 %v8001, %v8002
    %v8004 = vsel %vm736, %v7726, -inf
    %v8005 = vmax.f32 %v8003, %v8004
    %v8006 = vsel %vm736, %v7732, -inf
    %v8007 = vmax.f32 %v8005, %v8006
    %v8008 = vsel %vm736, %v7736, -inf
    %v8009 = vmax.f32 %v8007, %v8008
    %v8010 = vrot.slane %v8009, 4
    %v8011 = vmax.f32 %v8009, %v8010
    %v8012 = vrot.slane %v8011, 2
    %v8013 = vmax.f32 %v8011, %v8012
    %v8014 = vrot.slane %v8013, 1
    %v8015 = vmax.f32 %v8013, %v8014
    %v8016 = vmax.f32 %v7740, %v7744
    %v8017 = vmax.f32 %v8016, %v7750
    %v8018 = vmax.f32 %v8017, %v7754
    %v8019 = vmax.f32 %v8018, %v7760
    %v8020 = vmax.f32 %v8019, %v7764
    %v8021 = vmax.f32 %v8020, %v7770
    %v8022 = vmax.f32 %v8021, %v7774
    %v8023 = vrot.slane %v8022, 4
    %v8024 = vmax.f32 %v8022, %v8023
    %v8025 = vrot.slane %v8024, 2
    %v8026 = vmax.f32 %v8024, %v8025
    %v8027 = vrot.slane %v8026, 1
    %v8028 = vmax.f32 %v8026, %v8027
    %v8029 = vsel %vm736, %v7742, -inf
    %v8030 = vsel %vm736, %v7746, -inf
    %v8031 = vmax.f32 %v8029, %v8030
    %v8032 = vsel %vm736, %v7752, -inf
    %v8033 = vmax.f32 %v8031, %v8032
    %v8034 = vsel %vm736, %v7756, -inf
    %v8035 = vmax.f32 %v8033, %v8034
    %v8036 = vsel %vm736, %v7762, -inf
    %v8037 = vmax.f32 %v8035, %v8036
    %v8038 = vsel %vm736, %v7766, -inf
    %v8039 = vmax.f32 %v8037, %v8038
    %v8040 = vsel %vm736, %v7772, -inf
    %v8041 = vmax.f32 %v8039, %v8040
    %v8042 = vsel %vm736, %v7776, -inf
    %v8043 = vmax.f32 %v8041, %v8042
    %v8044 = vrot.slane %v8043, 4
    %v8045 = vmax.f32 %v8043, %v8044
    %v8046 = vrot.slane %v8045, 2
    %v8047 = vmax.f32 %v8045, %v8046
    %v8048 = vrot.slane %v8047, 1
    %v8049 = vmax.f32 %v8047, %v8048
    %v8050 = vpack.c.bf16 %v7790, %v7790
    %v8051 = vpack.c.bf16 %v7811, %v7811
    %v8052 = vpack.c.bf16 %v7824, %v7824
    %v8053 = vpack.c.bf16 %v7845, %v7845
    %v8054 = vpack.c.bf16 %v7858, %v7858
    %v8055 = vpack.c.bf16 %v7879, %v7879
    %v8056 = vpack.c.bf16 %v7892, %v7892
    %v8057 = vpack.c.bf16 %v7913, %v7913
    %v8058 = vpack.c.bf16 %v7926, %v7926
    %v8059 = vpack.c.bf16 %v7947, %v7947
    %v8060 = vpack.c.bf16 %v7960, %v7960
    %v8061 = vpack.c.bf16 %v7981, %v7981
    %v8062 = vpack.c.bf16 %v7994, %v7994
    %v8063 = vpack.c.bf16 %v8015, %v8015
    %v8064 = vpack.c.bf16 %v8028, %v8028
    %v8065 = vpack.c.bf16 %v8049, %v8049
    %s8066 = scalar_lea.vmem %s2, 720
    %v8067 = vld [vmem:[%s8066] sm:$0xf]
    %v8068 = vld [vmem:[%s8066 + $0x4] sm:$0xf]
    %v8069 = vld [vmem:[%s8066 + $0x8] sm:$0xf]
    %v8070 = vld [vmem:[%s8066 + $0xc] sm:$0xf]
    %v8071 = vld [vmem:[%s8066 + $0x10] sm:$0xf]
    %v8072 = vld [vmem:[%s8066 + $0x14] sm:$0xf]
    %v8073 = vld [vmem:[%s8066 + $0x18] sm:$0xf]
    %v8074 = vld [vmem:[%s8066 + $0x1c] sm:$0xf]
    %v8075 = vld [vmem:[%s8066 + $0x20] sm:$0xf]
    %v8076 = vld [vmem:[%s8066 + $0x24] sm:$0xf]
    %v8077 = vld [vmem:[%s8066 + $0x28] sm:$0xf]
    %v8078 = vld [vmem:[%s8066 + $0x2c] sm:$0xf]
    %v8079 = vld [vmem:[%s8066 + $0x30] sm:$0xf]
    %v8080 = vld [vmem:[%s8066 + $0x34] sm:$0xf]
    %v8081 = vld [vmem:[%s8066 + $0x38] sm:$0xf]
    %v8082 = vld [vmem:[%s8066 + $0x3c] sm:$0xf]
    %v8083 = vld [vmem:[%s8066 + $0x40] sm:$0xf]
    %v8084 = vld [vmem:[%s8066 + $0x44] sm:$0xf]
    %v8085 = vld [vmem:[%s8066 + $0x48] sm:$0xf]
    %v8086 = vld [vmem:[%s8066 + $0x4c] sm:$0xf]
    %v8087 = vld [vmem:[%s8066 + $0x50] sm:$0xf]
    %v8088 = vld [vmem:[%s8066 + $0x54] sm:$0xf]
    %v8089 = vld [vmem:[%s8066 + $0x58] sm:$0xf]
    %v8090 = vld [vmem:[%s8066 + $0x5c] sm:$0xf]
    %v8091 = vld [vmem:[%s8066 + $0x60] sm:$0xf]
    %v8092 = vld [vmem:[%s8066 + $0x64] sm:$0xf]
    %v8093 = vld [vmem:[%s8066 + $0x68] sm:$0xf]
    %v8094 = vld [vmem:[%s8066 + $0x6c] sm:$0xf]
    %v8095 = vld [vmem:[%s8066 + $0x70] sm:$0xf]
    %v8096 = vld [vmem:[%s8066 + $0x74] sm:$0xf]
    %v8113 = vunpack.c.l.b16 %v8050
    %v8114 = vunpack.c.l.b16 %v8051
    %v8115 = vunpack.c.l.b16 %v8052
    %v8116 = vunpack.c.l.b16 %v8053
    %v8117 = vunpack.c.l.b16 %v8054
    %v8118 = vunpack.c.l.b16 %v8055
    %v8119 = vunpack.c.l.b16 %v8056
    %v8120 = vunpack.c.l.b16 %v8057
    %v8121 = vunpack.c.l.b16 %v8058
    %v8122 = vunpack.c.l.b16 %v8059
    %v8123 = vunpack.c.l.b16 %v8060
    %v8124 = vunpack.c.l.b16 %v8061
    %v8125 = vunpack.c.l.b16 %v8062
    %v8126 = vunpack.c.l.b16 %v8063
    %v8127 = vunpack.c.l.b16 %v8064
    %v8128 = vunpack.c.l.b16 %v8065
    %v8129 = vsel %vm2066, %v8115, %v8113
    %v8130 = vsel %vm2068, %v8117, %v8129
    %v8131 = vsel %vm2070, %v8119, %v8130
    %v8132 = vsel %vm2072, %v8121, %v8131
    %v8133 = vsel %vm2074, %v8123, %v8132
    %v8134 = vsel %vm2076, %v8125, %v8133
    %v8135 = vsel %vm2078, %v8127, %v8134
    %v8136 = vsel %vm2066, %v8116, %v8114
    %v8137 = vsel %vm2068, %v8118, %v8136
    %v8138 = vsel %vm2070, %v8120, %v8137
    %v8139 = vsel %vm2072, %v8122, %v8138
    %v8140 = vsel %vm2074, %v8124, %v8139
    %v8141 = vsel %vm2076, %v8126, %v8140
    %v8142 = vsel %vm2078, %v8128, %v8141
    %v8143 = vpack.c.b16 %v8135, %v8135
    %v8144 = vpack.c.b16 %v8142, %v8142
    %v8176 = vunpack.c.l.b16 %v8067
    %v8177 = vunpack.c.l.b16 %v8068
    %v8178 = vunpack.c.l.b16 %v8069
    %v8179 = vunpack.c.l.b16 %v8070
    %v8180 = vunpack.c.l.b16 %v8071
    %v8181 = vunpack.c.l.b16 %v8072
    %v8182 = vunpack.c.l.b16 %v8073
    %v8183 = vunpack.c.l.b16 %v8074
    %v8184 = vunpack.c.l.b16 %v8075
    %v8185 = vunpack.c.l.b16 %v8076
    %v8186 = vunpack.c.l.b16 %v8077
    %v8187 = vunpack.c.l.b16 %v8078
    %v8188 = vunpack.c.l.b16 %v8079
    %v8189 = vunpack.c.l.b16 %v8080
    %v8190 = vunpack.c.l.b16 %v8081
    %v8191 = vunpack.c.l.b16 %v8082
    %v8192 = vunpack.c.l.b16 %v8083
    %v8193 = vunpack.c.l.b16 %v8084
    %v8194 = vunpack.c.l.b16 %v8085
    %v8195 = vunpack.c.l.b16 %v8086
    %v8196 = vunpack.c.l.b16 %v8087
    %v8197 = vunpack.c.l.b16 %v8088
    %v8198 = vunpack.c.l.b16 %v8089
    %v8199 = vunpack.c.l.b16 %v8090
    %v8200 = vunpack.c.l.b16 %v8091
    %v8201 = vunpack.c.l.b16 %v8092
    %v8202 = vunpack.c.l.b16 %v8093
    %v8203 = vunpack.c.l.b16 %v8094
    %v8204 = vunpack.c.l.b16 %v8095
    %v8205 = vunpack.c.l.b16 %v8096
    %v8206 = vpack.c.b16 %v8177, %v8176
    %v8207 = vpack.c.b16 %v8179, %v8178
    %v8208 = vpack.c.b16 %v8181, %v8180
    %v8209 = vpack.c.b16 %v8183, %v8182
    %v8210 = vpack.c.b16 %v8185, %v8184
    %v8211 = vpack.c.b16 %v8187, %v8186
    %v8212 = vpack.c.b16 %v8189, %v8188
    %v8213 = vpack.c.b16 %v8191, %v8190
    %v8214 = vpack.c.b16 %v8193, %v8192
    %v8215 = vpack.c.b16 %v8195, %v8194
    %v8216 = vpack.c.b16 %v8197, %v8196
    %v8217 = vpack.c.b16 %v8199, %v8198
    %v8218 = vpack.c.b16 %v8201, %v8200
    %v8219 = vpack.c.b16 %v8203, %v8202
    %v8220 = vpack.c.b16 %v8205, %v8204
    %v8237 = vsel %vm736, %v8144, 0
    %8239 = vmatprep.subr.bf16.mxu0 0
    %8240 = vmatpush1.bf16.msra.mxu0 %v8213
    %8241 = vmatprep.subr.bf16.mxu0 0
    %8242 = vmatpush1.bf16.msra.mxu0 %v8212
    %8243 = vmatprep.subr.bf16.mxu0 0
    %8244 = vmatpush1.bf16.msra.mxu0 %v8211
    %8245 = vmatprep.subr.bf16.mxu0 0
    %8246 = vmatpush1.bf16.msra.mxu0 %v8210
    %8247 = vmatprep.subr.bf16.mxu0 0
    %8248 = vmatpush1.bf16.msra.mxu0 %v8209
    %8249 = vmatprep.subr.bf16.mxu0 0
    %8250 = vmatpush1.bf16.msra.mxu0 %v8208
    %8251 = vmatprep.subr.bf16.mxu0 0
    %8252 = vmatpush1.bf16.msra.mxu0 %v8207
    %8253 = vmatprep.subr.bf16.mxu0 0
    %8254 = vmatpush1.bf16.msra.mxu0 %v8206
    %8255 = vmatprep.subr.bf16.mxu0 0
    %8256 = vmatpush2.bf16.msra.mxu0 0
    %8257 = vmatprep.subr.bf16.mxu0 0
    %8258 = vmatpush2.bf16.msra.mxu0 %v8220
    %8259 = vmatprep.subr.bf16.mxu0 0
    %8260 = vmatpush2.bf16.msra.mxu0 %v8219
    %8261 = vmatprep.subr.bf16.mxu0 0
    %8262 = vmatpush2.bf16.msra.mxu0 %v8218
    %8263 = vmatprep.subr.bf16.mxu0 0
    %8264 = vmatpush2.bf16.msra.mxu0 %v8217
    %8265 = vmatprep.subr.bf16.mxu0 0
    %8266 = vmatpush2.bf16.msra.mxu0 %v8216
    %8267 = vmatprep.subr.bf16.mxu0 0
    %8268 = vmatpush2.bf16.msra.mxu0 %v8215
    %8269 = vmatprep.subr.bf16.mxu0 0
    %8270 = vmatpush2.bf16.msra.mxu0 %v8214
    %8271 = vmatprep.mubr.bf16.mxu0 %v8237
    %8272 = vmatmul.mubr.bf16.gmra.mxu0 %v8143
    %v8273 = vpop.f32.mrf.mxu0
    %v8274 = vadd.f32 0.0, %v8273
    %v8275 = vpop.f32.mrf.mxu0
    %v8276 = vpop.f32.mrf.mxu0
    %v8277 = vpop.f32.mrf.mxu0
    %8278 = vdwg.mxu0
    %v8279 = vadd.f32 %v7104, %v8274
    %v8280 = vld [vmem:[%s0 + $0xe0] sm:$0xf]
    %v8281 = vld [vmem:[%s0 + $0xe4] sm:$0xf]
    %v8282 = vld [vmem:[%s0 + $0xe8] sm:$0xf]
    %v8283 = vld [vmem:[%s0 + $0xec] sm:$0xf]
    %v8284 = vld [vmem:[%s0 + $0xf0] sm:$0xf]
    %v8285 = vld [vmem:[%s0 + $0xf4] sm:$0xf]
    %v8286 = vld [vmem:[%s0 + $0xf8] sm:$0xf]
    %v8287 = vld [vmem:[%s0 + $0xfc] sm:$0xf]
    %v8288 = vld [vmem:[%s0 + $0x200] sm:$0xf]
    %v8289 = vld [vmem:[%s0 + $0x204] sm:$0xf]
    %v8290 = vld [vmem:[%s0 + $0x208] sm:$0xf]
    %v8291 = vld [vmem:[%s0 + $0x20c] sm:$0xf]
    %v8292 = vld [vmem:[%s0 + $0x210] sm:$0xf]
    %v8293 = vld [vmem:[%s0 + $0x214] sm:$0xf]
    %v8294 = vld [vmem:[%s0 + $0x218] sm:$0xf]
    %v8295 = vld [vmem:[%s0 + $0x21c] sm:$0xf]
    %v8296 = vld [vmem:[%s0 + $0x320] sm:$0xf]
    %v8297 = vld [vmem:[%s0 + $0x324] sm:$0xf]
    %v8298 = vld [vmem:[%s0 + $0x328] sm:$0xf]
    %v8299 = vld [vmem:[%s0 + $0x32c] sm:$0xf]
    %v8300 = vld [vmem:[%s0 + $0x330] sm:$0xf]
    %v8301 = vld [vmem:[%s0 + $0x334] sm:$0xf]
    %v8302 = vld [vmem:[%s0 + $0x338] sm:$0xf]
    %v8303 = vld [vmem:[%s0 + $0x33c] sm:$0xf]
    %v8304 = vld [vmem:[%s0 + $0x440] sm:$0xf]
    %v8305 = vld [vmem:[%s0 + $0x444] sm:$0xf]
    %v8306 = vld [vmem:[%s0 + $0x448] sm:$0xf]
    %v8307 = vld [vmem:[%s0 + $0x44c] sm:$0xf]
    %v8308 = vld [vmem:[%s0 + $0x450] sm:$0xf]
    %v8309 = vld [vmem:[%s0 + $0x454] sm:$0xf]
    %v8310 = vld [vmem:[%s0 + $0x458] sm:$0xf]
    %v8311 = vld [vmem:[%s0 + $0x45c] sm:$0xf]
    %v8312 = vld [vmem:[%s0 + $0x560] sm:$0xf]
    %v8313 = vld [vmem:[%s0 + $0x564] sm:$0xf]
    %v8314 = vld [vmem:[%s0 + $0x568] sm:$0xf]
    %v8315 = vld [vmem:[%s0 + $0x56c] sm:$0xf]
    %v8316 = vld [vmem:[%s0 + $0x570] sm:$0xf]
    %v8317 = vld [vmem:[%s0 + $0x574] sm:$0xf]
    %v8318 = vld [vmem:[%s0 + $0x578] sm:$0xf]
    %v8319 = vld [vmem:[%s0 + $0x57c] sm:$0xf]
    %v8320 = vld [vmem:[%s0 + $0x680] sm:$0xf]
    %v8321 = vld [vmem:[%s0 + $0x684] sm:$0xf]
    %v8322 = vld [vmem:[%s0 + $0x688] sm:$0xf]
    %v8323 = vld [vmem:[%s0 + $0x68c] sm:$0xf]
    %v8324 = vld [vmem:[%s0 + $0x690] sm:$0xf]
    %v8325 = vld [vmem:[%s0 + $0x694] sm:$0xf]
    %v8326 = vld [vmem:[%s0 + $0x698] sm:$0xf]
    %v8327 = vld [vmem:[%s0 + $0x69c] sm:$0xf]
    %v8328 = vld [vmem:[%s0 + $0x7a0] sm:$0xf]
    %v8329 = vld [vmem:[%s0 + $0x7a4] sm:$0xf]
    %v8330 = vld [vmem:[%s0 + $0x7a8] sm:$0xf]
    %v8331 = vld [vmem:[%s0 + $0x7ac] sm:$0xf]
    %v8332 = vld [vmem:[%s0 + $0x7b0] sm:$0xf]
    %v8333 = vld [vmem:[%s0 + $0x7b4] sm:$0xf]
    %v8334 = vld [vmem:[%s0 + $0x7b8] sm:$0xf]
    %v8335 = vld [vmem:[%s0 + $0x7bc] sm:$0xf]
    %v8336 = vld [vmem:[%s0 + $0x8c0] sm:$0xf]
    %v8337 = vld [vmem:[%s0 + $0x8c4] sm:$0xf]
    %v8338 = vld [vmem:[%s0 + $0x8c8] sm:$0xf]
    %v8339 = vld [vmem:[%s0 + $0x8cc] sm:$0xf]
    %v8340 = vld [vmem:[%s0 + $0x8d0] sm:$0xf]
    %v8341 = vld [vmem:[%s0 + $0x8d4] sm:$0xf]
    %v8342 = vld [vmem:[%s0 + $0x8d8] sm:$0xf]
    %v8343 = vld [vmem:[%s0 + $0x8dc] sm:$0xf]
    %v8408 = vunpack.c.l.b16 %v8280
    %v8409 = vunpack.c.l.b16 %v8281
    %v8410 = vunpack.c.l.b16 %v8282
    %v8411 = vunpack.c.l.b16 %v8283
    %v8412 = vunpack.c.l.b16 %v8284
    %v8413 = vunpack.c.l.b16 %v8285
    %v8414 = vunpack.c.l.b16 %v8286
    %v8415 = vunpack.c.l.b16 %v8287
    %v8416 = vunpack.c.l.b16 %v8288
    %v8417 = vunpack.c.l.b16 %v8289
    %v8418 = vunpack.c.l.b16 %v8290
    %v8419 = vunpack.c.l.b16 %v8291
    %v8420 = vunpack.c.l.b16 %v8292
    %v8421 = vunpack.c.l.b16 %v8293
    %v8422 = vunpack.c.l.b16 %v8294
    %v8423 = vunpack.c.l.b16 %v8295
    %v8424 = vunpack.c.l.b16 %v8296
    %v8425 = vunpack.c.l.b16 %v8297
    %v8426 = vunpack.c.l.b16 %v8298
    %v8427 = vunpack.c.l.b16 %v8299
    %v8428 = vunpack.c.l.b16 %v8300
    %v8429 = vunpack.c.l.b16 %v8301
    %v8430 = vunpack.c.l.b16 %v8302
    %v8431 = vunpack.c.l.b16 %v8303
    %v8432 = vunpack.c.l.b16 %v8304
    %v8433 = vunpack.c.l.b16 %v8305
    %v8434 = vunpack.c.l.b16 %v8306
    %v8435 = vunpack.c.l.b16 %v8307
    %v8436 = vunpack.c.l.b16 %v8308
    %v8437 = vunpack.c.l.b16 %v8309
    %v8438 = vunpack.c.l.b16 %v8310
    %v8439 = vunpack.c.l.b16 %v8311
    %v8440 = vunpack.c.l.b16 %v8312
    %v8441 = vunpack.c.l.b16 %v8313
    %v8442 = vunpack.c.l.b16 %v8314
    %v8443 = vunpack.c.l.b16 %v8315
    %v8444 = vunpack.c.l.b16 %v8316
    %v8445 = vunpack.c.l.b16 %v8317
    %v8446 = vunpack.c.l.b16 %v8318
    %v8447 = vunpack.c.l.b16 %v8319
    %v8448 = vunpack.c.l.b16 %v8320
    %v8449 = vunpack.c.l.b16 %v8321
    %v8450 = vunpack.c.l.b16 %v8322
    %v8451 = vunpack.c.l.b16 %v8323
    %v8452 = vunpack.c.l.b16 %v8324
    %v8453 = vunpack.c.l.b16 %v8325
    %v8454 = vunpack.c.l.b16 %v8326
    %v8455 = vunpack.c.l.b16 %v8327
    %v8456 = vunpack.c.l.b16 %v8328
    %v8457 = vunpack.c.l.b16 %v8329
    %v8458 = vunpack.c.l.b16 %v8330
    %v8459 = vunpack.c.l.b16 %v8331
    %v8460 = vunpack.c.l.b16 %v8332
    %v8461 = vunpack.c.l.b16 %v8333
    %v8462 = vunpack.c.l.b16 %v8334
    %v8463 = vunpack.c.l.b16 %v8335
    %v8464 = vunpack.c.l.b16 %v8336
    %v8465 = vunpack.c.l.b16 %v8337
    %v8466 = vunpack.c.l.b16 %v8338
    %v8467 = vunpack.c.l.b16 %v8339
    %v8468 = vunpack.c.l.b16 %v8340
    %v8469 = vunpack.c.l.b16 %v8341
    %v8470 = vunpack.c.l.b16 %v8342
    %v8471 = vunpack.c.l.b16 %v8343
    %v8472 = vpack.c.b16 %v8409, %v8408
    %v8473 = vpack.c.b16 %v8411, %v8410
    %v8474 = vpack.c.b16 %v8413, %v8412
    %v8475 = vpack.c.b16 %v8415, %v8414
    %v8476 = vpack.c.b16 %v8417, %v8416
    %v8477 = vpack.c.b16 %v8419, %v8418
    %v8478 = vpack.c.b16 %v8421, %v8420
    %v8479 = vpack.c.b16 %v8423, %v8422
    %v8480 = vpack.c.b16 %v8425, %v8424
    %v8481 = vpack.c.b16 %v8427, %v8426
    %v8482 = vpack.c.b16 %v8429, %v8428
    %v8483 = vpack.c.b16 %v8431, %v8430
    %v8484 = vpack.c.b16 %v8433, %v8432
    %v8485 = vpack.c.b16 %v8435, %v8434
    %v8486 = vpack.c.b16 %v8437, %v8436
    %v8487 = vpack.c.b16 %v8439, %v8438
    %v8488 = vpack.c.b16 %v8441, %v8440
    %v8489 = vpack.c.b16 %v8443, %v8442
    %v8490 = vpack.c.b16 %v8445, %v8444
    %v8491 = vpack.c.b16 %v8447, %v8446
    %v8492 = vpack.c.b16 %v8449, %v8448
    %v8493 = vpack.c.b16 %v8451, %v8450
    %v8494 = vpack.c.b16 %v8453, %v8452
    %v8495 = vpack.c.b16 %v8455, %v8454
    %v8496 = vpack.c.b16 %v8457, %v8456
    %v8497 = vpack.c.b16 %v8459, %v8458
    %v8498 = vpack.c.b16 %v8461, %v8460
    %v8499 = vpack.c.b16 %v8463, %v8462
    %v8500 = vpack.c.b16 %v8465, %v8464
    %v8501 = vpack.c.b16 %v8467, %v8466
    %v8502 = vpack.c.b16 %v8469, %v8468
    %v8503 = vpack.c.b16 %v8471, %v8470
    %v8505 = vsel %vm273, %v8472, 0
    %v8508 = vsel %vm273, %v8473, 0
    %v8511 = vsel %vm273, %v8474, 0
    %v8514 = vsel %vm273, %v8475, 0
    %v8517 = vsel %vm273, %v8476, 0
    %v8520 = vsel %vm273, %v8477, 0
    %v8523 = vsel %vm273, %v8478, 0
    %v8526 = vsel %vm273, %v8479, 0
    %v8529 = vsel %vm273, %v8480, 0
    %v8532 = vsel %vm273, %v8481, 0
    %v8535 = vsel %vm273, %v8482, 0
    %v8538 = vsel %vm273, %v8483, 0
    %v8541 = vsel %vm273, %v8484, 0
    %v8544 = vsel %vm273, %v8485, 0
    %v8547 = vsel %vm273, %v8486, 0
    %v8550 = vsel %vm273, %v8487, 0
    %v8553 = vsel %vm273, %v8488, 0
    %v8556 = vsel %vm273, %v8489, 0
    %v8559 = vsel %vm273, %v8490, 0
    %v8562 = vsel %vm273, %v8491, 0
    %v8565 = vsel %vm273, %v8492, 0
    %v8568 = vsel %vm273, %v8493, 0
    %v8571 = vsel %vm273, %v8494, 0
    %v8574 = vsel %vm273, %v8495, 0
    %v8577 = vsel %vm273, %v8496, 0
    %v8580 = vsel %vm273, %v8497, 0
    %v8583 = vsel %vm273, %v8498, 0
    %v8586 = vsel %vm273, %v8499, 0
    %v8589 = vsel %vm273, %v8500, 0
    %v8592 = vsel %vm273, %v8501, 0
    %v8595 = vsel %vm273, %v8502, 0
    %v8598 = vsel %vm273, %v8503, 0
    %8600 = vmatprep.subr.bf16.mxu0 0
    %8601 = vmatpush1.bf16.msra.mxu0 0
    %8602 = vmatprep.subr.bf16.mxu0 0
    %8603 = vmatpush1.bf16.msra.mxu0 0
    %8604 = vmatprep.subr.bf16.mxu0 0
    %8605 = vmatpush1.bf16.msra.mxu0 0
    %8606 = vmatprep.subr.bf16.mxu0 0
    %8607 = vmatpush1.bf16.msra.mxu0 0
    %8608 = vmatprep.subr.bf16.mxu0 0
    %8609 = vmatpush1.bf16.msra.mxu0 0
    %8610 = vmatprep.subr.bf16.mxu0 0
    %8611 = vmatpush1.bf16.msra.mxu0 0
    %8612 = vmatprep.subr.bf16.mxu0 %v268
    %8613 = vmatpush1.bf16.msra.mxu0 %v267
    %8614 = vmatprep.subr.bf16.mxu0 %v266
    %8615 = vmatpush1.bf16.msra.mxu0 %v265
    %8616 = vmatprep.subr.bf16.mxu0 0
    %8617 = vmatpush2.bf16.msra.mxu0 0
    %8618 = vmatprep.subr.bf16.mxu0 0
    %8619 = vmatpush2.bf16.msra.mxu0 0
    %8620 = vmatprep.subr.bf16.mxu0 0
    %8621 = vmatpush2.bf16.msra.mxu0 0
    %8622 = vmatprep.subr.bf16.mxu0 0
    %8623 = vmatpush2.bf16.msra.mxu0 0
    %8624 = vmatprep.subr.bf16.mxu0 0
    %8625 = vmatpush2.bf16.msra.mxu0 0
    %8626 = vmatprep.subr.bf16.mxu0 0
    %8627 = vmatpush2.bf16.msra.mxu0 0
    %8628 = vmatprep.subr.bf16.mxu0 0
    %8629 = vmatpush2.bf16.msra.mxu0 0
    %8630 = vmatprep.subr.bf16.mxu0 0
    %8631 = vmatpush2.bf16.msra.mxu0 0
    %8632 = vmatprep.mubr.bf16.mxu0 0
    %8633 = vmatmul.mubr.bf16.gmra.mxu0 %v8505
    %v8634 = vpop.f32.mrf.mxu0
    %v8635 = vadd.f32 0.0, %v8634
    %v8636 = vpop.f32.mrf.mxu0
    %v8637 = vadd.f32 0.0, %v8636
    %v8638 = vpop.f32.mrf.mxu0
    %v8639 = vadd.f32 0.0, %v8638
    %v8640 = vpop.f32.mrf.mxu0
    %v8641 = vadd.f32 0.0, %v8640
    %8642 = vmatprep.mubr.bf16.mxu0 0
    %8643 = vmatmul.mubr.bf16.gmra.mxu0 %v8508
    %v8644 = vpop.f32.mrf.mxu0
    %v8645 = vadd.f32 0.0, %v8644
    %v8646 = vpop.f32.mrf.mxu0
    %v8647 = vadd.f32 0.0, %v8646
    %v8648 = vpop.f32.mrf.mxu0
    %v8649 = vadd.f32 0.0, %v8648
    %v8650 = vpop.f32.mrf.mxu0
    %v8651 = vadd.f32 0.0, %v8650
    %8652 = vmatprep.mubr.bf16.mxu0 0
    %8653 = vmatmul.mubr.bf16.gmra.mxu0 %v8511
    %v8654 = vpop.f32.mrf.mxu0
    %v8655 = vadd.f32 0.0, %v8654
    %v8656 = vpop.f32.mrf.mxu0
    %v8657 = vadd.f32 0.0, %v8656
    %v8658 = vpop.f32.mrf.mxu0
    %v8659 = vadd.f32 0.0, %v8658
    %v8660 = vpop.f32.mrf.mxu0
    %v8661 = vadd.f32 0.0, %v8660
    %8662 = vmatprep.mubr.bf16.mxu0 0
    %8663 = vmatmul.mubr.bf16.gmra.mxu0 %v8514
    %v8664 = vpop.f32.mrf.mxu0
    %v8665 = vadd.f32 0.0, %v8664
    %v8666 = vpop.f32.mrf.mxu0
    %v8667 = vadd.f32 0.0, %v8666
    %v8668 = vpop.f32.mrf.mxu0
    %v8669 = vadd.f32 0.0, %v8668
    %v8670 = vpop.f32.mrf.mxu0
    %v8671 = vadd.f32 0.0, %v8670
    %8672 = vmatprep.mubr.bf16.mxu0 0
    %8673 = vmatmul.mubr.bf16.gmra.mxu0 %v8517
    %v8674 = vpop.f32.mrf.mxu0
    %v8675 = vadd.f32 0.0, %v8674
    %v8676 = vpop.f32.mrf.mxu0
    %v8677 = vadd.f32 0.0, %v8676
    %v8678 = vpop.f32.mrf.mxu0
    %v8679 = vadd.f32 0.0, %v8678
    %v8680 = vpop.f32.mrf.mxu0
    %v8681 = vadd.f32 0.0, %v8680
    %8682 = vmatprep.mubr.bf16.mxu0 0
    %8683 = vmatmul.mubr.bf16.gmra.mxu0 %v8520
    %v8684 = vpop.f32.mrf.mxu0
    %v8685 = vadd.f32 0.0, %v8684
    %v8686 = vpop.f32.mrf.mxu0
    %v8687 = vadd.f32 0.0, %v8686
    %v8688 = vpop.f32.mrf.mxu0
    %v8689 = vadd.f32 0.0, %v8688
    %v8690 = vpop.f32.mrf.mxu0
    %v8691 = vadd.f32 0.0, %v8690
    %8692 = vmatprep.mubr.bf16.mxu0 0
    %8693 = vmatmul.mubr.bf16.gmra.mxu0 %v8523
    %v8694 = vpop.f32.mrf.mxu0
    %v8695 = vadd.f32 0.0, %v8694
    %v8696 = vpop.f32.mrf.mxu0
    %v8697 = vadd.f32 0.0, %v8696
    %v8698 = vpop.f32.mrf.mxu0
    %v8699 = vadd.f32 0.0, %v8698
    %v8700 = vpop.f32.mrf.mxu0
    %v8701 = vadd.f32 0.0, %v8700
    %8702 = vmatprep.mubr.bf16.mxu0 0
    %8703 = vmatmul.mubr.bf16.gmra.mxu0 %v8526
    %v8704 = vpop.f32.mrf.mxu0
    %v8705 = vadd.f32 0.0, %v8704
    %v8706 = vpop.f32.mrf.mxu0
    %v8707 = vadd.f32 0.0, %v8706
    %v8708 = vpop.f32.mrf.mxu0
    %v8709 = vadd.f32 0.0, %v8708
    %v8710 = vpop.f32.mrf.mxu0
    %v8711 = vadd.f32 0.0, %v8710
    %8712 = vmatprep.mubr.bf16.mxu0 0
    %8713 = vmatmul.mubr.bf16.gmra.mxu0 %v8529
    %v8714 = vpop.f32.mrf.mxu0
    %v8715 = vadd.f32 0.0, %v8714
    %v8716 = vpop.f32.mrf.mxu0
    %v8717 = vadd.f32 0.0, %v8716
    %v8718 = vpop.f32.mrf.mxu0
    %v8719 = vadd.f32 0.0, %v8718
    %v8720 = vpop.f32.mrf.mxu0
    %v8721 = vadd.f32 0.0, %v8720
    %8722 = vmatprep.mubr.bf16.mxu0 0
    %8723 = vmatmul.mubr.bf16.gmra.mxu0 %v8532
    %v8724 = vpop.f32.mrf.mxu0
    %v8725 = vadd.f32 0.0, %v8724
    %v8726 = vpop.f32.mrf.mxu0
    %v8727 = vadd.f32 0.0, %v8726
    %v8728 = vpop.f32.mrf.mxu0
    %v8729 = vadd.f32 0.0, %v8728
    %v8730 = vpop.f32.mrf.mxu0
    %v8731 = vadd.f32 0.0, %v8730
    %8732 = vmatprep.mubr.bf16.mxu0 0
    %8733 = vmatmul.mubr.bf16.gmra.mxu0 %v8535
    %v8734 = vpop.f32.mrf.mxu0
    %v8735 = vadd.f32 0.0, %v8734
    %v8736 = vpop.f32.mrf.mxu0
    %v8737 = vadd.f32 0.0, %v8736
    %v8738 = vpop.f32.mrf.mxu0
    %v8739 = vadd.f32 0.0, %v8738
    %v8740 = vpop.f32.mrf.mxu0
    %v8741 = vadd.f32 0.0, %v8740
    %8742 = vmatprep.mubr.bf16.mxu0 0
    %8743 = vmatmul.mubr.bf16.gmra.mxu0 %v8538
    %v8744 = vpop.f32.mrf.mxu0
    %v8745 = vadd.f32 0.0, %v8744
    %v8746 = vpop.f32.mrf.mxu0
    %v8747 = vadd.f32 0.0, %v8746
    %v8748 = vpop.f32.mrf.mxu0
    %v8749 = vadd.f32 0.0, %v8748
    %v8750 = vpop.f32.mrf.mxu0
    %v8751 = vadd.f32 0.0, %v8750
    %8752 = vmatprep.mubr.bf16.mxu0 0
    %8753 = vmatmul.mubr.bf16.gmra.mxu0 %v8541
    %v8754 = vpop.f32.mrf.mxu0
    %v8755 = vadd.f32 0.0, %v8754
    %v8756 = vpop.f32.mrf.mxu0
    %v8757 = vadd.f32 0.0, %v8756
    %v8758 = vpop.f32.mrf.mxu0
    %v8759 = vadd.f32 0.0, %v8758
    %v8760 = vpop.f32.mrf.mxu0
    %v8761 = vadd.f32 0.0, %v8760
    %8762 = vmatprep.mubr.bf16.mxu0 0
    %8763 = vmatmul.mubr.bf16.gmra.mxu0 %v8544
    %v8764 = vpop.f32.mrf.mxu0
    %v8765 = vadd.f32 0.0, %v8764
    %v8766 = vpop.f32.mrf.mxu0
    %v8767 = vadd.f32 0.0, %v8766
    %v8768 = vpop.f32.mrf.mxu0
    %v8769 = vadd.f32 0.0, %v8768
    %v8770 = vpop.f32.mrf.mxu0
    %v8771 = vadd.f32 0.0, %v8770
    %8772 = vmatprep.mubr.bf16.mxu0 0
    %8773 = vmatmul.mubr.bf16.gmra.mxu0 %v8547
    %v8774 = vpop.f32.mrf.mxu0
    %v8775 = vadd.f32 0.0, %v8774
    %v8776 = vpop.f32.mrf.mxu0
    %v8777 = vadd.f32 0.0, %v8776
    %v8778 = vpop.f32.mrf.mxu0
    %v8779 = vadd.f32 0.0, %v8778
    %v8780 = vpop.f32.mrf.mxu0
    %v8781 = vadd.f32 0.0, %v8780
    %8782 = vmatprep.mubr.bf16.mxu0 0
    %8783 = vmatmul.mubr.bf16.gmra.mxu0 %v8550
    %v8784 = vpop.f32.mrf.mxu0
    %v8785 = vadd.f32 0.0, %v8784
    %v8786 = vpop.f32.mrf.mxu0
    %v8787 = vadd.f32 0.0, %v8786
    %v8788 = vpop.f32.mrf.mxu0
    %v8789 = vadd.f32 0.0, %v8788
    %v8790 = vpop.f32.mrf.mxu0
    %v8791 = vadd.f32 0.0, %v8790
    %8792 = vmatprep.mubr.bf16.mxu0 0
    %8793 = vmatmul.mubr.bf16.gmra.mxu0 %v8553
    %v8794 = vpop.f32.mrf.mxu0
    %v8795 = vadd.f32 0.0, %v8794
    %v8796 = vpop.f32.mrf.mxu0
    %v8797 = vadd.f32 0.0, %v8796
    %v8798 = vpop.f32.mrf.mxu0
    %v8799 = vadd.f32 0.0, %v8798
    %v8800 = vpop.f32.mrf.mxu0
    %v8801 = vadd.f32 0.0, %v8800
    %8802 = vmatprep.mubr.bf16.mxu0 0
    %8803 = vmatmul.mubr.bf16.gmra.mxu0 %v8556
    %v8804 = vpop.f32.mrf.mxu0
    %v8805 = vadd.f32 0.0, %v8804
    %v8806 = vpop.f32.mrf.mxu0
    %v8807 = vadd.f32 0.0, %v8806
    %v8808 = vpop.f32.mrf.mxu0
    %v8809 = vadd.f32 0.0, %v8808
    %v8810 = vpop.f32.mrf.mxu0
    %v8811 = vadd.f32 0.0, %v8810
    %8812 = vmatprep.mubr.bf16.mxu0 0
    %8813 = vmatmul.mubr.bf16.gmra.mxu0 %v8559
    %v8814 = vpop.f32.mrf.mxu0
    %v8815 = vadd.f32 0.0, %v8814
    %v8816 = vpop.f32.mrf.mxu0
    %v8817 = vadd.f32 0.0, %v8816
    %v8818 = vpop.f32.mrf.mxu0
    %v8819 = vadd.f32 0.0, %v8818
    %v8820 = vpop.f32.mrf.mxu0
    %v8821 = vadd.f32 0.0, %v8820
    %8822 = vmatprep.mubr.bf16.mxu0 0
    %8823 = vmatmul.mubr.bf16.gmra.mxu0 %v8562
    %v8824 = vpop.f32.mrf.mxu0
    %v8825 = vadd.f32 0.0, %v8824
    %v8826 = vpop.f32.mrf.mxu0
    %v8827 = vadd.f32 0.0, %v8826
    %v8828 = vpop.f32.mrf.mxu0
    %v8829 = vadd.f32 0.0, %v8828
    %v8830 = vpop.f32.mrf.mxu0
    %v8831 = vadd.f32 0.0, %v8830
    %8832 = vmatprep.mubr.bf16.mxu0 0
    %8833 = vmatmul.mubr.bf16.gmra.mxu0 %v8565
    %v8834 = vpop.f32.mrf.mxu0
    %v8835 = vadd.f32 0.0, %v8834
    %v8836 = vpop.f32.mrf.mxu0
    %v8837 = vadd.f32 0.0, %v8836
    %v8838 = vpop.f32.mrf.mxu0
    %v8839 = vadd.f32 0.0, %v8838
    %v8840 = vpop.f32.mrf.mxu0
    %v8841 = vadd.f32 0.0, %v8840
    %8842 = vmatprep.mubr.bf16.mxu0 0
    %8843 = vmatmul.mubr.bf16.gmra.mxu0 %v8568
    %v8844 = vpop.f32.mrf.mxu0
    %v8845 = vadd.f32 0.0, %v8844
    %v8846 = vpop.f32.mrf.mxu0
    %v8847 = vadd.f32 0.0, %v8846
    %v8848 = vpop.f32.mrf.mxu0
    %v8849 = vadd.f32 0.0, %v8848
    %v8850 = vpop.f32.mrf.mxu0
    %v8851 = vadd.f32 0.0, %v8850
    %8852 = vmatprep.mubr.bf16.mxu0 0
    %8853 = vmatmul.mubr.bf16.gmra.mxu0 %v8571
    %v8854 = vpop.f32.mrf.mxu0
    %v8855 = vadd.f32 0.0, %v8854
    %v8856 = vpop.f32.mrf.mxu0
    %v8857 = vadd.f32 0.0, %v8856
    %v8858 = vpop.f32.mrf.mxu0
    %v8859 = vadd.f32 0.0, %v8858
    %v8860 = vpop.f32.mrf.mxu0
    %v8861 = vadd.f32 0.0, %v8860
    %8862 = vmatprep.mubr.bf16.mxu0 0
    %8863 = vmatmul.mubr.bf16.gmra.mxu0 %v8574
    %v8864 = vpop.f32.mrf.mxu0
    %v8865 = vadd.f32 0.0, %v8864
    %v8866 = vpop.f32.mrf.mxu0
    %v8867 = vadd.f32 0.0, %v8866
    %v8868 = vpop.f32.mrf.mxu0
    %v8869 = vadd.f32 0.0, %v8868
    %v8870 = vpop.f32.mrf.mxu0
    %v8871 = vadd.f32 0.0, %v8870
    %8872 = vmatprep.mubr.bf16.mxu0 0
    %8873 = vmatmul.mubr.bf16.gmra.mxu0 %v8577
    %v8874 = vpop.f32.mrf.mxu0
    %v8875 = vadd.f32 0.0, %v8874
    %v8876 = vpop.f32.mrf.mxu0
    %v8877 = vadd.f32 0.0, %v8876
    %v8878 = vpop.f32.mrf.mxu0
    %v8879 = vadd.f32 0.0, %v8878
    %v8880 = vpop.f32.mrf.mxu0
    %v8881 = vadd.f32 0.0, %v8880
    %8882 = vmatprep.mubr.bf16.mxu0 0
    %8883 = vmatmul.mubr.bf16.gmra.mxu0 %v8580
    %v8884 = vpop.f32.mrf.mxu0
    %v8885 = vadd.f32 0.0, %v8884
    %v8886 = vpop.f32.mrf.mxu0
    %v8887 = vadd.f32 0.0, %v8886
    %v8888 = vpop.f32.mrf.mxu0
    %v8889 = vadd.f32 0.0, %v8888
    %v8890 = vpop.f32.mrf.mxu0
    %v8891 = vadd.f32 0.0, %v8890
    %8892 = vmatprep.mubr.bf16.mxu0 0
    %8893 = vmatmul.mubr.bf16.gmra.mxu0 %v8583
    %v8894 = vpop.f32.mrf.mxu0
    %v8895 = vadd.f32 0.0, %v8894
    %v8896 = vpop.f32.mrf.mxu0
    %v8897 = vadd.f32 0.0, %v8896
    %v8898 = vpop.f32.mrf.mxu0
    %v8899 = vadd.f32 0.0, %v8898
    %v8900 = vpop.f32.mrf.mxu0
    %v8901 = vadd.f32 0.0, %v8900
    %8902 = vmatprep.mubr.bf16.mxu0 0
    %8903 = vmatmul.mubr.bf16.gmra.mxu0 %v8586
    %v8904 = vpop.f32.mrf.mxu0
    %v8905 = vadd.f32 0.0, %v8904
    %v8906 = vpop.f32.mrf.mxu0
    %v8907 = vadd.f32 0.0, %v8906
    %v8908 = vpop.f32.mrf.mxu0
    %v8909 = vadd.f32 0.0, %v8908
    %v8910 = vpop.f32.mrf.mxu0
    %v8911 = vadd.f32 0.0, %v8910
    %8912 = vmatprep.mubr.bf16.mxu0 0
    %8913 = vmatmul.mubr.bf16.gmra.mxu0 %v8589
    %v8914 = vpop.f32.mrf.mxu0
    %v8915 = vadd.f32 0.0, %v8914
    %v8916 = vpop.f32.mrf.mxu0
    %v8917 = vadd.f32 0.0, %v8916
    %v8918 = vpop.f32.mrf.mxu0
    %v8919 = vadd.f32 0.0, %v8918
    %v8920 = vpop.f32.mrf.mxu0
    %v8921 = vadd.f32 0.0, %v8920
    %8922 = vmatprep.mubr.bf16.mxu0 0
    %8923 = vmatmul.mubr.bf16.gmra.mxu0 %v8592
    %v8924 = vpop.f32.mrf.mxu0
    %v8925 = vadd.f32 0.0, %v8924
    %v8926 = vpop.f32.mrf.mxu0
    %v8927 = vadd.f32 0.0, %v8926
    %v8928 = vpop.f32.mrf.mxu0
    %v8929 = vadd.f32 0.0, %v8928
    %v8930 = vpop.f32.mrf.mxu0
    %v8931 = vadd.f32 0.0, %v8930
    %8932 = vmatprep.mubr.bf16.mxu0 0
    %8933 = vmatmul.mubr.bf16.gmra.mxu0 %v8595
    %v8934 = vpop.f32.mrf.mxu0
    %v8935 = vadd.f32 0.0, %v8934
    %v8936 = vpop.f32.mrf.mxu0
    %v8937 = vadd.f32 0.0, %v8936
    %v8938 = vpop.f32.mrf.mxu0
    %v8939 = vadd.f32 0.0, %v8938
    %v8940 = vpop.f32.mrf.mxu0
    %v8941 = vadd.f32 0.0, %v8940
    %8942 = vmatprep.mubr.bf16.mxu0 0
    %8943 = vmatmul.mubr.bf16.gmra.mxu0 %v8598
    %v8944 = vpop.f32.mrf.mxu0
    %v8945 = vadd.f32 0.0, %v8944
    %v8946 = vpop.f32.mrf.mxu0
    %v8947 = vadd.f32 0.0, %v8946
    %v8948 = vpop.f32.mrf.mxu0
    %v8949 = vadd.f32 0.0, %v8948
    %v8950 = vpop.f32.mrf.mxu0
    %v8951 = vadd.f32 0.0, %v8950
    %8952 = vdwg.mxu0
    %v8953 = vmax.f32 %v8635, %v8639
    %v8954 = vmax.f32 %v8953, %v8645
    %v8955 = vmax.f32 %v8954, %v8649
    %v8956 = vmax.f32 %v8955, %v8655
    %v8957 = vmax.f32 %v8956, %v8659
    %v8958 = vmax.f32 %v8957, %v8665
    %v8959 = vmax.f32 %v8958, %v8669
    %v8960 = vrot.slane %v8959, 4
    %v8961 = vmax.f32 %v8959, %v8960
    %v8962 = vrot.slane %v8961, 2
    %v8963 = vmax.f32 %v8961, %v8962
    %v8964 = vrot.slane %v8963, 1
    %v8965 = vmax.f32 %v8963, %v8964
    %v8966 = vsel %vm736, %v8637, -inf
    %v8967 = vsel %vm736, %v8641, -inf
    %v8968 = vmax.f32 %v8966, %v8967
    %v8969 = vsel %vm736, %v8647, -inf
    %v8970 = vmax.f32 %v8968, %v8969
    %v8971 = vsel %vm736, %v8651, -inf
    %v8972 = vmax.f32 %v8970, %v8971
    %v8973 = vsel %vm736, %v8657, -inf
    %v8974 = vmax.f32 %v8972, %v8973
    %v8975 = vsel %vm736, %v8661, -inf
    %v8976 = vmax.f32 %v8974, %v8975
    %v8977 = vsel %vm736, %v8667, -inf
    %v8978 = vmax.f32 %v8976, %v8977
    %v8979 = vsel %vm736, %v8671, -inf
    %v8980 = vmax.f32 %v8978, %v8979
    %v8981 = vrot.slane %v8980, 4
    %v8982 = vmax.f32 %v8980, %v8981
    %v8983 = vrot.slane %v8982, 2
    %v8984 = vmax.f32 %v8982, %v8983
    %v8985 = vrot.slane %v8984, 1
    %v8986 = vmax.f32 %v8984, %v8985
    %v8987 = vmax.f32 %v8675, %v8679
    %v8988 = vmax.f32 %v8987, %v8685
    %v8989 = vmax.f32 %v8988, %v8689
    %v8990 = vmax.f32 %v8989, %v8695
    %v8991 = vmax.f32 %v8990, %v8699
    %v8992 = vmax.f32 %v8991, %v8705
    %v8993 = vmax.f32 %v8992, %v8709
    %v8994 = vrot.slane %v8993, 4
    %v8995 = vmax.f32 %v8993, %v8994
    %v8996 = vrot.slane %v8995, 2
    %v8997 = vmax.f32 %v8995, %v8996
    %v8998 = vrot.slane %v8997, 1
    %v8999 = vmax.f32 %v8997, %v8998
    %v9000 = vsel %vm736, %v8677, -inf
    %v9001 = vsel %vm736, %v8681, -inf
    %v9002 = vmax.f32 %v9000, %v9001
    %v9003 = vsel %vm736, %v8687, -inf
    %v9004 = vmax.f32 %v9002, %v9003
    %v9005 = vsel %vm736, %v8691, -inf
    %v9006 = vmax.f32 %v9004, %v9005
    %v9007 = vsel %vm736, %v8697, -inf
    %v9008 = vmax.f32 %v9006, %v9007
    %v9009 = vsel %vm736, %v8701, -inf
    %v9010 = vmax.f32 %v9008, %v9009
    %v9011 = vsel %vm736, %v8707, -inf
    %v9012 = vmax.f32 %v9010, %v9011
    %v9013 = vsel %vm736, %v8711, -inf
    %v9014 = vmax.f32 %v9012, %v9013
    %v9015 = vrot.slane %v9014, 4
    %v9016 = vmax.f32 %v9014, %v9015
    %v9017 = vrot.slane %v9016, 2
    %v9018 = vmax.f32 %v9016, %v9017
    %v9019 = vrot.slane %v9018, 1
    %v9020 = vmax.f32 %v9018, %v9019
    %v9021 = vmax.f32 %v8715, %v8719
    %v9022 = vmax.f32 %v9021, %v8725
    %v9023 = vmax.f32 %v9022, %v8729
    %v9024 = vmax.f32 %v9023, %v8735
    %v9025 = vmax.f32 %v9024, %v8739
    %v9026 = vmax.f32 %v9025, %v8745
    %v9027 = vmax.f32 %v9026, %v8749
    %v9028 = vrot.slane %v9027, 4
    %v9029 = vmax.f32 %v9027, %v9028
    %v9030 = vrot.slane %v9029, 2
    %v9031 = vmax.f32 %v9029, %v9030
    %v9032 = vrot.slane %v9031, 1
    %v9033 = vmax.f32 %v9031, %v9032
    %v9034 = vsel %vm736, %v8717, -inf
    %v9035 = vsel %vm736, %v8721, -inf
    %v9036 = vmax.f32 %v9034, %v9035
    %v9037 = vsel %vm736, %v8727, -inf
    %v9038 = vmax.f32 %v9036, %v9037
    %v9039 = vsel %vm736, %v8731, -inf
    %v9040 = vmax.f32 %v9038, %v9039
    %v9041 = vsel %vm736, %v8737, -inf
    %v9042 = vmax.f32 %v9040, %v9041
    %v9043 = vsel %vm736, %v8741, -inf
    %v9044 = vmax.f32 %v9042, %v9043
    %v9045 = vsel %vm736, %v8747, -inf
    %v9046 = vmax.f32 %v9044, %v9045
    %v9047 = vsel %vm736, %v8751, -inf
    %v9048 = vmax.f32 %v9046, %v9047
    %v9049 = vrot.slane %v9048, 4
    %v9050 = vmax.f32 %v9048, %v9049
    %v9051 = vrot.slane %v9050, 2
    %v9052 = vmax.f32 %v9050, %v9051
    %v9053 = vrot.slane %v9052, 1
    %v9054 = vmax.f32 %v9052, %v9053
    %v9055 = vmax.f32 %v8755, %v8759
    %v9056 = vmax.f32 %v9055, %v8765
    %v9057 = vmax.f32 %v9056, %v8769
    %v9058 = vmax.f32 %v9057, %v8775
    %v9059 = vmax.f32 %v9058, %v8779
    %v9060 = vmax.f32 %v9059, %v8785
    %v9061 = vmax.f32 %v9060, %v8789
    %v9062 = vrot.slane %v9061, 4
    %v9063 = vmax.f32 %v9061, %v9062
    %v9064 = vrot.slane %v9063, 2
    %v9065 = vmax.f32 %v9063, %v9064
    %v9066 = vrot.slane %v9065, 1
    %v9067 = vmax.f32 %v9065, %v9066
    %v9068 = vsel %vm736, %v8757, -inf
    %v9069 = vsel %vm736, %v8761, -inf
    %v9070 = vmax.f32 %v9068, %v9069
    %v9071 = vsel %vm736, %v8767, -inf
    %v9072 = vmax.f32 %v9070, %v9071
    %v9073 = vsel %vm736, %v8771, -inf
    %v9074 = vmax.f32 %v9072, %v9073
    %v9075 = vsel %vm736, %v8777, -inf
    %v9076 = vmax.f32 %v9074, %v9075
    %v9077 = vsel %vm736, %v8781, -inf
    %v9078 = vmax.f32 %v9076, %v9077
    %v9079 = vsel %vm736, %v8787, -inf
    %v9080 = vmax.f32 %v9078, %v9079
    %v9081 = vsel %vm736, %v8791, -inf
    %v9082 = vmax.f32 %v9080, %v9081
    %v9083 = vrot.slane %v9082, 4
    %v9084 = vmax.f32 %v9082, %v9083
    %v9085 = vrot.slane %v9084, 2
    %v9086 = vmax.f32 %v9084, %v9085
    %v9087 = vrot.slane %v9086, 1
    %v9088 = vmax.f32 %v9086, %v9087
    %v9089 = vmax.f32 %v8795, %v8799
    %v9090 = vmax.f32 %v9089, %v8805
    %v9091 = vmax.f32 %v9090, %v8809
    %v9092 = vmax.f32 %v9091, %v8815
    %v9093 = vmax.f32 %v9092, %v8819
    %v9094 = vmax.f32 %v9093, %v8825
    %v9095 = vmax.f32 %v9094, %v8829
    %v9096 = vrot.slane %v9095, 4
    %v9097 = vmax.f32 %v9095, %v9096
    %v9098 = vrot.slane %v9097, 2
    %v9099 = vmax.f32 %v9097, %v9098
    %v9100 = vrot.slane %v9099, 1
    %v9101 = vmax.f32 %v9099, %v9100
    %v9102 = vsel %vm736, %v8797, -inf
    %v9103 = vsel %vm736, %v8801, -inf
    %v9104 = vmax.f32 %v9102, %v9103
    %v9105 = vsel %vm736, %v8807, -inf
    %v9106 = vmax.f32 %v9104, %v9105
    %v9107 = vsel %vm736, %v8811, -inf
    %v9108 = vmax.f32 %v9106, %v9107
    %v9109 = vsel %vm736, %v8817, -inf
    %v9110 = vmax.f32 %v9108, %v9109
    %v9111 = vsel %vm736, %v8821, -inf
    %v9112 = vmax.f32 %v9110, %v9111
    %v9113 = vsel %vm736, %v8827, -inf
    %v9114 = vmax.f32 %v9112, %v9113
    %v9115 = vsel %vm736, %v8831, -inf
    %v9116 = vmax.f32 %v9114, %v9115
    %v9117 = vrot.slane %v9116, 4
    %v9118 = vmax.f32 %v9116, %v9117
    %v9119 = vrot.slane %v9118, 2
    %v9120 = vmax.f32 %v9118, %v9119
    %v9121 = vrot.slane %v9120, 1
    %v9122 = vmax.f32 %v9120, %v9121
    %v9123 = vmax.f32 %v8835, %v8839
    %v9124 = vmax.f32 %v9123, %v8845
    %v9125 = vmax.f32 %v9124, %v8849
    %v9126 = vmax.f32 %v9125, %v8855
    %v9127 = vmax.f32 %v9126, %v8859
    %v9128 = vmax.f32 %v9127, %v8865
    %v9129 = vmax.f32 %v9128, %v8869
    %v9130 = vrot.slane %v9129, 4
    %v9131 = vmax.f32 %v9129, %v9130
    %v9132 = vrot.slane %v9131, 2
    %v9133 = vmax.f32 %v9131, %v9132
    %v9134 = vrot.slane %v9133, 1
    %v9135 = vmax.f32 %v9133, %v9134
    %v9136 = vsel %vm736, %v8837, -inf
    %v9137 = vsel %vm736, %v8841, -inf
    %v9138 = vmax.f32 %v9136, %v9137
    %v9139 = vsel %vm736, %v8847, -inf
    %v9140 = vmax.f32 %v9138, %v9139
    %v9141 = vsel %vm736, %v8851, -inf
    %v9142 = vmax.f32 %v9140, %v9141
    %v9143 = vsel %vm736, %v8857, -inf
    %v9144 = vmax.f32 %v9142, %v9143
    %v9145 = vsel %vm736, %v8861, -inf
    %v9146 = vmax.f32 %v9144, %v9145
    %v9147 = vsel %vm736, %v8867, -inf
    %v9148 = vmax.f32 %v9146, %v9147
    %v9149 = vsel %vm736, %v8871, -inf
    %v9150 = vmax.f32 %v9148, %v9149
    %v9151 = vrot.slane %v9150, 4
    %v9152 = vmax.f32 %v9150, %v9151
    %v9153 = vrot.slane %v9152, 2
    %v9154 = vmax.f32 %v9152, %v9153
    %v9155 = vrot.slane %v9154, 1
    %v9156 = vmax.f32 %v9154, %v9155
    %v9157 = vmax.f32 %v8875, %v8879
    %v9158 = vmax.f32 %v9157, %v8885
    %v9159 = vmax.f32 %v9158, %v8889
    %v9160 = vmax.f32 %v9159, %v8895
    %v9161 = vmax.f32 %v9160, %v8899
    %v9162 = vmax.f32 %v9161, %v8905
    %v9163 = vmax.f32 %v9162, %v8909
    %v9164 = vrot.slane %v9163, 4
    %v9165 = vmax.f32 %v9163, %v9164
    %v9166 = vrot.slane %v9165, 2
    %v9167 = vmax.f32 %v9165, %v9166
    %v9168 = vrot.slane %v9167, 1
    %v9169 = vmax.f32 %v9167, %v9168
    %v9170 = vsel %vm736, %v8877, -inf
    %v9171 = vsel %vm736, %v8881, -inf
    %v9172 = vmax.f32 %v9170, %v9171
    %v9173 = vsel %vm736, %v8887, -inf
    %v9174 = vmax.f32 %v9172, %v9173
    %v9175 = vsel %vm736, %v8891, -inf
    %v9176 = vmax.f32 %v9174, %v9175
    %v9177 = vsel %vm736, %v8897, -inf
    %v9178 = vmax.f32 %v9176, %v9177
    %v9179 = vsel %vm736, %v8901, -inf
    %v9180 = vmax.f32 %v9178, %v9179
    %v9181 = vsel %vm736, %v8907, -inf
    %v9182 = vmax.f32 %v9180, %v9181
    %v9183 = vsel %vm736, %v8911, -inf
    %v9184 = vmax.f32 %v9182, %v9183
    %v9185 = vrot.slane %v9184, 4
    %v9186 = vmax.f32 %v9184, %v9185
    %v9187 = vrot.slane %v9186, 2
    %v9188 = vmax.f32 %v9186, %v9187
    %v9189 = vrot.slane %v9188, 1
    %v9190 = vmax.f32 %v9188, %v9189
    %v9191 = vmax.f32 %v8915, %v8919
    %v9192 = vmax.f32 %v9191, %v8925
    %v9193 = vmax.f32 %v9192, %v8929
    %v9194 = vmax.f32 %v9193, %v8935
    %v9195 = vmax.f32 %v9194, %v8939
    %v9196 = vmax.f32 %v9195, %v8945
    %v9197 = vmax.f32 %v9196, %v8949
    %v9198 = vrot.slane %v9197, 4
    %v9199 = vmax.f32 %v9197, %v9198
    %v9200 = vrot.slane %v9199, 2
    %v9201 = vmax.f32 %v9199, %v9200
    %v9202 = vrot.slane %v9201, 1
    %v9203 = vmax.f32 %v9201, %v9202
    %v9204 = vsel %vm736, %v8917, -inf
    %v9205 = vsel %vm736, %v8921, -inf
    %v9206 = vmax.f32 %v9204, %v9205
    %v9207 = vsel %vm736, %v8927, -inf
    %v9208 = vmax.f32 %v9206, %v9207
    %v9209 = vsel %vm736, %v8931, -inf
    %v9210 = vmax.f32 %v9208, %v9209
    %v9211 = vsel %vm736, %v8937, -inf
    %v9212 = vmax.f32 %v9210, %v9211
    %v9213 = vsel %vm736, %v8941, -inf
    %v9214 = vmax.f32 %v9212, %v9213
    %v9215 = vsel %vm736, %v8947, -inf
    %v9216 = vmax.f32 %v9214, %v9215
    %v9217 = vsel %vm736, %v8951, -inf
    %v9218 = vmax.f32 %v9216, %v9217
    %v9219 = vrot.slane %v9218, 4
    %v9220 = vmax.f32 %v9218, %v9219
    %v9221 = vrot.slane %v9220, 2
    %v9222 = vmax.f32 %v9220, %v9221
    %v9223 = vrot.slane %v9222, 1
    %v9224 = vmax.f32 %v9222, %v9223
    %v9225 = vpack.c.bf16 %v8965, %v8965
    %v9226 = vpack.c.bf16 %v8986, %v8986
    %v9227 = vpack.c.bf16 %v8999, %v8999
    %v9228 = vpack.c.bf16 %v9020, %v9020
    %v9229 = vpack.c.bf16 %v9033, %v9033
    %v9230 = vpack.c.bf16 %v9054, %v9054
    %v9231 = vpack.c.bf16 %v9067, %v9067
    %v9232 = vpack.c.bf16 %v9088, %v9088
    %v9233 = vpack.c.bf16 %v9101, %v9101
    %v9234 = vpack.c.bf16 %v9122, %v9122
    %v9235 = vpack.c.bf16 %v9135, %v9135
    %v9236 = vpack.c.bf16 %v9156, %v9156
    %v9237 = vpack.c.bf16 %v9169, %v9169
    %v9238 = vpack.c.bf16 %v9190, %v9190
    %v9239 = vpack.c.bf16 %v9203, %v9203
    %v9240 = vpack.c.bf16 %v9224, %v9224
    %s9241 = scalar_lea.vmem %s2, 840
    %v9242 = vld [vmem:[%s9241] sm:$0xf]
    %v9243 = vld [vmem:[%s9241 + $0x4] sm:$0xf]
    %v9244 = vld [vmem:[%s9241 + $0x8] sm:$0xf]
    %v9245 = vld [vmem:[%s9241 + $0xc] sm:$0xf]
    %v9246 = vld [vmem:[%s9241 + $0x10] sm:$0xf]
    %v9247 = vld [vmem:[%s9241 + $0x14] sm:$0xf]
    %v9248 = vld [vmem:[%s9241 + $0x18] sm:$0xf]
    %v9249 = vld [vmem:[%s9241 + $0x1c] sm:$0xf]
    %v9250 = vld [vmem:[%s9241 + $0x20] sm:$0xf]
    %v9251 = vld [vmem:[%s9241 + $0x24] sm:$0xf]
    %v9252 = vld [vmem:[%s9241 + $0x28] sm:$0xf]
    %v9253 = vld [vmem:[%s9241 + $0x2c] sm:$0xf]
    %v9254 = vld [vmem:[%s9241 + $0x30] sm:$0xf]
    %v9255 = vld [vmem:[%s9241 + $0x34] sm:$0xf]
    %v9256 = vld [vmem:[%s9241 + $0x38] sm:$0xf]
    %v9257 = vld [vmem:[%s9241 + $0x3c] sm:$0xf]
    %v9258 = vld [vmem:[%s9241 + $0x40] sm:$0xf]
    %v9259 = vld [vmem:[%s9241 + $0x44] sm:$0xf]
    %v9260 = vld [vmem:[%s9241 + $0x48] sm:$0xf]
    %v9261 = vld [vmem:[%s9241 + $0x4c] sm:$0xf]
    %v9262 = vld [vmem:[%s9241 + $0x50] sm:$0xf]
    %v9263 = vld [vmem:[%s9241 + $0x54] sm:$0xf]
    %v9264 = vld [vmem:[%s9241 + $0x58] sm:$0xf]
    %v9265 = vld [vmem:[%s9241 + $0x5c] sm:$0xf]
    %v9266 = vld [vmem:[%s9241 + $0x60] sm:$0xf]
    %v9267 = vld [vmem:[%s9241 + $0x64] sm:$0xf]
    %v9268 = vld [vmem:[%s9241 + $0x68] sm:$0xf]
    %v9269 = vld [vmem:[%s9241 + $0x6c] sm:$0xf]
    %v9270 = vld [vmem:[%s9241 + $0x70] sm:$0xf]
    %v9271 = vld [vmem:[%s9241 + $0x74] sm:$0xf]
    %v9288 = vunpack.c.l.b16 %v9225
    %v9289 = vunpack.c.l.b16 %v9226
    %v9290 = vunpack.c.l.b16 %v9227
    %v9291 = vunpack.c.l.b16 %v9228
    %v9292 = vunpack.c.l.b16 %v9229
    %v9293 = vunpack.c.l.b16 %v9230
    %v9294 = vunpack.c.l.b16 %v9231
    %v9295 = vunpack.c.l.b16 %v9232
    %v9296 = vunpack.c.l.b16 %v9233
    %v9297 = vunpack.c.l.b16 %v9234
    %v9298 = vunpack.c.l.b16 %v9235
    %v9299 = vunpack.c.l.b16 %v9236
    %v9300 = vunpack.c.l.b16 %v9237
    %v9301 = vunpack.c.l.b16 %v9238
    %v9302 = vunpack.c.l.b16 %v9239
    %v9303 = vunpack.c.l.b16 %v9240
    %v9304 = vsel %vm2066, %v9290, %v9288
    %v9305 = vsel %vm2068, %v9292, %v9304
    %v9306 = vsel %vm2070, %v9294, %v9305
    %v9307 = vsel %vm2072, %v9296, %v9306
    %v9308 = vsel %vm2074, %v9298, %v9307
    %v9309 = vsel %vm2076, %v9300, %v9308
    %v9310 = vsel %vm2078, %v9302, %v9309
    %v9311 = vsel %vm2066, %v9291, %v9289
    %v9312 = vsel %vm2068, %v9293, %v9311
    %v9313 = vsel %vm2070, %v9295, %v9312
    %v9314 = vsel %vm2072, %v9297, %v9313
    %v9315 = vsel %vm2074, %v9299, %v9314
    %v9316 = vsel %vm2076, %v9301, %v9315
    %v9317 = vsel %vm2078, %v9303, %v9316
    %v9318 = vpack.c.b16 %v9310, %v9310
    %v9319 = vpack.c.b16 %v9317, %v9317
    %v9351 = vunpack.c.l.b16 %v9242
    %v9352 = vunpack.c.l.b16 %v9243
    %v9353 = vunpack.c.l.b16 %v9244
    %v9354 = vunpack.c.l.b16 %v9245
    %v9355 = vunpack.c.l.b16 %v9246
    %v9356 = vunpack.c.l.b16 %v9247
    %v9357 = vunpack.c.l.b16 %v9248
    %v9358 = vunpack.c.l.b16 %v9249
    %v9359 = vunpack.c.l.b16 %v9250
    %v9360 = vunpack.c.l.b16 %v9251
    %v9361 = vunpack.c.l.b16 %v9252
    %v9362 = vunpack.c.l.b16 %v9253
    %v9363 = vunpack.c.l.b16 %v9254
    %v9364 = vunpack.c.l.b16 %v9255
    %v9365 = vunpack.c.l.b16 %v9256
    %v9366 = vunpack.c.l.b16 %v9257
    %v9367 = vunpack.c.l.b16 %v9258
    %v9368 = vunpack.c.l.b16 %v9259
    %v9369 = vunpack.c.l.b16 %v9260
    %v9370 = vunpack.c.l.b16 %v9261
    %v9371 = vunpack.c.l.b16 %v9262
    %v9372 = vunpack.c.l.b16 %v9263
    %v9373 = vunpack.c.l.b16 %v9264
    %v9374 = vunpack.c.l.b16 %v9265
    %v9375 = vunpack.c.l.b16 %v9266
    %v9376 = vunpack.c.l.b16 %v9267
    %v9377 = vunpack.c.l.b16 %v9268
    %v9378 = vunpack.c.l.b16 %v9269
    %v9379 = vunpack.c.l.b16 %v9270
    %v9380 = vunpack.c.l.b16 %v9271
    %v9381 = vpack.c.b16 %v9352, %v9351
    %v9382 = vpack.c.b16 %v9354, %v9353
    %v9383 = vpack.c.b16 %v9356, %v9355
    %v9384 = vpack.c.b16 %v9358, %v9357
    %v9385 = vpack.c.b16 %v9360, %v9359
    %v9386 = vpack.c.b16 %v9362, %v9361
    %v9387 = vpack.c.b16 %v9364, %v9363
    %v9388 = vpack.c.b16 %v9366, %v9365
    %v9389 = vpack.c.b16 %v9368, %v9367
    %v9390 = vpack.c.b16 %v9370, %v9369
    %v9391 = vpack.c.b16 %v9372, %v9371
    %v9392 = vpack.c.b16 %v9374, %v9373
    %v9393 = vpack.c.b16 %v9376, %v9375
    %v9394 = vpack.c.b16 %v9378, %v9377
    %v9395 = vpack.c.b16 %v9380, %v9379
    %v9412 = vsel %vm736, %v9319, 0
    %9414 = vmatprep.subr.bf16.mxu0 0
    %9415 = vmatpush1.bf16.msra.mxu0 %v9388
    %9416 = vmatprep.subr.bf16.mxu0 0
    %9417 = vmatpush1.bf16.msra.mxu0 %v9387
    %9418 = vmatprep.subr.bf16.mxu0 0
    %9419 = vmatpush1.bf16.msra.mxu0 %v9386
    %9420 = vmatprep.subr.bf16.mxu0 0
    %9421 = vmatpush1.bf16.msra.mxu0 %v9385
    %9422 = vmatprep.subr.bf16.mxu0 0
    %9423 = vmatpush1.bf16.msra.mxu0 %v9384
    %9424 = vmatprep.subr.bf16.mxu0 0
    %9425 = vmatpush1.bf16.msra.mxu0 %v9383
    %9426 = vmatprep.subr.bf16.mxu0 0
    %9427 = vmatpush1.bf16.msra.mxu0 %v9382
    %9428 = vmatprep.subr.bf16.mxu0 0
    %9429 = vmatpush1.bf16.msra.mxu0 %v9381
    %9430 = vmatprep.subr.bf16.mxu0 0
    %9431 = vmatpush2.bf16.msra.mxu0 0
    %9432 = vmatprep.subr.bf16.mxu0 0
    %9433 = vmatpush2.bf16.msra.mxu0 %v9395
    %9434 = vmatprep.subr.bf16.mxu0 0
    %9435 = vmatpush2.bf16.msra.mxu0 %v9394
    %9436 = vmatprep.subr.bf16.mxu0 0
    %9437 = vmatpush2.bf16.msra.mxu0 %v9393
    %9438 = vmatprep.subr.bf16.mxu0 0
    %9439 = vmatpush2.bf16.msra.mxu0 %v9392
    %9440 = vmatprep.subr.bf16.mxu0 0
    %9441 = vmatpush2.bf16.msra.mxu0 %v9391
    %9442 = vmatprep.subr.bf16.mxu0 0
    %9443 = vmatpush2.bf16.msra.mxu0 %v9390
    %9444 = vmatprep.subr.bf16.mxu0 0
    %9445 = vmatpush2.bf16.msra.mxu0 %v9389
    %9446 = vmatprep.mubr.bf16.mxu0 %v9412
    %9447 = vmatmul.mubr.bf16.gmra.mxu0 %v9318
    %v9448 = vpop.f32.mrf.mxu0
    %v9449 = vadd.f32 0.0, %v9448
    %v9450 = vpop.f32.mrf.mxu0
    %v9451 = vpop.f32.mrf.mxu0
    %v9452 = vpop.f32.mrf.mxu0
    %9453 = vdwg.mxu0
    %v9454 = vadd.f32 %v8279, %v9449
    %v9455 = vld [vmem:[%s0 + $0x100] sm:$0xf]
    %v9456 = vld [vmem:[%s0 + $0x104] sm:$0xf]
    %v9457 = vld [vmem:[%s0 + $0x108] sm:$0xf]
    %v9458 = vld [vmem:[%s0 + $0x10c] sm:$0xf]
    %v9459 = vld [vmem:[%s0 + $0x110] sm:$0xf]
    %v9460 = vld [vmem:[%s0 + $0x114] sm:$0xf]
    %v9461 = vld [vmem:[%s0 + $0x118] sm:$0xf]
    %v9462 = vld [vmem:[%s0 + $0x11c] sm:$0xf]
    %v9463 = vld [vmem:[%s0 + $0x220] sm:$0xf]
    %v9464 = vld [vmem:[%s0 + $0x224] sm:$0xf]
    %v9465 = vld [vmem:[%s0 + $0x228] sm:$0xf]
    %v9466 = vld [vmem:[%s0 + $0x22c] sm:$0xf]
    %v9467 = vld [vmem:[%s0 + $0x230] sm:$0xf]
    %v9468 = vld [vmem:[%s0 + $0x234] sm:$0xf]
    %v9469 = vld [vmem:[%s0 + $0x238] sm:$0xf]
    %v9470 = vld [vmem:[%s0 + $0x23c] sm:$0xf]
    %v9471 = vld [vmem:[%s0 + $0x340] sm:$0xf]
    %v9472 = vld [vmem:[%s0 + $0x344] sm:$0xf]
    %v9473 = vld [vmem:[%s0 + $0x348] sm:$0xf]
    %v9474 = vld [vmem:[%s0 + $0x34c] sm:$0xf]
    %v9475 = vld [vmem:[%s0 + $0x350] sm:$0xf]
    %v9476 = vld [vmem:[%s0 + $0x354] sm:$0xf]
    %v9477 = vld [vmem:[%s0 + $0x358] sm:$0xf]
    %v9478 = vld [vmem:[%s0 + $0x35c] sm:$0xf]
    %v9479 = vld [vmem:[%s0 + $0x460] sm:$0xf]
    %v9480 = vld [vmem:[%s0 + $0x464] sm:$0xf]
    %v9481 = vld [vmem:[%s0 + $0x468] sm:$0xf]
    %v9482 = vld [vmem:[%s0 + $0x46c] sm:$0xf]
    %v9483 = vld [vmem:[%s0 + $0x470] sm:$0xf]
    %v9484 = vld [vmem:[%s0 + $0x474] sm:$0xf]
    %v9485 = vld [vmem:[%s0 + $0x478] sm:$0xf]
    %v9486 = vld [vmem:[%s0 + $0x47c] sm:$0xf]
    %v9487 = vld [vmem:[%s0 + $0x580] sm:$0xf]
    %v9488 = vld [vmem:[%s0 + $0x584] sm:$0xf]
    %v9489 = vld [vmem:[%s0 + $0x588] sm:$0xf]
    %v9490 = vld [vmem:[%s0 + $0x58c] sm:$0xf]
    %v9491 = vld [vmem:[%s0 + $0x590] sm:$0xf]
    %v9492 = vld [vmem:[%s0 + $0x594] sm:$0xf]
    %v9493 = vld [vmem:[%s0 + $0x598] sm:$0xf]
    %v9494 = vld [vmem:[%s0 + $0x59c] sm:$0xf]
    %v9495 = vld [vmem:[%s0 + $0x6a0] sm:$0xf]
    %v9496 = vld [vmem:[%s0 + $0x6a4] sm:$0xf]
    %v9497 = vld [vmem:[%s0 + $0x6a8] sm:$0xf]
    %v9498 = vld [vmem:[%s0 + $0x6ac] sm:$0xf]
    %v9499 = vld [vmem:[%s0 + $0x6b0] sm:$0xf]
    %v9500 = vld [vmem:[%s0 + $0x6b4] sm:$0xf]
    %v9501 = vld [vmem:[%s0 + $0x6b8] sm:$0xf]
    %v9502 = vld [vmem:[%s0 + $0x6bc] sm:$0xf]
    %v9503 = vld [vmem:[%s0 + $0x7c0] sm:$0xf]
    %v9504 = vld [vmem:[%s0 + $0x7c4] sm:$0xf]
    %v9505 = vld [vmem:[%s0 + $0x7c8] sm:$0xf]
    %v9506 = vld [vmem:[%s0 + $0x7cc] sm:$0xf]
    %v9507 = vld [vmem:[%s0 + $0x7d0] sm:$0xf]
    %v9508 = vld [vmem:[%s0 + $0x7d4] sm:$0xf]
    %v9509 = vld [vmem:[%s0 + $0x7d8] sm:$0xf]
    %v9510 = vld [vmem:[%s0 + $0x7dc] sm:$0xf]
    %v9511 = vld [vmem:[%s0 + $0x8e0] sm:$0xf]
    %v9512 = vld [vmem:[%s0 + $0x8e4] sm:$0xf]
    %v9513 = vld [vmem:[%s0 + $0x8e8] sm:$0xf]
    %v9514 = vld [vmem:[%s0 + $0x8ec] sm:$0xf]
    %v9515 = vld [vmem:[%s0 + $0x8f0] sm:$0xf]
    %v9516 = vld [vmem:[%s0 + $0x8f4] sm:$0xf]
    %v9517 = vld [vmem:[%s0 + $0x8f8] sm:$0xf]
    %v9518 = vld [vmem:[%s0 + $0x8fc] sm:$0xf]
    %v9583 = vunpack.c.l.b16 %v9455
    %v9584 = vunpack.c.l.b16 %v9456
    %v9585 = vunpack.c.l.b16 %v9457
    %v9586 = vunpack.c.l.b16 %v9458
    %v9587 = vunpack.c.l.b16 %v9459
    %v9588 = vunpack.c.l.b16 %v9460
    %v9589 = vunpack.c.l.b16 %v9461
    %v9590 = vunpack.c.l.b16 %v9462
    %v9591 = vunpack.c.l.b16 %v9463
    %v9592 = vunpack.c.l.b16 %v9464
    %v9593 = vunpack.c.l.b16 %v9465
    %v9594 = vunpack.c.l.b16 %v9466
    %v9595 = vunpack.c.l.b16 %v9467
    %v9596 = vunpack.c.l.b16 %v9468
    %v9597 = vunpack.c.l.b16 %v9469
    %v9598 = vunpack.c.l.b16 %v9470
    %v9599 = vunpack.c.l.b16 %v9471
    %v9600 = vunpack.c.l.b16 %v9472
    %v9601 = vunpack.c.l.b16 %v9473
    %v9602 = vunpack.c.l.b16 %v9474
    %v9603 = vunpack.c.l.b16 %v9475
    %v9604 = vunpack.c.l.b16 %v9476
    %v9605 = vunpack.c.l.b16 %v9477
    %v9606 = vunpack.c.l.b16 %v9478
    %v9607 = vunpack.c.l.b16 %v9479
    %v9608 = vunpack.c.l.b16 %v9480
    %v9609 = vunpack.c.l.b16 %v9481
    %v9610 = vunpack.c.l.b16 %v9482
    %v9611 = vunpack.c.l.b16 %v9483
    %v9612 = vunpack.c.l.b16 %v9484
    %v9613 = vunpack.c.l.b16 %v9485
    %v9614 = vunpack.c.l.b16 %v9486
    %v9615 = vunpack.c.l.b16 %v9487
    %v9616 = vunpack.c.l.b16 %v9488
    %v9617 = vunpack.c.l.b16 %v9489
    %v9618 = vunpack.c.l.b16 %v9490
    %v9619 = vunpack.c.l.b16 %v9491
    %v9620 = vunpack.c.l.b16 %v9492
    %v9621 = vunpack.c.l.b16 %v9493
    %v9622 = vunpack.c.l.b16 %v9494
    %v9623 = vunpack.c.l.b16 %v9495
    %v9624 = vunpack.c.l.b16 %v9496
    %v9625 = vunpack.c.l.b16 %v9497
    %v9626 = vunpack.c.l.b16 %v9498
    %v9627 = vunpack.c.l.b16 %v9499
    %v9628 = vunpack.c.l.b16 %v9500
    %v9629 = vunpack.c.l.b16 %v9501
    %v9630 = vunpack.c.l.b16 %v9502
    %v9631 = vunpack.c.l.b16 %v9503
    %v9632 = vunpack.c.l.b16 %v9504
    %v9633 = vunpack.c.l.b16 %v9505
    %v9634 = vunpack.c.l.b16 %v9506
    %v9635 = vunpack.c.l.b16 %v9507
    %v9636 = vunpack.c.l.b16 %v9508
    %v9637 = vunpack.c.l.b16 %v9509
    %v9638 = vunpack.c.l.b16 %v9510
    %v9639 = vunpack.c.l.b16 %v9511
    %v9640 = vunpack.c.l.b16 %v9512
    %v9641 = vunpack.c.l.b16 %v9513
    %v9642 = vunpack.c.l.b16 %v9514
    %v9643 = vunpack.c.l.b16 %v9515
    %v9644 = vunpack.c.l.b16 %v9516
    %v9645 = vunpack.c.l.b16 %v9517
    %v9646 = vunpack.c.l.b16 %v9518
    %v9647 = vpack.c.b16 %v9584, %v9583
    %v9648 = vpack.c.b16 %v9586, %v9585
    %v9649 = vpack.c.b16 %v9588, %v9587
    %v9650 = vpack.c.b16 %v9590, %v9589
    %v9651 = vpack.c.b16 %v9592, %v9591
    %v9652 = vpack.c.b16 %v9594, %v9593
    %v9653 = vpack.c.b16 %v9596, %v9595
    %v9654 = vpack.c.b16 %v9598, %v9597
    %v9655 = vpack.c.b16 %v9600, %v9599
    %v9656 = vpack.c.b16 %v9602, %v9601
    %v9657 = vpack.c.b16 %v9604, %v9603
    %v9658 = vpack.c.b16 %v9606, %v9605
    %v9659 = vpack.c.b16 %v9608, %v9607
    %v9660 = vpack.c.b16 %v9610, %v9609
    %v9661 = vpack.c.b16 %v9612, %v9611
    %v9662 = vpack.c.b16 %v9614, %v9613
    %v9663 = vpack.c.b16 %v9616, %v9615
    %v9664 = vpack.c.b16 %v9618, %v9617
    %v9665 = vpack.c.b16 %v9620, %v9619
    %v9666 = vpack.c.b16 %v9622, %v9621
    %v9667 = vpack.c.b16 %v9624, %v9623
    %v9668 = vpack.c.b16 %v9626, %v9625
    %v9669 = vpack.c.b16 %v9628, %v9627
    %v9670 = vpack.c.b16 %v9630, %v9629
    %v9671 = vpack.c.b16 %v9632, %v9631
    %v9672 = vpack.c.b16 %v9634, %v9633
    %v9673 = vpack.c.b16 %v9636, %v9635
    %v9674 = vpack.c.b16 %v9638, %v9637
    %v9675 = vpack.c.b16 %v9640, %v9639
    %v9676 = vpack.c.b16 %v9642, %v9641
    %v9677 = vpack.c.b16 %v9644, %v9643
    %v9678 = vpack.c.b16 %v9646, %v9645
    %v9680 = vsel %vm273, %v9647, 0
    %v9683 = vsel %vm273, %v9648, 0
    %v9686 = vsel %vm273, %v9649, 0
    %v9689 = vsel %vm273, %v9650, 0
    %v9692 = vsel %vm273, %v9651, 0
    %v9695 = vsel %vm273, %v9652, 0
    %v9698 = vsel %vm273, %v9653, 0
    %v9701 = vsel %vm273, %v9654, 0
    %v9704 = vsel %vm273, %v9655, 0
    %v9707 = vsel %vm273, %v9656, 0
    %v9710 = vsel %vm273, %v9657, 0
    %v9713 = vsel %vm273, %v9658, 0
    %v9716 = vsel %vm273, %v9659, 0
    %v9719 = vsel %vm273, %v9660, 0
    %v9722 = vsel %vm273, %v9661, 0
    %v9725 = vsel %vm273, %v9662, 0
    %v9728 = vsel %vm273, %v9663, 0
    %v9731 = vsel %vm273, %v9664, 0
    %v9734 = vsel %vm273, %v9665, 0
    %v9737 = vsel %vm273, %v9666, 0
    %v9740 = vsel %vm273, %v9667, 0
    %v9743 = vsel %vm273, %v9668, 0
    %v9746 = vsel %vm273, %v9669, 0
    %v9749 = vsel %vm273, %v9670, 0
    %v9752 = vsel %vm273, %v9671, 0
    %v9755 = vsel %vm273, %v9672, 0
    %v9758 = vsel %vm273, %v9673, 0
    %v9761 = vsel %vm273, %v9674, 0
    %v9764 = vsel %vm273, %v9675, 0
    %v9767 = vsel %vm273, %v9676, 0
    %v9770 = vsel %vm273, %v9677, 0
    %v9773 = vsel %vm273, %v9678, 0
    %9775 = vmatprep.subr.bf16.mxu0 0
    %9776 = vmatpush1.bf16.msra.mxu0 0
    %9777 = vmatprep.subr.bf16.mxu0 0
    %9778 = vmatpush1.bf16.msra.mxu0 0
    %9779 = vmatprep.subr.bf16.mxu0 0
    %9780 = vmatpush1.bf16.msra.mxu0 0
    %9781 = vmatprep.subr.bf16.mxu0 0
    %9782 = vmatpush1.bf16.msra.mxu0 0
    %9783 = vmatprep.subr.bf16.mxu0 0
    %9784 = vmatpush1.bf16.msra.mxu0 0
    %9785 = vmatprep.subr.bf16.mxu0 0
    %9786 = vmatpush1.bf16.msra.mxu0 0
    %9787 = vmatprep.subr.bf16.mxu0 %v268
    %9788 = vmatpush1.bf16.msra.mxu0 %v267
    %9789 = vmatprep.subr.bf16.mxu0 %v266
    %9790 = vmatpush1.bf16.msra.mxu0 %v265
    %9791 = vmatprep.subr.bf16.mxu0 0
    %9792 = vmatpush2.bf16.msra.mxu0 0
    %9793 = vmatprep.subr.bf16.mxu0 0
    %9794 = vmatpush2.bf16.msra.mxu0 0
    %9795 = vmatprep.subr.bf16.mxu0 0
    %9796 = vmatpush2.bf16.msra.mxu0 0
    %9797 = vmatprep.subr.bf16.mxu0 0
    %9798 = vmatpush2.bf16.msra.mxu0 0
    %9799 = vmatprep.subr.bf16.mxu0 0
    %9800 = vmatpush2.bf16.msra.mxu0 0
    %9801 = vmatprep.subr.bf16.mxu0 0
    %9802 = vmatpush2.bf16.msra.mxu0 0
    %9803 = vmatprep.subr.bf16.mxu0 0
    %9804 = vmatpush2.bf16.msra.mxu0 0
    %9805 = vmatprep.subr.bf16.mxu0 0
    %9806 = vmatpush2.bf16.msra.mxu0 0
    %9807 = vmatprep.mubr.bf16.mxu0 0
    %9808 = vmatmul.mubr.bf16.gmra.mxu0 %v9680
    %v9809 = vpop.f32.mrf.mxu0
    %v9810 = vadd.f32 0.0, %v9809
    %v9811 = vpop.f32.mrf.mxu0
    %v9812 = vadd.f32 0.0, %v9811
    %v9813 = vpop.f32.mrf.mxu0
    %v9814 = vadd.f32 0.0, %v9813
    %v9815 = vpop.f32.mrf.mxu0
    %v9816 = vadd.f32 0.0, %v9815
    %9817 = vmatprep.mubr.bf16.mxu0 0
    %9818 = vmatmul.mubr.bf16.gmra.mxu0 %v9683
    %v9819 = vpop.f32.mrf.mxu0
    %v9820 = vadd.f32 0.0, %v9819
    %v9821 = vpop.f32.mrf.mxu0
    %v9822 = vadd.f32 0.0, %v9821
    %v9823 = vpop.f32.mrf.mxu0
    %v9824 = vadd.f32 0.0, %v9823
    %v9825 = vpop.f32.mrf.mxu0
    %v9826 = vadd.f32 0.0, %v9825
    %9827 = vmatprep.mubr.bf16.mxu0 0
    %9828 = vmatmul.mubr.bf16.gmra.mxu0 %v9686
    %v9829 = vpop.f32.mrf.mxu0
    %v9830 = vadd.f32 0.0, %v9829
    %v9831 = vpop.f32.mrf.mxu0
    %v9832 = vadd.f32 0.0, %v9831
    %v9833 = vpop.f32.mrf.mxu0
    %v9834 = vadd.f32 0.0, %v9833
    %v9835 = vpop.f32.mrf.mxu0
    %v9836 = vadd.f32 0.0, %v9835
    %9837 = vmatprep.mubr.bf16.mxu0 0
    %9838 = vmatmul.mubr.bf16.gmra.mxu0 %v9689
    %v9839 = vpop.f32.mrf.mxu0
    %v9840 = vadd.f32 0.0, %v9839
    %v9841 = vpop.f32.mrf.mxu0
    %v9842 = vadd.f32 0.0, %v9841
    %v9843 = vpop.f32.mrf.mxu0
    %v9844 = vadd.f32 0.0, %v9843
    %v9845 = vpop.f32.mrf.mxu0
    %v9846 = vadd.f32 0.0, %v9845
    %9847 = vmatprep.mubr.bf16.mxu0 0
    %9848 = vmatmul.mubr.bf16.gmra.mxu0 %v9692
    %v9849 = vpop.f32.mrf.mxu0
    %v9850 = vadd.f32 0.0, %v9849
    %v9851 = vpop.f32.mrf.mxu0
    %v9852 = vadd.f32 0.0, %v9851
    %v9853 = vpop.f32.mrf.mxu0
    %v9854 = vadd.f32 0.0, %v9853
    %v9855 = vpop.f32.mrf.mxu0
    %v9856 = vadd.f32 0.0, %v9855
    %9857 = vmatprep.mubr.bf16.mxu0 0
    %9858 = vmatmul.mubr.bf16.gmra.mxu0 %v9695
    %v9859 = vpop.f32.mrf.mxu0
    %v9860 = vadd.f32 0.0, %v9859
    %v9861 = vpop.f32.mrf.mxu0
    %v9862 = vadd.f32 0.0, %v9861
    %v9863 = vpop.f32.mrf.mxu0
    %v9864 = vadd.f32 0.0, %v9863
    %v9865 = vpop.f32.mrf.mxu0
    %v9866 = vadd.f32 0.0, %v9865
    %9867 = vmatprep.mubr.bf16.mxu0 0
    %9868 = vmatmul.mubr.bf16.gmra.mxu0 %v9698
    %v9869 = vpop.f32.mrf.mxu0
    %v9870 = vadd.f32 0.0, %v9869
    %v9871 = vpop.f32.mrf.mxu0
    %v9872 = vadd.f32 0.0, %v9871
    %v9873 = vpop.f32.mrf.mxu0
    %v9874 = vadd.f32 0.0, %v9873
    %v9875 = vpop.f32.mrf.mxu0
    %v9876 = vadd.f32 0.0, %v9875
    %9877 = vmatprep.mubr.bf16.mxu0 0
    %9878 = vmatmul.mubr.bf16.gmra.mxu0 %v9701
    %v9879 = vpop.f32.mrf.mxu0
    %v9880 = vadd.f32 0.0, %v9879
    %v9881 = vpop.f32.mrf.mxu0
    %v9882 = vadd.f32 0.0, %v9881
    %v9883 = vpop.f32.mrf.mxu0
    %v9884 = vadd.f32 0.0, %v9883
    %v9885 = vpop.f32.mrf.mxu0
    %v9886 = vadd.f32 0.0, %v9885
    %9887 = vmatprep.mubr.bf16.mxu0 0
    %9888 = vmatmul.mubr.bf16.gmra.mxu0 %v9704
    %v9889 = vpop.f32.mrf.mxu0
    %v9890 = vadd.f32 0.0, %v9889
    %v9891 = vpop.f32.mrf.mxu0
    %v9892 = vadd.f32 0.0, %v9891
    %v9893 = vpop.f32.mrf.mxu0
    %v9894 = vadd.f32 0.0, %v9893
    %v9895 = vpop.f32.mrf.mxu0
    %v9896 = vadd.f32 0.0, %v9895
    %9897 = vmatprep.mubr.bf16.mxu0 0
    %9898 = vmatmul.mubr.bf16.gmra.mxu0 %v9707
    %v9899 = vpop.f32.mrf.mxu0
    %v9900 = vadd.f32 0.0, %v9899
    %v9901 = vpop.f32.mrf.mxu0
    %v9902 = vadd.f32 0.0, %v9901
    %v9903 = vpop.f32.mrf.mxu0
    %v9904 = vadd.f32 0.0, %v9903
    %v9905 = vpop.f32.mrf.mxu0
    %v9906 = vadd.f32 0.0, %v9905
    %9907 = vmatprep.mubr.bf16.mxu0 0
    %9908 = vmatmul.mubr.bf16.gmra.mxu0 %v9710
    %v9909 = vpop.f32.mrf.mxu0
    %v9910 = vadd.f32 0.0, %v9909
    %v9911 = vpop.f32.mrf.mxu0
    %v9912 = vadd.f32 0.0, %v9911
    %v9913 = vpop.f32.mrf.mxu0
    %v9914 = vadd.f32 0.0, %v9913
    %v9915 = vpop.f32.mrf.mxu0
    %v9916 = vadd.f32 0.0, %v9915
    %9917 = vmatprep.mubr.bf16.mxu0 0
    %9918 = vmatmul.mubr.bf16.gmra.mxu0 %v9713
    %v9919 = vpop.f32.mrf.mxu0
    %v9920 = vadd.f32 0.0, %v9919
    %v9921 = vpop.f32.mrf.mxu0
    %v9922 = vadd.f32 0.0, %v9921
    %v9923 = vpop.f32.mrf.mxu0
    %v9924 = vadd.f32 0.0, %v9923
    %v9925 = vpop.f32.mrf.mxu0
    %v9926 = vadd.f32 0.0, %v9925
    %9927 = vmatprep.mubr.bf16.mxu0 0
    %9928 = vmatmul.mubr.bf16.gmra.mxu0 %v9716
    %v9929 = vpop.f32.mrf.mxu0
    %v9930 = vadd.f32 0.0, %v9929
    %v9931 = vpop.f32.mrf.mxu0
    %v9932 = vadd.f32 0.0, %v9931
    %v9933 = vpop.f32.mrf.mxu0
    %v9934 = vadd.f32 0.0, %v9933
    %v9935 = vpop.f32.mrf.mxu0
    %v9936 = vadd.f32 0.0, %v9935
    %9937 = vmatprep.mubr.bf16.mxu0 0
    %9938 = vmatmul.mubr.bf16.gmra.mxu0 %v9719
    %v9939 = vpop.f32.mrf.mxu0
    %v9940 = vadd.f32 0.0, %v9939
    %v9941 = vpop.f32.mrf.mxu0
    %v9942 = vadd.f32 0.0, %v9941
    %v9943 = vpop.f32.mrf.mxu0
    %v9944 = vadd.f32 0.0, %v9943
    %v9945 = vpop.f32.mrf.mxu0
    %v9946 = vadd.f32 0.0, %v9945
    %9947 = vmatprep.mubr.bf16.mxu0 0
    %9948 = vmatmul.mubr.bf16.gmra.mxu0 %v9722
    %v9949 = vpop.f32.mrf.mxu0
    %v9950 = vadd.f32 0.0, %v9949
    %v9951 = vpop.f32.mrf.mxu0
    %v9952 = vadd.f32 0.0, %v9951
    %v9953 = vpop.f32.mrf.mxu0
    %v9954 = vadd.f32 0.0, %v9953
    %v9955 = vpop.f32.mrf.mxu0
    %v9956 = vadd.f32 0.0, %v9955
    %9957 = vmatprep.mubr.bf16.mxu0 0
    %9958 = vmatmul.mubr.bf16.gmra.mxu0 %v9725
    %v9959 = vpop.f32.mrf.mxu0
    %v9960 = vadd.f32 0.0, %v9959
    %v9961 = vpop.f32.mrf.mxu0
    %v9962 = vadd.f32 0.0, %v9961
    %v9963 = vpop.f32.mrf.mxu0
    %v9964 = vadd.f32 0.0, %v9963
    %v9965 = vpop.f32.mrf.mxu0
    %v9966 = vadd.f32 0.0, %v9965
    %9967 = vmatprep.mubr.bf16.mxu0 0
    %9968 = vmatmul.mubr.bf16.gmra.mxu0 %v9728
    %v9969 = vpop.f32.mrf.mxu0
    %v9970 = vadd.f32 0.0, %v9969
    %v9971 = vpop.f32.mrf.mxu0
    %v9972 = vadd.f32 0.0, %v9971
    %v9973 = vpop.f32.mrf.mxu0
    %v9974 = vadd.f32 0.0, %v9973
    %v9975 = vpop.f32.mrf.mxu0
    %v9976 = vadd.f32 0.0, %v9975
    %9977 = vmatprep.mubr.bf16.mxu0 0
    %9978 = vmatmul.mubr.bf16.gmra.mxu0 %v9731
    %v9979 = vpop.f32.mrf.mxu0
    %v9980 = vadd.f32 0.0, %v9979
    %v9981 = vpop.f32.mrf.mxu0
    %v9982 = vadd.f32 0.0, %v9981
    %v9983 = vpop.f32.mrf.mxu0
    %v9984 = vadd.f32 0.0, %v9983
    %v9985 = vpop.f32.mrf.mxu0
    %v9986 = vadd.f32 0.0, %v9985
    %9987 = vmatprep.mubr.bf16.mxu0 0
    %9988 = vmatmul.mubr.bf16.gmra.mxu0 %v9734
    %v9989 = vpop.f32.mrf.mxu0
    %v9990 = vadd.f32 0.0, %v9989
    %v9991 = vpop.f32.mrf.mxu0
    %v9992 = vadd.f32 0.0, %v9991
    %v9993 = vpop.f32.mrf.mxu0
    %v9994 = vadd.f32 0.0, %v9993
    %v9995 = vpop.f32.mrf.mxu0
    %v9996 = vadd.f32 0.0, %v9995
    %9997 = vmatprep.mubr.bf16.mxu0 0
    %9998 = vmatmul.mubr.bf16.gmra.mxu0 %v9737
    %v9999 = vpop.f32.mrf.mxu0
    %v10000 = vadd.f32 0.0, %v9999
    %v10001 = vpop.f32.mrf.mxu0
    %v10002 = vadd.f32 0.0, %v10001
    %v10003 = vpop.f32.mrf.mxu0
    %v10004 = vadd.f32 0.0, %v10003
    %v10005 = vpop.f32.mrf.mxu0
    %v10006 = vadd.f32 0.0, %v10005
    %10007 = vmatprep.mubr.bf16.mxu0 0
    %10008 = vmatmul.mubr.bf16.gmra.mxu0 %v9740
    %v10009 = vpop.f32.mrf.mxu0
    %v10010 = vadd.f32 0.0, %v10009
    %v10011 = vpop.f32.mrf.mxu0
    %v10012 = vadd.f32 0.0, %v10011
    %v10013 = vpop.f32.mrf.mxu0
    %v10014 = vadd.f32 0.0, %v10013
    %v10015 = vpop.f32.mrf.mxu0
    %v10016 = vadd.f32 0.0, %v10015
    %10017 = vmatprep.mubr.bf16.mxu0 0
    %10018 = vmatmul.mubr.bf16.gmra.mxu0 %v9743
    %v10019 = vpop.f32.mrf.mxu0
    %v10020 = vadd.f32 0.0, %v10019
    %v10021 = vpop.f32.mrf.mxu0
    %v10022 = vadd.f32 0.0, %v10021
    %v10023 = vpop.f32.mrf.mxu0
    %v10024 = vadd.f32 0.0, %v10023
    %v10025 = vpop.f32.mrf.mxu0
    %v10026 = vadd.f32 0.0, %v10025
    %10027 = vmatprep.mubr.bf16.mxu0 0
    %10028 = vmatmul.mubr.bf16.gmra.mxu0 %v9746
    %v10029 = vpop.f32.mrf.mxu0
    %v10030 = vadd.f32 0.0, %v10029
    %v10031 = vpop.f32.mrf.mxu0
    %v10032 = vadd.f32 0.0, %v10031
    %v10033 = vpop.f32.mrf.mxu0
    %v10034 = vadd.f32 0.0, %v10033
    %v10035 = vpop.f32.mrf.mxu0
    %v10036 = vadd.f32 0.0, %v10035
    %10037 = vmatprep.mubr.bf16.mxu0 0
    %10038 = vmatmul.mubr.bf16.gmra.mxu0 %v9749
    %v10039 = vpop.f32.mrf.mxu0
    %v10040 = vadd.f32 0.0, %v10039
    %v10041 = vpop.f32.mrf.mxu0
    %v10042 = vadd.f32 0.0, %v10041
    %v10043 = vpop.f32.mrf.mxu0
    %v10044 = vadd.f32 0.0, %v10043
    %v10045 = vpop.f32.mrf.mxu0
    %v10046 = vadd.f32 0.0, %v10045
    %10047 = vmatprep.mubr.bf16.mxu0 0
    %10048 = vmatmul.mubr.bf16.gmra.mxu0 %v9752
    %v10049 = vpop.f32.mrf.mxu0
    %v10050 = vadd.f32 0.0, %v10049
    %v10051 = vpop.f32.mrf.mxu0
    %v10052 = vadd.f32 0.0, %v10051
    %v10053 = vpop.f32.mrf.mxu0
    %v10054 = vadd.f32 0.0, %v10053
    %v10055 = vpop.f32.mrf.mxu0
    %v10056 = vadd.f32 0.0, %v10055
    %10057 = vmatprep.mubr.bf16.mxu0 0
    %10058 = vmatmul.mubr.bf16.gmra.mxu0 %v9755
    %v10059 = vpop.f32.mrf.mxu0
    %v10060 = vadd.f32 0.0, %v10059
    %v10061 = vpop.f32.mrf.mxu0
    %v10062 = vadd.f32 0.0, %v10061
    %v10063 = vpop.f32.mrf.mxu0
    %v10064 = vadd.f32 0.0, %v10063
    %v10065 = vpop.f32.mrf.mxu0
    %v10066 = vadd.f32 0.0, %v10065
    %10067 = vmatprep.mubr.bf16.mxu0 0
    %10068 = vmatmul.mubr.bf16.gmra.mxu0 %v9758
    %v10069 = vpop.f32.mrf.mxu0
    %v10070 = vadd.f32 0.0, %v10069
    %v10071 = vpop.f32.mrf.mxu0
    %v10072 = vadd.f32 0.0, %v10071
    %v10073 = vpop.f32.mrf.mxu0
    %v10074 = vadd.f32 0.0, %v10073
    %v10075 = vpop.f32.mrf.mxu0
    %v10076 = vadd.f32 0.0, %v10075
    %10077 = vmatprep.mubr.bf16.mxu0 0
    %10078 = vmatmul.mubr.bf16.gmra.mxu0 %v9761
    %v10079 = vpop.f32.mrf.mxu0
    %v10080 = vadd.f32 0.0, %v10079
    %v10081 = vpop.f32.mrf.mxu0
    %v10082 = vadd.f32 0.0, %v10081
    %v10083 = vpop.f32.mrf.mxu0
    %v10084 = vadd.f32 0.0, %v10083
    %v10085 = vpop.f32.mrf.mxu0
    %v10086 = vadd.f32 0.0, %v10085
    %10087 = vmatprep.mubr.bf16.mxu0 0
    %10088 = vmatmul.mubr.bf16.gmra.mxu0 %v9764
    %v10089 = vpop.f32.mrf.mxu0
    %v10090 = vadd.f32 0.0, %v10089
    %v10091 = vpop.f32.mrf.mxu0
    %v10092 = vadd.f32 0.0, %v10091
    %v10093 = vpop.f32.mrf.mxu0
    %v10094 = vadd.f32 0.0, %v10093
    %v10095 = vpop.f32.mrf.mxu0
    %v10096 = vadd.f32 0.0, %v10095
    %10097 = vmatprep.mubr.bf16.mxu0 0
    %10098 = vmatmul.mubr.bf16.gmra.mxu0 %v9767
    %v10099 = vpop.f32.mrf.mxu0
    %v10100 = vadd.f32 0.0, %v10099
    %v10101 = vpop.f32.mrf.mxu0
    %v10102 = vadd.f32 0.0, %v10101
    %v10103 = vpop.f32.mrf.mxu0
    %v10104 = vadd.f32 0.0, %v10103
    %v10105 = vpop.f32.mrf.mxu0
    %v10106 = vadd.f32 0.0, %v10105
    %10107 = vmatprep.mubr.bf16.mxu0 0
    %10108 = vmatmul.mubr.bf16.gmra.mxu0 %v9770
    %v10109 = vpop.f32.mrf.mxu0
    %v10110 = vadd.f32 0.0, %v10109
    %v10111 = vpop.f32.mrf.mxu0
    %v10112 = vadd.f32 0.0, %v10111
    %v10113 = vpop.f32.mrf.mxu0
    %v10114 = vadd.f32 0.0, %v10113
    %v10115 = vpop.f32.mrf.mxu0
    %v10116 = vadd.f32 0.0, %v10115
    %10117 = vmatprep.mubr.bf16.mxu0 0
    %10118 = vmatmul.mubr.bf16.gmra.mxu0 %v9773
    %v10119 = vpop.f32.mrf.mxu0
    %v10120 = vadd.f32 0.0, %v10119
    %v10121 = vpop.f32.mrf.mxu0
    %v10122 = vadd.f32 0.0, %v10121
    %v10123 = vpop.f32.mrf.mxu0
    %v10124 = vadd.f32 0.0, %v10123
    %v10125 = vpop.f32.mrf.mxu0
    %v10126 = vadd.f32 0.0, %v10125
    %10127 = vdwg.mxu0
    %v10128 = vmax.f32 %v9810, %v9814
    %v10129 = vmax.f32 %v10128, %v9820
    %v10130 = vmax.f32 %v10129, %v9824
    %v10131 = vmax.f32 %v10130, %v9830
    %v10132 = vmax.f32 %v10131, %v9834
    %v10133 = vmax.f32 %v10132, %v9840
    %v10134 = vmax.f32 %v10133, %v9844
    %v10135 = vrot.slane %v10134, 4
    %v10136 = vmax.f32 %v10134, %v10135
    %v10137 = vrot.slane %v10136, 2
    %v10138 = vmax.f32 %v10136, %v10137
    %v10139 = vrot.slane %v10138, 1
    %v10140 = vmax.f32 %v10138, %v10139
    %v10141 = vsel %vm736, %v9812, -inf
    %v10142 = vsel %vm736, %v9816, -inf
    %v10143 = vmax.f32 %v10141, %v10142
    %v10144 = vsel %vm736, %v9822, -inf
    %v10145 = vmax.f32 %v10143, %v10144
    %v10146 = vsel %vm736, %v9826, -inf
    %v10147 = vmax.f32 %v10145, %v10146
    %v10148 = vsel %vm736, %v9832, -inf
    %v10149 = vmax.f32 %v10147, %v10148
    %v10150 = vsel %vm736, %v9836, -inf
    %v10151 = vmax.f32 %v10149, %v10150
    %v10152 = vsel %vm736, %v9842, -inf
    %v10153 = vmax.f32 %v10151, %v10152
    %v10154 = vsel %vm736, %v9846, -inf
    %v10155 = vmax.f32 %v10153, %v10154
    %v10156 = vrot.slane %v10155, 4
    %v10157 = vmax.f32 %v10155, %v10156
    %v10158 = vrot.slane %v10157, 2
    %v10159 = vmax.f32 %v10157, %v10158
    %v10160 = vrot.slane %v10159, 1
    %v10161 = vmax.f32 %v10159, %v10160
    %v10162 = vmax.f32 %v9850, %v9854
    %v10163 = vmax.f32 %v10162, %v9860
    %v10164 = vmax.f32 %v10163, %v9864
    %v10165 = vmax.f32 %v10164, %v9870
    %v10166 = vmax.f32 %v10165, %v9874
    %v10167 = vmax.f32 %v10166, %v9880
    %v10168 = vmax.f32 %v10167, %v9884
    %v10169 = vrot.slane %v10168, 4
    %v10170 = vmax.f32 %v10168, %v10169
    %v10171 = vrot.slane %v10170, 2
    %v10172 = vmax.f32 %v10170, %v10171
    %v10173 = vrot.slane %v10172, 1
    %v10174 = vmax.f32 %v10172, %v10173
    %v10175 = vsel %vm736, %v9852, -inf
    %v10176 = vsel %vm736, %v9856, -inf
    %v10177 = vmax.f32 %v10175, %v10176
    %v10178 = vsel %vm736, %v9862, -inf
    %v10179 = vmax.f32 %v10177, %v10178
    %v10180 = vsel %vm736, %v9866, -inf
    %v10181 = vmax.f32 %v10179, %v10180
    %v10182 = vsel %vm736, %v9872, -inf
    %v10183 = vmax.f32 %v10181, %v10182
    %v10184 = vsel %vm736, %v9876, -inf
    %v10185 = vmax.f32 %v10183, %v10184
    %v10186 = vsel %vm736, %v9882, -inf
    %v10187 = vmax.f32 %v10185, %v10186
    %v10188 = vsel %vm736, %v9886, -inf
    %v10189 = vmax.f32 %v10187, %v10188
    %v10190 = vrot.slane %v10189, 4
    %v10191 = vmax.f32 %v10189, %v10190
    %v10192 = vrot.slane %v10191, 2
    %v10193 = vmax.f32 %v10191, %v10192
    %v10194 = vrot.slane %v10193, 1
    %v10195 = vmax.f32 %v10193, %v10194
    %v10196 = vmax.f32 %v9890, %v9894
    %v10197 = vmax.f32 %v10196, %v9900
    %v10198 = vmax.f32 %v10197, %v9904
    %v10199 = vmax.f32 %v10198, %v9910
    %v10200 = vmax.f32 %v10199, %v9914
    %v10201 = vmax.f32 %v10200, %v9920
    %v10202 = vmax.f32 %v10201, %v9924
    %v10203 = vrot.slane %v10202, 4
    %v10204 = vmax.f32 %v10202, %v10203
    %v10205 = vrot.slane %v10204, 2
    %v10206 = vmax.f32 %v10204, %v10205
    %v10207 = vrot.slane %v10206, 1
    %v10208 = vmax.f32 %v10206, %v10207
    %v10209 = vsel %vm736, %v9892, -inf
    %v10210 = vsel %vm736, %v9896, -inf
    %v10211 = vmax.f32 %v10209, %v10210
    %v10212 = vsel %vm736, %v9902, -inf
    %v10213 = vmax.f32 %v10211, %v10212
    %v10214 = vsel %vm736, %v9906, -inf
    %v10215 = vmax.f32 %v10213, %v10214
    %v10216 = vsel %vm736, %v9912, -inf
    %v10217 = vmax.f32 %v10215, %v10216
    %v10218 = vsel %vm736, %v9916, -inf
    %v10219 = vmax.f32 %v10217, %v10218
    %v10220 = vsel %vm736, %v9922, -inf
    %v10221 = vmax.f32 %v10219, %v10220
    %v10222 = vsel %vm736, %v9926, -inf
    %v10223 = vmax.f32 %v10221, %v10222
    %v10224 = vrot.slane %v10223, 4
    %v10225 = vmax.f32 %v10223, %v10224
    %v10226 = vrot.slane %v10225, 2
    %v10227 = vmax.f32 %v10225, %v10226
    %v10228 = vrot.slane %v10227, 1
    %v10229 = vmax.f32 %v10227, %v10228
    %v10230 = vmax.f32 %v9930, %v9934
    %v10231 = vmax.f32 %v10230, %v9940
    %v10232 = vmax.f32 %v10231, %v9944
    %v10233 = vmax.f32 %v10232, %v9950
    %v10234 = vmax.f32 %v10233, %v9954
    %v10235 = vmax.f32 %v10234, %v9960
    %v10236 = vmax.f32 %v10235, %v9964
    %v10237 = vrot.slane %v10236, 4
    %v10238 = vmax.f32 %v10236, %v10237
    %v10239 = vrot.slane %v10238, 2
    %v10240 = vmax.f32 %v10238, %v10239
    %v10241 = vrot.slane %v10240, 1
    %v10242 = vmax.f32 %v10240, %v10241
    %v10243 = vsel %vm736, %v9932, -inf
    %v10244 = vsel %vm736, %v9936, -inf
    %v10245 = vmax.f32 %v10243, %v10244
    %v10246 = vsel %vm736, %v9942, -inf
    %v10247 = vmax.f32 %v10245, %v10246
    %v10248 = vsel %vm736, %v9946, -inf
    %v10249 = vmax.f32 %v10247, %v10248
    %v10250 = vsel %vm736, %v9952, -inf
    %v10251 = vmax.f32 %v10249, %v10250
    %v10252 = vsel %vm736, %v9956, -inf
    %v10253 = vmax.f32 %v10251, %v10252
    %v10254 = vsel %vm736, %v9962, -inf
    %v10255 = vmax.f32 %v10253, %v10254
    %v10256 = vsel %vm736, %v9966, -inf
    %v10257 = vmax.f32 %v10255, %v10256
    %v10258 = vrot.slane %v10257, 4
    %v10259 = vmax.f32 %v10257, %v10258
    %v10260 = vrot.slane %v10259, 2
    %v10261 = vmax.f32 %v10259, %v10260
    %v10262 = vrot.slane %v10261, 1
    %v10263 = vmax.f32 %v10261, %v10262
    %v10264 = vmax.f32 %v9970, %v9974
    %v10265 = vmax.f32 %v10264, %v9980
    %v10266 = vmax.f32 %v10265, %v9984
    %v10267 = vmax.f32 %v10266, %v9990
    %v10268 = vmax.f32 %v10267, %v9994
    %v10269 = vmax.f32 %v10268, %v10000
    %v10270 = vmax.f32 %v10269, %v10004
    %v10271 = vrot.slane %v10270, 4
    %v10272 = vmax.f32 %v10270, %v10271
    %v10273 = vrot.slane %v10272, 2
    %v10274 = vmax.f32 %v10272, %v10273
    %v10275 = vrot.slane %v10274, 1
    %v10276 = vmax.f32 %v10274, %v10275
    %v10277 = vsel %vm736, %v9972, -inf
    %v10278 = vsel %vm736, %v9976, -inf
    %v10279 = vmax.f32 %v10277, %v10278
    %v10280 = vsel %vm736, %v9982, -inf
    %v10281 = vmax.f32 %v10279, %v10280
    %v10282 = vsel %vm736, %v9986, -inf
    %v10283 = vmax.f32 %v10281, %v10282
    %v10284 = vsel %vm736, %v9992, -inf
    %v10285 = vmax.f32 %v10283, %v10284
    %v10286 = vsel %vm736, %v9996, -inf
    %v10287 = vmax.f32 %v10285, %v10286
    %v10288 = vsel %vm736, %v10002, -inf
    %v10289 = vmax.f32 %v10287, %v10288
    %v10290 = vsel %vm736, %v10006, -inf
    %v10291 = vmax.f32 %v10289, %v10290
    %v10292 = vrot.slane %v10291, 4
    %v10293 = vmax.f32 %v10291, %v10292
    %v10294 = vrot.slane %v10293, 2
    %v10295 = vmax.f32 %v10293, %v10294
    %v10296 = vrot.slane %v10295, 1
    %v10297 = vmax.f32 %v10295, %v10296
    %v10298 = vmax.f32 %v10010, %v10014
    %v10299 = vmax.f32 %v10298, %v10020
    %v10300 = vmax.f32 %v10299, %v10024
    %v10301 = vmax.f32 %v10300, %v10030
    %v10302 = vmax.f32 %v10301, %v10034
    %v10303 = vmax.f32 %v10302, %v10040
    %v10304 = vmax.f32 %v10303, %v10044
    %v10305 = vrot.slane %v10304, 4
    %v10306 = vmax.f32 %v10304, %v10305
    %v10307 = vrot.slane %v10306, 2
    %v10308 = vmax.f32 %v10306, %v10307
    %v10309 = vrot.slane %v10308, 1
    %v10310 = vmax.f32 %v10308, %v10309
    %v10311 = vsel %vm736, %v10012, -inf
    %v10312 = vsel %vm736, %v10016, -inf
    %v10313 = vmax.f32 %v10311, %v10312
    %v10314 = vsel %vm736, %v10022, -inf
    %v10315 = vmax.f32 %v10313, %v10314
    %v10316 = vsel %vm736, %v10026, -inf
    %v10317 = vmax.f32 %v10315, %v10316
    %v10318 = vsel %vm736, %v10032, -inf
    %v10319 = vmax.f32 %v10317, %v10318
    %v10320 = vsel %vm736, %v10036, -inf
    %v10321 = vmax.f32 %v10319, %v10320
    %v10322 = vsel %vm736, %v10042, -inf
    %v10323 = vmax.f32 %v10321, %v10322
    %v10324 = vsel %vm736, %v10046, -inf
    %v10325 = vmax.f32 %v10323, %v10324
    %v10326 = vrot.slane %v10325, 4
    %v10327 = vmax.f32 %v10325, %v10326
    %v10328 = vrot.slane %v10327, 2
    %v10329 = vmax.f32 %v10327, %v10328
    %v10330 = vrot.slane %v10329, 1
    %v10331 = vmax.f32 %v10329, %v10330
    %v10332 = vmax.f32 %v10050, %v10054
    %v10333 = vmax.f32 %v10332, %v10060
    %v10334 = vmax.f32 %v10333, %v10064
    %v10335 = vmax.f32 %v10334, %v10070
    %v10336 = vmax.f32 %v10335, %v10074
    %v10337 = vmax.f32 %v10336, %v10080
    %v10338 = vmax.f32 %v10337, %v10084
    %v10339 = vrot.slane %v10338, 4
    %v10340 = vmax.f32 %v10338, %v10339
    %v10341 = vrot.slane %v10340, 2
    %v10342 = vmax.f32 %v10340, %v10341
    %v10343 = vrot.slane %v10342, 1
    %v10344 = vmax.f32 %v10342, %v10343
    %v10345 = vsel %vm736, %v10052, -inf
    %v10346 = vsel %vm736, %v10056, -inf
    %v10347 = vmax.f32 %v10345, %v10346
    %v10348 = vsel %vm736, %v10062, -inf
    %v10349 = vmax.f32 %v10347, %v10348
    %v10350 = vsel %vm736, %v10066, -inf
    %v10351 = vmax.f32 %v10349, %v10350
    %v10352 = vsel %vm736, %v10072, -inf
    %v10353 = vmax.f32 %v10351, %v10352
    %v10354 = vsel %vm736, %v10076, -inf
    %v10355 = vmax.f32 %v10353, %v10354
    %v10356 = vsel %vm736, %v10082, -inf
    %v10357 = vmax.f32 %v10355, %v10356
    %v10358 = vsel %vm736, %v10086, -inf
    %v10359 = vmax.f32 %v10357, %v10358
    %v10360 = vrot.slane %v10359, 4
    %v10361 = vmax.f32 %v10359, %v10360
    %v10362 = vrot.slane %v10361, 2
    %v10363 = vmax.f32 %v10361, %v10362
    %v10364 = vrot.slane %v10363, 1
    %v10365 = vmax.f32 %v10363, %v10364
    %v10366 = vmax.f32 %v10090, %v10094
    %v10367 = vmax.f32 %v10366, %v10100
    %v10368 = vmax.f32 %v10367, %v10104
    %v10369 = vmax.f32 %v10368, %v10110
    %v10370 = vmax.f32 %v10369, %v10114
    %v10371 = vmax.f32 %v10370, %v10120
    %v10372 = vmax.f32 %v10371, %v10124
    %v10373 = vrot.slane %v10372, 4
    %v10374 = vmax.f32 %v10372, %v10373
    %v10375 = vrot.slane %v10374, 2
    %v10376 = vmax.f32 %v10374, %v10375
    %v10377 = vrot.slane %v10376, 1
    %v10378 = vmax.f32 %v10376, %v10377
    %v10379 = vsel %vm736, %v10092, -inf
    %v10380 = vsel %vm736, %v10096, -inf
    %v10381 = vmax.f32 %v10379, %v10380
    %v10382 = vsel %vm736, %v10102, -inf
    %v10383 = vmax.f32 %v10381, %v10382
    %v10384 = vsel %vm736, %v10106, -inf
    %v10385 = vmax.f32 %v10383, %v10384
    %v10386 = vsel %vm736, %v10112, -inf
    %v10387 = vmax.f32 %v10385, %v10386
    %v10388 = vsel %vm736, %v10116, -inf
    %v10389 = vmax.f32 %v10387, %v10388
    %v10390 = vsel %vm736, %v10122, -inf
    %v10391 = vmax.f32 %v10389, %v10390
    %v10392 = vsel %vm736, %v10126, -inf
    %v10393 = vmax.f32 %v10391, %v10392
    %v10394 = vrot.slane %v10393, 4
    %v10395 = vmax.f32 %v10393, %v10394
    %v10396 = vrot.slane %v10395, 2
    %v10397 = vmax.f32 %v10395, %v10396
    %v10398 = vrot.slane %v10397, 1
    %v10399 = vmax.f32 %v10397, %v10398
    %v10400 = vpack.c.bf16 %v10140, %v10140
    %v10401 = vpack.c.bf16 %v10161, %v10161
    %v10402 = vpack.c.bf16 %v10174, %v10174
    %v10403 = vpack.c.bf16 %v10195, %v10195
    %v10404 = vpack.c.bf16 %v10208, %v10208
    %v10405 = vpack.c.bf16 %v10229, %v10229
    %v10406 = vpack.c.bf16 %v10242, %v10242
    %v10407 = vpack.c.bf16 %v10263, %v10263
    %v10408 = vpack.c.bf16 %v10276, %v10276
    %v10409 = vpack.c.bf16 %v10297, %v10297
    %v10410 = vpack.c.bf16 %v10310, %v10310
    %v10411 = vpack.c.bf16 %v10331, %v10331
    %v10412 = vpack.c.bf16 %v10344, %v10344
    %v10413 = vpack.c.bf16 %v10365, %v10365
    %v10414 = vpack.c.bf16 %v10378, %v10378
    %v10415 = vpack.c.bf16 %v10399, %v10399
    %s10416 = scalar_lea.vmem %s2, 960
    %v10417 = vld [vmem:[%s10416] sm:$0xf]
    %v10418 = vld [vmem:[%s10416 + $0x4] sm:$0xf]
    %v10419 = vld [vmem:[%s10416 + $0x8] sm:$0xf]
    %v10420 = vld [vmem:[%s10416 + $0xc] sm:$0xf]
    %v10421 = vld [vmem:[%s10416 + $0x10] sm:$0xf]
    %v10422 = vld [vmem:[%s10416 + $0x14] sm:$0xf]
    %v10423 = vld [vmem:[%s10416 + $0x18] sm:$0xf]
    %v10424 = vld [vmem:[%s10416 + $0x1c] sm:$0xf]
    %v10425 = vld [vmem:[%s10416 + $0x20] sm:$0xf]
    %v10426 = vld [vmem:[%s10416 + $0x24] sm:$0xf]
    %v10427 = vld [vmem:[%s10416 + $0x28] sm:$0xf]
    %v10428 = vld [vmem:[%s10416 + $0x2c] sm:$0xf]
    %v10429 = vld [vmem:[%s10416 + $0x30] sm:$0xf]
    %v10430 = vld [vmem:[%s10416 + $0x34] sm:$0xf]
    %v10431 = vld [vmem:[%s10416 + $0x38] sm:$0xf]
    %v10432 = vld [vmem:[%s10416 + $0x3c] sm:$0xf]
    %v10433 = vld [vmem:[%s10416 + $0x40] sm:$0xf]
    %v10434 = vld [vmem:[%s10416 + $0x44] sm:$0xf]
    %v10435 = vld [vmem:[%s10416 + $0x48] sm:$0xf]
    %v10436 = vld [vmem:[%s10416 + $0x4c] sm:$0xf]
    %v10437 = vld [vmem:[%s10416 + $0x50] sm:$0xf]
    %v10438 = vld [vmem:[%s10416 + $0x54] sm:$0xf]
    %v10439 = vld [vmem:[%s10416 + $0x58] sm:$0xf]
    %v10440 = vld [vmem:[%s10416 + $0x5c] sm:$0xf]
    %v10441 = vld [vmem:[%s10416 + $0x60] sm:$0xf]
    %v10442 = vld [vmem:[%s10416 + $0x64] sm:$0xf]
    %v10443 = vld [vmem:[%s10416 + $0x68] sm:$0xf]
    %v10444 = vld [vmem:[%s10416 + $0x6c] sm:$0xf]
    %v10445 = vld [vmem:[%s10416 + $0x70] sm:$0xf]
    %v10446 = vld [vmem:[%s10416 + $0x74] sm:$0xf]
    %v10463 = vunpack.c.l.b16 %v10400
    %v10464 = vunpack.c.l.b16 %v10401
    %v10465 = vunpack.c.l.b16 %v10402
    %v10466 = vunpack.c.l.b16 %v10403
    %v10467 = vunpack.c.l.b16 %v10404
    %v10468 = vunpack.c.l.b16 %v10405
    %v10469 = vunpack.c.l.b16 %v10406
    %v10470 = vunpack.c.l.b16 %v10407
    %v10471 = vunpack.c.l.b16 %v10408
    %v10472 = vunpack.c.l.b16 %v10409
    %v10473 = vunpack.c.l.b16 %v10410
    %v10474 = vunpack.c.l.b16 %v10411
    %v10475 = vunpack.c.l.b16 %v10412
    %v10476 = vunpack.c.l.b16 %v10413
    %v10477 = vunpack.c.l.b16 %v10414
    %v10478 = vunpack.c.l.b16 %v10415
    %v10479 = vsel %vm2066, %v10465, %v10463
    %v10480 = vsel %vm2068, %v10467, %v10479
    %v10481 = vsel %vm2070, %v10469, %v10480
    %v10482 = vsel %vm2072, %v10471, %v10481
    %v10483 = vsel %vm2074, %v10473, %v10482
    %v10484 = vsel %vm2076, %v10475, %v10483
    %v10485 = vsel %vm2078, %v10477, %v10484
    %v10486 = vsel %vm2066, %v10466, %v10464
    %v10487 = vsel %vm2068, %v10468, %v10486
    %v10488 = vsel %vm2070, %v10470, %v10487
    %v10489 = vsel %vm2072, %v10472, %v10488
    %v10490 = vsel %vm2074, %v10474, %v10489
    %v10491 = vsel %vm2076, %v10476, %v10490
    %v10492 = vsel %vm2078, %v10478, %v10491
    %v10493 = vpack.c.b16 %v10485, %v10485
    %v10494 = vpack.c.b16 %v10492, %v10492
    %v10526 = vunpack.c.l.b16 %v10417
    %v10527 = vunpack.c.l.b16 %v10418
    %v10528 = vunpack.c.l.b16 %v10419
    %v10529 = vunpack.c.l.b16 %v10420
    %v10530 = vunpack.c.l.b16 %v10421
    %v10531 = vunpack.c.l.b16 %v10422
    %v10532 = vunpack.c.l.b16 %v10423
    %v10533 = vunpack.c.l.b16 %v10424
    %v10534 = vunpack.c.l.b16 %v10425
    %v10535 = vunpack.c.l.b16 %v10426
    %v10536 = vunpack.c.l.b16 %v10427
    %v10537 = vunpack.c.l.b16 %v10428
    %v10538 = vunpack.c.l.b16 %v10429
    %v10539 = vunpack.c.l.b16 %v10430
    %v10540 = vunpack.c.l.b16 %v10431
    %v10541 = vunpack.c.l.b16 %v10432
    %v10542 = vunpack.c.l.b16 %v10433
    %v10543 = vunpack.c.l.b16 %v10434
    %v10544 = vunpack.c.l.b16 %v10435
    %v10545 = vunpack.c.l.b16 %v10436
    %v10546 = vunpack.c.l.b16 %v10437
    %v10547 = vunpack.c.l.b16 %v10438
    %v10548 = vunpack.c.l.b16 %v10439
    %v10549 = vunpack.c.l.b16 %v10440
    %v10550 = vunpack.c.l.b16 %v10441
    %v10551 = vunpack.c.l.b16 %v10442
    %v10552 = vunpack.c.l.b16 %v10443
    %v10553 = vunpack.c.l.b16 %v10444
    %v10554 = vunpack.c.l.b16 %v10445
    %v10555 = vunpack.c.l.b16 %v10446
    %v10556 = vpack.c.b16 %v10527, %v10526
    %v10557 = vpack.c.b16 %v10529, %v10528
    %v10558 = vpack.c.b16 %v10531, %v10530
    %v10559 = vpack.c.b16 %v10533, %v10532
    %v10560 = vpack.c.b16 %v10535, %v10534
    %v10561 = vpack.c.b16 %v10537, %v10536
    %v10562 = vpack.c.b16 %v10539, %v10538
    %v10563 = vpack.c.b16 %v10541, %v10540
    %v10564 = vpack.c.b16 %v10543, %v10542
    %v10565 = vpack.c.b16 %v10545, %v10544
    %v10566 = vpack.c.b16 %v10547, %v10546
    %v10567 = vpack.c.b16 %v10549, %v10548
    %v10568 = vpack.c.b16 %v10551, %v10550
    %v10569 = vpack.c.b16 %v10553, %v10552
    %v10570 = vpack.c.b16 %v10555, %v10554
    %v10587 = vsel %vm736, %v10494, 0
    %10589 = vmatprep.subr.bf16.mxu0 0
    %10590 = vmatpush1.bf16.msra.mxu0 %v10563
    %10591 = vmatprep.subr.bf16.mxu0 0
    %10592 = vmatpush1.bf16.msra.mxu0 %v10562
    %10593 = vmatprep.subr.bf16.mxu0 0
    %10594 = vmatpush1.bf16.msra.mxu0 %v10561
    %10595 = vmatprep.subr.bf16.mxu0 0
    %10596 = vmatpush1.bf16.msra.mxu0 %v10560
    %10597 = vmatprep.subr.bf16.mxu0 0
    %10598 = vmatpush1.bf16.msra.mxu0 %v10559
    %10599 = vmatprep.subr.bf16.mxu0 0
    %10600 = vmatpush1.bf16.msra.mxu0 %v10558
    %10601 = vmatprep.subr.bf16.mxu0 0
    %10602 = vmatpush1.bf16.msra.mxu0 %v10557
    %10603 = vmatprep.subr.bf16.mxu0 0
    %10604 = vmatpush1.bf16.msra.mxu0 %v10556
    %10605 = vmatprep.subr.bf16.mxu0 0
    %10606 = vmatpush2.bf16.msra.mxu0 0
    %10607 = vmatprep.subr.bf16.mxu0 0
    %10608 = vmatpush2.bf16.msra.mxu0 %v10570
    %10609 = vmatprep.subr.bf16.mxu0 0
    %10610 = vmatpush2.bf16.msra.mxu0 %v10569
    %10611 = vmatprep.subr.bf16.mxu0 0
    %10612 = vmatpush2.bf16.msra.mxu0 %v10568
    %10613 = vmatprep.subr.bf16.mxu0 0
    %10614 = vmatpush2.bf16.msra.mxu0 %v10567
    %10615 = vmatprep.subr.bf16.mxu0 0
    %10616 = vmatpush2.bf16.msra.mxu0 %v10566
    %10617 = vmatprep.subr.bf16.mxu0 0
    %10618 = vmatpush2.bf16.msra.mxu0 %v10565
    %10619 = vmatprep.subr.bf16.mxu0 0
    %10620 = vmatpush2.bf16.msra.mxu0 %v10564
    %10621 = vmatprep.mubr.bf16.mxu0 %v10587
    %10622 = vmatmul.mubr.bf16.gmra.mxu0 %v10493
    %v10623 = vpop.f32.mrf.mxu0
    %v10624 = vadd.f32 0.0, %v10623
    %v10625 = vpop.f32.mrf.mxu0
    %v10626 = vpop.f32.mrf.mxu0
    %v10627 = vpop.f32.mrf.mxu0
    %10628 = vdwg.mxu0
    %v10629 = vadd.f32 %v9454, %v10624
    %v10630 = vld [vmem:[%s3] sm:$0x1]
    %v10632 = vlaneseq
    %v10633 = vshrl.u32 %v10632, 7
    %v10634 = vsub.s32 0, %v10633
    %v10635 = vrot.slane %v10630, %v10634
    %v10637 = vadd.f32 %v10629, %v10635
    %v10638 = vmax.f32 %v10637, 0.0
    %v10639 = vpack.c.bf16 %v10638, %v10638
    %v10640 = vld [vmem:[%s4] sm:$0xf]
    %v10641 = vld [vmem:[%s4 + $0x4] sm:$0xf]
    %v10642 = vld [vmem:[%s4 + $0x8] sm:$0xf]
    %v10643 = vld [vmem:[%s4 + $0xc] sm:$0xf]
    %v10644 = vld [vmem:[%s4 + $0x10] sm:$0xf]
    %v10645 = vld [vmem:[%s4 + $0x14] sm:$0xf]
    %v10646 = vld [vmem:[%s4 + $0x18] sm:$0xf]
    %v10647 = vld [vmem:[%s4 + $0x1c] sm:$0xf]
    %v10648 = vld [vmem:[%s4 + $0x20] sm:$0xf]
    %v10649 = vld [vmem:[%s4 + $0x24] sm:$0xf]
    %v10650 = vld [vmem:[%s4 + $0x28] sm:$0xf]
    %v10651 = vld [vmem:[%s4 + $0x2c] sm:$0xf]
    %v10652 = vld [vmem:[%s4 + $0x30] sm:$0xf]
    %v10653 = vld [vmem:[%s4 + $0x34] sm:$0xf]
    %v10654 = vld [vmem:[%s4 + $0x38] sm:$0xf]
    %v10655 = vld [vmem:[%s4 + $0x3c] sm:$0xf]
    %v10656 = vld [vmem:[%s5] sm:$0x1]
    %v10658 = vlaneseq
    %v10659 = vshrl.u32 %v10658, 7
    %v10660 = vsub.s32 0, %v10659
    %v10661 = vrot.slane %v10656, %v10660
    %v10679 = vunpack.c.l.b16 %v10640
    %v10680 = vunpack.c.l.b16 %v10641
    %v10681 = vunpack.c.l.b16 %v10642
    %v10682 = vunpack.c.l.b16 %v10643
    %v10683 = vunpack.c.l.b16 %v10644
    %v10684 = vunpack.c.l.b16 %v10645
    %v10685 = vunpack.c.l.b16 %v10646
    %v10686 = vunpack.c.l.b16 %v10647
    %v10687 = vunpack.c.l.b16 %v10648
    %v10688 = vunpack.c.l.b16 %v10649
    %v10689 = vunpack.c.l.b16 %v10650
    %v10690 = vunpack.c.l.b16 %v10651
    %v10691 = vunpack.c.l.b16 %v10652
    %v10692 = vunpack.c.l.b16 %v10653
    %v10693 = vunpack.c.l.b16 %v10654
    %v10694 = vunpack.c.l.b16 %v10655
    %v10695 = vpack.c.b16 %v10680, %v10679
    %v10696 = vpack.c.b16 %v10682, %v10681
    %v10697 = vpack.c.b16 %v10684, %v10683
    %v10698 = vpack.c.b16 %v10686, %v10685
    %v10699 = vpack.c.b16 %v10688, %v10687
    %v10700 = vpack.c.b16 %v10690, %v10689
    %v10701 = vpack.c.b16 %v10692, %v10691
    %v10702 = vpack.c.b16 %v10694, %v10693
    %10711 = vmatprep.subr.bf16.mxu0 0
    %10712 = vmatpush1.bf16.msra.mxu0 %v10702
    %10713 = vmatprep.subr.bf16.mxu0 0
    %10714 = vmatpush1.bf16.msra.mxu0 %v10701
    %10715 = vmatprep.subr.bf16.mxu0 0
    %10716 = vmatpush1.bf16.msra.mxu0 %v10700
    %10717 = vmatprep.subr.bf16.mxu0 0
    %10718 = vmatpush1.bf16.msra.mxu0 %v10699
    %10719 = vmatprep.subr.bf16.mxu0 0
    %10720 = vmatpush1.bf16.msra.mxu0 %v10698
    %10721 = vmatprep.subr.bf16.mxu0 0
    %10722 = vmatpush1.bf16.msra.mxu0 %v10697
    %10723 = vmatprep.subr.bf16.mxu0 0
    %10724 = vmatpush1.bf16.msra.mxu0 %v10696
    %10725 = vmatprep.subr.bf16.mxu0 0
    %10726 = vmatpush1.bf16.msra.mxu0 %v10695
    %10727 = vmatprep.subr.bf16.mxu0 0
    %10728 = vmatpush2.bf16.msra.mxu0 0
    %10729 = vmatprep.subr.bf16.mxu0 0
    %10730 = vmatpush2.bf16.msra.mxu0 0
    %10731 = vmatprep.subr.bf16.mxu0 0
    %10732 = vmatpush2.bf16.msra.mxu0 0
    %10733 = vmatprep.subr.bf16.mxu0 0
    %10734 = vmatpush2.bf16.msra.mxu0 0
    %10735 = vmatprep.subr.bf16.mxu0 0
    %10736 = vmatpush2.bf16.msra.mxu0 0
    %10737 = vmatprep.subr.bf16.mxu0 0
    %10738 = vmatpush2.bf16.msra.mxu0 0
    %10739 = vmatprep.subr.bf16.mxu0 0
    %10740 = vmatpush2.bf16.msra.mxu0 0
    %10741 = vmatprep.subr.bf16.mxu0 0
    %10742 = vmatpush2.bf16.msra.mxu0 0
    %10743 = vmatprep.mubr.bf16.mxu0 0
    %10744 = vmatmul.mubr.bf16.gmra.mxu0 %v10639
    %v10745 = vpop.f32.mrf.mxu0
    %v10746 = vadd.f32 %v10661, %v10745
    %v10747 = vpop.f32.mrf.mxu0
    %v10748 = vpop.f32.mrf.mxu0
    %v10749 = vpop.f32.mrf.mxu0
    %10750 = vdwg.mxu0
    %10751 = vst [vmem:[#allocation2] sm:$0xff] %v10746
    // Predicated region
    $region26: #{tpu_custom_call.1} parent=1 // pred_check
      _
    $region27: #{tpu_custom_call.1} parent=1 // pred_check_branch
      %10753 = sbr.rel (0) target = $region29
    $region28: #{tpu_custom_call.1} parent=1 // pred_region
      %s10755 = ssub.s32 128, 128
      %10756 = vsyncadd [#allocation3], %s10755
      %s10758 = sshll.u32 [#allocation2], 4
      %s10759 = int_to_ptr.vmem [resolvable:$true] %s10758
      %10761 = dma.vmem_to_hbm [thread:$0]  %s10759, 128, %s6, [#allocation3]
    $region29: #{tpu_custom_call.1} parent=1 // pred_fallthru
      _
    // Predicated region
    $region30: #{tpu_custom_call.1} parent=1 // pred_check
      _
    $region31: #{tpu_custom_call.1} parent=1 // pred_check_branch
      %10763 = sbr.rel (0) target = $region33
    $region32: #{tpu_custom_call.1} parent=1 // pred_region
      %10764 = dma.done [#allocation3], 128
    $region33: #{tpu_custom_call.1} parent=1 // pred_fallthru
      _
    %10765 = vsyncpa [#allocation3], 1

</llo_original>
